<compile_context>
chip_gen: v6e
topology: v6e:2x2x1
jax: 0.10.0
libtpu: 0.0.40
codegen_flags: <defaults>
</compile_context>

<pallas_src>
import math
import functools

import jax
import jax.numpy as jnp
from jax import lax
from jax.experimental import pallas as pl
from jax.experimental.pallas import tpu as pltpu


# ----------------------------- in-kernel helpers -----------------------------

def _layernorm(x, gamma, beta, eps=1e-5):
    mu = jnp.mean(x, axis=-1, keepdims=True)
    var = jnp.mean((x - mu) ** 2, axis=-1, keepdims=True)
    return (x - mu) * lax.rsqrt(var + eps) * gamma + beta


def _mha(q2d, k2d, v2d, wo_heads, bo, *, nhead, nb, lq, lk):
    """Head-batched multi-head attention for a block of `nb` batch elements.

    q2d: (nb*lq, C) f32, k2d/v2d: (nb*lk, C) f32 -- already projected (bias incl.)
    wo_heads: (nhead, hd, C) bf16 == out_proj.weight.T reshaped per head (host-side)
    bo: (1, C) f32.  Returns (nb*lq, C) f32.
    """
    C = q2d.shape[-1]
    hd = C // nhead
    scale = 1.0 / math.sqrt(hd)
    bf16 = jnp.bfloat16

    def to_heads(x2d, l):
        # (nb*l, C) -> (nhead*nb, l, hd), head-major batch ordering.
        x3 = x2d.reshape(nb, l, C).astype(bf16)
        return jnp.concatenate(
            [x3[:, :, h * hd:(h + 1) * hd] for h in range(nhead)], axis=0)

    qh = to_heads(q2d, lq)                                  # (H*nb, lq, hd)
    kh = to_heads(k2d, lk)                                  # (H*nb, lk, hd)
    vh = to_heads(v2d, lk)                                  # (H*nb, lk, hd)

    # scores: (H*nb, lq, hd) x (H*nb, lk, hd) -> (H*nb, lq, lk), f32 accumulate
    s = lax.dot_general(qh, kh, (((2,), (2,)), ((0,), (0,))),
                        preferred_element_type=jnp.float32) * scale
    s = s - jnp.max(s, axis=-1, keepdims=True)
    e = jnp.exp(s)
    p = e * pl.reciprocal(jnp.sum(e, axis=-1, keepdims=True), approx=True)

    # P @ V: (H*nb, lq, lk) x (H*nb, lk, hd) -> (H*nb, lq, hd)
    o = lax.dot_general(p.astype(bf16), vh, (((2,), (1,)), ((0,), (0,))),
                        preferred_element_type=jnp.float32)

    # per-head output projection; (H*nb, lq, hd) -> (H, nb*lq, hd) is a contiguous,
    # tile-aligned regroup (head-major batch ordering makes it so).
    o = o.reshape(nhead, nb * lq, hd).astype(bf16)
    proj = lax.dot_general(o, wo_heads, (((2,), (1,)), ((0,), (0,))),
                           preferred_element_type=jnp.float32)   # (H, nb*lq, C)
    return jnp.sum(proj, axis=0) + bo                            # (nb*lq, C)


# ------------------------------- fused kernel ---------------------------------

def fused_decoder_kernel(
    # activations (resident across the layer axis)
    tgt_ref, qpos_ref, mem_ref, kp_ref,
    # self-attention weights (bf16) / biases (f32)
    sa_wqk_ref, sa_bqk_ref, sa_wv_ref, sa_bv_ref, sa_wo_ref, sa_bo_ref,
    # cross-attention weights (bf16) / biases (f32)
    ca_wq_ref, ca_bq_ref, ca_wk_ref, ca_bk_ref, ca_wv_ref, ca_bv_ref,
    ca_wo_ref, ca_bo_ref,
    # feed-forward
    w1_ref, b1_ref, w2_ref, b2_ref,
    # per-layer LayerNorms
    n1g_ref, n1b_ref, n2g_ref, n2b_ref, n3g_ref, n3b_ref,
    # final decoder LayerNorm
    fng_ref, fnb_ref,
    # output + scratch
    out_ref, x_sc,
    *, nhead, nb, lq, lk):
    """One grid step = one decoder layer applied to one batch block.

    grid = (batch_blocks, num_layers); the residual stream lives in x_sc across
    the (sequential, "arbitrary") layer axis; out_ref is written only on the last
    layer step (its block index is constant along the layer axis so the block
    stays resident until the batch-block index changes).
    """
    layer = pl.program_id(1)
    C = out_ref.shape[-1]
    bf16 = jnp.bfloat16

    # ---- first layer for this batch block: load the residual stream
    @pl.when(layer == 0)
    def _init():
        x_sc[...] = tgt_ref[...]

    x = x_sc[...]                        # (nb*lq, C) f32 residual stream
    qpos = qpos_ref[...]                 # (nb*lq, C) f32

    # ---- self-attention: q = k = x + query_pos, v = x  (Q/K projection fused)
    qk = jnp.dot((x + qpos).astype(bf16), sa_wqk_ref[0],
                 preferred_element_type=jnp.float32) + sa_bqk_ref[0]   # (M, 2C)
    sv = jnp.dot(x.astype(bf16), sa_wv_ref[0],
                 preferred_element_type=jnp.float32) + sa_bv_ref[0]    # (M, C)
    sa = _mha(qk[:, :C], qk[:, C:], sv, sa_wo_ref[0], sa_bo_ref[0],
              nhead=nhead, nb=nb, lq=lq, lk=lq)
    x = _layernorm(x + sa, n1g_ref[0], n1b_ref[0])

    # ---- cross-attention: q = x + query_pos, k = memory + pos, v = memory
    cq = jnp.dot((x + qpos).astype(bf16), ca_wq_ref[0],
                 preferred_element_type=jnp.float32) + ca_bq_ref[0]
    ck = jnp.dot(kp_ref[...], ca_wk_ref[0],
                 preferred_element_type=jnp.float32) + ca_bk_ref[0]
    cv = jnp.dot(mem_ref[...], ca_wv_ref[0],
                 preferred_element_type=jnp.float32) + ca_bv_ref[0]
    ca = _mha(cq, ck, cv, ca_wo_ref[0], ca_bo_ref[0],
              nhead=nhead, nb=nb, lq=lq, lk=lk)
    x = _layernorm(x + ca, n2g_ref[0], n2b_ref[0])

    # ---- feed-forward
    h = jnp.maximum(jnp.dot(x.astype(bf16), w1_ref[0],
                            preferred_element_type=jnp.float32) + b1_ref[0], 0.0)
    f = jnp.dot(h.astype(bf16), w2_ref[0],
                preferred_element_type=jnp.float32) + b2_ref[0]
    x = _layernorm(x + f, n3g_ref[0], n3b_ref[0])

    x_sc[...] = x

    # ---- final decoder LayerNorm fused into the last layer step (only out write)
    @pl.when(layer == pl.num_programs(1) - 1)
    def _final():
        out_ref[...] = _layernorm(x, fng_ref[...], fnb_ref[...])


# ------------------------------- wrapper ---------------------------------------

_WEIGHT_NAMES = ("sa_wqk", "sa_bqk", "sa_wv", "sa_bv", "sa_wo", "sa_bo",
                 "ca_wq", "ca_bq", "ca_wk", "ca_bk", "ca_wv", "ca_bv",
                 "ca_wo", "ca_bo",
                 "w1", "b1", "w2", "b2",
                 "n1g", "n1b", "n2g", "n2b", "n3g", "n3b")


def _block_bytes(shape, dtype):
    n = 1
    for d in shape:
        n *= int(d)
    return n * jnp.dtype(dtype).itemsize


def transformer_decoder_forward(tgt, memory, pos, query_pos, packed, nhead,
                                batch_block=None):
    """forward_pet: inputs seq-first (L,B,C)/(S,B,C); returns (1, L, B, C).

    batch_block: batch elements per grid block.  Default = B (whole batch folded
    into the matmul M dimension).  On v7x pass batch_block = B // 2 ONLY when the
    kernel is compute-bound and per-core M = (B/2)*L >= 256; in the
    weight-bandwidth-bound regime (small B*L) keep batch_block = B so layer
    weights are streamed from HBM once per chip rather than once per core.
    """
    L, B, C = tgt.shape
    S = memory.shape[0]
    num_layers = packed["sa_wqk"].shape[0]
    nb = B if batch_block is None else batch_block
    assert B % nb == 0, "batch_block must divide the batch size"

    # (L,B,C)/(S,B,C) -> batch-major, flattened to 2-D lane-friendly slabs.
    x2d = jnp.transpose(tgt, (1, 0, 2)).reshape(B * L, C).astype(jnp.float32)
    qp2d = jnp.transpose(query_pos, (1, 0, 2)).reshape(B * L, C).astype(jnp.float32)
    mem_bt = jnp.transpose(memory, (1, 0, 2)).reshape(B * S, C)
    pos_bt = jnp.transpose(pos, (1, 0, 2)).reshape(B * S, C)
    # memory + pos computed once on the host; both are matmul-only operands -> bf16.
    mem2d = mem_bt.astype(jnp.bfloat16)
    kp2d = (mem_bt + pos_bt).astype(jnp.bfloat16)

    grid = (B // nb, num_layers)

    def act_map(b, l):
        return (b, 0)

    def const_map(b, l):
        return (0, 0)

    weights = [packed[n] for n in _WEIGHT_NAMES]

    def w_spec(w):
        blk = (1,) + w.shape[1:]
        if w.ndim == 3:
            return pl.BlockSpec(blk, lambda b, l: (l, 0, 0))
        return pl.BlockSpec(blk, lambda b, l: (l, 0, 0, 0))

    in_specs = (
        [pl.BlockSpec((nb * L, C), act_map),     # tgt
         pl.BlockSpec((nb * L, C), act_map),     # query_pos
         pl.BlockSpec((nb * S, C), act_map),     # memory (bf16)
         pl.BlockSpec((nb * S, C), act_map)]     # memory + pos (bf16)
        + [w_spec(w) for w in weights]
        + [pl.BlockSpec(packed["fng"].shape, const_map),
           pl.BlockSpec(packed["fnb"].shape, const_map)]
    )

    # ---- VMEM budget: double-buffered blocks + output + residual scratch.
    act_blocks = [((nb * L, C), x2d.dtype), ((nb * L, C), qp2d.dtype),
                  ((nb * S, C), mem2d.dtype), ((nb * S, C), kp2d.dtype)]
    est = sum(2 * _block_bytes(s, d) for s, d in act_blocks)
    est += sum(2 * _block_bytes((1,) + w.shape[1:], w.dtype) for w in weights)
    est += 2 * _block_bytes(packed["fng"].shape, packed["fng"].dtype)
    est += 2 * _block_bytes(packed["fnb"].shape, packed["fnb"].dtype)
    est += 2 * _block_bytes((nb * L, C), jnp.float32)      # output block
    est += _block_bytes((nb * L, C), jnp.float32)          # residual scratch
    # >= default scoped limit (never more restrictive), <= 56 MiB (safe on v7x 64 MiB).
    vmem_limit = int(min(56 << 20, max(32 << 20, 2 * est)))

    kernel = functools.partial(fused_decoder_kernel,
                               nhead=nhead, nb=nb, lq=L, lk=S)

    y2d = pl.pallas_call(
        kernel,
        out_shape=jax.ShapeDtypeStruct((B * L, C), jnp.float32),
        grid=grid,
        in_specs=in_specs,
        out_specs=pl.BlockSpec((nb * L, C), act_map),
        scratch_shapes=[pltpu.VMEM((nb * L, C), jnp.float32)],   # residual stream
        compiler_params=pltpu.CompilerParams(
            dimension_semantics=("parallel", "arbitrary"),
            vmem_limit_bytes=vmem_limit),
    )(x2d, qp2d, mem2d, kp2d, *weights, packed["fng"], packed["fnb"])

    # back to PyTorch convention: output.unsqueeze(0) -> (1, L, B, C)
    return jnp.transpose(y2d.reshape(B, L, C), (1, 0, 2))[None]


# ------------------------------- params ----------------------------------------

def init_layer_params(key, d_model, dim_feedforward):
    """PyTorch-layout parameters for one decoder layer."""
    ks = jax.random.split(key, 12)
    s = 0.02
    f32 = jnp.float32
    return {
        "sa_in_w": s * jax.random.normal(ks[0], (3 * d_model, d_model), f32),
        "sa_in_b": s * jax.random.normal(ks[1], (3 * d_model,), f32),
        "sa_out_w": s * jax.random.normal(ks[2], (d_model, d_model), f32),
        "sa_out_b": s * jax.random.normal(ks[3], (d_model,), f32),
        "ca_in_w": s * jax.random.normal(ks[4], (3 * d_model, d_model), f32),
        "ca_in_b": s * jax.random.normal(ks[5], (3 * d_model,), f32),
        "ca_out_w": s * jax.random.normal(ks[6], (d_model, d_model), f32),
        "ca_out_b": s * jax.random.normal(ks[7], (d_model,), f32),
        "w1": s * jax.random.normal(ks[8], (dim_feedforward, d_model), f32),
        "b1": s * jax.random.normal(ks[9], (dim_feedforward,), f32),
        "w2": s * jax.random.normal(ks[10], (d_model, dim_feedforward), f32),
        "b2": s * jax.random.normal(ks[11], (d_model,), f32),
        "n1_g": jnp.ones((d_model,), f32), "n1_b": jnp.zeros((d_model,), f32),
        "n2_g": jnp.ones((d_model,), f32), "n2_b": jnp.zeros((d_model,), f32),
        "n3_g": jnp.ones((d_model,), f32), "n3_b": jnp.zeros((d_model,), f32),
    }


def pack_decoder_params(layer_params, final_norm, nhead):
    """PyTorch-layout per-layer params -> stacked, pre-transposed kernel layout.

    Matmul weights in bf16 (weight-streaming bandwidth / MXU rate); biases and
    LayerNorm params in f32 (applied after the f32-accumulated matmuls).
    """
    C = layer_params[0]["sa_out_w"].shape[0]
    hd = C // nhead
    bf16 = jnp.bfloat16
    f32 = jnp.float32

    def stack(fn, dtype):
        return jnp.stack([fn(p) for p in layer_params], axis=0).astype(dtype)

    row = lambda v: v.reshape(1, -1)
    return {
        # self-attention
        "sa_wqk": stack(lambda p: p["sa_in_w"][:2 * C].T, bf16),           # (nl,C,2C)
        "sa_bqk": stack(lambda p: row(p["sa_in_b"][:2 * C]), f32),         # (nl,1,2C)
        "sa_wv": stack(lambda p: p["sa_in_w"][2 * C:].T, bf16),            # (nl,C,C)
        "sa_bv": stack(lambda p: row(p["sa_in_b"][2 * C:]), f32),
        "sa_wo": stack(lambda p: p["sa_out_w"].T.reshape(nhead, hd, C), bf16),
        "sa_bo": stack(lambda p: row(p["sa_out_b"]), f32),
        # cross-attention
        "ca_wq": stack(lambda p: p["ca_in_w"][:C].T, bf16),
        "ca_bq": stack(lambda p: row(p["ca_in_b"][:C]), f32),
        "ca_wk": stack(lambda p: p["ca_in_w"][C:2 * C].T, bf16),
        "ca_bk": stack(lambda p: row(p["ca_in_b"][C:2 * C]), f32),
        "ca_wv": stack(lambda p: p["ca_in_w"][2 * C:].T, bf16),
        "ca_bv": stack(lambda p: row(p["ca_in_b"][2 * C:]), f32),
        "ca_wo": stack(lambda p: p["ca_out_w"].T.reshape(nhead, hd, C), bf16),
        "ca_bo": stack(lambda p: row(p["ca_out_b"]), f32),
        # feed-forward
        "w1": stack(lambda p: p["w1"].T, bf16),                            # (nl,C,DFF)
        "b1": stack(lambda p: row(p["b1"]), f32),
        "w2": stack(lambda p: p["w2"].T, bf16),                            # (nl,DFF,C)
        "b2": stack(lambda p: row(p["b2"]), f32),
        # LayerNorms
        "n1g": stack(lambda p: row(p["n1_g"]), f32), "n1b": stack(lambda p: row(p["n1_b"]), f32),
        "n2g": stack(lambda p: row(p["n2_g"]), f32), "n2b": stack(lambda p: row(p["n2_b"]), f32),
        "n3g": stack(lambda p: row(p["n3_g"]), f32), "n3b": stack(lambda p: row(p["n3_b"]), f32),
        "fng": row(final_norm["g"]).astype(f32), "fnb": row(final_norm["b"]).astype(f32),
    }


# ------------------------------- pure-JAX reference -----------------------------

def reference_forward(tgt, memory, pos, query_pos, layer_params, final_norm, nhead):
    def ln(x, g, b, eps=1e-5):
        mu = jnp.mean(x, -1, keepdims=True)
        var = jnp.mean((x - mu) ** 2, -1, keepdims=True)
        return (x - mu) / jnp.sqrt(var + eps) * g + b

    def mha(q_in, k_in, v_in, in_w, in_b, out_w, out_b):
        Lq, B, C = q_in.shape
        Lk = k_in.shape[0]
        hd = C // nhead
        q = q_in @ in_w[:C].T + in_b[:C]
        k = k_in @ in_w[C:2 * C].T + in_b[C:2 * C]
        v = v_in @ in_w[2 * C:].T + in_b[2 * C:]
        q = q.reshape(Lq, B, nhead, hd).transpose(1, 2, 0, 3)
        k = k.reshape(Lk, B, nhead, hd).transpose(1, 2, 0, 3)
        v = v.reshape(Lk, B, nhead, hd).transpose(1, 2, 0, 3)
        s = jnp.einsum("bhqd,bhkd->bhqk", q, k) / math.sqrt(hd)
        p = jax.nn.softmax(s, axis=-1)
        o = jnp.einsum("bhqk,bhkd->bhqd", p, v)
        o = o.transpose(2, 0, 1, 3).reshape(Lq, B, C)
        return o @ out_w.T + out_b

    x = tgt
    for p_ in layer_params:
        sa = mha(x + query_pos, x + query_pos, x,
                 p_["sa_in_w"], p_["sa_in_b"], p_["sa_out_w"], p_["sa_out_b"])
        x = ln(x + sa, p_["n1_g"], p_["n1_b"])
        ca = mha(x + query_pos, memory + pos, memory,
                 p_["ca_in_w"], p_["ca_in_b"], p_["ca_out_w"], p_["ca_out_b"])
        x = ln(x + ca, p_["n2_g"], p_["n2_b"])
        h = jax.nn.relu(x @ p_["w1"].T + p_["b1"])
        f = h @ p_["w2"].T + p_["b2"]
        x = ln(x + f, p_["n3_g"], p_["n3_b"])
    x = ln(x, final_norm["g"], final_norm["b"])
    return x[None]


# ------------------------------- test -------------------------------------------

if __name__ == "__main__":
    # small shapes: L=8 queries, S=16 memory tokens, B=2, d_model=32, nhead=8
    L, S, B, C, NHEAD, DFF, NUM_LAYERS = 8, 16, 2, 32, 8, 64, 2

    key = jax.random.PRNGKey(0)
    k_in, k_par = jax.random.split(key)
    k_tgt, k_mem, k_pos, k_qp = jax.random.split(k_in, 4)

    tgt = jax.random.normal(k_tgt, (L, B, C), jnp.float32)
    memory = jax.random.normal(k_mem, (S, B, C), jnp.float32)
    pos = jax.random.normal(k_pos, (S, B, C), jnp.float32)
    query_pos = jax.random.normal(k_qp, (L, B, C), jnp.float32)

    layer_keys = jax.random.split(k_par, NUM_LAYERS)
    layer_params = [init_layer_params(layer_keys[i], C, DFF)
                    for i in range(NUM_LAYERS)]
    final_norm = {"g": jnp.ones((C,), jnp.float32),
                  "b": jnp.zeros((C,), jnp.float32)}

    packed = pack_decoder_params(layer_params, final_norm, NHEAD)

    out = transformer_decoder_forward(tgt, memory, pos, query_pos, packed, NHEAD)
    out = jax.block_until_ready(out)
    assert out.shape == (1, L, B, C), out.shape
    assert bool(jnp.all(jnp.isfinite(out)))

    ref = reference_forward(tgt, memory, pos, query_pos, layer_params,
                            final_norm, NHEAD)
    err = float(jnp.max(jnp.abs(out - ref)))
    assert err < 5e-2, f"kernel/reference mismatch: max abs err = {err}"

    print("KERNEL_OK")
</pallas_src>

<mosaic_0001>
module attributes {stable_mosaic.version = 11 : i64} {
  func.func @fused_decoder_kernel(%arg0: i32, %arg1: i32, %arg2: memref<16x32xf32, #tpu.memory_space<vmem>>, %arg3: memref<16x32xf32, #tpu.memory_space<vmem>>, %arg4: memref<32x32xbf16, #tpu.memory_space<vmem>>, %arg5: memref<32x32xbf16, #tpu.memory_space<vmem>>, %arg6: memref<1x32x64xbf16, #tpu.memory_space<vmem>>, %arg7: memref<1x1x64xf32, #tpu.memory_space<vmem>>, %arg8: memref<1x32x32xbf16, #tpu.memory_space<vmem>>, %arg9: memref<1x1x32xf32, #tpu.memory_space<vmem>>, %arg10: memref<1x8x4x32xbf16, #tpu.memory_space<vmem>>, %arg11: memref<1x1x32xf32, #tpu.memory_space<vmem>>, %arg12: memref<1x32x32xbf16, #tpu.memory_space<vmem>>, %arg13: memref<1x1x32xf32, #tpu.memory_space<vmem>>, %arg14: memref<1x32x32xbf16, #tpu.memory_space<vmem>>, %arg15: memref<1x1x32xf32, #tpu.memory_space<vmem>>, %arg16: memref<1x32x32xbf16, #tpu.memory_space<vmem>>, %arg17: memref<1x1x32xf32, #tpu.memory_space<vmem>>, %arg18: memref<1x8x4x32xbf16, #tpu.memory_space<vmem>>, %arg19: memref<1x1x32xf32, #tpu.memory_space<vmem>>, %arg20: memref<1x32x64xbf16, #tpu.memory_space<vmem>>, %arg21: memref<1x1x64xf32, #tpu.memory_space<vmem>>, %arg22: memref<1x64x32xbf16, #tpu.memory_space<vmem>>, %arg23: memref<1x1x32xf32, #tpu.memory_space<vmem>>, %arg24: memref<1x1x32xf32, #tpu.memory_space<vmem>>, %arg25: memref<1x1x32xf32, #tpu.memory_space<vmem>>, %arg26: memref<1x1x32xf32, #tpu.memory_space<vmem>>, %arg27: memref<1x1x32xf32, #tpu.memory_space<vmem>>, %arg28: memref<1x1x32xf32, #tpu.memory_space<vmem>>, %arg29: memref<1x1x32xf32, #tpu.memory_space<vmem>>, %arg30: memref<1x32xf32, #tpu.memory_space<vmem>>, %arg31: memref<1x32xf32, #tpu.memory_space<vmem>>, %arg32: memref<16x32xf32, #tpu.memory_space<vmem>>, %arg33: memref<16x32xf32, #tpu.memory_space<vmem>>) attributes {dimension_semantics = [#tpu.dimension_semantics<parallel>, #tpu.dimension_semantics<arbitrary>], iteration_bounds = array<i64: 1, 2>, scalar_prefetch = 0 : i64, scratch_operands = 1 : i64, tpu.core_type = #tpu.core_type<tc>, window_params = [{transform_indices = @transform_0, window_bounds = array<i64: 16, 32>}, {transform_indices = @transform_1, window_bounds = array<i64: 16, 32>}, {transform_indices = @transform_2, window_bounds = array<i64: 32, 32>}, {transform_indices = @transform_3, window_bounds = array<i64: 32, 32>}, {transform_indices = @transform_4, window_bounds = array<i64: 1, 32, 64>}, {transform_indices = @transform_5, window_bounds = array<i64: 1, 1, 64>}, {transform_indices = @transform_6, window_bounds = array<i64: 1, 32, 32>}, {transform_indices = @transform_7, window_bounds = array<i64: 1, 1, 32>}, {transform_indices = @transform_8, window_bounds = array<i64: 1, 8, 4, 32>}, {transform_indices = @transform_9, window_bounds = array<i64: 1, 1, 32>}, {transform_indices = @transform_10, window_bounds = array<i64: 1, 32, 32>}, {transform_indices = @transform_11, window_bounds = array<i64: 1, 1, 32>}, {transform_indices = @transform_12, window_bounds = array<i64: 1, 32, 32>}, {transform_indices = @transform_13, window_bounds = array<i64: 1, 1, 32>}, {transform_indices = @transform_14, window_bounds = array<i64: 1, 32, 32>}, {transform_indices = @transform_15, window_bounds = array<i64: 1, 1, 32>}, {transform_indices = @transform_16, window_bounds = array<i64: 1, 8, 4, 32>}, {transform_indices = @transform_17, window_bounds = array<i64: 1, 1, 32>}, {transform_indices = @transform_18, window_bounds = array<i64: 1, 32, 64>}, {transform_indices = @transform_19, window_bounds = array<i64: 1, 1, 64>}, {transform_indices = @transform_20, window_bounds = array<i64: 1, 64, 32>}, {transform_indices = @transform_21, window_bounds = array<i64: 1, 1, 32>}, {transform_indices = @transform_22, window_bounds = array<i64: 1, 1, 32>}, {transform_indices = @transform_23, window_bounds = array<i64: 1, 1, 32>}, {transform_indices = @transform_24, window_bounds = array<i64: 1, 1, 32>}, {transform_indices = @transform_25, window_bounds = array<i64: 1, 1, 32>}, {transform_indices = @transform_26, window_bounds = array<i64: 1, 1, 32>}, {transform_indices = @transform_27, window_bounds = array<i64: 1, 1, 32>}, {pipeline_mode = #tpu.pipeline_mode<synchronous>, transform_indices = @transform_28, window_bounds = array<i64: 1, 32>}, {pipeline_mode = #tpu.pipeline_mode<synchronous>, transform_indices = @transform_29, window_bounds = array<i64: 1, 32>}, {transform_indices = @transform_30, window_bounds = array<i64: 16, 32>}]} {
    %c0_i32 = arith.constant 0 : i32
    %0 = arith.cmpi eq, %arg1, %c0_i32 : i32
    %1 = arith.extui %0 : i1 to i32
    %c0_i32_0 = arith.constant 0 : i32
    %2 = arith.cmpi ne, %1, %c0_i32_0 : i32
    scf.if %2 {
      %c0_121 = arith.constant 0 : index
      %c0_122 = arith.constant 0 : index
      %268 = vector.load %arg2[%c0_121, %c0_122] : memref<16x32xf32, #tpu.memory_space<vmem>>, vector<16x32xf32>
      %c0_123 = arith.constant 0 : index
      %c0_124 = arith.constant 0 : index
      %269 = vector.load %arg33[%c0_123, %c0_124] : memref<16x32xf32, #tpu.memory_space<vmem>>, vector<16x32xf32>
      tpu.vector_store %arg33[%c0_123, %c0_124], %268 {strides = array<i32>} : memref<16x32xf32, #tpu.memory_space<vmem>>, vector<16x32xf32>,
    } else {
    }
    %c0 = arith.constant 0 : index
    %c0_1 = arith.constant 0 : index
    %3 = vector.load %arg33[%c0, %c0_1] : memref<16x32xf32, #tpu.memory_space<vmem>>, vector<16x32xf32>
    %c0_2 = arith.constant 0 : index
    %c0_3 = arith.constant 0 : index
    %4 = vector.load %arg3[%c0_2, %c0_3] : memref<16x32xf32, #tpu.memory_space<vmem>>, vector<16x32xf32>
    %5 = arith.addf %3, %4 : vector<16x32xf32>
    %6 = arith.truncf %5 : vector<16x32xf32> to vector<16x32xbf16>
    %c0_4 = arith.constant 0 : index
    %c0_5 = arith.constant 0 : index
    %c0_6 = arith.constant 0 : index
    %7 = vector.load %arg6[%c0_4, %c0_5, %c0_6] : memref<1x32x64xbf16, #tpu.memory_space<vmem>>, vector<1x32x64xbf16>
    %8 = vector.shape_cast %7 : vector<1x32x64xbf16> to vector<32x64xbf16>
    %cst = arith.constant dense<0.000000e+00> : vector<16x64xf32>
    %9 = tpu.matmul %6, %8, %cst {dimension_numbers = #tpu.dot_dimension_numbers<[1], [0], [0], [1], [0, 0, 1, 1], [], []>} : vector<16x32xbf16>, vector<32x64xbf16>, vector<16x64xf32> -> vector<16x64xf32>
    %c0_7 = arith.constant 0 : index
    %c0_8 = arith.constant 0 : index
    %c0_9 = arith.constant 0 : index
    %10 = vector.load %arg7[%c0_7, %c0_8, %c0_9] : memref<1x1x64xf32, #tpu.memory_space<vmem>>, vector<1x1x64xf32>
    %11 = vector.shape_cast %10 : vector<1x1x64xf32> to vector<1x64xf32>
    %12 = vector.broadcast %11 : vector<1x64xf32> to vector<16x64xf32>
    %13 = arith.addf %9, %12 : vector<16x64xf32>
    %14 = arith.truncf %3 : vector<16x32xf32> to vector<16x32xbf16>
    %c0_10 = arith.constant 0 : index
    %c0_11 = arith.constant 0 : index
    %c0_12 = arith.constant 0 : index
    %15 = vector.load %arg8[%c0_10, %c0_11, %c0_12] : memref<1x32x32xbf16, #tpu.memory_space<vmem>>, vector<1x32x32xbf16>
    %16 = vector.shape_cast %15 : vector<1x32x32xbf16> to vector<32x32xbf16>
    %cst_13 = arith.constant dense<0.000000e+00> : vector<16x32xf32>
    %17 = tpu.matmul %14, %16, %cst_13 {dimension_numbers = #tpu.dot_dimension_numbers<[1], [0], [0], [1], [0, 0, 1, 1], [], []>} : vector<16x32xbf16>, vector<32x32xbf16>, vector<16x32xf32> -> vector<16x32xf32>
    %c0_14 = arith.constant 0 : index
    %c0_15 = arith.constant 0 : index
    %c0_16 = arith.constant 0 : index
    %18 = vector.load %arg9[%c0_14, %c0_15, %c0_16] : memref<1x1x32xf32, #tpu.memory_space<vmem>>, vector<1x1x32xf32>
    %19 = vector.shape_cast %18 : vector<1x1x32xf32> to vector<1x32xf32>
    %20 = vector.broadcast %19 : vector<1x32xf32> to vector<16x32xf32>
    %21 = arith.addf %17, %20 : vector<16x32xf32>
    %22 = vector.extract_strided_slice %13 {offsets = [0, 0], sizes = [16, 32], strides = [1, 1]} : vector<16x64xf32> to vector<16x32xf32>
    %23 = vector.extract_strided_slice %13 {offsets = [0, 32], sizes = [16, 32], strides = [1, 1]} : vector<16x64xf32> to vector<16x32xf32>
    %c0_17 = arith.constant 0 : index
    %c0_18 = arith.constant 0 : index
    %c0_19 = arith.constant 0 : index
    %c0_20 = arith.constant 0 : index
    %24 = vector.load %arg10[%c0_17, %c0_18, %c0_19, %c0_20] : memref<1x8x4x32xbf16, #tpu.memory_space<vmem>>, vector<1x8x4x32xbf16>
    %25 = vector.shape_cast %24 : vector<1x8x4x32xbf16> to vector<8x4x32xbf16>
    %c0_21 = arith.constant 0 : index
    %c0_22 = arith.constant 0 : index
    %c0_23 = arith.constant 0 : index
    %26 = vector.load %arg11[%c0_21, %c0_22, %c0_23] : memref<1x1x32xf32, #tpu.memory_space<vmem>>, vector<1x1x32xf32>
    %27 = vector.shape_cast %26 : vector<1x1x32xf32> to vector<1x32xf32>
    %28 = vector.shape_cast %22 : vector<16x32xf32> to vector<2x8x32xf32>
    %29 = arith.truncf %28 : vector<2x8x32xf32> to vector<2x8x32xbf16>
    %30 = vector.extract_strided_slice %29 {offsets = [0, 0, 0], sizes = [2, 8, 4], strides = [1, 1, 1]} : vector<2x8x32xbf16> to vector<2x8x4xbf16>
    %31 = vector.extract_strided_slice %29 {offsets = [0, 0, 4], sizes = [2, 8, 4], strides = [1, 1, 1]} : vector<2x8x32xbf16> to vector<2x8x4xbf16>
    %32 = vector.extract_strided_slice %29 {offsets = [0, 0, 8], sizes = [2, 8, 4], strides = [1, 1, 1]} : vector<2x8x32xbf16> to vector<2x8x4xbf16>
    %33 = vector.extract_strided_slice %29 {offsets = [0, 0, 12], sizes = [2, 8, 4], strides = [1, 1, 1]} : vector<2x8x32xbf16> to vector<2x8x4xbf16>
    %34 = vector.extract_strided_slice %29 {offsets = [0, 0, 16], sizes = [2, 8, 4], strides = [1, 1, 1]} : vector<2x8x32xbf16> to vector<2x8x4xbf16>
    %35 = vector.extract_strided_slice %29 {offsets = [0, 0, 20], sizes = [2, 8, 4], strides = [1, 1, 1]} : vector<2x8x32xbf16> to vector<2x8x4xbf16>
    %36 = vector.extract_strided_slice %29 {offsets = [0, 0, 24], sizes = [2, 8, 4], strides = [1, 1, 1]} : vector<2x8x32xbf16> to vector<2x8x4xbf16>
    %37 = vector.extract_strided_slice %29 {offsets = [0, 0, 28], sizes = [2, 8, 4], strides = [1, 1, 1]} : vector<2x8x32xbf16> to vector<2x8x4xbf16>
    %38 = tpu.concatenate %30, %31, %32, %33, %34, %35, %36, %37 in 0 : vector<2x8x4xbf16>, vector<2x8x4xbf16>, vector<2x8x4xbf16>, vector<2x8x4xbf16>, vector<2x8x4xbf16>, vector<2x8x4xbf16>, vector<2x8x4xbf16>, vector<2x8x4xbf16> -> vector<16x8x4xbf16>
    %39 = vector.shape_cast %23 : vector<16x32xf32> to vector<2x8x32xf32>
    %40 = arith.truncf %39 : vector<2x8x32xf32> to vector<2x8x32xbf16>
    %41 = vector.extract_strided_slice %40 {offsets = [0, 0, 0], sizes = [2, 8, 4], strides = [1, 1, 1]} : vector<2x8x32xbf16> to vector<2x8x4xbf16>
    %42 = vector.extract_strided_slice %40 {offsets = [0, 0, 4], sizes = [2, 8, 4], strides = [1, 1, 1]} : vector<2x8x32xbf16> to vector<2x8x4xbf16>
    %43 = vector.extract_strided_slice %40 {offsets = [0, 0, 8], sizes = [2, 8, 4], strides = [1, 1, 1]} : vector<2x8x32xbf16> to vector<2x8x4xbf16>
    %44 = vector.extract_strided_slice %40 {offsets = [0, 0, 12], sizes = [2, 8, 4], strides = [1, 1, 1]} : vector<2x8x32xbf16> to vector<2x8x4xbf16>
    %45 = vector.extract_strided_slice %40 {offsets = [0, 0, 16], sizes = [2, 8, 4], strides = [1, 1, 1]} : vector<2x8x32xbf16> to vector<2x8x4xbf16>
    %46 = vector.extract_strided_slice %40 {offsets = [0, 0, 20], sizes = [2, 8, 4], strides = [1, 1, 1]} : vector<2x8x32xbf16> to vector<2x8x4xbf16>
    %47 = vector.extract_strided_slice %40 {offsets = [0, 0, 24], sizes = [2, 8, 4], strides = [1, 1, 1]} : vector<2x8x32xbf16> to vector<2x8x4xbf16>
    %48 = vector.extract_strided_slice %40 {offsets = [0, 0, 28], sizes = [2, 8, 4], strides = [1, 1, 1]} : vector<2x8x32xbf16> to vector<2x8x4xbf16>
    %49 = tpu.concatenate %41, %42, %43, %44, %45, %46, %47, %48 in 0 : vector<2x8x4xbf16>, vector<2x8x4xbf16>, vector<2x8x4xbf16>, vector<2x8x4xbf16>, vector<2x8x4xbf16>, vector<2x8x4xbf16>, vector<2x8x4xbf16>, vector<2x8x4xbf16> -> vector<16x8x4xbf16>
    %50 = vector.shape_cast %21 : vector<16x32xf32> to vector<2x8x32xf32>
    %51 = arith.truncf %50 : vector<2x8x32xf32> to vector<2x8x32xbf16>
    %52 = vector.extract_strided_slice %51 {offsets = [0, 0, 0], sizes = [2, 8, 4], strides = [1, 1, 1]} : vector<2x8x32xbf16> to vector<2x8x4xbf16>
    %53 = vector.extract_strided_slice %51 {offsets = [0, 0, 4], sizes = [2, 8, 4], strides = [1, 1, 1]} : vector<2x8x32xbf16> to vector<2x8x4xbf16>
    %54 = vector.extract_strided_slice %51 {offsets = [0, 0, 8], sizes = [2, 8, 4], strides = [1, 1, 1]} : vector<2x8x32xbf16> to vector<2x8x4xbf16>
    %55 = vector.extract_strided_slice %51 {offsets = [0, 0, 12], sizes = [2, 8, 4], strides = [1, 1, 1]} : vector<2x8x32xbf16> to vector<2x8x4xbf16>
    %56 = vector.extract_strided_slice %51 {offsets = [0, 0, 16], sizes = [2, 8, 4], strides = [1, 1, 1]} : vector<2x8x32xbf16> to vector<2x8x4xbf16>
    %57 = vector.extract_strided_slice %51 {offsets = [0, 0, 20], sizes = [2, 8, 4], strides = [1, 1, 1]} : vector<2x8x32xbf16> to vector<2x8x4xbf16>
    %58 = vector.extract_strided_slice %51 {offsets = [0, 0, 24], sizes = [2, 8, 4], strides = [1, 1, 1]} : vector<2x8x32xbf16> to vector<2x8x4xbf16>
    %59 = vector.extract_strided_slice %51 {offsets = [0, 0, 28], sizes = [2, 8, 4], strides = [1, 1, 1]} : vector<2x8x32xbf16> to vector<2x8x4xbf16>
    %60 = tpu.concatenate %52, %53, %54, %55, %56, %57, %58, %59 in 0 : vector<2x8x4xbf16>, vector<2x8x4xbf16>, vector<2x8x4xbf16>, vector<2x8x4xbf16>, vector<2x8x4xbf16>, vector<2x8x4xbf16>, vector<2x8x4xbf16>, vector<2x8x4xbf16> -> vector<16x8x4xbf16>
    %cst_24 = arith.constant dense<0.000000e+00> : vector<16x8x8xf32>
    %61 = tpu.matmul %38, %49, %cst_24 {dimension_numbers = #tpu.dot_dimension_numbers<[2], [2], [1], [1], [0, 0, 0, 1, 1, 1], [0], [0]>} : vector<16x8x4xbf16>, vector<16x8x4xbf16>, vector<16x8x8xf32> -> vector<16x8x8xf32>
    %cst_25 = arith.constant 5.000000e-01 : f32
    %62 = vector.broadcast %cst_25 : f32 to vector<16x8x8xf32>
    %63 = arith.mulf %61, %62 : vector<16x8x8xf32>
    %cst_26 = arith.constant dense<0xFF800000> : vector<16x8xf32>
    %64 = vector.multi_reduction <maximumf>, %63, %cst_26 [2] : vector<16x8x8xf32> to vector<16x8xf32>
    %65 = vector.shape_cast %64 : vector<16x8xf32> to vector<16x8x1xf32>
    %66 = vector.broadcast %65 : vector<16x8x1xf32> to vector<16x8x8xf32>
    %67 = arith.subf %63, %66 : vector<16x8x8xf32>
    %68 = math.exp %67 : vector<16x8x8xf32>
    %cst_27 = arith.constant dense<0.000000e+00> : vector<16x8xf32>
    %69 = vector.multi_reduction <add>, %68, %cst_27 [2] : vector<16x8x8xf32> to vector<16x8xf32>
    %70 = vector.shape_cast %69 : vector<16x8xf32> to vector<16x8x1xf32>
    %71 = tpu.reciprocal %70 {approx = true} : vector<16x8x1xf32> -> vector<16x8x1xf32>
    %72 = vector.broadcast %71 : vector<16x8x1xf32> to vector<16x8x8xf32>
    %73 = arith.mulf %68, %72 : vector<16x8x8xf32>
    %74 = arith.truncf %73 : vector<16x8x8xf32> to vector<16x8x8xbf16>
    %cst_28 = arith.constant dense<0.000000e+00> : vector<16x8x4xf32>
    %75 = tpu.matmul %74, %60, %cst_28 {dimension_numbers = #tpu.dot_dimension_numbers<[2], [1], [1], [2], [0, 0, 0, 1, 1, 2], [0], [0]>} : vector<16x8x8xbf16>, vector<16x8x4xbf16>, vector<16x8x4xf32> -> vector<16x8x4xf32>
    %76 = vector.shape_cast %75 : vector<16x8x4xf32> to vector<8x16x4xf32>
    %77 = arith.truncf %76 : vector<8x16x4xf32> to vector<8x16x4xbf16>
    %cst_29 = arith.constant dense<0.000000e+00> : vector<8x16x32xf32>
    %78 = tpu.matmul %77, %25, %cst_29 {dimension_numbers = #tpu.dot_dimension_numbers<[2], [1], [1], [2], [0, 0, 0, 1, 1, 2], [0], [0]>} : vector<8x16x4xbf16>, vector<8x4x32xbf16>, vector<8x16x32xf32> -> vector<8x16x32xf32>
    %cst_30 = arith.constant dense<0.000000e+00> : vector<16x32xf32>
    %79 = vector.multi_reduction <add>, %78, %cst_30 [0] : vector<8x16x32xf32> to vector<16x32xf32>
    %80 = vector.broadcast %27 : vector<1x32xf32> to vector<16x32xf32>
    %81 = arith.addf %79, %80 : vector<16x32xf32>
    %82 = arith.addf %3, %81 : vector<16x32xf32>
    %c0_31 = arith.constant 0 : index
    %c0_32 = arith.constant 0 : index
    %c0_33 = arith.constant 0 : index
    %83 = vector.load %arg24[%c0_31, %c0_32, %c0_33] : memref<1x1x32xf32, #tpu.memory_space<vmem>>, vector<1x1x32xf32>
    %84 = vector.shape_cast %83 : vector<1x1x32xf32> to vector<1x32xf32>
    %c0_34 = arith.constant 0 : index
    %c0_35 = arith.constant 0 : index
    %c0_36 = arith.constant 0 : index
    %85 = vector.load %arg25[%c0_34, %c0_35, %c0_36] : memref<1x1x32xf32, #tpu.memory_space<vmem>>, vector<1x1x32xf32>
    %86 = vector.shape_cast %85 : vector<1x1x32xf32> to vector<1x32xf32>
    %cst_37 = arith.constant dense<0.000000e+00> : vector<16xf32>
    %87 = vector.multi_reduction <add>, %82, %cst_37 [1] : vector<16x32xf32> to vector<16xf32>
    %88 = vector.shape_cast %87 : vector<16xf32> to vector<16x1xf32>
    %cst_38 = arith.constant 3.200000e+01 : f32
    %89 = vector.broadcast %cst_38 : f32 to vector<16x1xf32>
    %90 = arith.divf %88, %89 : vector<16x1xf32>
    %91 = vector.broadcast %90 : vector<16x1xf32> to vector<16x32xf32>
    %92 = arith.subf %82, %91 : vector<16x32xf32>
    %93 = arith.mulf %92, %92 : vector<16x32xf32>
    %cst_39 = arith.constant dense<0.000000e+00> : vector<16xf32>
    %94 = vector.multi_reduction <add>, %93, %cst_39 [1] : vector<16x32xf32> to vector<16xf32>
    %95 = vector.shape_cast %94 : vector<16xf32> to vector<16x1xf32>
    %cst_40 = arith.constant 3.200000e+01 : f32
    %96 = vector.broadcast %cst_40 : f32 to vector<16x1xf32>
    %97 = arith.divf %95, %96 : vector<16x1xf32>
    %98 = vector.broadcast %90 : vector<16x1xf32> to vector<16x32xf32>
    %99 = arith.subf %82, %98 : vector<16x32xf32>
    %cst_41 = arith.constant 9.99999974E-6 : f32
    %100 = vector.broadcast %cst_41 : f32 to vector<16x1xf32>
    %101 = arith.addf %97, %100 : vector<16x1xf32>
    %102 = math.rsqrt %101 : vector<16x1xf32>
    %103 = vector.broadcast %102 : vector<16x1xf32> to vector<16x32xf32>
    %104 = arith.mulf %99, %103 : vector<16x32xf32>
    %105 = vector.broadcast %84 : vector<1x32xf32> to vector<16x32xf32>
    %106 = arith.mulf %104, %105 : vector<16x32xf32>
    %107 = vector.broadcast %86 : vector<1x32xf32> to vector<16x32xf32>
    %108 = arith.addf %106, %107 : vector<16x32xf32>
    %109 = arith.addf %108, %4 : vector<16x32xf32>
    %110 = arith.truncf %109 : vector<16x32xf32> to vector<16x32xbf16>
    %c0_42 = arith.constant 0 : index
    %c0_43 = arith.constant 0 : index
    %c0_44 = arith.constant 0 : index
    %111 = vector.load %arg12[%c0_42, %c0_43, %c0_44] : memref<1x32x32xbf16, #tpu.memory_space<vmem>>, vector<1x32x32xbf16>
    %112 = vector.shape_cast %111 : vector<1x32x32xbf16> to vector<32x32xbf16>
    %cst_45 = arith.constant dense<0.000000e+00> : vector<16x32xf32>
    %113 = tpu.matmul %110, %112, %cst_45 {dimension_numbers = #tpu.dot_dimension_numbers<[1], [0], [0], [1], [0, 0, 1, 1], [], []>} : vector<16x32xbf16>, vector<32x32xbf16>, vector<16x32xf32> -> vector<16x32xf32>
    %c0_46 = arith.constant 0 : index
    %c0_47 = arith.constant 0 : index
    %c0_48 = arith.constant 0 : index
    %114 = vector.load %arg13[%c0_46, %c0_47, %c0_48] : memref<1x1x32xf32, #tpu.memory_space<vmem>>, vector<1x1x32xf32>
    %115 = vector.shape_cast %114 : vector<1x1x32xf32> to vector<1x32xf32>
    %116 = vector.broadcast %115 : vector<1x32xf32> to vector<16x32xf32>
    %117 = arith.addf %113, %116 : vector<16x32xf32>
    %c0_49 = arith.constant 0 : index
    %c0_50 = arith.constant 0 : index
    %118 = vector.load %arg5[%c0_49, %c0_50] : memref<32x32xbf16, #tpu.memory_space<vmem>>, vector<32x32xbf16>
    %c0_51 = arith.constant 0 : index
    %c0_52 = arith.constant 0 : index
    %c0_53 = arith.constant 0 : index
    %119 = vector.load %arg14[%c0_51, %c0_52, %c0_53] : memref<1x32x32xbf16, #tpu.memory_space<vmem>>, vector<1x32x32xbf16>
    %120 = vector.shape_cast %119 : vector<1x32x32xbf16> to vector<32x32xbf16>
    %cst_54 = arith.constant dense<0.000000e+00> : vector<32x32xf32>
    %121 = tpu.matmul %118, %120, %cst_54 {dimension_numbers = #tpu.dot_dimension_numbers<[1], [0], [0], [1], [0, 0, 1, 1], [], []>} : vector<32x32xbf16>, vector<32x32xbf16>, vector<32x32xf32> -> vector<32x32xf32>
    %c0_55 = arith.constant 0 : index
    %c0_56 = arith.constant 0 : index
    %c0_57 = arith.constant 0 : index
    %122 = vector.load %arg15[%c0_55, %c0_56, %c0_57] : memref<1x1x32xf32, #tpu.memory_space<vmem>>, vector<1x1x32xf32>
    %123 = vector.shape_cast %122 : vector<1x1x32xf32> to vector<1x32xf32>
    %124 = vector.broadcast %123 : vector<1x32xf32> to vector<32x32xf32>
    %125 = arith.addf %121, %124 : vector<32x32xf32>
    %c0_58 = arith.constant 0 : index
    %c0_59 = arith.constant 0 : index
    %126 = vector.load %arg4[%c0_58, %c0_59] : memref<32x32xbf16, #tpu.memory_space<vmem>>, vector<32x32xbf16>
    %c0_60 = arith.constant 0 : index
    %c0_61 = arith.constant 0 : index
    %c0_62 = arith.constant 0 : index
    %127 = vector.load %arg16[%c0_60, %c0_61, %c0_62] : memref<1x32x32xbf16, #tpu.memory_space<vmem>>, vector<1x32x32xbf16>
    %128 = vector.shape_cast %127 : vector<1x32x32xbf16> to vector<32x32xbf16>
    %cst_63 = arith.constant dense<0.000000e+00> : vector<32x32xf32>
    %129 = tpu.matmul %126, %128, %cst_63 {dimension_numbers = #tpu.dot_dimension_numbers<[1], [0], [0], [1], [0, 0, 1, 1], [], []>} : vector<32x32xbf16>, vector<32x32xbf16>, vector<32x32xf32> -> vector<32x32xf32>
    %c0_64 = arith.constant 0 : index
    %c0_65 = arith.constant 0 : index
    %c0_66 = arith.constant 0 : index
    %130 = vector.load %arg17[%c0_64, %c0_65, %c0_66] : memref<1x1x32xf32, #tpu.memory_space<vmem>>, vector<1x1x32xf32>
    %131 = vector.shape_cast %130 : vector<1x1x32xf32> to vector<1x32xf32>
    %132 = vector.broadcast %131 : vector<1x32xf32> to vector<32x32xf32>
    %133 = arith.addf %129, %132 : vector<32x32xf32>
    %c0_67 = arith.constant 0 : index
    %c0_68 = arith.constant 0 : index
    %c0_69 = arith.constant 0 : index
    %c0_70 = arith.constant 0 : index
    %134 = vector.load %arg18[%c0_67, %c0_68, %c0_69, %c0_70] : memref<1x8x4x32xbf16, #tpu.memory_space<vmem>>, vector<1x8x4x32xbf16>
    %135 = vector.shape_cast %134 : vector<1x8x4x32xbf16> to vector<8x4x32xbf16>
    %c0_71 = arith.constant 0 : index
    %c0_72 = arith.constant 0 : index
    %c0_73 = arith.constant 0 : index
    %136 = vector.load %arg19[%c0_71, %c0_72, %c0_73] : memref<1x1x32xf32, #tpu.memory_space<vmem>>, vector<1x1x32xf32>
    %137 = vector.shape_cast %136 : vector<1x1x32xf32> to vector<1x32xf32>
    %138 = vector.shape_cast %117 : vector<16x32xf32> to vector<2x8x32xf32>
    %139 = arith.truncf %138 : vector<2x8x32xf32> to vector<2x8x32xbf16>
    %140 = vector.extract_strided_slice %139 {offsets = [0, 0, 0], sizes = [2, 8, 4], strides = [1, 1, 1]} : vector<2x8x32xbf16> to vector<2x8x4xbf16>
    %141 = vector.extract_strided_slice %139 {offsets = [0, 0, 4], sizes = [2, 8, 4], strides = [1, 1, 1]} : vector<2x8x32xbf16> to vector<2x8x4xbf16>
    %142 = vector.extract_strided_slice %139 {offsets = [0, 0, 8], sizes = [2, 8, 4], strides = [1, 1, 1]} : vector<2x8x32xbf16> to vector<2x8x4xbf16>
    %143 = vector.extract_strided_slice %139 {offsets = [0, 0, 12], sizes = [2, 8, 4], strides = [1, 1, 1]} : vector<2x8x32xbf16> to vector<2x8x4xbf16>
    %144 = vector.extract_strided_slice %139 {offsets = [0, 0, 16], sizes = [2, 8, 4], strides = [1, 1, 1]} : vector<2x8x32xbf16> to vector<2x8x4xbf16>
    %145 = vector.extract_strided_slice %139 {offsets = [0, 0, 20], sizes = [2, 8, 4], strides = [1, 1, 1]} : vector<2x8x32xbf16> to vector<2x8x4xbf16>
    %146 = vector.extract_strided_slice %139 {offsets = [0, 0, 24], sizes = [2, 8, 4], strides = [1, 1, 1]} : vector<2x8x32xbf16> to vector<2x8x4xbf16>
    %147 = vector.extract_strided_slice %139 {offsets = [0, 0, 28], sizes = [2, 8, 4], strides = [1, 1, 1]} : vector<2x8x32xbf16> to vector<2x8x4xbf16>
    %148 = tpu.concatenate %140, %141, %142, %143, %144, %145, %146, %147 in 0 : vector<2x8x4xbf16>, vector<2x8x4xbf16>, vector<2x8x4xbf16>, vector<2x8x4xbf16>, vector<2x8x4xbf16>, vector<2x8x4xbf16>, vector<2x8x4xbf16>, vector<2x8x4xbf16> -> vector<16x8x4xbf16>
    %149 = vector.shape_cast %125 : vector<32x32xf32> to vector<2x16x32xf32>
    %150 = arith.truncf %149 : vector<2x16x32xf32> to vector<2x16x32xbf16>
    %151 = vector.extract_strided_slice %150 {offsets = [0, 0, 0], sizes = [2, 16, 4], strides = [1, 1, 1]} : vector<2x16x32xbf16> to vector<2x16x4xbf16>
    %152 = vector.extract_strided_slice %150 {offsets = [0, 0, 4], sizes = [2, 16, 4], strides = [1, 1, 1]} : vector<2x16x32xbf16> to vector<2x16x4xbf16>
    %153 = vector.extract_strided_slice %150 {offsets = [0, 0, 8], sizes = [2, 16, 4], strides = [1, 1, 1]} : vector<2x16x32xbf16> to vector<2x16x4xbf16>
    %154 = vector.extract_strided_slice %150 {offsets = [0, 0, 12], sizes = [2, 16, 4], strides = [1, 1, 1]} : vector<2x16x32xbf16> to vector<2x16x4xbf16>
    %155 = vector.extract_strided_slice %150 {offsets = [0, 0, 16], sizes = [2, 16, 4], strides = [1, 1, 1]} : vector<2x16x32xbf16> to vector<2x16x4xbf16>
    %156 = vector.extract_strided_slice %150 {offsets = [0, 0, 20], sizes = [2, 16, 4], strides = [1, 1, 1]} : vector<2x16x32xbf16> to vector<2x16x4xbf16>
    %157 = vector.extract_strided_slice %150 {offsets = [0, 0, 24], sizes = [2, 16, 4], strides = [1, 1, 1]} : vector<2x16x32xbf16> to vector<2x16x4xbf16>
    %158 = vector.extract_strided_slice %150 {offsets = [0, 0, 28], sizes = [2, 16, 4], strides = [1, 1, 1]} : vector<2x16x32xbf16> to vector<2x16x4xbf16>
    %159 = tpu.concatenate %151, %152, %153, %154, %155, %156, %157, %158 in 0 : vector<2x16x4xbf16>, vector<2x16x4xbf16>, vector<2x16x4xbf16>, vector<2x16x4xbf16>, vector<2x16x4xbf16>, vector<2x16x4xbf16>, vector<2x16x4xbf16>, vector<2x16x4xbf16> -> vector<16x16x4xbf16>
    %160 = vector.shape_cast %133 : vector<32x32xf32> to vector<2x16x32xf32>
    %161 = arith.truncf %160 : vector<2x16x32xf32> to vector<2x16x32xbf16>
    %162 = vector.extract_strided_slice %161 {offsets = [0, 0, 0], sizes = [2, 16, 4], strides = [1, 1, 1]} : vector<2x16x32xbf16> to vector<2x16x4xbf16>
    %163 = vector.extract_strided_slice %161 {offsets = [0, 0, 4], sizes = [2, 16, 4], strides = [1, 1, 1]} : vector<2x16x32xbf16> to vector<2x16x4xbf16>
    %164 = vector.extract_strided_slice %161 {offsets = [0, 0, 8], sizes = [2, 16, 4], strides = [1, 1, 1]} : vector<2x16x32xbf16> to vector<2x16x4xbf16>
    %165 = vector.extract_strided_slice %161 {offsets = [0, 0, 12], sizes = [2, 16, 4], strides = [1, 1, 1]} : vector<2x16x32xbf16> to vector<2x16x4xbf16>
    %166 = vector.extract_strided_slice %161 {offsets = [0, 0, 16], sizes = [2, 16, 4], strides = [1, 1, 1]} : vector<2x16x32xbf16> to vector<2x16x4xbf16>
    %167 = vector.extract_strided_slice %161 {offsets = [0, 0, 20], sizes = [2, 16, 4], strides = [1, 1, 1]} : vector<2x16x32xbf16> to vector<2x16x4xbf16>
    %168 = vector.extract_strided_slice %161 {offsets = [0, 0, 24], sizes = [2, 16, 4], strides = [1, 1, 1]} : vector<2x16x32xbf16> to vector<2x16x4xbf16>
    %169 = vector.extract_strided_slice %161 {offsets = [0, 0, 28], sizes = [2, 16, 4], strides = [1, 1, 1]} : vector<2x16x32xbf16> to vector<2x16x4xbf16>
    %170 = tpu.concatenate %162, %163, %164, %165, %166, %167, %168, %169 in 0 : vector<2x16x4xbf16>, vector<2x16x4xbf16>, vector<2x16x4xbf16>, vector<2x16x4xbf16>, vector<2x16x4xbf16>, vector<2x16x4xbf16>, vector<2x16x4xbf16>, vector<2x16x4xbf16> -> vector<16x16x4xbf16>
    %cst_74 = arith.constant dense<0.000000e+00> : vector<16x8x16xf32>
    %171 = tpu.matmul %148, %159, %cst_74 {dimension_numbers = #tpu.dot_dimension_numbers<[2], [2], [1], [1], [0, 0, 0, 1, 1, 1], [0], [0]>} : vector<16x8x4xbf16>, vector<16x16x4xbf16>, vector<16x8x16xf32> -> vector<16x8x16xf32>
    %cst_75 = arith.constant 5.000000e-01 : f32
    %172 = vector.broadcast %cst_75 : f32 to vector<16x8x16xf32>
    %173 = arith.mulf %171, %172 : vector<16x8x16xf32>
    %cst_76 = arith.constant dense<0xFF800000> : vector<16x8xf32>
    %174 = vector.multi_reduction <maximumf>, %173, %cst_76 [2] : vector<16x8x16xf32> to vector<16x8xf32>
    %175 = vector.shape_cast %174 : vector<16x8xf32> to vector<16x8x1xf32>
    %176 = vector.broadcast %175 : vector<16x8x1xf32> to vector<16x8x16xf32>
    %177 = arith.subf %173, %176 : vector<16x8x16xf32>
    %178 = math.exp %177 : vector<16x8x16xf32>
    %cst_77 = arith.constant dense<0.000000e+00> : vector<16x8xf32>
    %179 = vector.multi_reduction <add>, %178, %cst_77 [2] : vector<16x8x16xf32> to vector<16x8xf32>
    %180 = vector.shape_cast %179 : vector<16x8xf32> to vector<16x8x1xf32>
    %181 = tpu.reciprocal %180 {approx = true} : vector<16x8x1xf32> -> vector<16x8x1xf32>
    %182 = vector.broadcast %181 : vector<16x8x1xf32> to vector<16x8x16xf32>
    %183 = arith.mulf %178, %182 : vector<16x8x16xf32>
    %184 = arith.truncf %183 : vector<16x8x16xf32> to vector<16x8x16xbf16>
    %cst_78 = arith.constant dense<0.000000e+00> : vector<16x8x4xf32>
    %185 = tpu.matmul %184, %170, %cst_78 {dimension_numbers = #tpu.dot_dimension_numbers<[2], [1], [1], [2], [0, 0, 0, 1, 1, 2], [0], [0]>} : vector<16x8x16xbf16>, vector<16x16x4xbf16>, vector<16x8x4xf32> -> vector<16x8x4xf32>
    %186 = vector.shape_cast %185 : vector<16x8x4xf32> to vector<8x16x4xf32>
    %187 = arith.truncf %186 : vector<8x16x4xf32> to vector<8x16x4xbf16>
    %cst_79 = arith.constant dense<0.000000e+00> : vector<8x16x32xf32>
    %188 = tpu.matmul %187, %135, %cst_79 {dimension_numbers = #tpu.dot_dimension_numbers<[2], [1], [1], [2], [0, 0, 0, 1, 1, 2], [0], [0]>} : vector<8x16x4xbf16>, vector<8x4x32xbf16>, vector<8x16x32xf32> -> vector<8x16x32xf32>
    %cst_80 = arith.constant dense<0.000000e+00> : vector<16x32xf32>
    %189 = vector.multi_reduction <add>, %188, %cst_80 [0] : vector<8x16x32xf32> to vector<16x32xf32>
    %190 = vector.broadcast %137 : vector<1x32xf32> to vector<16x32xf32>
    %191 = arith.addf %189, %190 : vector<16x32xf32>
    %192 = arith.addf %108, %191 : vector<16x32xf32>
    %c0_81 = arith.constant 0 : index
    %c0_82 = arith.constant 0 : index
    %c0_83 = arith.constant 0 : index
    %193 = vector.load %arg26[%c0_81, %c0_82, %c0_83] : memref<1x1x32xf32, #tpu.memory_space<vmem>>, vector<1x1x32xf32>
    %194 = vector.shape_cast %193 : vector<1x1x32xf32> to vector<1x32xf32>
    %c0_84 = arith.constant 0 : index
    %c0_85 = arith.constant 0 : index
    %c0_86 = arith.constant 0 : index
    %195 = vector.load %arg27[%c0_84, %c0_85, %c0_86] : memref<1x1x32xf32, #tpu.memory_space<vmem>>, vector<1x1x32xf32>
    %196 = vector.shape_cast %195 : vector<1x1x32xf32> to vector<1x32xf32>
    %cst_87 = arith.constant dense<0.000000e+00> : vector<16xf32>
    %197 = vector.multi_reduction <add>, %192, %cst_87 [1] : vector<16x32xf32> to vector<16xf32>
    %198 = vector.shape_cast %197 : vector<16xf32> to vector<16x1xf32>
    %cst_88 = arith.constant 3.200000e+01 : f32
    %199 = vector.broadcast %cst_88 : f32 to vector<16x1xf32>
    %200 = arith.divf %198, %199 : vector<16x1xf32>
    %201 = vector.broadcast %200 : vector<16x1xf32> to vector<16x32xf32>
    %202 = arith.subf %192, %201 : vector<16x32xf32>
    %203 = arith.mulf %202, %202 : vector<16x32xf32>
    %cst_89 = arith.constant dense<0.000000e+00> : vector<16xf32>
    %204 = vector.multi_reduction <add>, %203, %cst_89 [1] : vector<16x32xf32> to vector<16xf32>
    %205 = vector.shape_cast %204 : vector<16xf32> to vector<16x1xf32>
    %cst_90 = arith.constant 3.200000e+01 : f32
    %206 = vector.broadcast %cst_90 : f32 to vector<16x1xf32>
    %207 = arith.divf %205, %206 : vector<16x1xf32>
    %208 = vector.broadcast %200 : vector<16x1xf32> to vector<16x32xf32>
    %209 = arith.subf %192, %208 : vector<16x32xf32>
    %cst_91 = arith.constant 9.99999974E-6 : f32
    %210 = vector.broadcast %cst_91 : f32 to vector<16x1xf32>
    %211 = arith.addf %207, %210 : vector<16x1xf32>
    %212 = math.rsqrt %211 : vector<16x1xf32>
    %213 = vector.broadcast %212 : vector<16x1xf32> to vector<16x32xf32>
    %214 = arith.mulf %209, %213 : vector<16x32xf32>
    %215 = vector.broadcast %194 : vector<1x32xf32> to vector<16x32xf32>
    %216 = arith.mulf %214, %215 : vector<16x32xf32>
    %217 = vector.broadcast %196 : vector<1x32xf32> to vector<16x32xf32>
    %218 = arith.addf %216, %217 : vector<16x32xf32>
    %219 = arith.truncf %218 : vector<16x32xf32> to vector<16x32xbf16>
    %c0_92 = arith.constant 0 : index
    %c0_93 = arith.constant 0 : index
    %c0_94 = arith.constant 0 : index
    %220 = vector.load %arg20[%c0_92, %c0_93, %c0_94] : memref<1x32x64xbf16, #tpu.memory_space<vmem>>, vector<1x32x64xbf16>
    %221 = vector.shape_cast %220 : vector<1x32x64xbf16> to vector<32x64xbf16>
    %cst_95 = arith.constant dense<0.000000e+00> : vector<16x64xf32>
    %222 = tpu.matmul %219, %221, %cst_95 {dimension_numbers = #tpu.dot_dimension_numbers<[1], [0], [0], [1], [0, 0, 1, 1], [], []>} : vector<16x32xbf16>, vector<32x64xbf16>, vector<16x64xf32> -> vector<16x64xf32>
    %c0_96 = arith.constant 0 : index
    %c0_97 = arith.constant 0 : index
    %c0_98 = arith.constant 0 : index
    %223 = vector.load %arg21[%c0_96, %c0_97, %c0_98] : memref<1x1x64xf32, #tpu.memory_space<vmem>>, vector<1x1x64xf32>
    %224 = vector.shape_cast %223 : vector<1x1x64xf32> to vector<1x64xf32>
    %225 = vector.broadcast %224 : vector<1x64xf32> to vector<16x64xf32>
    %226 = arith.addf %222, %225 : vector<16x64xf32>
    %cst_99 = arith.constant 0.000000e+00 : f32
    %227 = vector.broadcast %cst_99 : f32 to vector<16x64xf32>
    %228 = arith.maximumf %226, %227 : vector<16x64xf32>
    %229 = arith.truncf %228 : vector<16x64xf32> to vector<16x64xbf16>
    %c0_100 = arith.constant 0 : index
    %c0_101 = arith.constant 0 : index
    %c0_102 = arith.constant 0 : index
    %230 = vector.load %arg22[%c0_100, %c0_101, %c0_102] : memref<1x64x32xbf16, #tpu.memory_space<vmem>>, vector<1x64x32xbf16>
    %231 = vector.shape_cast %230 : vector<1x64x32xbf16> to vector<64x32xbf16>
    %cst_103 = arith.constant dense<0.000000e+00> : vector<16x32xf32>
    %232 = tpu.matmul %229, %231, %cst_103 {dimension_numbers = #tpu.dot_dimension_numbers<[1], [0], [0], [1], [0, 0, 1, 1], [], []>} : vector<16x64xbf16>, vector<64x32xbf16>, vector<16x32xf32> -> vector<16x32xf32>
    %c0_104 = arith.constant 0 : index
    %c0_105 = arith.constant 0 : index
    %c0_106 = arith.constant 0 : index
    %233 = vector.load %arg23[%c0_104, %c0_105, %c0_106] : memref<1x1x32xf32, #tpu.memory_space<vmem>>, vector<1x1x32xf32>
    %234 = vector.shape_cast %233 : vector<1x1x32xf32> to vector<1x32xf32>
    %235 = vector.broadcast %234 : vector<1x32xf32> to vector<16x32xf32>
    %236 = arith.addf %232, %235 : vector<16x32xf32>
    %237 = arith.addf %218, %236 : vector<16x32xf32>
    %c0_107 = arith.constant 0 : index
    %c0_108 = arith.constant 0 : index
    %c0_109 = arith.constant 0 : index
    %238 = vector.load %arg28[%c0_107, %c0_108, %c0_109] : memref<1x1x32xf32, #tpu.memory_space<vmem>>, vector<1x1x32xf32>
    %239 = vector.shape_cast %238 : vector<1x1x32xf32> to vector<1x32xf32>
    %c0_110 = arith.constant 0 : index
    %c0_111 = arith.constant 0 : index
    %c0_112 = arith.constant 0 : index
    %240 = vector.load %arg29[%c0_110, %c0_111, %c0_112] : memref<1x1x32xf32, #tpu.memory_space<vmem>>, vector<1x1x32xf32>
    %241 = vector.shape_cast %240 : vector<1x1x32xf32> to vector<1x32xf32>
    %cst_113 = arith.constant dense<0.000000e+00> : vector<16xf32>
    %242 = vector.multi_reduction <add>, %237, %cst_113 [1] : vector<16x32xf32> to vector<16xf32>
    %243 = vector.shape_cast %242 : vector<16xf32> to vector<16x1xf32>
    %cst_114 = arith.constant 3.200000e+01 : f32
    %244 = vector.broadcast %cst_114 : f32 to vector<16x1xf32>
    %245 = arith.divf %243, %244 : vector<16x1xf32>
    %246 = vector.broadcast %245 : vector<16x1xf32> to vector<16x32xf32>
    %247 = arith.subf %237, %246 : vector<16x32xf32>
    %248 = arith.mulf %247, %247 : vector<16x32xf32>
    %cst_115 = arith.constant dense<0.000000e+00> : vector<16xf32>
    %249 = vector.multi_reduction <add>, %248, %cst_115 [1] : vector<16x32xf32> to vector<16xf32>
    %250 = vector.shape_cast %249 : vector<16xf32> to vector<16x1xf32>
    %cst_116 = arith.constant 3.200000e+01 : f32
    %251 = vector.broadcast %cst_116 : f32 to vector<16x1xf32>
    %252 = arith.divf %250, %251 : vector<16x1xf32>
    %253 = vector.broadcast %245 : vector<16x1xf32> to vector<16x32xf32>
    %254 = arith.subf %237, %253 : vector<16x32xf32>
    %cst_117 = arith.constant 9.99999974E-6 : f32
    %255 = vector.broadcast %cst_117 : f32 to vector<16x1xf32>
    %256 = arith.addf %252, %255 : vector<16x1xf32>
    %257 = math.rsqrt %256 : vector<16x1xf32>
    %258 = vector.broadcast %257 : vector<16x1xf32> to vector<16x32xf32>
    %259 = arith.mulf %254, %258 : vector<16x32xf32>
    %260 = vector.broadcast %239 : vector<1x32xf32> to vector<16x32xf32>
    %261 = arith.mulf %259, %260 : vector<16x32xf32>
    %262 = vector.broadcast %241 : vector<1x32xf32> to vector<16x32xf32>
    %263 = arith.addf %261, %262 : vector<16x32xf32>
    %c0_118 = arith.constant 0 : index
    %c0_119 = arith.constant 0 : index
    %264 = vector.load %arg33[%c0_118, %c0_119] : memref<16x32xf32, #tpu.memory_space<vmem>>, vector<16x32xf32>
    tpu.vector_store %arg33[%c0_118, %c0_119], %263 {strides = array<i32>} : memref<16x32xf32, #tpu.memory_space<vmem>>, vector<16x32xf32>,
    %c1_i32 = arith.constant 1 : i32
    %265 = arith.cmpi eq, %arg1, %c1_i32 : i32
    %266 = arith.extui %265 : i1 to i32
    %c0_i32_120 = arith.constant 0 : i32
    %267 = arith.cmpi ne, %266, %c0_i32_120 : i32
    scf.if %267 {
      %c0_121 = arith.constant 0 : index
      %c0_122 = arith.constant 0 : index
      %268 = vector.load %arg30[%c0_121, %c0_122] : memref<1x32xf32, #tpu.memory_space<vmem>>, vector<1x32xf32>
      %c0_123 = arith.constant 0 : index
      %c0_124 = arith.constant 0 : index
      %269 = vector.load %arg31[%c0_123, %c0_124] : memref<1x32xf32, #tpu.memory_space<vmem>>, vector<1x32xf32>
      %cst_125 = arith.constant dense<0.000000e+00> : vector<16xf32>
      %270 = vector.multi_reduction <add>, %263, %cst_125 [1] : vector<16x32xf32> to vector<16xf32>
      %271 = vector.shape_cast %270 : vector<16xf32> to vector<16x1xf32>
      %cst_126 = arith.constant 3.200000e+01 : f32
      %272 = vector.broadcast %cst_126 : f32 to vector<16x1xf32>
      %273 = arith.divf %271, %272 : vector<16x1xf32>
      %274 = vector.broadcast %273 : vector<16x1xf32> to vector<16x32xf32>
      %275 = arith.subf %263, %274 : vector<16x32xf32>
      %276 = arith.mulf %275, %275 : vector<16x32xf32>
      %cst_127 = arith.constant dense<0.000000e+00> : vector<16xf32>
      %277 = vector.multi_reduction <add>, %276, %cst_127 [1] : vector<16x32xf32> to vector<16xf32>
      %278 = vector.shape_cast %277 : vector<16xf32> to vector<16x1xf32>
      %cst_128 = arith.constant 3.200000e+01 : f32
      %279 = vector.broadcast %cst_128 : f32 to vector<16x1xf32>
      %280 = arith.divf %278, %279 : vector<16x1xf32>
      %281 = vector.broadcast %273 : vector<16x1xf32> to vector<16x32xf32>
      %282 = arith.subf %263, %281 : vector<16x32xf32>
      %cst_129 = arith.constant 9.99999974E-6 : f32
      %283 = vector.broadcast %cst_129 : f32 to vector<16x1xf32>
      %284 = arith.addf %280, %283 : vector<16x1xf32>
      %285 = math.rsqrt %284 : vector<16x1xf32>
      %286 = vector.broadcast %285 : vector<16x1xf32> to vector<16x32xf32>
      %287 = arith.mulf %282, %286 : vector<16x32xf32>
      %288 = vector.broadcast %268 : vector<1x32xf32> to vector<16x32xf32>
      %289 = arith.mulf %287, %288 : vector<16x32xf32>
      %290 = vector.broadcast %269 : vector<1x32xf32> to vector<16x32xf32>
      %291 = arith.addf %289, %290 : vector<16x32xf32>
      %c0_130 = arith.constant 0 : index
      %c0_131 = arith.constant 0 : index
      %292 = vector.load %arg32[%c0_130, %c0_131] : memref<16x32xf32, #tpu.memory_space<vmem>>, vector<16x32xf32>
      tpu.vector_store %arg32[%c0_130, %c0_131], %291 {strides = array<i32>} : memref<16x32xf32, #tpu.memory_space<vmem>>, vector<16x32xf32>,
    } else {
    }
    return
  }
  func.func @transform_0(%arg0: i32, %arg1: i32) -> (i32, i32) {
    %c0_i32 = arith.constant 0 : i32
    %c0_i32_0 = arith.constant 0 : i32
    return %arg0, %c0_i32 : i32, i32
  }
  func.func @transform_1(%arg0: i32, %arg1: i32) -> (i32, i32) {
    %c0_i32 = arith.constant 0 : i32
    %c0_i32_0 = arith.constant 0 : i32
    return %arg0, %c0_i32 : i32, i32
  }
  func.func @transform_2(%arg0: i32, %arg1: i32) -> (i32, i32) {
    %c0_i32 = arith.constant 0 : i32
    %c0_i32_0 = arith.constant 0 : i32
    return %arg0, %c0_i32 : i32, i32
  }
  func.func @transform_3(%arg0: i32, %arg1: i32) -> (i32, i32) {
    %c0_i32 = arith.constant 0 : i32
    %c0_i32_0 = arith.constant 0 : i32
    return %arg0, %c0_i32 : i32, i32
  }
  func.func @transform_4(%arg0: i32, %arg1: i32) -> (i32, i32, i32) {
    %c0_i32 = arith.constant 0 : i32
    %c0_i32_0 = arith.constant 0 : i32
    %c0_i32_1 = arith.constant 0 : i32
    return %arg1, %c0_i32, %c0_i32_0 : i32, i32, i32
  }
  func.func @transform_5(%arg0: i32, %arg1: i32) -> (i32, i32, i32) {
    %c0_i32 = arith.constant 0 : i32
    %c0_i32_0 = arith.constant 0 : i32
    %c0_i32_1 = arith.constant 0 : i32
    return %arg1, %c0_i32, %c0_i32_0 : i32, i32, i32
  }
  func.func @transform_6(%arg0: i32, %arg1: i32) -> (i32, i32, i32) {
    %c0_i32 = arith.constant 0 : i32
    %c0_i32_0 = arith.constant 0 : i32
    %c0_i32_1 = arith.constant 0 : i32
    return %arg1, %c0_i32, %c0_i32_0 : i32, i32, i32
  }
  func.func @transform_7(%arg0: i32, %arg1: i32) -> (i32, i32, i32) {
    %c0_i32 = arith.constant 0 : i32
    %c0_i32_0 = arith.constant 0 : i32
    %c0_i32_1 = arith.constant 0 : i32
    return %arg1, %c0_i32, %c0_i32_0 : i32, i32, i32
  }
  func.func @transform_8(%arg0: i32, %arg1: i32) -> (i32, i32, i32, i32) {
    %c0_i32 = arith.constant 0 : i32
    %c0_i32_0 = arith.constant 0 : i32
    %c0_i32_1 = arith.constant 0 : i32
    %c0_i32_2 = arith.constant 0 : i32
    return %arg1, %c0_i32, %c0_i32_0, %c0_i32_1 : i32, i32, i32, i32
  }
  func.func @transform_9(%arg0: i32, %arg1: i32) -> (i32, i32, i32) {
    %c0_i32 = arith.constant 0 : i32
    %c0_i32_0 = arith.constant 0 : i32
    %c0_i32_1 = arith.constant 0 : i32
    return %arg1, %c0_i32, %c0_i32_0 : i32, i32, i32
  }
  func.func @transform_10(%arg0: i32, %arg1: i32) -> (i32, i32, i32) {
    %c0_i32 = arith.constant 0 : i32
    %c0_i32_0 = arith.constant 0 : i32
    %c0_i32_1 = arith.constant 0 : i32
    return %arg1, %c0_i32, %c0_i32_0 : i32, i32, i32
  }
  func.func @transform_11(%arg0: i32, %arg1: i32) -> (i32, i32, i32) {
    %c0_i32 = arith.constant 0 : i32
    %c0_i32_0 = arith.constant 0 : i32
    %c0_i32_1 = arith.constant 0 : i32
    return %arg1, %c0_i32, %c0_i32_0 : i32, i32, i32
  }
  func.func @transform_12(%arg0: i32, %arg1: i32) -> (i32, i32, i32) {
    %c0_i32 = arith.constant 0 : i32
    %c0_i32_0 = arith.constant 0 : i32
    %c0_i32_1 = arith.constant 0 : i32
    return %arg1, %c0_i32, %c0_i32_0 : i32, i32, i32
  }
  func.func @transform_13(%arg0: i32, %arg1: i32) -> (i32, i32, i32) {
    %c0_i32 = arith.constant 0 : i32
    %c0_i32_0 = arith.constant 0 : i32
    %c0_i32_1 = arith.constant 0 : i32
    return %arg1, %c0_i32, %c0_i32_0 : i32, i32, i32
  }
  func.func @transform_14(%arg0: i32, %arg1: i32) -> (i32, i32, i32) {
    %c0_i32 = arith.constant 0 : i32
    %c0_i32_0 = arith.constant 0 : i32
    %c0_i32_1 = arith.constant 0 : i32
    return %arg1, %c0_i32, %c0_i32_0 : i32, i32, i32
  }
  func.func @transform_15(%arg0: i32, %arg1: i32) -> (i32, i32, i32) {
    %c0_i32 = arith.constant 0 : i32
    %c0_i32_0 = arith.constant 0 : i32
    %c0_i32_1 = arith.constant 0 : i32
    return %arg1, %c0_i32, %c0_i32_0 : i32, i32, i32
  }
  func.func @transform_16(%arg0: i32, %arg1: i32) -> (i32, i32, i32, i32) {
    %c0_i32 = arith.constant 0 : i32
    %c0_i32_0 = arith.constant 0 : i32
    %c0_i32_1 = arith.constant 0 : i32
    %c0_i32_2 = arith.constant 0 : i32
    return %arg1, %c0_i32, %c0_i32_0, %c0_i32_1 : i32, i32, i32, i32
  }
  func.func @transform_17(%arg0: i32, %arg1: i32) -> (i32, i32, i32) {
    %c0_i32 = arith.constant 0 : i32
    %c0_i32_0 = arith.constant 0 : i32
    %c0_i32_1 = arith.constant 0 : i32
    return %arg1, %c0_i32, %c0_i32_0 : i32, i32, i32
  }
  func.func @transform_18(%arg0: i32, %arg1: i32) -> (i32, i32, i32) {
    %c0_i32 = arith.constant 0 : i32
    %c0_i32_0 = arith.constant 0 : i32
    %c0_i32_1 = arith.constant 0 : i32
    return %arg1, %c0_i32, %c0_i32_0 : i32, i32, i32
  }
  func.func @transform_19(%arg0: i32, %arg1: i32) -> (i32, i32, i32) {
    %c0_i32 = arith.constant 0 : i32
    %c0_i32_0 = arith.constant 0 : i32
    %c0_i32_1 = arith.constant 0 : i32
    return %arg1, %c0_i32, %c0_i32_0 : i32, i32, i32
  }
  func.func @transform_20(%arg0: i32, %arg1: i32) -> (i32, i32, i32) {
    %c0_i32 = arith.constant 0 : i32
    %c0_i32_0 = arith.constant 0 : i32
    %c0_i32_1 = arith.constant 0 : i32
    return %arg1, %c0_i32, %c0_i32_0 : i32, i32, i32
  }
  func.func @transform_21(%arg0: i32, %arg1: i32) -> (i32, i32, i32) {
    %c0_i32 = arith.constant 0 : i32
    %c0_i32_0 = arith.constant 0 : i32
    %c0_i32_1 = arith.constant 0 : i32
    return %arg1, %c0_i32, %c0_i32_0 : i32, i32, i32
  }
  func.func @transform_22(%arg0: i32, %arg1: i32) -> (i32, i32, i32) {
    %c0_i32 = arith.constant 0 : i32
    %c0_i32_0 = arith.constant 0 : i32
    %c0_i32_1 = arith.constant 0 : i32
    return %arg1, %c0_i32, %c0_i32_0 : i32, i32, i32
  }
  func.func @transform_23(%arg0: i32, %arg1: i32) -> (i32, i32, i32) {
    %c0_i32 = arith.constant 0 : i32
    %c0_i32_0 = arith.constant 0 : i32
    %c0_i32_1 = arith.constant 0 : i32
    return %arg1, %c0_i32, %c0_i32_0 : i32, i32, i32
  }
  func.func @transform_24(%arg0: i32, %arg1: i32) -> (i32, i32, i32) {
    %c0_i32 = arith.constant 0 : i32
    %c0_i32_0 = arith.constant 0 : i32
    %c0_i32_1 = arith.constant 0 : i32
    return %arg1, %c0_i32, %c0_i32_0 : i32, i32, i32
  }
  func.func @transform_25(%arg0: i32, %arg1: i32) -> (i32, i32, i32) {
    %c0_i32 = arith.constant 0 : i32
    %c0_i32_0 = arith.constant 0 : i32
    %c0_i32_1 = arith.constant 0 : i32
    return %arg1, %c0_i32, %c0_i32_0 : i32, i32, i32
  }
  func.func @transform_26(%arg0: i32, %arg1: i32) -> (i32, i32, i32) {
    %c0_i32 = arith.constant 0 : i32
    %c0_i32_0 = arith.constant 0 : i32
    %c0_i32_1 = arith.constant 0 : i32
    return %arg1, %c0_i32, %c0_i32_0 : i32, i32, i32
  }
  func.func @transform_27(%arg0: i32, %arg1: i32) -> (i32, i32, i32) {
    %c0_i32 = arith.constant 0 : i32
    %c0_i32_0 = arith.constant 0 : i32
    %c0_i32_1 = arith.constant 0 : i32
    return %arg1, %c0_i32, %c0_i32_0 : i32, i32, i32
  }
  func.func @transform_28(%arg0: i32, %arg1: i32) -> (i32, i32) {
    %c0_i32 = arith.constant 0 : i32
    %c0_i32_0 = arith.constant 0 : i32
    %c0_i32_1 = arith.constant 0 : i32
    return %c0_i32, %c0_i32_0 : i32, i32
  }
  func.func @transform_29(%arg0: i32, %arg1: i32) -> (i32, i32) {
    %c0_i32 = arith.constant 0 : i32
    %c0_i32_0 = arith.constant 0 : i32
    %c0_i32_1 = arith.constant 0 : i32
    return %c0_i32, %c0_i32_0 : i32, i32
  }
  func.func @transform_30(%arg0: i32, %arg1: i32) -> (i32, i32) {
    %c0_i32 = arith.constant 0 : i32
    %c0_i32_0 = arith.constant 0 : i32
    return %arg0, %c0_i32 : i32, i32
  }
}

</mosaic_0001>

<llo_original>
// kernel: tpu_custom_call.1
$region0: #{tpu_custom_call.1}
  #allocation0 [shape = 'u32[]', space=smem, size = 0x4, offset = 0x4, fixed_abs, tag = 'smem constant byte address 0x4 - core index']
  #allocation1 [shape = 'u32[144,128]{1,0:T(1,128)}', space=vmem, size = 0x12000, scoped, tag = 'internal scratch']
  #allocation2 [shape = 'f32[16,32]{1,0:T(8,128)}', space=vmem, size = 0x2000, scoped, tag = 'scratch operand']
  %s0 = inlined_call_operand.smem [shape: u32[31], index: -1, kind: input, shape index: {}]
  %s1 = sld [smem:[%s0]]
  %s2 = scalar_lea.smem %s0, 1
  %s3 = sld [smem:[%s2]]
  %s4 = scalar_lea.smem %s0, 2
  %s5 = sld [smem:[%s4]]
  %s6 = scalar_lea.smem %s0, 3
  %s7 = sld [smem:[%s6]]
  %s8 = scalar_lea.smem %s0, 4
  %s9 = sld [smem:[%s8]]
  %s10 = scalar_lea.smem %s0, 5
  %s11 = sld [smem:[%s10]]
  %s12 = scalar_lea.smem %s0, 6
  %s13 = sld [smem:[%s12]]
  %s14 = scalar_lea.smem %s0, 7
  %s15 = sld [smem:[%s14]]
  %s16 = scalar_lea.smem %s0, 8
  %s17 = sld [smem:[%s16]]
  %s18 = scalar_lea.smem %s0, 9
  %s19 = sld [smem:[%s18]]
  %s20 = scalar_lea.smem %s0, 10
  %s21 = sld [smem:[%s20]]
  %s22 = scalar_lea.smem %s0, 11
  %s23 = sld [smem:[%s22]]
  %s24 = scalar_lea.smem %s0, 12
  %s25 = sld [smem:[%s24]]
  %s26 = scalar_lea.smem %s0, 13
  %s27 = sld [smem:[%s26]]
  %s28 = scalar_lea.smem %s0, 14
  %s29 = sld [smem:[%s28]]
  %s30 = scalar_lea.smem %s0, 15
  %s31 = sld [smem:[%s30]]
  %s32 = scalar_lea.smem %s0, 16
  %s33 = sld [smem:[%s32]]
  %s34 = scalar_lea.smem %s0, 17
  %s35 = sld [smem:[%s34]]
  %s36 = scalar_lea.smem %s0, 18
  %s37 = sld [smem:[%s36]]
  %s38 = scalar_lea.smem %s0, 19
  %s39 = sld [smem:[%s38]]
  %s40 = scalar_lea.smem %s0, 20
  %s41 = sld [smem:[%s40]]
  %s42 = scalar_lea.smem %s0, 21
  %s43 = sld [smem:[%s42]]
  %s44 = scalar_lea.smem %s0, 22
  %s45 = sld [smem:[%s44]]
  %s46 = scalar_lea.smem %s0, 23
  %s47 = sld [smem:[%s46]]
  %s48 = scalar_lea.smem %s0, 24
  %s49 = sld [smem:[%s48]]
  %s50 = scalar_lea.smem %s0, 25
  %s51 = sld [smem:[%s50]]
  %s52 = scalar_lea.smem %s0, 26
  %s53 = sld [smem:[%s52]]
  %s54 = scalar_lea.smem %s0, 27
  %s55 = sld [smem:[%s54]]
  %s56 = scalar_lea.smem %s0, 28
  %s57 = sld [smem:[%s56]]
  %s58 = scalar_lea.smem %s0, 29
  %s59 = sld [smem:[%s58]]
  %s60 = scalar_lea.smem %s0, 30
  %s61 = sld [smem:[%s60]]
  %s62 = sld [smem:[#allocation0]]
  $region225: #{tpu_custom_call.1} parent=0
    _
  %s64 = ssub.s32 1, %s62
  %s65 = scalar_select 0, %s64, %s62
  $region1: #{tpu_custom_call.1} parent=0
    #allocation3 [shape = 'u8[8192]{0}', space=vmem, size = 0x2000, scoped, tag = 'input window, operand 0, single buffered']
    #allocation4 [shape = 's32[2]{0}', space=sflag, size = 0x8, scoped, tag = 'scoped memory for tpu_custom_call.1']
    #allocation5 [shape = 's32[2]{0}', space=sflag, size = 0x8, scoped, tag = 'scoped memory for tpu_custom_call.1']
    #allocation6 [shape = 'u8[8192]{0}', space=vmem, size = 0x2000, scoped, tag = 'input window, operand 1, single buffered']
    #allocation7 [shape = 's32[1]{0}', space=sflag, size = 0x4, scoped, tag = 'scoped memory for tpu_custom_call.1']
    #allocation8 [shape = 'u8[8192]{0}', space=vmem, size = 0x2000, scoped, tag = 'input window, operand 2, single buffered']
    #allocation9 [shape = 'u8[8192]{0}', space=vmem, size = 0x2000, scoped, tag = 'input window, operand 3, single buffered']
    #allocation10 [shape = 's32[1]{0}', space=sflag, size = 0x4, scoped, tag = 'scoped memory for tpu_custom_call.1']
    #allocation11 [shape = 'u8[1024]{0}', space=vmem, size = 0x400, scoped, tag = 'input window, operand 9']
    #allocation12 [shape = 'u8[16384]{0}', space=vmem, size = 0x4000, scoped, tag = 'input window, operand 10']
    #allocation13 [shape = 'u8[1024]{0}', space=vmem, size = 0x400, scoped, tag = 'input window, operand 11']
    #allocation14 [shape = 'u8[16384]{0}', space=vmem, size = 0x4000, scoped, tag = 'input window, operand 12']
    #allocation15 [shape = 'u8[1024]{0}', space=vmem, size = 0x400, scoped, tag = 'input window, operand 13']
    #allocation16 [shape = 'u8[16384]{0}', space=vmem, size = 0x4000, scoped, tag = 'input window, operand 14']
    #allocation17 [shape = 'u8[1024]{0}', space=vmem, size = 0x400, scoped, tag = 'input window, operand 15']
    #allocation18 [shape = 'u8[16384]{0}', space=vmem, size = 0x4000, scoped, tag = 'input window, operand 16']
    #allocation19 [shape = 'u8[1024]{0}', space=vmem, size = 0x400, scoped, tag = 'input window, operand 17']
    #allocation20 [shape = 'u8[16384]{0}', space=vmem, size = 0x4000, scoped, tag = 'input window, operand 18']
    #allocation21 [shape = 'u8[1024]{0}', space=vmem, size = 0x400, scoped, tag = 'input window, operand 19']
    #allocation22 [shape = 'u8[1024]{0}', space=vmem, size = 0x400, scoped, tag = 'input window, operand 24']
    #allocation23 [shape = 'u8[8192]{0}', space=vmem, size = 0x2000, scoped, tag = 'output window, operand 0, single buffered']
    %66 = vsyncpa [#allocation4], 0
    %67 = vsyncpa [#allocation7], 0
    %68 = vsyncpa [#allocation10], 0
    %69 = vsyncpa [#allocation5], 0
    loop: start=0, step=1, limit=4
    $region2: #{tpu_custom_call.1} parent=1 // loop_pre_header
      _
    $region3: #{tpu_custom_call.1} parent=1 // loop_header
      %s71 = sphi 0, %s75
      %p72 = scmp.ge.s32.totalorder %s71, 4
      %s78 = sphi 0, %s90
      %s79 = sphi 0, %s86
      %s80 = sphi 0, %s78
      %s81 = sphi 0, %s79
      %s82 = sphi 0, %s80
      %s83 = sphi 0, %s81
      %s93 = sphi 0, %s95
      %s96 = sphi 0, %s93
      %s97 = sphi 0, %s96
      %s113 = sphi 0, %s97
      %s119 = sphi 0, %s121
      %s122 = sphi 0, %s119
      %s123 = sphi 0, %s122
      %s139 = sphi 0, %s123
      %s145 = sphi 0, %s147
      %s148 = sphi 0, %s145
      %s149 = sphi 0, %s148
      %s165 = sphi 0, %s149
      %s171 = sphi 0, %s173
      %s174 = sphi 0, %s171
      %s175 = sphi 0, %s174
      %s191 = sphi 0, %s175
      %s197 = sphi 0, %s199
      %s200 = sphi 0, %s197
      %s201 = sphi 0, %s200
      %s217 = sphi 0, %s201
      %s223 = sphi 0, %s225
      %s226 = sphi 0, %s223
      %s227 = sphi 0, %s226
      %s243 = sphi 0, %s227
      %s249 = sphi 0, %s251
      %s252 = sphi 0, %s249
      %s253 = sphi 0, %s252
      %s269 = sphi 0, %s253
      %s275 = sphi 0, %s277
      %s278 = sphi 0, %s275
      %s279 = sphi 0, %s278
      %s295 = sphi 0, %s279
      %s301 = sphi 0, %s303
      %s304 = sphi 0, %s301
      %s305 = sphi 0, %s304
      %s321 = sphi 0, %s305
      %s327 = sphi 0, %s329
      %s330 = sphi 0, %s327
      %s331 = sphi 0, %s330
      %s347 = sphi 0, %s331
      %s353 = sphi 0, %s355
      %s356 = sphi 0, %s353
      %s357 = sphi 0, %s356
      %s373 = sphi 0, %s357
      %s379 = sphi 0, %s381
      %s382 = sphi 0, %s379
      %s383 = sphi 0, %s382
      %s399 = sphi 0, %s383
      %s405 = sphi 0, %s407
      %s408 = sphi 0, %s405
      %s409 = sphi 0, %s408
      %s425 = sphi 0, %s409
      %s431 = sphi 0, %s433
      %s434 = sphi 0, %s431
      %s435 = sphi 0, %s434
      %s451 = sphi 0, %s435
      %s457 = sphi 0, %s459
      %s460 = sphi 0, %s457
      %s461 = sphi 0, %s460
      %s477 = sphi 0, %s461
      %s483 = sphi 0, %s485
      %s486 = sphi 0, %s483
      %s487 = sphi 0, %s486
      %s503 = sphi 0, %s487
      %s509 = sphi 0, %s511
      %s512 = sphi 0, %s509
      %s513 = sphi 0, %s512
      %s529 = sphi 0, %s513
      %s535 = sphi 0, %s537
      %s538 = sphi 0, %s535
      %s539 = sphi 0, %s538
      %s555 = sphi 0, %s539
      %s561 = sphi 0, %s563
      %s564 = sphi 0, %s561
      %s565 = sphi 0, %s564
      %s581 = sphi 0, %s565
      %s587 = sphi 0, %s589
      %s590 = sphi 0, %s587
      %s591 = sphi 0, %s590
      %s607 = sphi 0, %s591
      %s613 = sphi 0, %s615
      %s616 = sphi 0, %s613
      %s617 = sphi 0, %s616
      %s633 = sphi 0, %s617
      %s639 = sphi 0, %s641
      %s642 = sphi 0, %s639
      %s643 = sphi 0, %s642
      %s659 = sphi 0, %s643
      %s665 = sphi 0, %s667
      %s668 = sphi 0, %s665
      %s669 = sphi 0, %s668
      %s685 = sphi 0, %s669
      %s691 = sphi 0, %s693
      %s694 = sphi 0, %s691
      %s695 = sphi 0, %s694
      %s711 = sphi 0, %s695
      %s717 = sphi 0, %s719
      %s720 = sphi 0, %s717
      %s721 = sphi 0, %s720
      %s737 = sphi 0, %s721
      %s743 = sphi 0, %s745
      %s746 = sphi 0, %s743
      %s747 = sphi 0, %s746
      %s763 = sphi 0, %s747
      %s769 = sphi 0, %s771
      %s772 = sphi 0, %s769
      %s773 = sphi 0, %s772
      %s789 = sphi 0, %s773
      %s795 = sphi 0, %s797
      %s798 = sphi 0, %s795
      %s799 = sphi 0, %s798
      %s815 = sphi 0, %s799
      %s819 = sphi 0, %s819
      %s821 = sphi 0, %s819
      %s822 = sphi 0, %s821
      %s836 = sphi 0, %s822
      %s840 = sphi 0, %s840
      %s842 = sphi 0, %s840
      %s843 = sphi 0, %s842
      %s857 = sphi 0, %s843
      %s863 = sphi 0, %s865
      %s866 = sphi 0, %s863
      %s867 = sphi 0, %s866
      %s883 = sphi 0, %s867
    $region4: #{tpu_custom_call.1} parent=1 // loop_header_branch
      %74 = sbr.rel (%p72) target = $region8
    $region5: #{tpu_custom_call.1} parent=1 // loop_body
      %s76 = ssub.s32 %s71, 1
      %s77 = ssub.s32 %s71, 2
      %s84 = sadd.s32 1, %s79
      %p85 = scmp.ge.s32.totalorder %s84, 2
      %s86 = scalar_select %p85, 0, %s84
      %s87 = sadd.s32 1, %s78
      %s88 = scalar_select %p85, %s87, %s78
      %p89 = scmp.ge.s32.totalorder %s88, 1
      %s90 = scalar_select %p89, 0, %s88
      %s91 = ssub.s32 %s78, %s90
      %p92 = scmp.eq.s32.totalorder %s91, 0
      %s94 = sadd.s32 %s93, 1
      %s95 = scalar_select %p92, %s93, %s94
      %p98 = pneg %p92
      %p99 = scmp.eq.s32.totalorder %s71, 1
      %p100 = por %p98, %p99
      %p101 = scmp.ne.s32.totalorder %s93, %s96
      %p102 = scmp.eq.s32.totalorder %s71, 0
      %p103 = por %p101, %p102
      %p104 = scmp.ne.s32.totalorder %s93, %s96
      %p105 = scmp.eq.s32.totalorder %s76, 1
      %p106 = por %p104, %p105
      %p107 = scmp.ne.s32.totalorder %s96, %s97
      %p108 = scmp.eq.s32.totalorder %s76, 0
      %p109 = por %p107, %p108
      %p110 = scmp.ne.s32.totalorder %s96, %s97
      %p111 = scmp.eq.s32.totalorder %s77, 1
      %p112 = por %p110, %p111
      %p114 = scmp.ne.s32.totalorder %s97, %s113
      %p115 = scmp.eq.s32.totalorder %s77, 0
      %p116 = por %p114, %p115
      %s117 = ssub.s32 %s78, %s90
      %p118 = scmp.eq.s32.totalorder %s117, 0
      %s120 = sadd.s32 %s119, 1
      %s121 = scalar_select %p118, %s119, %s120
      %p124 = pneg %p118
      %p125 = scmp.eq.s32.totalorder %s71, 1
      %p126 = por %p124, %p125
      %p127 = scmp.ne.s32.totalorder %s119, %s122
      %p128 = scmp.eq.s32.totalorder %s71, 0
      %p129 = por %p127, %p128
      %p130 = scmp.ne.s32.totalorder %s119, %s122
      %p131 = scmp.eq.s32.totalorder %s76, 1
      %p132 = por %p130, %p131
      %p133 = scmp.ne.s32.totalorder %s122, %s123
      %p134 = scmp.eq.s32.totalorder %s76, 0
      %p135 = por %p133, %p134
      %p136 = scmp.ne.s32.totalorder %s122, %s123
      %p137 = scmp.eq.s32.totalorder %s77, 1
      %p138 = por %p136, %p137
      %p140 = scmp.ne.s32.totalorder %s123, %s139
      %p141 = scmp.eq.s32.totalorder %s77, 0
      %p142 = por %p140, %p141
      %s143 = ssub.s32 %s78, %s90
      %p144 = scmp.eq.s32.totalorder %s143, 0
      %s146 = sadd.s32 %s145, 1
      %s147 = scalar_select %p144, %s145, %s146
      %p150 = pneg %p144
      %p151 = scmp.eq.s32.totalorder %s71, 1
      %p152 = por %p150, %p151
      %p153 = scmp.ne.s32.totalorder %s145, %s148
      %p154 = scmp.eq.s32.totalorder %s71, 0
      %p155 = por %p153, %p154
      %p156 = scmp.ne.s32.totalorder %s145, %s148
      %p157 = scmp.eq.s32.totalorder %s76, 1
      %p158 = por %p156, %p157
      %p159 = scmp.ne.s32.totalorder %s148, %s149
      %p160 = scmp.eq.s32.totalorder %s76, 0
      %p161 = por %p159, %p160
      %p162 = scmp.ne.s32.totalorder %s148, %s149
      %p163 = scmp.eq.s32.totalorder %s77, 1
      %p164 = por %p162, %p163
      %p166 = scmp.ne.s32.totalorder %s149, %s165
      %p167 = scmp.eq.s32.totalorder %s77, 0
      %p168 = por %p166, %p167
      %s169 = ssub.s32 %s78, %s90
      %p170 = scmp.eq.s32.totalorder %s169, 0
      %s172 = sadd.s32 %s171, 1
      %s173 = scalar_select %p170, %s171, %s172
      %p176 = pneg %p170
      %p177 = scmp.eq.s32.totalorder %s71, 1
      %p178 = por %p176, %p177
      %p179 = scmp.ne.s32.totalorder %s171, %s174
      %p180 = scmp.eq.s32.totalorder %s71, 0
      %p181 = por %p179, %p180
      %p182 = scmp.ne.s32.totalorder %s171, %s174
      %p183 = scmp.eq.s32.totalorder %s76, 1
      %p184 = por %p182, %p183
      %p185 = scmp.ne.s32.totalorder %s174, %s175
      %p186 = scmp.eq.s32.totalorder %s76, 0
      %p187 = por %p185, %p186
      %p188 = scmp.ne.s32.totalorder %s174, %s175
      %p189 = scmp.eq.s32.totalorder %s77, 1
      %p190 = por %p188, %p189
      %p192 = scmp.ne.s32.totalorder %s175, %s191
      %p193 = scmp.eq.s32.totalorder %s77, 0
      %p194 = por %p192, %p193
      %s195 = ssub.s32 %s79, %s86
      %p196 = scmp.eq.s32.totalorder %s195, 0
      %s198 = sadd.s32 %s197, 1
      %s199 = scalar_select %p196, %s197, %s198
      %p202 = pneg %p196
      %p203 = scmp.eq.s32.totalorder %s71, 1
      %p204 = por %p202, %p203
      %p205 = scmp.ne.s32.totalorder %s197, %s200
      %p206 = scmp.eq.s32.totalorder %s71, 0
      %p207 = por %p205, %p206
      %p208 = scmp.ne.s32.totalorder %s197, %s200
      %p209 = scmp.eq.s32.totalorder %s76, 1
      %p210 = por %p208, %p209
      %p211 = scmp.ne.s32.totalorder %s200, %s201
      %p212 = scmp.eq.s32.totalorder %s76, 0
      %p213 = por %p211, %p212
      %p214 = scmp.ne.s32.totalorder %s200, %s201
      %p215 = scmp.eq.s32.totalorder %s77, 1
      %p216 = por %p214, %p215
      %p218 = scmp.ne.s32.totalorder %s201, %s217
      %p219 = scmp.eq.s32.totalorder %s77, 0
      %p220 = por %p218, %p219
      %s221 = ssub.s32 %s79, %s86
      %p222 = scmp.eq.s32.totalorder %s221, 0
      %s224 = sadd.s32 %s223, 1
      %s225 = scalar_select %p222, %s223, %s224
      %p228 = pneg %p222
      %p229 = scmp.eq.s32.totalorder %s71, 1
      %p230 = por %p228, %p229
      %p231 = scmp.ne.s32.totalorder %s223, %s226
      %p232 = scmp.eq.s32.totalorder %s71, 0
      %p233 = por %p231, %p232
      %p234 = scmp.ne.s32.totalorder %s223, %s226
      %p235 = scmp.eq.s32.totalorder %s76, 1
      %p236 = por %p234, %p235
      %p237 = scmp.ne.s32.totalorder %s226, %s227
      %p238 = scmp.eq.s32.totalorder %s76, 0
      %p239 = por %p237, %p238
      %p240 = scmp.ne.s32.totalorder %s226, %s227
      %p241 = scmp.eq.s32.totalorder %s77, 1
      %p242 = por %p240, %p241
      %p244 = scmp.ne.s32.totalorder %s227, %s243
      %p245 = scmp.eq.s32.totalorder %s77, 0
      %p246 = por %p244, %p245
      %s247 = ssub.s32 %s79, %s86
      %p248 = scmp.eq.s32.totalorder %s247, 0
      %s250 = sadd.s32 %s249, 1
      %s251 = scalar_select %p248, %s249, %s250
      %p254 = pneg %p248
      %p255 = scmp.eq.s32.totalorder %s71, 1
      %p256 = por %p254, %p255
      %p257 = scmp.ne.s32.totalorder %s249, %s252
      %p258 = scmp.eq.s32.totalorder %s71, 0
      %p259 = por %p257, %p258
      %p260 = scmp.ne.s32.totalorder %s249, %s252
      %p261 = scmp.eq.s32.totalorder %s76, 1
      %p262 = por %p260, %p261
      %p263 = scmp.ne.s32.totalorder %s252, %s253
      %p264 = scmp.eq.s32.totalorder %s76, 0
      %p265 = por %p263, %p264
      %p266 = scmp.ne.s32.totalorder %s252, %s253
      %p267 = scmp.eq.s32.totalorder %s77, 1
      %p268 = por %p266, %p267
      %p270 = scmp.ne.s32.totalorder %s253, %s269
      %p271 = scmp.eq.s32.totalorder %s77, 0
      %p272 = por %p270, %p271
      %s273 = ssub.s32 %s79, %s86
      %p274 = scmp.eq.s32.totalorder %s273, 0
      %s276 = sadd.s32 %s275, 1
      %s277 = scalar_select %p274, %s275, %s276
      %p280 = pneg %p274
      %p281 = scmp.eq.s32.totalorder %s71, 1
      %p282 = por %p280, %p281
      %p283 = scmp.ne.s32.totalorder %s275, %s278
      %p284 = scmp.eq.s32.totalorder %s71, 0
      %p285 = por %p283, %p284
      %p286 = scmp.ne.s32.totalorder %s275, %s278
      %p287 = scmp.eq.s32.totalorder %s76, 1
      %p288 = por %p286, %p287
      %p289 = scmp.ne.s32.totalorder %s278, %s279
      %p290 = scmp.eq.s32.totalorder %s76, 0
      %p291 = por %p289, %p290
      %p292 = scmp.ne.s32.totalorder %s278, %s279
      %p293 = scmp.eq.s32.totalorder %s77, 1
      %p294 = por %p292, %p293
      %p296 = scmp.ne.s32.totalorder %s279, %s295
      %p297 = scmp.eq.s32.totalorder %s77, 0
      %p298 = por %p296, %p297
      %s299 = ssub.s32 %s79, %s86
      %p300 = scmp.eq.s32.totalorder %s299, 0
      %s302 = sadd.s32 %s301, 1
      %s303 = scalar_select %p300, %s301, %s302
      %p306 = pneg %p300
      %p307 = scmp.eq.s32.totalorder %s71, 1
      %p308 = por %p306, %p307
      %p309 = scmp.ne.s32.totalorder %s301, %s304
      %p310 = scmp.eq.s32.totalorder %s71, 0
      %p311 = por %p309, %p310
      %p312 = scmp.ne.s32.totalorder %s301, %s304
      %p313 = scmp.eq.s32.totalorder %s76, 1
      %p314 = por %p312, %p313
      %p315 = scmp.ne.s32.totalorder %s304, %s305
      %p316 = scmp.eq.s32.totalorder %s76, 0
      %p317 = por %p315, %p316
      %p318 = scmp.ne.s32.totalorder %s304, %s305
      %p319 = scmp.eq.s32.totalorder %s77, 1
      %p320 = por %p318, %p319
      %p322 = scmp.ne.s32.totalorder %s305, %s321
      %p323 = scmp.eq.s32.totalorder %s77, 0
      %p324 = por %p322, %p323
      %s325 = ssub.s32 %s79, %s86
      %p326 = scmp.eq.s32.totalorder %s325, 0
      %s328 = sadd.s32 %s327, 1
      %s329 = scalar_select %p326, %s327, %s328
      %p332 = pneg %p326
      %p333 = scmp.eq.s32.totalorder %s71, 1
      %p334 = por %p332, %p333
      %p335 = scmp.ne.s32.totalorder %s327, %s330
      %p336 = scmp.eq.s32.totalorder %s71, 0
      %p337 = por %p335, %p336
      %p338 = scmp.ne.s32.totalorder %s327, %s330
      %p339 = scmp.eq.s32.totalorder %s76, 1
      %p340 = por %p338, %p339
      %p341 = scmp.ne.s32.totalorder %s330, %s331
      %p342 = scmp.eq.s32.totalorder %s76, 0
      %p343 = por %p341, %p342
      %p344 = scmp.ne.s32.totalorder %s330, %s331
      %p345 = scmp.eq.s32.totalorder %s77, 1
      %p346 = por %p344, %p345
      %p348 = scmp.ne.s32.totalorder %s331, %s347
      %p349 = scmp.eq.s32.totalorder %s77, 0
      %p350 = por %p348, %p349
      %s351 = ssub.s32 %s79, %s86
      %p352 = scmp.eq.s32.totalorder %s351, 0
      %s354 = sadd.s32 %s353, 1
      %s355 = scalar_select %p352, %s353, %s354
      %p358 = pneg %p352
      %p359 = scmp.eq.s32.totalorder %s71, 1
      %p360 = por %p358, %p359
      %p361 = scmp.ne.s32.totalorder %s353, %s356
      %p362 = scmp.eq.s32.totalorder %s71, 0
      %p363 = por %p361, %p362
      %p364 = scmp.ne.s32.totalorder %s353, %s356
      %p365 = scmp.eq.s32.totalorder %s76, 1
      %p366 = por %p364, %p365
      %p367 = scmp.ne.s32.totalorder %s356, %s357
      %p368 = scmp.eq.s32.totalorder %s76, 0
      %p369 = por %p367, %p368
      %p370 = scmp.ne.s32.totalorder %s356, %s357
      %p371 = scmp.eq.s32.totalorder %s77, 1
      %p372 = por %p370, %p371
      %p374 = scmp.ne.s32.totalorder %s357, %s373
      %p375 = scmp.eq.s32.totalorder %s77, 0
      %p376 = por %p374, %p375
      %s377 = ssub.s32 %s79, %s86
      %p378 = scmp.eq.s32.totalorder %s377, 0
      %s380 = sadd.s32 %s379, 1
      %s381 = scalar_select %p378, %s379, %s380
      %p384 = pneg %p378
      %p385 = scmp.eq.s32.totalorder %s71, 1
      %p386 = por %p384, %p385
      %p387 = scmp.ne.s32.totalorder %s379, %s382
      %p388 = scmp.eq.s32.totalorder %s71, 0
      %p389 = por %p387, %p388
      %p390 = scmp.ne.s32.totalorder %s379, %s382
      %p391 = scmp.eq.s32.totalorder %s76, 1
      %p392 = por %p390, %p391
      %p393 = scmp.ne.s32.totalorder %s382, %s383
      %p394 = scmp.eq.s32.totalorder %s76, 0
      %p395 = por %p393, %p394
      %p396 = scmp.ne.s32.totalorder %s382, %s383
      %p397 = scmp.eq.s32.totalorder %s77, 1
      %p398 = por %p396, %p397
      %p400 = scmp.ne.s32.totalorder %s383, %s399
      %p401 = scmp.eq.s32.totalorder %s77, 0
      %p402 = por %p400, %p401
      %s403 = ssub.s32 %s79, %s86
      %p404 = scmp.eq.s32.totalorder %s403, 0
      %s406 = sadd.s32 %s405, 1
      %s407 = scalar_select %p404, %s405, %s406
      %p410 = pneg %p404
      %p411 = scmp.eq.s32.totalorder %s71, 1
      %p412 = por %p410, %p411
      %p413 = scmp.ne.s32.totalorder %s405, %s408
      %p414 = scmp.eq.s32.totalorder %s71, 0
      %p415 = por %p413, %p414
      %p416 = scmp.ne.s32.totalorder %s405, %s408
      %p417 = scmp.eq.s32.totalorder %s76, 1
      %p418 = por %p416, %p417
      %p419 = scmp.ne.s32.totalorder %s408, %s409
      %p420 = scmp.eq.s32.totalorder %s76, 0
      %p421 = por %p419, %p420
      %p422 = scmp.ne.s32.totalorder %s408, %s409
      %p423 = scmp.eq.s32.totalorder %s77, 1
      %p424 = por %p422, %p423
      %p426 = scmp.ne.s32.totalorder %s409, %s425
      %p427 = scmp.eq.s32.totalorder %s77, 0
      %p428 = por %p426, %p427
      %s429 = ssub.s32 %s79, %s86
      %p430 = scmp.eq.s32.totalorder %s429, 0
      %s432 = sadd.s32 %s431, 1
      %s433 = scalar_select %p430, %s431, %s432
      %p436 = pneg %p430
      %p437 = scmp.eq.s32.totalorder %s71, 1
      %p438 = por %p436, %p437
      %p439 = scmp.ne.s32.totalorder %s431, %s434
      %p440 = scmp.eq.s32.totalorder %s71, 0
      %p441 = por %p439, %p440
      %p442 = scmp.ne.s32.totalorder %s431, %s434
      %p443 = scmp.eq.s32.totalorder %s76, 1
      %p444 = por %p442, %p443
      %p445 = scmp.ne.s32.totalorder %s434, %s435
      %p446 = scmp.eq.s32.totalorder %s76, 0
      %p447 = por %p445, %p446
      %p448 = scmp.ne.s32.totalorder %s434, %s435
      %p449 = scmp.eq.s32.totalorder %s77, 1
      %p450 = por %p448, %p449
      %p452 = scmp.ne.s32.totalorder %s435, %s451
      %p453 = scmp.eq.s32.totalorder %s77, 0
      %p454 = por %p452, %p453
      %s455 = ssub.s32 %s79, %s86
      %p456 = scmp.eq.s32.totalorder %s455, 0
      %s458 = sadd.s32 %s457, 1
      %s459 = scalar_select %p456, %s457, %s458
      %p462 = pneg %p456
      %p463 = scmp.eq.s32.totalorder %s71, 1
      %p464 = por %p462, %p463
      %p465 = scmp.ne.s32.totalorder %s457, %s460
      %p466 = scmp.eq.s32.totalorder %s71, 0
      %p467 = por %p465, %p466
      %p468 = scmp.ne.s32.totalorder %s457, %s460
      %p469 = scmp.eq.s32.totalorder %s76, 1
      %p470 = por %p468, %p469
      %p471 = scmp.ne.s32.totalorder %s460, %s461
      %p472 = scmp.eq.s32.totalorder %s76, 0
      %p473 = por %p471, %p472
      %p474 = scmp.ne.s32.totalorder %s460, %s461
      %p475 = scmp.eq.s32.totalorder %s77, 1
      %p476 = por %p474, %p475
      %p478 = scmp.ne.s32.totalorder %s461, %s477
      %p479 = scmp.eq.s32.totalorder %s77, 0
      %p480 = por %p478, %p479
      %s481 = ssub.s32 %s79, %s86
      %p482 = scmp.eq.s32.totalorder %s481, 0
      %s484 = sadd.s32 %s483, 1
      %s485 = scalar_select %p482, %s483, %s484
      %p488 = pneg %p482
      %p489 = scmp.eq.s32.totalorder %s71, 1
      %p490 = por %p488, %p489
      %p491 = scmp.ne.s32.totalorder %s483, %s486
      %p492 = scmp.eq.s32.totalorder %s71, 0
      %p493 = por %p491, %p492
      %p494 = scmp.ne.s32.totalorder %s483, %s486
      %p495 = scmp.eq.s32.totalorder %s76, 1
      %p496 = por %p494, %p495
      %p497 = scmp.ne.s32.totalorder %s486, %s487
      %p498 = scmp.eq.s32.totalorder %s76, 0
      %p499 = por %p497, %p498
      %p500 = scmp.ne.s32.totalorder %s486, %s487
      %p501 = scmp.eq.s32.totalorder %s77, 1
      %p502 = por %p500, %p501
      %p504 = scmp.ne.s32.totalorder %s487, %s503
      %p505 = scmp.eq.s32.totalorder %s77, 0
      %p506 = por %p504, %p505
      %s507 = ssub.s32 %s79, %s86
      %p508 = scmp.eq.s32.totalorder %s507, 0
      %s510 = sadd.s32 %s509, 1
      %s511 = scalar_select %p508, %s509, %s510
      %p514 = pneg %p508
      %p515 = scmp.eq.s32.totalorder %s71, 1
      %p516 = por %p514, %p515
      %p517 = scmp.ne.s32.totalorder %s509, %s512
      %p518 = scmp.eq.s32.totalorder %s71, 0
      %p519 = por %p517, %p518
      %p520 = scmp.ne.s32.totalorder %s509, %s512
      %p521 = scmp.eq.s32.totalorder %s76, 1
      %p522 = por %p520, %p521
      %p523 = scmp.ne.s32.totalorder %s512, %s513
      %p524 = scmp.eq.s32.totalorder %s76, 0
      %p525 = por %p523, %p524
      %p526 = scmp.ne.s32.totalorder %s512, %s513
      %p527 = scmp.eq.s32.totalorder %s77, 1
      %p528 = por %p526, %p527
      %p530 = scmp.ne.s32.totalorder %s513, %s529
      %p531 = scmp.eq.s32.totalorder %s77, 0
      %p532 = por %p530, %p531
      %s533 = ssub.s32 %s79, %s86
      %p534 = scmp.eq.s32.totalorder %s533, 0
      %s536 = sadd.s32 %s535, 1
      %s537 = scalar_select %p534, %s535, %s536
      %p540 = pneg %p534
      %p541 = scmp.eq.s32.totalorder %s71, 1
      %p542 = por %p540, %p541
      %p543 = scmp.ne.s32.totalorder %s535, %s538
      %p544 = scmp.eq.s32.totalorder %s71, 0
      %p545 = por %p543, %p544
      %p546 = scmp.ne.s32.totalorder %s535, %s538
      %p547 = scmp.eq.s32.totalorder %s76, 1
      %p548 = por %p546, %p547
      %p549 = scmp.ne.s32.totalorder %s538, %s539
      %p550 = scmp.eq.s32.totalorder %s76, 0
      %p551 = por %p549, %p550
      %p552 = scmp.ne.s32.totalorder %s538, %s539
      %p553 = scmp.eq.s32.totalorder %s77, 1
      %p554 = por %p552, %p553
      %p556 = scmp.ne.s32.totalorder %s539, %s555
      %p557 = scmp.eq.s32.totalorder %s77, 0
      %p558 = por %p556, %p557
      %s559 = ssub.s32 %s79, %s86
      %p560 = scmp.eq.s32.totalorder %s559, 0
      %s562 = sadd.s32 %s561, 1
      %s563 = scalar_select %p560, %s561, %s562
      %p566 = pneg %p560
      %p567 = scmp.eq.s32.totalorder %s71, 1
      %p568 = por %p566, %p567
      %p569 = scmp.ne.s32.totalorder %s561, %s564
      %p570 = scmp.eq.s32.totalorder %s71, 0
      %p571 = por %p569, %p570
      %p572 = scmp.ne.s32.totalorder %s561, %s564
      %p573 = scmp.eq.s32.totalorder %s76, 1
      %p574 = por %p572, %p573
      %p575 = scmp.ne.s32.totalorder %s564, %s565
      %p576 = scmp.eq.s32.totalorder %s76, 0
      %p577 = por %p575, %p576
      %p578 = scmp.ne.s32.totalorder %s564, %s565
      %p579 = scmp.eq.s32.totalorder %s77, 1
      %p580 = por %p578, %p579
      %p582 = scmp.ne.s32.totalorder %s565, %s581
      %p583 = scmp.eq.s32.totalorder %s77, 0
      %p584 = por %p582, %p583
      %s585 = ssub.s32 %s79, %s86
      %p586 = scmp.eq.s32.totalorder %s585, 0
      %s588 = sadd.s32 %s587, 1
      %s589 = scalar_select %p586, %s587, %s588
      %p592 = pneg %p586
      %p593 = scmp.eq.s32.totalorder %s71, 1
      %p594 = por %p592, %p593
      %p595 = scmp.ne.s32.totalorder %s587, %s590
      %p596 = scmp.eq.s32.totalorder %s71, 0
      %p597 = por %p595, %p596
      %p598 = scmp.ne.s32.totalorder %s587, %s590
      %p599 = scmp.eq.s32.totalorder %s76, 1
      %p600 = por %p598, %p599
      %p601 = scmp.ne.s32.totalorder %s590, %s591
      %p602 = scmp.eq.s32.totalorder %s76, 0
      %p603 = por %p601, %p602
      %p604 = scmp.ne.s32.totalorder %s590, %s591
      %p605 = scmp.eq.s32.totalorder %s77, 1
      %p606 = por %p604, %p605
      %p608 = scmp.ne.s32.totalorder %s591, %s607
      %p609 = scmp.eq.s32.totalorder %s77, 0
      %p610 = por %p608, %p609
      %s611 = ssub.s32 %s79, %s86
      %p612 = scmp.eq.s32.totalorder %s611, 0
      %s614 = sadd.s32 %s613, 1
      %s615 = scalar_select %p612, %s613, %s614
      %p618 = pneg %p612
      %p619 = scmp.eq.s32.totalorder %s71, 1
      %p620 = por %p618, %p619
      %p621 = scmp.ne.s32.totalorder %s613, %s616
      %p622 = scmp.eq.s32.totalorder %s71, 0
      %p623 = por %p621, %p622
      %p624 = scmp.ne.s32.totalorder %s613, %s616
      %p625 = scmp.eq.s32.totalorder %s76, 1
      %p626 = por %p624, %p625
      %p627 = scmp.ne.s32.totalorder %s616, %s617
      %p628 = scmp.eq.s32.totalorder %s76, 0
      %p629 = por %p627, %p628
      %p630 = scmp.ne.s32.totalorder %s616, %s617
      %p631 = scmp.eq.s32.totalorder %s77, 1
      %p632 = por %p630, %p631
      %p634 = scmp.ne.s32.totalorder %s617, %s633
      %p635 = scmp.eq.s32.totalorder %s77, 0
      %p636 = por %p634, %p635
      %s637 = ssub.s32 %s79, %s86
      %p638 = scmp.eq.s32.totalorder %s637, 0
      %s640 = sadd.s32 %s639, 1
      %s641 = scalar_select %p638, %s639, %s640
      %p644 = pneg %p638
      %p645 = scmp.eq.s32.totalorder %s71, 1
      %p646 = por %p644, %p645
      %p647 = scmp.ne.s32.totalorder %s639, %s642
      %p648 = scmp.eq.s32.totalorder %s71, 0
      %p649 = por %p647, %p648
      %p650 = scmp.ne.s32.totalorder %s639, %s642
      %p651 = scmp.eq.s32.totalorder %s76, 1
      %p652 = por %p650, %p651
      %p653 = scmp.ne.s32.totalorder %s642, %s643
      %p654 = scmp.eq.s32.totalorder %s76, 0
      %p655 = por %p653, %p654
      %p656 = scmp.ne.s32.totalorder %s642, %s643
      %p657 = scmp.eq.s32.totalorder %s77, 1
      %p658 = por %p656, %p657
      %p660 = scmp.ne.s32.totalorder %s643, %s659
      %p661 = scmp.eq.s32.totalorder %s77, 0
      %p662 = por %p660, %p661
      %s663 = ssub.s32 %s79, %s86
      %p664 = scmp.eq.s32.totalorder %s663, 0
      %s666 = sadd.s32 %s665, 1
      %s667 = scalar_select %p664, %s665, %s666
      %p670 = pneg %p664
      %p671 = scmp.eq.s32.totalorder %s71, 1
      %p672 = por %p670, %p671
      %p673 = scmp.ne.s32.totalorder %s665, %s668
      %p674 = scmp.eq.s32.totalorder %s71, 0
      %p675 = por %p673, %p674
      %p676 = scmp.ne.s32.totalorder %s665, %s668
      %p677 = scmp.eq.s32.totalorder %s76, 1
      %p678 = por %p676, %p677
      %p679 = scmp.ne.s32.totalorder %s668, %s669
      %p680 = scmp.eq.s32.totalorder %s76, 0
      %p681 = por %p679, %p680
      %p682 = scmp.ne.s32.totalorder %s668, %s669
      %p683 = scmp.eq.s32.totalorder %s77, 1
      %p684 = por %p682, %p683
      %p686 = scmp.ne.s32.totalorder %s669, %s685
      %p687 = scmp.eq.s32.totalorder %s77, 0
      %p688 = por %p686, %p687
      %s689 = ssub.s32 %s79, %s86
      %p690 = scmp.eq.s32.totalorder %s689, 0
      %s692 = sadd.s32 %s691, 1
      %s693 = scalar_select %p690, %s691, %s692
      %p696 = pneg %p690
      %p697 = scmp.eq.s32.totalorder %s71, 1
      %p698 = por %p696, %p697
      %p699 = scmp.ne.s32.totalorder %s691, %s694
      %p700 = scmp.eq.s32.totalorder %s71, 0
      %p701 = por %p699, %p700
      %p702 = scmp.ne.s32.totalorder %s691, %s694
      %p703 = scmp.eq.s32.totalorder %s76, 1
      %p704 = por %p702, %p703
      %p705 = scmp.ne.s32.totalorder %s694, %s695
      %p706 = scmp.eq.s32.totalorder %s76, 0
      %p707 = por %p705, %p706
      %p708 = scmp.ne.s32.totalorder %s694, %s695
      %p709 = scmp.eq.s32.totalorder %s77, 1
      %p710 = por %p708, %p709
      %p712 = scmp.ne.s32.totalorder %s695, %s711
      %p713 = scmp.eq.s32.totalorder %s77, 0
      %p714 = por %p712, %p713
      %s715 = ssub.s32 %s79, %s86
      %p716 = scmp.eq.s32.totalorder %s715, 0
      %s718 = sadd.s32 %s717, 1
      %s719 = scalar_select %p716, %s717, %s718
      %p722 = pneg %p716
      %p723 = scmp.eq.s32.totalorder %s71, 1
      %p724 = por %p722, %p723
      %p725 = scmp.ne.s32.totalorder %s717, %s720
      %p726 = scmp.eq.s32.totalorder %s71, 0
      %p727 = por %p725, %p726
      %p728 = scmp.ne.s32.totalorder %s717, %s720
      %p729 = scmp.eq.s32.totalorder %s76, 1
      %p730 = por %p728, %p729
      %p731 = scmp.ne.s32.totalorder %s720, %s721
      %p732 = scmp.eq.s32.totalorder %s76, 0
      %p733 = por %p731, %p732
      %p734 = scmp.ne.s32.totalorder %s720, %s721
      %p735 = scmp.eq.s32.totalorder %s77, 1
      %p736 = por %p734, %p735
      %p738 = scmp.ne.s32.totalorder %s721, %s737
      %p739 = scmp.eq.s32.totalorder %s77, 0
      %p740 = por %p738, %p739
      %s741 = ssub.s32 %s79, %s86
      %p742 = scmp.eq.s32.totalorder %s741, 0
      %s744 = sadd.s32 %s743, 1
      %s745 = scalar_select %p742, %s743, %s744
      %p748 = pneg %p742
      %p749 = scmp.eq.s32.totalorder %s71, 1
      %p750 = por %p748, %p749
      %p751 = scmp.ne.s32.totalorder %s743, %s746
      %p752 = scmp.eq.s32.totalorder %s71, 0
      %p753 = por %p751, %p752
      %p754 = scmp.ne.s32.totalorder %s743, %s746
      %p755 = scmp.eq.s32.totalorder %s76, 1
      %p756 = por %p754, %p755
      %p757 = scmp.ne.s32.totalorder %s746, %s747
      %p758 = scmp.eq.s32.totalorder %s76, 0
      %p759 = por %p757, %p758
      %p760 = scmp.ne.s32.totalorder %s746, %s747
      %p761 = scmp.eq.s32.totalorder %s77, 1
      %p762 = por %p760, %p761
      %p764 = scmp.ne.s32.totalorder %s747, %s763
      %p765 = scmp.eq.s32.totalorder %s77, 0
      %p766 = por %p764, %p765
      %s767 = ssub.s32 %s79, %s86
      %p768 = scmp.eq.s32.totalorder %s767, 0
      %s770 = sadd.s32 %s769, 1
      %s771 = scalar_select %p768, %s769, %s770
      %p774 = pneg %p768
      %p775 = scmp.eq.s32.totalorder %s71, 1
      %p776 = por %p774, %p775
      %p777 = scmp.ne.s32.totalorder %s769, %s772
      %p778 = scmp.eq.s32.totalorder %s71, 0
      %p779 = por %p777, %p778
      %p780 = scmp.ne.s32.totalorder %s769, %s772
      %p781 = scmp.eq.s32.totalorder %s76, 1
      %p782 = por %p780, %p781
      %p783 = scmp.ne.s32.totalorder %s772, %s773
      %p784 = scmp.eq.s32.totalorder %s76, 0
      %p785 = por %p783, %p784
      %p786 = scmp.ne.s32.totalorder %s772, %s773
      %p787 = scmp.eq.s32.totalorder %s77, 1
      %p788 = por %p786, %p787
      %p790 = scmp.ne.s32.totalorder %s773, %s789
      %p791 = scmp.eq.s32.totalorder %s77, 0
      %p792 = por %p790, %p791
      %s793 = ssub.s32 %s79, %s86
      %p794 = scmp.eq.s32.totalorder %s793, 0
      %s796 = sadd.s32 %s795, 1
      %s797 = scalar_select %p794, %s795, %s796
      %p800 = pneg %p794
      %p801 = scmp.eq.s32.totalorder %s71, 1
      %p802 = por %p800, %p801
      %p803 = scmp.ne.s32.totalorder %s795, %s798
      %p804 = scmp.eq.s32.totalorder %s71, 0
      %p805 = por %p803, %p804
      %p806 = scmp.ne.s32.totalorder %s795, %s798
      %p807 = scmp.eq.s32.totalorder %s76, 1
      %p808 = por %p806, %p807
      %p809 = scmp.ne.s32.totalorder %s798, %s799
      %p810 = scmp.eq.s32.totalorder %s76, 0
      %p811 = por %p809, %p810
      %p812 = scmp.ne.s32.totalorder %s798, %s799
      %p813 = scmp.eq.s32.totalorder %s77, 1
      %p814 = por %p812, %p813
      %p816 = scmp.ne.s32.totalorder %s799, %s815
      %p817 = scmp.eq.s32.totalorder %s77, 0
      %p818 = por %p816, %p817
      %s820 = sadd.s32 %s819, 1
      %p823 = scmp.eq.s32.totalorder %s71, 1
      %p824 = scmp.ne.s32.totalorder %s819, %s821
      %p825 = scmp.eq.s32.totalorder %s71, 0
      %p826 = por %p824, %p825
      %p827 = scmp.ne.s32.totalorder %s819, %s821
      %p828 = scmp.eq.s32.totalorder %s76, 1
      %p829 = por %p827, %p828
      %p830 = scmp.ne.s32.totalorder %s821, %s822
      %p831 = scmp.eq.s32.totalorder %s76, 0
      %p832 = por %p830, %p831
      %p833 = scmp.ne.s32.totalorder %s821, %s822
      %p834 = scmp.eq.s32.totalorder %s77, 1
      %p835 = por %p833, %p834
      %p837 = scmp.ne.s32.totalorder %s822, %s836
      %p838 = scmp.eq.s32.totalorder %s77, 0
      %p839 = por %p837, %p838
      %s841 = sadd.s32 %s840, 1
      %p844 = scmp.eq.s32.totalorder %s71, 1
      %p845 = scmp.ne.s32.totalorder %s840, %s842
      %p846 = scmp.eq.s32.totalorder %s71, 0
      %p847 = por %p845, %p846
      %p848 = scmp.ne.s32.totalorder %s840, %s842
      %p849 = scmp.eq.s32.totalorder %s76, 1
      %p850 = por %p848, %p849
      %p851 = scmp.ne.s32.totalorder %s842, %s843
      %p852 = scmp.eq.s32.totalorder %s76, 0
      %p853 = por %p851, %p852
      %p854 = scmp.ne.s32.totalorder %s842, %s843
      %p855 = scmp.eq.s32.totalorder %s77, 1
      %p856 = por %p854, %p855
      %p858 = scmp.ne.s32.totalorder %s843, %s857
      %p859 = scmp.eq.s32.totalorder %s77, 0
      %p860 = por %p858, %p859
      %s861 = ssub.s32 %s78, %s90
      %p862 = scmp.eq.s32.totalorder %s861, 0
      %s864 = sadd.s32 %s863, 1
      %s865 = scalar_select %p862, %s863, %s864
      %p868 = pneg %p862
      %p869 = scmp.eq.s32.totalorder %s71, 1
      %p870 = por %p868, %p869
      %p871 = scmp.ne.s32.totalorder %s863, %s866
      %p872 = scmp.eq.s32.totalorder %s71, 0
      %p873 = por %p871, %p872
      %p874 = scmp.ne.s32.totalorder %s863, %s866
      %p875 = scmp.eq.s32.totalorder %s76, 1
      %p876 = por %p874, %p875
      %p877 = scmp.ne.s32.totalorder %s866, %s867
      %p878 = scmp.eq.s32.totalorder %s76, 0
      %p879 = por %p877, %p878
      %p880 = scmp.ne.s32.totalorder %s866, %s867
      %p881 = scmp.eq.s32.totalorder %s77, 1
      %p882 = por %p880, %p881
      %p884 = scmp.ne.s32.totalorder %s867, %s883
      %p885 = scmp.eq.s32.totalorder %s77, 0
      %p886 = por %p884, %p885
      %p887 = scmp.le.s32.totalorder 1, %s71
      %p888 = scmp.lt.s32.totalorder %s71, 3
      %p889 = pnand %p887, %p888
      %p890 = pneg %p889
      // Predicated region
      $region9: #{tpu_custom_call.1} parent=5 // pred_check
        _
      $region10: #{tpu_custom_call.1} parent=5 // pred_check_branch
        %892 = sbr.rel (%p889) target = $region12
      $region11: #{tpu_custom_call.1} parent=5 // pred_region
        %s893 = ssub.s32 %s71, 1
        // Predicated region
        $region13: #{tpu_custom_call.1} parent=11 // pred_check
          %p894 = pneg %p109
        $region14: #{tpu_custom_call.1} parent=11 // pred_check_branch
          %896 = sbr.rel (%p894) target = $region16
        $region15: #{tpu_custom_call.1} parent=11 // pred_region
          %s897 = smul.u32 2, %s80
          %s899 = ssub.s32 256, 256
          %900 = vsyncadd [#allocation4], %s899
          %s901 = smul.addr %s897, 128
          %s902 = scalar_lea.hbm %s1, %s901
          %s903 = sshll.u32 [#allocation3], 4
          %s904 = int_to_ptr.vmem [resolvable:$true] %s903
          %909 = dma.hbm_to_vmem [thread:$0]  %s902, 256, %s904, [#allocation4], 128, 128, 8
        $region16: #{tpu_custom_call.1} parent=11 // pred_fallthru
          _
        // Predicated region
        $region17: #{tpu_custom_call.1} parent=11 // pred_check
          %p910 = pneg %p135
        $region18: #{tpu_custom_call.1} parent=11 // pred_check_branch
          %912 = sbr.rel (%p910) target = $region20
        $region19: #{tpu_custom_call.1} parent=11 // pred_region
          %s913 = smul.u32 2, %s80
          %s915 = ssub.s32 256, 256
          %916 = vsyncadd [#allocation7], %s915
          %s917 = smul.addr %s913, 128
          %s918 = scalar_lea.hbm %s3, %s917
          %s919 = sshll.u32 [#allocation6], 4
          %s920 = int_to_ptr.vmem [resolvable:$true] %s919
          %925 = dma.hbm_to_vmem [thread:$0]  %s918, 256, %s920, [#allocation7], 128, 128, 8
        $region20: #{tpu_custom_call.1} parent=11 // pred_fallthru
          _
        // Predicated region
        $region21: #{tpu_custom_call.1} parent=11 // pred_check
          %p926 = pneg %p161
        $region22: #{tpu_custom_call.1} parent=11 // pred_check_branch
          %928 = sbr.rel (%p926) target = $region24
        $region23: #{tpu_custom_call.1} parent=11 // pred_region
          %s929 = smul.u32 4, %s80
          %s931 = ssub.s32 256, 256
          %932 = vsyncadd [#allocation7], %s931
          %s933 = smul.addr %s929, 64
          %s934 = scalar_lea.hbm %s5, %s933
          %s935 = sshll.u32 [#allocation8], 4
          %s936 = int_to_ptr.vmem [resolvable:$true] %s935
          %941 = dma.hbm_to_vmem [thread:$0]  %s934, 256, %s936, [#allocation7], 64, 64, 4
        $region24: #{tpu_custom_call.1} parent=11 // pred_fallthru
          _
        // Predicated region
        $region25: #{tpu_custom_call.1} parent=11 // pred_check
          %p942 = pneg %p187
        $region26: #{tpu_custom_call.1} parent=11 // pred_check_branch
          %944 = sbr.rel (%p942) target = $region28
        $region27: #{tpu_custom_call.1} parent=11 // pred_region
          %s945 = smul.u32 4, %s80
          %s947 = ssub.s32 256, 256
          %948 = vsyncadd [#allocation10], %s947
          %s949 = smul.addr %s945, 64
          %s950 = scalar_lea.hbm %s7, %s949
          %s951 = sshll.u32 [#allocation9], 4
          %s952 = int_to_ptr.vmem [resolvable:$true] %s951
          %957 = dma.hbm_to_vmem [thread:$0]  %s950, 256, %s952, [#allocation10], 64, 64, 4
        $region28: #{tpu_custom_call.1} parent=11 // pred_fallthru
          _
        // Predicated region
        $region29: #{tpu_custom_call.1} parent=11 // pred_check
          %p958 = pneg %p832
        $region30: #{tpu_custom_call.1} parent=11 // pred_check_branch
          %960 = sbr.rel (%p958) target = $region32
        $region31: #{tpu_custom_call.1} parent=11 // pred_region
          _
        $region32: #{tpu_custom_call.1} parent=11 // pred_fallthru
          _
        // Predicated region
        $region33: #{tpu_custom_call.1} parent=11 // pred_check
          %p961 = pneg %p853
        $region34: #{tpu_custom_call.1} parent=11 // pred_check_branch
          %963 = sbr.rel (%p961) target = $region36
        $region35: #{tpu_custom_call.1} parent=11 // pred_region
          _
        $region36: #{tpu_custom_call.1} parent=11 // pred_fallthru
          _
      $region12: #{tpu_custom_call.1} parent=5 // pred_fallthru
        _
      %p964 = scmp.lt.s32.totalorder %s71, 2
      // Predicated region
      $region37: #{tpu_custom_call.1} parent=5 // pred_check
        %p965 = pneg %p964
      $region38: #{tpu_custom_call.1} parent=5 // pred_check_branch
        %967 = sbr.rel (%p965) target = $region40
      $region39: #{tpu_custom_call.1} parent=5 // pred_region
        // Predicated region
        $region41: #{tpu_custom_call.1} parent=39 // pred_check
          %p968 = pneg %p207
        $region42: #{tpu_custom_call.1} parent=39 // pred_check_branch
          %970 = sbr.rel (%p968) target = $region44
        $region43: #{tpu_custom_call.1} parent=39 // pred_region
          %p971 = scmp.lt.s32.totalorder %s79, 1
          %s972 = scalar_select %p971, %s79, 1
          %s973 = smul.addr %s972, 4
          %s974 = smul.addr %s973, 4
          %s975 = scalar_lea.vmem %s9, %s974
        $region44: #{tpu_custom_call.1} parent=39 // pred_fallthru
          _
        // Predicated region
        $region45: #{tpu_custom_call.1} parent=39 // pred_check
          %p976 = pneg %p233
        $region46: #{tpu_custom_call.1} parent=39 // pred_check_branch
          %978 = sbr.rel (%p976) target = $region48
        $region47: #{tpu_custom_call.1} parent=39 // pred_region
          %p979 = scmp.lt.s32.totalorder %s79, 1
          %s980 = scalar_select %p979, %s79, 1
          %s981 = scalar_lea.vmem %s11, %s980
        $region48: #{tpu_custom_call.1} parent=39 // pred_fallthru
          _
        // Predicated region
        $region49: #{tpu_custom_call.1} parent=39 // pred_check
          %p982 = pneg %p259
        $region50: #{tpu_custom_call.1} parent=39 // pred_check_branch
          %984 = sbr.rel (%p982) target = $region52
        $region51: #{tpu_custom_call.1} parent=39 // pred_region
          %p985 = scmp.lt.s32.totalorder %s79, 1
          %s986 = scalar_select %p985, %s79, 1
          %s987 = smul.addr %s986, 4
          %s988 = smul.addr %s987, 4
          %s989 = scalar_lea.vmem %s13, %s988
        $region52: #{tpu_custom_call.1} parent=39 // pred_fallthru
          _
        // Predicated region
        $region53: #{tpu_custom_call.1} parent=39 // pred_check
          %p990 = pneg %p285
        $region54: #{tpu_custom_call.1} parent=39 // pred_check_branch
          %992 = sbr.rel (%p990) target = $region56
        $region55: #{tpu_custom_call.1} parent=39 // pred_region
          %p993 = scmp.lt.s32.totalorder %s79, 1
          %s994 = scalar_select %p993, %s79, 1
          %s995 = scalar_lea.vmem %s15, %s994
        $region56: #{tpu_custom_call.1} parent=39 // pred_fallthru
          _
        // Predicated region
        $region57: #{tpu_custom_call.1} parent=39 // pred_check
          %p996 = pneg %p311
        $region58: #{tpu_custom_call.1} parent=39 // pred_check_branch
          %998 = sbr.rel (%p996) target = $region60
        $region59: #{tpu_custom_call.1} parent=39 // pred_region
          %p999 = scmp.lt.s32.totalorder %s79, 1
          %s1000 = scalar_select %p999, %s79, 1
          %s1001 = smul.addr %s1000, 8
          %s1002 = smul.addr %s1001, 2
          %s1003 = scalar_lea.vmem %s17, %s1002
        $region60: #{tpu_custom_call.1} parent=39 // pred_fallthru
          _
        // Predicated region
        $region61: #{tpu_custom_call.1} parent=39 // pred_check
          %p1004 = pneg %p337
        $region62: #{tpu_custom_call.1} parent=39 // pred_check_branch
          %1006 = sbr.rel (%p1004) target = $region64
        $region63: #{tpu_custom_call.1} parent=39 // pred_region
          %s1007 = sand.u32 %s71, 1
          %s1008 = scalar_lea.sflag [#allocation4], %s1007
          %s1009 = sand.u32 %s327, 1
          %s1010 = scalar_lea.vmem [#allocation11], %s1009
          %s1012 = ssub.s32 16, 16
          %1013 = vsyncadd %s1008, %s1012
          %s1014 = smul.addr %s79, 16
          %s1015 = scalar_lea.hbm %s19, %s1014
          %s1017 = sshll.u32 %s1010, 4
          %s1018 = int_to_ptr.vmem [resolvable:$true] %s1017
          %1020 = dma.hbm_to_vmem [thread:$0]  %s1015, 16, %s1018, %s1008
        $region64: #{tpu_custom_call.1} parent=39 // pred_fallthru
          _
        // Predicated region
        $region65: #{tpu_custom_call.1} parent=39 // pred_check
          %p1021 = pneg %p363
        $region66: #{tpu_custom_call.1} parent=39 // pred_check_branch
          %1023 = sbr.rel (%p1021) target = $region68
        $region67: #{tpu_custom_call.1} parent=39 // pred_region
          %s1024 = sand.u32 %s71, 1
          %s1025 = scalar_lea.sflag [#allocation4], %s1024
          %s1026 = sand.u32 %s353, 1
          %s1027 = smul.addr %s1026, 16
          %s1028 = scalar_lea.vmem [#allocation12], %s1027
          %s1030 = ssub.s32 256, 256
          %1031 = vsyncadd %s1025, %s1030
          %s1032 = smul.addr %s79, 4
          %s1033 = smul.addr %s1032, 64
          %s1034 = scalar_lea.hbm %s21, %s1033
          %s1035 = sshll.u32 %s1028, 4
          %s1036 = int_to_ptr.vmem [resolvable:$true] %s1035
          %1041 = dma.hbm_to_vmem [thread:$0]  %s1034, 256, %s1036, %s1025, 64, 64, 4
        $region68: #{tpu_custom_call.1} parent=39 // pred_fallthru
          _
        // Predicated region
        $region69: #{tpu_custom_call.1} parent=39 // pred_check
          %p1042 = pneg %p389
        $region70: #{tpu_custom_call.1} parent=39 // pred_check_branch
          %1044 = sbr.rel (%p1042) target = $region72
        $region71: #{tpu_custom_call.1} parent=39 // pred_region
          %s1045 = sand.u32 %s71, 1
          %s1046 = scalar_lea.sflag [#allocation4], %s1045
          %s1047 = sand.u32 %s379, 1
          %s1048 = scalar_lea.vmem [#allocation13], %s1047
          %s1050 = ssub.s32 16, 16
          %1051 = vsyncadd %s1046, %s1050
          %s1052 = smul.addr %s79, 16
          %s1053 = scalar_lea.hbm %s23, %s1052
          %s1055 = sshll.u32 %s1048, 4
          %s1056 = int_to_ptr.vmem [resolvable:$true] %s1055
          %1058 = dma.hbm_to_vmem [thread:$0]  %s1053, 16, %s1056, %s1046
        $region72: #{tpu_custom_call.1} parent=39 // pred_fallthru
          _
        // Predicated region
        $region73: #{tpu_custom_call.1} parent=39 // pred_check
          %p1059 = pneg %p415
        $region74: #{tpu_custom_call.1} parent=39 // pred_check_branch
          %1061 = sbr.rel (%p1059) target = $region76
        $region75: #{tpu_custom_call.1} parent=39 // pred_region
          %s1062 = sand.u32 %s71, 1
          %s1063 = scalar_lea.sflag [#allocation4], %s1062
          %s1064 = sand.u32 %s405, 1
          %s1065 = smul.addr %s1064, 16
          %s1066 = scalar_lea.vmem [#allocation14], %s1065
          %s1068 = ssub.s32 256, 256
          %1069 = vsyncadd %s1063, %s1068
          %s1070 = smul.addr %s79, 4
          %s1071 = smul.addr %s1070, 64
          %s1072 = scalar_lea.hbm %s25, %s1071
          %s1073 = sshll.u32 %s1066, 4
          %s1074 = int_to_ptr.vmem [resolvable:$true] %s1073
          %1079 = dma.hbm_to_vmem [thread:$0]  %s1072, 256, %s1074, %s1063, 64, 64, 4
        $region76: #{tpu_custom_call.1} parent=39 // pred_fallthru
          _
        // Predicated region
        $region77: #{tpu_custom_call.1} parent=39 // pred_check
          %p1080 = pneg %p441
        $region78: #{tpu_custom_call.1} parent=39 // pred_check_branch
          %1082 = sbr.rel (%p1080) target = $region80
        $region79: #{tpu_custom_call.1} parent=39 // pred_region
          %s1083 = sand.u32 %s71, 1
          %s1084 = scalar_lea.sflag [#allocation4], %s1083
          %s1085 = sand.u32 %s431, 1
          %s1086 = scalar_lea.vmem [#allocation15], %s1085
          %s1088 = ssub.s32 16, 16
          %1089 = vsyncadd %s1084, %s1088
          %s1090 = smul.addr %s79, 16
          %s1091 = scalar_lea.hbm %s27, %s1090
          %s1093 = sshll.u32 %s1086, 4
          %s1094 = int_to_ptr.vmem [resolvable:$true] %s1093
          %1096 = dma.hbm_to_vmem [thread:$0]  %s1091, 16, %s1094, %s1084
        $region80: #{tpu_custom_call.1} parent=39 // pred_fallthru
          _
        // Predicated region
        $region81: #{tpu_custom_call.1} parent=39 // pred_check
          %p1097 = pneg %p467
        $region82: #{tpu_custom_call.1} parent=39 // pred_check_branch
          %1099 = sbr.rel (%p1097) target = $region84
        $region83: #{tpu_custom_call.1} parent=39 // pred_region
          %s1100 = sand.u32 %s71, 1
          %s1101 = scalar_lea.sflag [#allocation4], %s1100
          %s1102 = sand.u32 %s457, 1
          %s1103 = smul.addr %s1102, 16
          %s1104 = scalar_lea.vmem [#allocation16], %s1103
          %s1106 = ssub.s32 256, 256
          %1107 = vsyncadd %s1101, %s1106
          %s1108 = smul.addr %s79, 4
          %s1109 = smul.addr %s1108, 64
          %s1110 = scalar_lea.hbm %s29, %s1109
          %s1111 = sshll.u32 %s1104, 4
          %s1112 = int_to_ptr.vmem [resolvable:$true] %s1111
          %1117 = dma.hbm_to_vmem [thread:$0]  %s1110, 256, %s1112, %s1101, 64, 64, 4
        $region84: #{tpu_custom_call.1} parent=39 // pred_fallthru
          _
        // Predicated region
        $region85: #{tpu_custom_call.1} parent=39 // pred_check
          %p1118 = pneg %p493
        $region86: #{tpu_custom_call.1} parent=39 // pred_check_branch
          %1120 = sbr.rel (%p1118) target = $region88
        $region87: #{tpu_custom_call.1} parent=39 // pred_region
          %s1121 = sand.u32 %s71, 1
          %s1122 = scalar_lea.sflag [#allocation4], %s1121
          %s1123 = sand.u32 %s483, 1
          %s1124 = scalar_lea.vmem [#allocation17], %s1123
          %s1126 = ssub.s32 16, 16
          %1127 = vsyncadd %s1122, %s1126
          %s1128 = smul.addr %s79, 16
          %s1129 = scalar_lea.hbm %s31, %s1128
          %s1131 = sshll.u32 %s1124, 4
          %s1132 = int_to_ptr.vmem [resolvable:$true] %s1131
          %1134 = dma.hbm_to_vmem [thread:$0]  %s1129, 16, %s1132, %s1122
        $region88: #{tpu_custom_call.1} parent=39 // pred_fallthru
          _
        // Predicated region
        $region89: #{tpu_custom_call.1} parent=39 // pred_check
          %p1135 = pneg %p519
        $region90: #{tpu_custom_call.1} parent=39 // pred_check_branch
          %1137 = sbr.rel (%p1135) target = $region92
        $region91: #{tpu_custom_call.1} parent=39 // pred_region
          %s1138 = sand.u32 %s71, 1
          %s1139 = scalar_lea.sflag [#allocation4], %s1138
          %s1140 = sand.u32 %s509, 1
          %s1141 = smul.addr %s1140, 16
          %s1142 = scalar_lea.vmem [#allocation18], %s1141
          %s1144 = ssub.s32 256, 256
          %1145 = vsyncadd %s1139, %s1144
          %s1146 = smul.addr %s79, 8
          %s1147 = smul.addr %s1146, 32
          %s1148 = scalar_lea.hbm %s33, %s1147
          %s1149 = sshll.u32 %s1142, 4
          %s1150 = int_to_ptr.vmem [resolvable:$true] %s1149
          %1155 = dma.hbm_to_vmem [thread:$0]  %s1148, 256, %s1150, %s1139, 32, 32, 2
        $region92: #{tpu_custom_call.1} parent=39 // pred_fallthru
          _
        // Predicated region
        $region93: #{tpu_custom_call.1} parent=39 // pred_check
          %p1156 = pneg %p545
        $region94: #{tpu_custom_call.1} parent=39 // pred_check_branch
          %1158 = sbr.rel (%p1156) target = $region96
        $region95: #{tpu_custom_call.1} parent=39 // pred_region
          %s1159 = sand.u32 %s71, 1
          %s1160 = scalar_lea.sflag [#allocation4], %s1159
          %s1161 = sand.u32 %s535, 1
          %s1162 = scalar_lea.vmem [#allocation19], %s1161
          %s1164 = ssub.s32 16, 16
          %1165 = vsyncadd %s1160, %s1164
          %s1166 = smul.addr %s79, 16
          %s1167 = scalar_lea.hbm %s35, %s1166
          %s1169 = sshll.u32 %s1162, 4
          %s1170 = int_to_ptr.vmem [resolvable:$true] %s1169
          %1172 = dma.hbm_to_vmem [thread:$0]  %s1167, 16, %s1170, %s1160
        $region96: #{tpu_custom_call.1} parent=39 // pred_fallthru
          _
        // Predicated region
        $region97: #{tpu_custom_call.1} parent=39 // pred_check
          %p1173 = pneg %p571
        $region98: #{tpu_custom_call.1} parent=39 // pred_check_branch
          %1175 = sbr.rel (%p1173) target = $region100
        $region99: #{tpu_custom_call.1} parent=39 // pred_region
          %s1176 = sand.u32 %s71, 1
          %s1177 = scalar_lea.sflag [#allocation4], %s1176
          %s1178 = sand.u32 %s561, 1
          %s1179 = smul.addr %s1178, 16
          %s1180 = scalar_lea.vmem [#allocation20], %s1179
          %s1182 = ssub.s32 256, 256
          %1183 = vsyncadd %s1177, %s1182
          %s1184 = smul.addr %s79, 4
          %s1185 = smul.addr %s1184, 64
          %s1186 = scalar_lea.hbm %s37, %s1185
          %s1187 = sshll.u32 %s1180, 4
          %s1188 = int_to_ptr.vmem [resolvable:$true] %s1187
          %1193 = dma.hbm_to_vmem [thread:$0]  %s1186, 256, %s1188, %s1177, 64, 64, 4
        $region100: #{tpu_custom_call.1} parent=39 // pred_fallthru
          _
        // Predicated region
        $region101: #{tpu_custom_call.1} parent=39 // pred_check
          %p1194 = pneg %p597
        $region102: #{tpu_custom_call.1} parent=39 // pred_check_branch
          %1196 = sbr.rel (%p1194) target = $region104
        $region103: #{tpu_custom_call.1} parent=39 // pred_region
          %s1197 = sand.u32 %s71, 1
          %s1198 = scalar_lea.sflag [#allocation4], %s1197
          %s1199 = sand.u32 %s587, 1
          %s1200 = scalar_lea.vmem [#allocation21], %s1199
          %s1202 = ssub.s32 16, 16
          %1203 = vsyncadd %s1198, %s1202
          %s1204 = smul.addr %s79, 16
          %s1205 = scalar_lea.hbm %s39, %s1204
          %s1207 = sshll.u32 %s1200, 4
          %s1208 = int_to_ptr.vmem [resolvable:$true] %s1207
          %1210 = dma.hbm_to_vmem [thread:$0]  %s1205, 16, %s1208, %s1198
        $region104: #{tpu_custom_call.1} parent=39 // pred_fallthru
          _
        // Predicated region
        $region105: #{tpu_custom_call.1} parent=39 // pred_check
          %p1211 = pneg %p623
        $region106: #{tpu_custom_call.1} parent=39 // pred_check_branch
          %1213 = sbr.rel (%p1211) target = $region108
        $region107: #{tpu_custom_call.1} parent=39 // pred_region
          %p1214 = scmp.lt.s32.totalorder %s79, 1
          %s1215 = scalar_select %p1214, %s79, 1
          %s1216 = smul.addr %s1215, 8
          %s1217 = smul.addr %s1216, 4
          %s1218 = scalar_lea.vmem %s41, %s1217
        $region108: #{tpu_custom_call.1} parent=39 // pred_fallthru
          _
        // Predicated region
        $region109: #{tpu_custom_call.1} parent=39 // pred_check
          %p1219 = pneg %p649
        $region110: #{tpu_custom_call.1} parent=39 // pred_check_branch
          %1221 = sbr.rel (%p1219) target = $region112
        $region111: #{tpu_custom_call.1} parent=39 // pred_region
          %p1222 = scmp.lt.s32.totalorder %s79, 1
          %s1223 = scalar_select %p1222, %s79, 1
          %s1224 = scalar_lea.vmem %s43, %s1223
        $region112: #{tpu_custom_call.1} parent=39 // pred_fallthru
          _
        // Predicated region
        $region113: #{tpu_custom_call.1} parent=39 // pred_check
          %p1225 = pneg %p675
        $region114: #{tpu_custom_call.1} parent=39 // pred_check_branch
          %1227 = sbr.rel (%p1225) target = $region116
        $region115: #{tpu_custom_call.1} parent=39 // pred_region
          %p1228 = scmp.lt.s32.totalorder %s79, 1
          %s1229 = scalar_select %p1228, %s79, 1
          %s1230 = scalar_lea.vmem %s45, %s1229
        $region116: #{tpu_custom_call.1} parent=39 // pred_fallthru
          _
        // Predicated region
        $region117: #{tpu_custom_call.1} parent=39 // pred_check
          %p1231 = pneg %p701
        $region118: #{tpu_custom_call.1} parent=39 // pred_check_branch
          %1233 = sbr.rel (%p1231) target = $region120
        $region119: #{tpu_custom_call.1} parent=39 // pred_region
          %p1234 = scmp.lt.s32.totalorder %s79, 1
          %s1235 = scalar_select %p1234, %s79, 1
          %s1236 = scalar_lea.vmem %s47, %s1235
        $region120: #{tpu_custom_call.1} parent=39 // pred_fallthru
          _
        // Predicated region
        $region121: #{tpu_custom_call.1} parent=39 // pred_check
          %p1237 = pneg %p727
        $region122: #{tpu_custom_call.1} parent=39 // pred_check_branch
          %1239 = sbr.rel (%p1237) target = $region124
        $region123: #{tpu_custom_call.1} parent=39 // pred_region
          %s1240 = sand.u32 %s71, 1
          %s1241 = scalar_lea.sflag [#allocation4], %s1240
          %s1242 = sand.u32 %s717, 1
          %s1243 = scalar_lea.vmem [#allocation22], %s1242
          %s1245 = ssub.s32 16, 16
          %1246 = vsyncadd %s1241, %s1245
          %s1247 = smul.addr %s79, 16
          %s1248 = scalar_lea.hbm %s49, %s1247
          %s1250 = sshll.u32 %s1243, 4
          %s1251 = int_to_ptr.vmem [resolvable:$true] %s1250
          %1253 = dma.hbm_to_vmem [thread:$0]  %s1248, 16, %s1251, %s1241
        $region124: #{tpu_custom_call.1} parent=39 // pred_fallthru
          _
        // Predicated region
        $region125: #{tpu_custom_call.1} parent=39 // pred_check
          %p1254 = pneg %p753
        $region126: #{tpu_custom_call.1} parent=39 // pred_check_branch
          %1256 = sbr.rel (%p1254) target = $region128
        $region127: #{tpu_custom_call.1} parent=39 // pred_region
          %p1257 = scmp.lt.s32.totalorder %s79, 1
          %s1258 = scalar_select %p1257, %s79, 1
          %s1259 = scalar_lea.vmem %s51, %s1258
        $region128: #{tpu_custom_call.1} parent=39 // pred_fallthru
          _
        // Predicated region
        $region129: #{tpu_custom_call.1} parent=39 // pred_check
          %p1260 = pneg %p779
        $region130: #{tpu_custom_call.1} parent=39 // pred_check_branch
          %1262 = sbr.rel (%p1260) target = $region132
        $region131: #{tpu_custom_call.1} parent=39 // pred_region
          %p1263 = scmp.lt.s32.totalorder %s79, 1
          %s1264 = scalar_select %p1263, %s79, 1
          %s1265 = scalar_lea.vmem %s53, %s1264
        $region132: #{tpu_custom_call.1} parent=39 // pred_fallthru
          _
        // Predicated region
        $region133: #{tpu_custom_call.1} parent=39 // pred_check
          %p1266 = pneg %p805
        $region134: #{tpu_custom_call.1} parent=39 // pred_check_branch
          %1268 = sbr.rel (%p1266) target = $region136
        $region135: #{tpu_custom_call.1} parent=39 // pred_region
          %p1269 = scmp.lt.s32.totalorder %s79, 1
          %s1270 = scalar_select %p1269, %s79, 1
          %s1271 = scalar_lea.vmem %s55, %s1270
        $region136: #{tpu_custom_call.1} parent=39 // pred_fallthru
          _
      $region40: #{tpu_custom_call.1} parent=5 // pred_fallthru
        _
      %p1272 = scmp.le.s32.totalorder 1, %s71
      %p1273 = scmp.lt.s32.totalorder %s71, 3
      %p1274 = pnand %p1272, %p1273
      %p1275 = pneg %p1274
      // Predicated region
      $region137: #{tpu_custom_call.1} parent=5 // pred_check
        _
      $region138: #{tpu_custom_call.1} parent=5 // pred_check_branch
        %1277 = sbr.rel (%p1274) target = $region140
      $region139: #{tpu_custom_call.1} parent=5 // pred_region
        %s1278 = ssub.s32 %s71, 1
        // Predicated region
        $region141: #{tpu_custom_call.1} parent=139 // pred_check
          %p1279 = pneg %p109
        $region142: #{tpu_custom_call.1} parent=139 // pred_check_branch
          %1281 = sbr.rel (%p1279) target = $region144
        $region143: #{tpu_custom_call.1} parent=139 // pred_region
          %1282 = dma.done [#allocation4], 256
        $region144: #{tpu_custom_call.1} parent=139 // pred_fallthru
          _
        // Predicated region
        $region145: #{tpu_custom_call.1} parent=139 // pred_check
          %p1283 = pneg %p135
        $region146: #{tpu_custom_call.1} parent=139 // pred_check_branch
          %1285 = sbr.rel (%p1283) target = $region148
        $region147: #{tpu_custom_call.1} parent=139 // pred_region
          %1286 = dma.done [#allocation7], 256
        $region148: #{tpu_custom_call.1} parent=139 // pred_fallthru
          _
        // Predicated region
        $region149: #{tpu_custom_call.1} parent=139 // pred_check
          %p1287 = pneg %p161
        $region150: #{tpu_custom_call.1} parent=139 // pred_check_branch
          %1289 = sbr.rel (%p1287) target = $region152
        $region151: #{tpu_custom_call.1} parent=139 // pred_region
          %1290 = dma.done [#allocation7], 256
        $region152: #{tpu_custom_call.1} parent=139 // pred_fallthru
          _
        // Predicated region
        $region153: #{tpu_custom_call.1} parent=139 // pred_check
          %p1291 = pneg %p187
        $region154: #{tpu_custom_call.1} parent=139 // pred_check_branch
          %1293 = sbr.rel (%p1291) target = $region156
        $region155: #{tpu_custom_call.1} parent=139 // pred_region
          %1294 = dma.done [#allocation10], 256
        $region156: #{tpu_custom_call.1} parent=139 // pred_fallthru
          _
        %s1295 = sand.u32 %s76, 1
        %s1296 = scalar_lea.sflag [#allocation4], %s1295
        %s1297 = sand.u32 %s330, 1
        %s1298 = scalar_lea.vmem [#allocation11], %s1297
        // Predicated region
        $region157: #{tpu_custom_call.1} parent=139 // pred_check
          %p1299 = pneg %p343
        $region158: #{tpu_custom_call.1} parent=139 // pred_check_branch
          %1301 = sbr.rel (%p1299) target = $region160
        $region159: #{tpu_custom_call.1} parent=139 // pred_region
          %1302 = dma.done %s1296, 16
        $region160: #{tpu_custom_call.1} parent=139 // pred_fallthru
          _
        %s1303 = sand.u32 %s76, 1
        %s1304 = scalar_lea.sflag [#allocation4], %s1303
        %s1305 = sand.u32 %s356, 1
        %s1306 = smul.addr %s1305, 16
        %s1307 = scalar_lea.vmem [#allocation12], %s1306
        // Predicated region
        $region161: #{tpu_custom_call.1} parent=139 // pred_check
          %p1308 = pneg %p369
        $region162: #{tpu_custom_call.1} parent=139 // pred_check_branch
          %1310 = sbr.rel (%p1308) target = $region164
        $region163: #{tpu_custom_call.1} parent=139 // pred_region
          %1311 = dma.done %s1304, 256
        $region164: #{tpu_custom_call.1} parent=139 // pred_fallthru
          _
        %s1312 = sand.u32 %s76, 1
        %s1313 = scalar_lea.sflag [#allocation4], %s1312
        %s1314 = sand.u32 %s382, 1
        %s1315 = scalar_lea.vmem [#allocation13], %s1314
        // Predicated region
        $region165: #{tpu_custom_call.1} parent=139 // pred_check
          %p1316 = pneg %p395
        $region166: #{tpu_custom_call.1} parent=139 // pred_check_branch
          %1318 = sbr.rel (%p1316) target = $region168
        $region167: #{tpu_custom_call.1} parent=139 // pred_region
          %1319 = dma.done %s1313, 16
        $region168: #{tpu_custom_call.1} parent=139 // pred_fallthru
          _
        %s1320 = sand.u32 %s76, 1
        %s1321 = scalar_lea.sflag [#allocation4], %s1320
        %s1322 = sand.u32 %s408, 1
        %s1323 = smul.addr %s1322, 16
        %s1324 = scalar_lea.vmem [#allocation14], %s1323
        // Predicated region
        $region169: #{tpu_custom_call.1} parent=139 // pred_check
          %p1325 = pneg %p421
        $region170: #{tpu_custom_call.1} parent=139 // pred_check_branch
          %1327 = sbr.rel (%p1325) target = $region172
        $region171: #{tpu_custom_call.1} parent=139 // pred_region
          %1328 = dma.done %s1321, 256
        $region172: #{tpu_custom_call.1} parent=139 // pred_fallthru
          _
        %s1329 = sand.u32 %s76, 1
        %s1330 = scalar_lea.sflag [#allocation4], %s1329
        %s1331 = sand.u32 %s434, 1
        %s1332 = scalar_lea.vmem [#allocation15], %s1331
        // Predicated region
        $region173: #{tpu_custom_call.1} parent=139 // pred_check
          %p1333 = pneg %p447
        $region174: #{tpu_custom_call.1} parent=139 // pred_check_branch
          %1335 = sbr.rel (%p1333) target = $region176
        $region175: #{tpu_custom_call.1} parent=139 // pred_region
          %1336 = dma.done %s1330, 16
        $region176: #{tpu_custom_call.1} parent=139 // pred_fallthru
          _
        %s1337 = sand.u32 %s76, 1
        %s1338 = scalar_lea.sflag [#allocation4], %s1337
        %s1339 = sand.u32 %s460, 1
        %s1340 = smul.addr %s1339, 16
        %s1341 = scalar_lea.vmem [#allocation16], %s1340
        // Predicated region
        $region177: #{tpu_custom_call.1} parent=139 // pred_check
          %p1342 = pneg %p473
        $region178: #{tpu_custom_call.1} parent=139 // pred_check_branch
          %1344 = sbr.rel (%p1342) target = $region180
        $region179: #{tpu_custom_call.1} parent=139 // pred_region
          %1345 = dma.done %s1338, 256
        $region180: #{tpu_custom_call.1} parent=139 // pred_fallthru
          _
        %s1346 = sand.u32 %s76, 1
        %s1347 = scalar_lea.sflag [#allocation4], %s1346
        %s1348 = sand.u32 %s486, 1
        %s1349 = scalar_lea.vmem [#allocation17], %s1348
        // Predicated region
        $region181: #{tpu_custom_call.1} parent=139 // pred_check
          %p1350 = pneg %p499
        $region182: #{tpu_custom_call.1} parent=139 // pred_check_branch
          %1352 = sbr.rel (%p1350) target = $region184
        $region183: #{tpu_custom_call.1} parent=139 // pred_region
          %1353 = dma.done %s1347, 16
        $region184: #{tpu_custom_call.1} parent=139 // pred_fallthru
          _
        %s1354 = sand.u32 %s76, 1
        %s1355 = scalar_lea.sflag [#allocation4], %s1354
        %s1356 = sand.u32 %s512, 1
        %s1357 = smul.addr %s1356, 16
        %s1358 = scalar_lea.vmem [#allocation18], %s1357
        // Predicated region
        $region185: #{tpu_custom_call.1} parent=139 // pred_check
          %p1359 = pneg %p525
        $region186: #{tpu_custom_call.1} parent=139 // pred_check_branch
          %1361 = sbr.rel (%p1359) target = $region188
        $region187: #{tpu_custom_call.1} parent=139 // pred_region
          %1362 = dma.done %s1355, 256
        $region188: #{tpu_custom_call.1} parent=139 // pred_fallthru
          _
        %s1363 = sand.u32 %s76, 1
        %s1364 = scalar_lea.sflag [#allocation4], %s1363
        %s1365 = sand.u32 %s538, 1
        %s1366 = scalar_lea.vmem [#allocation19], %s1365
        // Predicated region
        $region189: #{tpu_custom_call.1} parent=139 // pred_check
          %p1367 = pneg %p551
        $region190: #{tpu_custom_call.1} parent=139 // pred_check_branch
          %1369 = sbr.rel (%p1367) target = $region192
        $region191: #{tpu_custom_call.1} parent=139 // pred_region
          %1370 = dma.done %s1364, 16
        $region192: #{tpu_custom_call.1} parent=139 // pred_fallthru
          _
        %s1371 = sand.u32 %s76, 1
        %s1372 = scalar_lea.sflag [#allocation4], %s1371
        %s1373 = sand.u32 %s564, 1
        %s1374 = smul.addr %s1373, 16
        %s1375 = scalar_lea.vmem [#allocation20], %s1374
        // Predicated region
        $region193: #{tpu_custom_call.1} parent=139 // pred_check
          %p1376 = pneg %p577
        $region194: #{tpu_custom_call.1} parent=139 // pred_check_branch
          %1378 = sbr.rel (%p1376) target = $region196
        $region195: #{tpu_custom_call.1} parent=139 // pred_region
          %1379 = dma.done %s1372, 256
        $region196: #{tpu_custom_call.1} parent=139 // pred_fallthru
          _
        %s1380 = sand.u32 %s76, 1
        %s1381 = scalar_lea.sflag [#allocation4], %s1380
        %s1382 = sand.u32 %s590, 1
        %s1383 = scalar_lea.vmem [#allocation21], %s1382
        // Predicated region
        $region197: #{tpu_custom_call.1} parent=139 // pred_check
          %p1384 = pneg %p603
        $region198: #{tpu_custom_call.1} parent=139 // pred_check_branch
          %1386 = sbr.rel (%p1384) target = $region200
        $region199: #{tpu_custom_call.1} parent=139 // pred_region
          %1387 = dma.done %s1381, 16
        $region200: #{tpu_custom_call.1} parent=139 // pred_fallthru
          _
        %s1388 = sand.u32 %s76, 1
        %s1389 = scalar_lea.sflag [#allocation4], %s1388
        %s1390 = sand.u32 %s720, 1
        %s1391 = scalar_lea.vmem [#allocation22], %s1390
        // Predicated region
        $region201: #{tpu_custom_call.1} parent=139 // pred_check
          %p1392 = pneg %p733
        $region202: #{tpu_custom_call.1} parent=139 // pred_check_branch
          %1394 = sbr.rel (%p1392) target = $region204
        $region203: #{tpu_custom_call.1} parent=139 // pred_region
          %1395 = dma.done %s1389, 16
        $region204: #{tpu_custom_call.1} parent=139 // pred_fallthru
          _
        %p1396 = pneg %p109
        %p1397 = pneg %p106
        %p1398 = pneg %p135
        %p1399 = pneg %p132
        %p1400 = pneg %p161
        %p1401 = pneg %p158
        %p1402 = pneg %p187
        %p1403 = pneg %p184
        %p1404 = scmp.lt.s32.totalorder %s81, 1
        %s1405 = scalar_select %p1404, %s81, 1
        %s1406 = smul.addr %s1405, 4
        %s1407 = smul.addr %s1406, 4
        %s1408 = scalar_lea.vmem %s9, %s1407
        %p1409 = pneg %p213
        %p1410 = pneg %p210
        %p1411 = scmp.lt.s32.totalorder %s81, 1
        %s1412 = scalar_select %p1411, %s81, 1
        %s1413 = scalar_lea.vmem %s11, %s1412
        %p1414 = pneg %p239
        %p1415 = pneg %p236
        %p1416 = scmp.lt.s32.totalorder %s81, 1
        %s1417 = scalar_select %p1416, %s81, 1
        %s1418 = smul.addr %s1417, 4
        %s1419 = smul.addr %s1418, 4
        %s1420 = scalar_lea.vmem %s13, %s1419
        %p1421 = pneg %p265
        %p1422 = pneg %p262
        %p1423 = scmp.lt.s32.totalorder %s81, 1
        %s1424 = scalar_select %p1423, %s81, 1
        %s1425 = scalar_lea.vmem %s15, %s1424
        %p1426 = pneg %p291
        %p1427 = pneg %p288
        %p1428 = scmp.lt.s32.totalorder %s81, 1
        %s1429 = scalar_select %p1428, %s81, 1
        %s1430 = smul.addr %s1429, 8
        %s1431 = smul.addr %s1430, 2
        %s1432 = scalar_lea.vmem %s17, %s1431
        %p1433 = pneg %p317
        %p1434 = pneg %p314
        %s1435 = sand.u32 %s76, 1
        %s1436 = scalar_lea.sflag [#allocation4], %s1435
        %s1437 = sand.u32 %s330, 1
        %s1438 = scalar_lea.vmem [#allocation11], %s1437
        %p1439 = pneg %p343
        %p1440 = pneg %p340
        %s1441 = sand.u32 %s76, 1
        %s1442 = scalar_lea.sflag [#allocation4], %s1441
        %s1443 = sand.u32 %s356, 1
        %s1444 = smul.addr %s1443, 16
        %s1445 = scalar_lea.vmem [#allocation12], %s1444
        %p1446 = pneg %p369
        %p1447 = pneg %p366
        %s1448 = sand.u32 %s76, 1
        %s1449 = scalar_lea.sflag [#allocation4], %s1448
        %s1450 = sand.u32 %s382, 1
        %s1451 = scalar_lea.vmem [#allocation13], %s1450
        %p1452 = pneg %p395
        %p1453 = pneg %p392
        %s1454 = sand.u32 %s76, 1
        %s1455 = scalar_lea.sflag [#allocation4], %s1454
        %s1456 = sand.u32 %s408, 1
        %s1457 = smul.addr %s1456, 16
        %s1458 = scalar_lea.vmem [#allocation14], %s1457
        %p1459 = pneg %p421
        %p1460 = pneg %p418
        %s1461 = sand.u32 %s76, 1
        %s1462 = scalar_lea.sflag [#allocation4], %s1461
        %s1463 = sand.u32 %s434, 1
        %s1464 = scalar_lea.vmem [#allocation15], %s1463
        %p1465 = pneg %p447
        %p1466 = pneg %p444
        %s1467 = sand.u32 %s76, 1
        %s1468 = scalar_lea.sflag [#allocation4], %s1467
        %s1469 = sand.u32 %s460, 1
        %s1470 = smul.addr %s1469, 16
        %s1471 = scalar_lea.vmem [#allocation16], %s1470
        %p1472 = pneg %p473
        %p1473 = pneg %p470
        %s1474 = sand.u32 %s76, 1
        %s1475 = scalar_lea.sflag [#allocation4], %s1474
        %s1476 = sand.u32 %s486, 1
        %s1477 = scalar_lea.vmem [#allocation17], %s1476
        %p1478 = pneg %p499
        %p1479 = pneg %p496
        %s1480 = sand.u32 %s76, 1
        %s1481 = scalar_lea.sflag [#allocation4], %s1480
        %s1482 = sand.u32 %s512, 1
        %s1483 = smul.addr %s1482, 16
        %s1484 = scalar_lea.vmem [#allocation18], %s1483
        %p1485 = pneg %p525
        %p1486 = pneg %p522
        %s1487 = sand.u32 %s76, 1
        %s1488 = scalar_lea.sflag [#allocation4], %s1487
        %s1489 = sand.u32 %s538, 1
        %s1490 = scalar_lea.vmem [#allocation19], %s1489
        %p1491 = pneg %p551
        %p1492 = pneg %p548
        %s1493 = sand.u32 %s76, 1
        %s1494 = scalar_lea.sflag [#allocation4], %s1493
        %s1495 = sand.u32 %s564, 1
        %s1496 = smul.addr %s1495, 16
        %s1497 = scalar_lea.vmem [#allocation20], %s1496
        %p1498 = pneg %p577
        %p1499 = pneg %p574
        %s1500 = sand.u32 %s76, 1
        %s1501 = scalar_lea.sflag [#allocation4], %s1500
        %s1502 = sand.u32 %s590, 1
        %s1503 = scalar_lea.vmem [#allocation21], %s1502
        %p1504 = pneg %p603
        %p1505 = pneg %p600
        %p1506 = scmp.lt.s32.totalorder %s81, 1
        %s1507 = scalar_select %p1506, %s81, 1
        %s1508 = smul.addr %s1507, 8
        %s1509 = smul.addr %s1508, 4
        %s1510 = scalar_lea.vmem %s41, %s1509
        %p1511 = pneg %p629
        %p1512 = pneg %p626
        %p1513 = scmp.lt.s32.totalorder %s81, 1
        %s1514 = scalar_select %p1513, %s81, 1
        %s1515 = scalar_lea.vmem %s43, %s1514
        %p1516 = pneg %p655
        %p1517 = pneg %p652
        %p1518 = scmp.lt.s32.totalorder %s81, 1
        %s1519 = scalar_select %p1518, %s81, 1
        %s1520 = scalar_lea.vmem %s45, %s1519
        %p1521 = pneg %p681
        %p1522 = pneg %p678
        %p1523 = scmp.lt.s32.totalorder %s81, 1
        %s1524 = scalar_select %p1523, %s81, 1
        %s1525 = scalar_lea.vmem %s47, %s1524
        %p1526 = pneg %p707
        %p1527 = pneg %p704
        %s1528 = sand.u32 %s76, 1
        %s1529 = scalar_lea.sflag [#allocation4], %s1528
        %s1530 = sand.u32 %s720, 1
        %s1531 = scalar_lea.vmem [#allocation22], %s1530
        %p1532 = pneg %p733
        %p1533 = pneg %p730
        %p1534 = scmp.lt.s32.totalorder %s81, 1
        %s1535 = scalar_select %p1534, %s81, 1
        %s1536 = scalar_lea.vmem %s51, %s1535
        %p1537 = pneg %p759
        %p1538 = pneg %p756
        %p1539 = scmp.lt.s32.totalorder %s81, 1
        %s1540 = scalar_select %p1539, %s81, 1
        %s1541 = scalar_lea.vmem %s53, %s1540
        %p1542 = pneg %p785
        %p1543 = pneg %p782
        %p1544 = scmp.lt.s32.totalorder %s81, 1
        %s1545 = scalar_select %p1544, %s81, 1
        %s1546 = scalar_lea.vmem %s55, %s1545
        %p1547 = pneg %p811
        %p1548 = pneg %p808
        %p1549 = pneg %p832
        %p1550 = pneg %p829
        %p1551 = pneg %p853
        %p1552 = pneg %p850
        %p1553 = pneg %p879
        %p1554 = pneg %p876
        %s1555 = smul.u32 2, %s80
        %s1556 = smul.u32 2, %s80
        %s1557 = smul.u32 4, %s80
        %s1558 = smul.u32 4, %s80
        %p1559 = scmp.lt.s32.totalorder %s81, 1
        %s1560 = scalar_select %p1559, %s81, 1
        %s1561 = smul.addr %s1560, 4
        %s1562 = smul.addr %s1561, 4
        %s1563 = scalar_lea.vmem %s9, %s1562
        %p1564 = scmp.lt.s32.totalorder %s81, 1
        %s1565 = scalar_select %p1564, %s81, 1
        %s1566 = scalar_lea.vmem %s11, %s1565
        %p1567 = scmp.lt.s32.totalorder %s81, 1
        %s1568 = scalar_select %p1567, %s81, 1
        %s1569 = smul.addr %s1568, 4
        %s1570 = smul.addr %s1569, 4
        %s1571 = scalar_lea.vmem %s13, %s1570
        %p1572 = scmp.lt.s32.totalorder %s81, 1
        %s1573 = scalar_select %p1572, %s81, 1
        %s1574 = scalar_lea.vmem %s15, %s1573
        %p1575 = scmp.lt.s32.totalorder %s81, 1
        %s1576 = scalar_select %p1575, %s81, 1
        %s1577 = smul.addr %s1576, 8
        %s1578 = smul.addr %s1577, 2
        %s1579 = scalar_lea.vmem %s17, %s1578
        %p1580 = scmp.lt.s32.totalorder %s81, 1
        %s1581 = scalar_select %p1580, %s81, 1
        %s1582 = smul.addr %s1581, 8
        %s1583 = smul.addr %s1582, 4
        %s1584 = scalar_lea.vmem %s41, %s1583
        %p1585 = scmp.lt.s32.totalorder %s81, 1
        %s1586 = scalar_select %p1585, %s81, 1
        %s1587 = scalar_lea.vmem %s43, %s1586
        %p1588 = scmp.lt.s32.totalorder %s81, 1
        %s1589 = scalar_select %p1588, %s81, 1
        %s1590 = scalar_lea.vmem %s45, %s1589
        %p1591 = scmp.lt.s32.totalorder %s81, 1
        %s1592 = scalar_select %p1591, %s81, 1
        %s1593 = scalar_lea.vmem %s47, %s1592
        %p1594 = scmp.lt.s32.totalorder %s81, 1
        %s1595 = scalar_select %p1594, %s81, 1
        %s1596 = scalar_lea.vmem %s51, %s1595
        %p1597 = scmp.lt.s32.totalorder %s81, 1
        %s1598 = scalar_select %p1597, %s81, 1
        %s1599 = scalar_lea.vmem %s53, %s1598
        %p1600 = scmp.lt.s32.totalorder %s81, 1
        %s1601 = scalar_select %p1600, %s81, 1
        %s1602 = scalar_lea.vmem %s55, %s1601
        %s1603 = smul.u32 2, %s80
        %p1605 = scmp.eq.s32.totalorder %s81, 0
        // Predicated region
        $region205: #{tpu_custom_call.1} parent=139 // pred_check
          %p1606 = pneg %p1605
        $region206: #{tpu_custom_call.1} parent=139 // pred_check_branch
          %1608 = sbr.rel (%p1606) target = $region208
        $region207: #{tpu_custom_call.1} parent=139 // pred_region
          %v1609 = vld [vmem:[#allocation3] sm:$0xff]
          %v1610 = vld [vmem:[#allocation3 + $0x8] sm:$0xff]
          %vm1611 = vcmask 261120
          %1612 = vst.msk [vmem:[#allocation2] sm:$0xff] %vm1611, %v1609
          %1613 = vst.msk [vmem:[#allocation2 + $0x8] sm:$0xff] %vm1611, %v1610
        $region208: #{tpu_custom_call.1} parent=139 // pred_fallthru
          _
        %v1614 = vld [vmem:[#allocation2] sm:$0xff]
        %v1615 = vld [vmem:[#allocation2 + $0x8] sm:$0xff]
        %v1616 = vld [vmem:[#allocation6] sm:$0xff]
        %v1617 = vld [vmem:[#allocation6 + $0x8] sm:$0xff]
        %v1618 = vadd.f32 %v1614, %v1616
        %v1619 = vadd.f32 %v1615, %v1617
        %v1620 = vpack.c.bf16 %v1619, %v1618
        %v1621 = vld [vmem:[%s1563] sm:$0xf]
        %v1622 = vld [vmem:[%s1563 + $0x4] sm:$0xf]
        %v1623 = vld [vmem:[%s1563 + $0x8] sm:$0xf]
        %v1624 = vld [vmem:[%s1563 + $0xc] sm:$0xf]
        %v1625 = vld [vmem:[%s1566] sm:$0x1]
        %v1627 = vlaneseq
        %v1628 = vshrl.u32 %v1627, 7
        %v1629 = vsub.s32 0, %v1628
        %v1630 = vrot.slane %v1625, %v1629
        %v1636 = vunpack.c.l.b16 %v1621
        %v1637 = vunpack.c.l.b16 %v1622
        %v1638 = vunpack.c.l.b16 %v1623
        %v1639 = vunpack.c.l.b16 %v1624
        %v1640 = vpack.c.b16 %v1637, %v1636
        %v1641 = vpack.c.b16 %v1639, %v1638
        %vm1644 = vcmask 261120
        %v1646 = vsel %vm1644, %v1620, 0
        %1648 = vmatprep.subr.bf16.mxu0 0
        %1649 = vmatpush1.bf16.msra.mxu0 0
        %1650 = vmatprep.subr.bf16.mxu0 0
        %1651 = vmatpush1.bf16.msra.mxu0 0
        %1652 = vmatprep.subr.bf16.mxu0 0
        %1653 = vmatpush1.bf16.msra.mxu0 0
        %1654 = vmatprep.subr.bf16.mxu0 0
        %1655 = vmatpush1.bf16.msra.mxu0 0
        %1656 = vmatprep.subr.bf16.mxu0 0
        %1657 = vmatpush1.bf16.msra.mxu0 0
        %1658 = vmatprep.subr.bf16.mxu0 0
        %1659 = vmatpush1.bf16.msra.mxu0 0
        %1660 = vmatprep.subr.bf16.mxu0 0
        %1661 = vmatpush1.bf16.msra.mxu0 %v1641
        %1662 = vmatprep.subr.bf16.mxu0 0
        %1663 = vmatpush1.bf16.msra.mxu0 %v1640
        %1664 = vmatprep.subr.bf16.mxu0 0
        %1665 = vmatpush2.bf16.msra.mxu0 0
        %1666 = vmatprep.subr.bf16.mxu0 0
        %1667 = vmatpush2.bf16.msra.mxu0 0
        %1668 = vmatprep.subr.bf16.mxu0 0
        %1669 = vmatpush2.bf16.msra.mxu0 0
        %1670 = vmatprep.subr.bf16.mxu0 0
        %1671 = vmatpush2.bf16.msra.mxu0 0
        %1672 = vmatprep.subr.bf16.mxu0 0
        %1673 = vmatpush2.bf16.msra.mxu0 0
        %1674 = vmatprep.subr.bf16.mxu0 0
        %1675 = vmatpush2.bf16.msra.mxu0 0
        %1676 = vmatprep.subr.bf16.mxu0 0
        %1677 = vmatpush2.bf16.msra.mxu0 0
        %1678 = vmatprep.subr.bf16.mxu0 0
        %1679 = vmatpush2.bf16.msra.mxu0 0
        %1680 = vmatprep.mubr.bf16.mxu0 0
        %1681 = vmatmul.mubr.bf16.gmra.mxu0 %v1646
        %v1682 = vpop.f32.mrf.mxu0
        %v1683 = vadd.f32 %v1630, %v1682
        %v1684 = vpop.f32.mrf.mxu0
        %v1685 = vpop.f32.mrf.mxu0
        %v1686 = vadd.f32 %v1630, %v1685
        %v1687 = vpop.f32.mrf.mxu0
        %1688 = vdwg.mxu0
        %v1689 = vpack.c.bf16 %v1615, %v1614
        %v1690 = vld [vmem:[%s1571] sm:$0xf]
        %v1691 = vld [vmem:[%s1571 + $0x4] sm:$0xf]
        %v1692 = vld [vmem:[%s1571 + $0x8] sm:$0xf]
        %v1693 = vld [vmem:[%s1571 + $0xc] sm:$0xf]
        %v1694 = vld [vmem:[%s1574] sm:$0x1]
        %v1696 = vlaneseq
        %v1697 = vshrl.u32 %v1696, 7
        %v1698 = vsub.s32 0, %v1697
        %v1699 = vrot.slane %v1694, %v1698
        %v1705 = vunpack.c.l.b16 %v1690
        %v1706 = vunpack.c.l.b16 %v1691
        %v1707 = vunpack.c.l.b16 %v1692
        %v1708 = vunpack.c.l.b16 %v1693
        %v1709 = vpack.c.b16 %v1706, %v1705
        %v1710 = vpack.c.b16 %v1708, %v1707
        %v1714 = vsel %vm1644, %v1689, 0
        %1716 = vmatprep.subr.bf16.mxu0 0
        %1717 = vmatpush1.bf16.msra.mxu0 0
        %1718 = vmatprep.subr.bf16.mxu0 0
        %1719 = vmatpush1.bf16.msra.mxu0 0
        %1720 = vmatprep.subr.bf16.mxu0 0
        %1721 = vmatpush1.bf16.msra.mxu0 0
        %1722 = vmatprep.subr.bf16.mxu0 0
        %1723 = vmatpush1.bf16.msra.mxu0 0
        %1724 = vmatprep.subr.bf16.mxu0 0
        %1725 = vmatpush1.bf16.msra.mxu0 0
        %1726 = vmatprep.subr.bf16.mxu0 0
        %1727 = vmatpush1.bf16.msra.mxu0 0
        %1728 = vmatprep.subr.bf16.mxu0 0
        %1729 = vmatpush1.bf16.msra.mxu0 %v1710
        %1730 = vmatprep.subr.bf16.mxu0 0
        %1731 = vmatpush1.bf16.msra.mxu0 %v1709
        %1732 = vmatprep.subr.bf16.mxu0 0
        %1733 = vmatpush2.bf16.msra.mxu0 0
        %1734 = vmatprep.subr.bf16.mxu0 0
        %1735 = vmatpush2.bf16.msra.mxu0 0
        %1736 = vmatprep.subr.bf16.mxu0 0
        %1737 = vmatpush2.bf16.msra.mxu0 0
        %1738 = vmatprep.subr.bf16.mxu0 0
        %1739 = vmatpush2.bf16.msra.mxu0 0
        %1740 = vmatprep.subr.bf16.mxu0 0
        %1741 = vmatpush2.bf16.msra.mxu0 0
        %1742 = vmatprep.subr.bf16.mxu0 0
        %1743 = vmatpush2.bf16.msra.mxu0 0
        %1744 = vmatprep.subr.bf16.mxu0 0
        %1745 = vmatpush2.bf16.msra.mxu0 0
        %1746 = vmatprep.subr.bf16.mxu0 0
        %1747 = vmatpush2.bf16.msra.mxu0 0
        %1748 = vmatprep.mubr.bf16.mxu0 0
        %1749 = vmatmul.mubr.bf16.gmra.mxu0 %v1714
        %v1750 = vpop.f32.mrf.mxu0
        %v1751 = vadd.f32 %v1699, %v1750
        %v1752 = vpop.f32.mrf.mxu0
        %v1753 = vpop.f32.mrf.mxu0
        %v1754 = vadd.f32 %v1699, %v1753
        %v1755 = vpop.f32.mrf.mxu0
        %1756 = vdwg.mxu0
        %v1757 = vld [vmem:[%s1579] sm:$0x3]
        %v1758 = vld [vmem:[%s1579 + $0x2] sm:$0x3]
        %v1759 = vld [vmem:[%s1579 + $0x4] sm:$0x3]
        %v1760 = vld [vmem:[%s1579 + $0x6] sm:$0x3]
        %v1761 = vld [vmem:[%s1579 + $0x8] sm:$0x3]
        %v1762 = vld [vmem:[%s1579 + $0xa] sm:$0x3]
        %v1763 = vld [vmem:[%s1579 + $0xc] sm:$0x3]
        %v1764 = vld [vmem:[%s1579 + $0xe] sm:$0x3]
        %v1765 = vld [vmem:[%s1298] sm:$0x1]
        %v1766 = vpack.c.bf16 %v1683, %v1683
        %v1767 = vpack.c.bf16 %v1686, %v1686
        %1770 = vrot.lane.b32.xlu0 %v1766, 124
        %v1771 = vpop.permute.xlu0 %1770
        %1772 = vrot.lane.b32.xlu0 %v1767, 124
        %v1773 = vpop.permute.xlu0 %1772
        %1774 = vrot.lane.b32.xlu0 %v1766, 120
        %v1775 = vpop.permute.xlu0 %1774
        %1776 = vrot.lane.b32.xlu0 %v1767, 120
        %v1777 = vpop.permute.xlu0 %1776
        %1778 = vrot.lane.b32.xlu0 %v1766, 116
        %v1779 = vpop.permute.xlu0 %1778
        %1780 = vrot.lane.b32.xlu0 %v1767, 116
        %v1781 = vpop.permute.xlu0 %1780
        %1782 = vrot.lane.b32.xlu0 %v1766, 112
        %v1783 = vpop.permute.xlu0 %1782
        %1784 = vrot.lane.b32.xlu0 %v1767, 112
        %v1785 = vpop.permute.xlu0 %1784
        %1786 = vrot.lane.b32.xlu0 %v1766, 108
        %v1787 = vpop.permute.xlu0 %1786
        %1788 = vrot.lane.b32.xlu0 %v1767, 108
        %v1789 = vpop.permute.xlu0 %1788
        %1790 = vrot.lane.b32.xlu0 %v1766, 104
        %v1791 = vpop.permute.xlu0 %1790
        %1792 = vrot.lane.b32.xlu0 %v1767, 104
        %v1793 = vpop.permute.xlu0 %1792
        %1794 = vrot.lane.b32.xlu0 %v1766, 100
        %v1795 = vpop.permute.xlu0 %1794
        %1796 = vrot.lane.b32.xlu0 %v1767, 100
        %v1797 = vpop.permute.xlu0 %1796
        %v1798 = vpack.c.bf16 %v1751, %v1751
        %v1799 = vpack.c.bf16 %v1754, %v1754
        %1802 = vrot.lane.b32.xlu0 %v1798, 124
        %v1803 = vpop.permute.xlu0 %1802
        %1804 = vrot.lane.b32.xlu0 %v1799, 124
        %v1805 = vpop.permute.xlu0 %1804
        %1806 = vrot.lane.b32.xlu0 %v1798, 120
        %v1807 = vpop.permute.xlu0 %1806
        %1808 = vrot.lane.b32.xlu0 %v1799, 120
        %v1809 = vpop.permute.xlu0 %1808
        %1810 = vrot.lane.b32.xlu0 %v1798, 116
        %v1811 = vpop.permute.xlu0 %1810
        %1812 = vrot.lane.b32.xlu0 %v1799, 116
        %v1813 = vpop.permute.xlu0 %1812
        %1814 = vrot.lane.b32.xlu0 %v1798, 112
        %v1815 = vpop.permute.xlu0 %1814
        %1816 = vrot.lane.b32.xlu0 %v1799, 112
        %v1817 = vpop.permute.xlu0 %1816
        %1818 = vrot.lane.b32.xlu0 %v1798, 108
        %v1819 = vpop.permute.xlu0 %1818
        %1820 = vrot.lane.b32.xlu0 %v1799, 108
        %v1821 = vpop.permute.xlu0 %1820
        %1822 = vrot.lane.b32.xlu0 %v1798, 104
        %v1823 = vpop.permute.xlu0 %1822
        %1824 = vrot.lane.b32.xlu0 %v1799, 104
        %v1825 = vpop.permute.xlu0 %1824
        %1826 = vrot.lane.b32.xlu0 %v1798, 100
        %v1827 = vpop.permute.xlu0 %1826
        %1828 = vrot.lane.b32.xlu0 %v1799, 100
        %v1829 = vpop.permute.xlu0 %1828
        %1830 = vrot.lane.b32.xlu0 %v1766, 96
        %v1831 = vpop.permute.xlu0 %1830
        %vm1832 = vcmask 31744
        %v1834 = vsel %vm1832, %v1766, 0
        %v1837 = vsel %vm1832, %v1831, 0
        %1839 = vmatprep.subr.bf16.mxu0 0
        %1840 = vmatpush1.bf16.xpose.msra.mxu0 0
        %1841 = vmatprep.subr.bf16.mxu0 0
        %1842 = vmatpush1.bf16.xpose.msra.mxu0 0
        %1843 = vmatprep.subr.bf16.mxu0 0
        %1844 = vmatpush1.bf16.xpose.msra.mxu0 0
        %1845 = vmatprep.subr.bf16.mxu0 0
        %1846 = vmatpush1.bf16.xpose.msra.mxu0 0
        %1847 = vmatprep.subr.bf16.mxu0 0
        %1848 = vmatpush1.bf16.xpose.msra.mxu0 0
        %1849 = vmatprep.subr.bf16.mxu0 0
        %1850 = vmatpush1.bf16.xpose.msra.mxu0 0
        %1851 = vmatprep.subr.bf16.mxu0 0
        %1852 = vmatpush1.bf16.xpose.msra.mxu0 0
        %1853 = vmatprep.subr.bf16.mxu0 0
        %1854 = vmatpush1.bf16.xpose.msra.mxu0 %v1837
        %1855 = vmatprep.subr.bf16.mxu0 0
        %1856 = vmatpush2.bf16.xpose.msra.mxu0 0
        %1857 = vmatprep.subr.bf16.mxu0 0
        %1858 = vmatpush2.bf16.xpose.msra.mxu0 0
        %1859 = vmatprep.subr.bf16.mxu0 0
        %1860 = vmatpush2.bf16.xpose.msra.mxu0 0
        %1861 = vmatprep.subr.bf16.mxu0 0
        %1862 = vmatpush2.bf16.xpose.msra.mxu0 0
        %1863 = vmatprep.subr.bf16.mxu0 0
        %1864 = vmatpush2.bf16.xpose.msra.mxu0 0
        %1865 = vmatprep.subr.bf16.mxu0 0
        %1866 = vmatpush2.bf16.xpose.msra.mxu0 0
        %1867 = vmatprep.subr.bf16.mxu0 0
        %1868 = vmatpush2.bf16.xpose.msra.mxu0 0
        %1869 = vmatprep.subr.bf16.mxu0 0
        %1870 = vmatpush2.bf16.xpose.msra.mxu0 0
        %1871 = vmatprep.mubr.bf16.mxu0 0
        %1872 = vmatmul.mubr.bf16.gmra.mxu0 %v1834
        %v1873 = vpop.f32.mrf.mxu0
        %v1874 = vadd.f32 0.0, %v1873
        %v1875 = vpop.f32.mrf.mxu0
        %v1876 = vpop.f32.mrf.mxu0
        %v1877 = vpop.f32.mrf.mxu0
        %1878 = vdwg.mxu0
        %1879 = vrot.lane.b32.xlu0 %v1767, 96
        %v1880 = vpop.permute.xlu0 %1879
        %v1882 = vsel %vm1832, %v1767, 0
        %v1885 = vsel %vm1832, %v1880, 0
        %1887 = vmatprep.subr.bf16.mxu0 0
        %1888 = vmatpush1.bf16.xpose.msra.mxu0 0
        %1889 = vmatprep.subr.bf16.mxu0 0
        %1890 = vmatpush1.bf16.xpose.msra.mxu0 0
        %1891 = vmatprep.subr.bf16.mxu0 0
        %1892 = vmatpush1.bf16.xpose.msra.mxu0 0
        %1893 = vmatprep.subr.bf16.mxu0 0
        %1894 = vmatpush1.bf16.xpose.msra.mxu0 0
        %1895 = vmatprep.subr.bf16.mxu0 0
        %1896 = vmatpush1.bf16.xpose.msra.mxu0 0
        %1897 = vmatprep.subr.bf16.mxu0 0
        %1898 = vmatpush1.bf16.xpose.msra.mxu0 0
        %1899 = vmatprep.subr.bf16.mxu0 0
        %1900 = vmatpush1.bf16.xpose.msra.mxu0 0
        %1901 = vmatprep.subr.bf16.mxu0 0
        %1902 = vmatpush1.bf16.xpose.msra.mxu0 %v1885
        %1903 = vmatprep.subr.bf16.mxu0 0
        %1904 = vmatpush2.bf16.xpose.msra.mxu0 0
        %1905 = vmatprep.subr.bf16.mxu0 0
        %1906 = vmatpush2.bf16.xpose.msra.mxu0 0
        %1907 = vmatprep.subr.bf16.mxu0 0
        %1908 = vmatpush2.bf16.xpose.msra.mxu0 0
        %1909 = vmatprep.subr.bf16.mxu0 0
        %1910 = vmatpush2.bf16.xpose.msra.mxu0 0
        %1911 = vmatprep.subr.bf16.mxu0 0
        %1912 = vmatpush2.bf16.xpose.msra.mxu0 0
        %1913 = vmatprep.subr.bf16.mxu0 0
        %1914 = vmatpush2.bf16.xpose.msra.mxu0 0
        %1915 = vmatprep.subr.bf16.mxu0 0
        %1916 = vmatpush2.bf16.xpose.msra.mxu0 0
        %1917 = vmatprep.subr.bf16.mxu0 0
        %1918 = vmatpush2.bf16.xpose.msra.mxu0 0
        %1919 = vmatprep.mubr.bf16.mxu0 0
        %1920 = vmatmul.mubr.bf16.gmra.mxu0 %v1882
        %v1921 = vpop.f32.mrf.mxu0
        %v1922 = vadd.f32 0.0, %v1921
        %v1923 = vpop.f32.mrf.mxu0
        %v1924 = vpop.f32.mrf.mxu0
        %v1925 = vpop.f32.mrf.mxu0
        %1926 = vdwg.mxu0
        %1927 = vrot.lane.b32.xlu0 %v1771, 96
        %v1928 = vpop.permute.xlu0 %1927
        %v1930 = vsel %vm1832, %v1771, 0
        %v1933 = vsel %vm1832, %v1928, 0
        %1935 = vmatprep.subr.bf16.mxu0 0
        %1936 = vmatpush1.bf16.xpose.msra.mxu0 0
        %1937 = vmatprep.subr.bf16.mxu0 0
        %1938 = vmatpush1.bf16.xpose.msra.mxu0 0
        %1939 = vmatprep.subr.bf16.mxu0 0
        %1940 = vmatpush1.bf16.xpose.msra.mxu0 0
        %1941 = vmatprep.subr.bf16.mxu0 0
        %1942 = vmatpush1.bf16.xpose.msra.mxu0 0
        %1943 = vmatprep.subr.bf16.mxu0 0
        %1944 = vmatpush1.bf16.xpose.msra.mxu0 0
        %1945 = vmatprep.subr.bf16.mxu0 0
        %1946 = vmatpush1.bf16.xpose.msra.mxu0 0
        %1947 = vmatprep.subr.bf16.mxu0 0
        %1948 = vmatpush1.bf16.xpose.msra.mxu0 0
        %1949 = vmatprep.subr.bf16.mxu0 0
        %1950 = vmatpush1.bf16.xpose.msra.mxu0 %v1933
        %1951 = vmatprep.subr.bf16.mxu0 0
        %1952 = vmatpush2.bf16.xpose.msra.mxu0 0
        %1953 = vmatprep.subr.bf16.mxu0 0
        %1954 = vmatpush2.bf16.xpose.msra.mxu0 0
        %1955 = vmatprep.subr.bf16.mxu0 0
        %1956 = vmatpush2.bf16.xpose.msra.mxu0 0
        %1957 = vmatprep.subr.bf16.mxu0 0
        %1958 = vmatpush2.bf16.xpose.msra.mxu0 0
        %1959 = vmatprep.subr.bf16.mxu0 0
        %1960 = vmatpush2.bf16.xpose.msra.mxu0 0
        %1961 = vmatprep.subr.bf16.mxu0 0
        %1962 = vmatpush2.bf16.xpose.msra.mxu0 0
        %1963 = vmatprep.subr.bf16.mxu0 0
        %1964 = vmatpush2.bf16.xpose.msra.mxu0 0
        %1965 = vmatprep.subr.bf16.mxu0 0
        %1966 = vmatpush2.bf16.xpose.msra.mxu0 0
        %1967 = vmatprep.mubr.bf16.mxu0 0
        %1968 = vmatmul.mubr.bf16.gmra.mxu0 %v1930
        %v1969 = vpop.f32.mrf.mxu0
        %v1970 = vadd.f32 0.0, %v1969
        %v1971 = vpop.f32.mrf.mxu0
        %v1972 = vpop.f32.mrf.mxu0
        %v1973 = vpop.f32.mrf.mxu0
        %1974 = vdwg.mxu0
        %1975 = vrot.lane.b32.xlu0 %v1773, 96
        %v1976 = vpop.permute.xlu0 %1975
        %v1978 = vsel %vm1832, %v1773, 0
        %v1981 = vsel %vm1832, %v1976, 0
        %1983 = vmatprep.subr.bf16.mxu0 0
        %1984 = vmatpush1.bf16.xpose.msra.mxu0 0
        %1985 = vmatprep.subr.bf16.mxu0 0
        %1986 = vmatpush1.bf16.xpose.msra.mxu0 0
        %1987 = vmatprep.subr.bf16.mxu0 0
        %1988 = vmatpush1.bf16.xpose.msra.mxu0 0
        %1989 = vmatprep.subr.bf16.mxu0 0
        %1990 = vmatpush1.bf16.xpose.msra.mxu0 0
        %1991 = vmatprep.subr.bf16.mxu0 0
        %1992 = vmatpush1.bf16.xpose.msra.mxu0 0
        %1993 = vmatprep.subr.bf16.mxu0 0
        %1994 = vmatpush1.bf16.xpose.msra.mxu0 0
        %1995 = vmatprep.subr.bf16.mxu0 0
        %1996 = vmatpush1.bf16.xpose.msra.mxu0 0
        %1997 = vmatprep.subr.bf16.mxu0 0
        %1998 = vmatpush1.bf16.xpose.msra.mxu0 %v1981
        %1999 = vmatprep.subr.bf16.mxu0 0
        %2000 = vmatpush2.bf16.xpose.msra.mxu0 0
        %2001 = vmatprep.subr.bf16.mxu0 0
        %2002 = vmatpush2.bf16.xpose.msra.mxu0 0
        %2003 = vmatprep.subr.bf16.mxu0 0
        %2004 = vmatpush2.bf16.xpose.msra.mxu0 0
        %2005 = vmatprep.subr.bf16.mxu0 0
        %2006 = vmatpush2.bf16.xpose.msra.mxu0 0
        %2007 = vmatprep.subr.bf16.mxu0 0
        %2008 = vmatpush2.bf16.xpose.msra.mxu0 0
        %2009 = vmatprep.subr.bf16.mxu0 0
        %2010 = vmatpush2.bf16.xpose.msra.mxu0 0
        %2011 = vmatprep.subr.bf16.mxu0 0
        %2012 = vmatpush2.bf16.xpose.msra.mxu0 0
        %2013 = vmatprep.subr.bf16.mxu0 0
        %2014 = vmatpush2.bf16.xpose.msra.mxu0 0
        %2015 = vmatprep.mubr.bf16.mxu0 0
        %2016 = vmatmul.mubr.bf16.gmra.mxu0 %v1978
        %v2017 = vpop.f32.mrf.mxu0
        %v2018 = vadd.f32 0.0, %v2017
        %v2019 = vpop.f32.mrf.mxu0
        %v2020 = vpop.f32.mrf.mxu0
        %v2021 = vpop.f32.mrf.mxu0
        %2022 = vdwg.mxu0
        %2023 = vrot.lane.b32.xlu0 %v1775, 96
        %v2024 = vpop.permute.xlu0 %2023
        %v2026 = vsel %vm1832, %v1775, 0
        %v2029 = vsel %vm1832, %v2024, 0
        %2031 = vmatprep.subr.bf16.mxu0 0
        %2032 = vmatpush1.bf16.xpose.msra.mxu0 0
        %2033 = vmatprep.subr.bf16.mxu0 0
        %2034 = vmatpush1.bf16.xpose.msra.mxu0 0
        %2035 = vmatprep.subr.bf16.mxu0 0
        %2036 = vmatpush1.bf16.xpose.msra.mxu0 0
        %2037 = vmatprep.subr.bf16.mxu0 0
        %2038 = vmatpush1.bf16.xpose.msra.mxu0 0
        %2039 = vmatprep.subr.bf16.mxu0 0
        %2040 = vmatpush1.bf16.xpose.msra.mxu0 0
        %2041 = vmatprep.subr.bf16.mxu0 0
        %2042 = vmatpush1.bf16.xpose.msra.mxu0 0
        %2043 = vmatprep.subr.bf16.mxu0 0
        %2044 = vmatpush1.bf16.xpose.msra.mxu0 0
        %2045 = vmatprep.subr.bf16.mxu0 0
        %2046 = vmatpush1.bf16.xpose.msra.mxu0 %v2029
        %2047 = vmatprep.subr.bf16.mxu0 0
        %2048 = vmatpush2.bf16.xpose.msra.mxu0 0
        %2049 = vmatprep.subr.bf16.mxu0 0
        %2050 = vmatpush2.bf16.xpose.msra.mxu0 0
        %2051 = vmatprep.subr.bf16.mxu0 0
        %2052 = vmatpush2.bf16.xpose.msra.mxu0 0
        %2053 = vmatprep.subr.bf16.mxu0 0
        %2054 = vmatpush2.bf16.xpose.msra.mxu0 0
        %2055 = vmatprep.subr.bf16.mxu0 0
        %2056 = vmatpush2.bf16.xpose.msra.mxu0 0
        %2057 = vmatprep.subr.bf16.mxu0 0
        %2058 = vmatpush2.bf16.xpose.msra.mxu0 0
        %2059 = vmatprep.subr.bf16.mxu0 0
        %2060 = vmatpush2.bf16.xpose.msra.mxu0 0
        %2061 = vmatprep.subr.bf16.mxu0 0
        %2062 = vmatpush2.bf16.xpose.msra.mxu0 0
        %2063 = vmatprep.mubr.bf16.mxu0 0
        %2064 = vmatmul.mubr.bf16.gmra.mxu0 %v2026
        %v2065 = vpop.f32.mrf.mxu0
        %v2066 = vadd.f32 0.0, %v2065
        %v2067 = vpop.f32.mrf.mxu0
        %v2068 = vpop.f32.mrf.mxu0
        %v2069 = vpop.f32.mrf.mxu0
        %2070 = vdwg.mxu0
        %2071 = vrot.lane.b32.xlu0 %v1777, 96
        %v2072 = vpop.permute.xlu0 %2071
        %v2074 = vsel %vm1832, %v1777, 0
        %v2077 = vsel %vm1832, %v2072, 0
        %2079 = vmatprep.subr.bf16.mxu0 0
        %2080 = vmatpush1.bf16.xpose.msra.mxu0 0
        %2081 = vmatprep.subr.bf16.mxu0 0
        %2082 = vmatpush1.bf16.xpose.msra.mxu0 0
        %2083 = vmatprep.subr.bf16.mxu0 0
        %2084 = vmatpush1.bf16.xpose.msra.mxu0 0
        %2085 = vmatprep.subr.bf16.mxu0 0
        %2086 = vmatpush1.bf16.xpose.msra.mxu0 0
        %2087 = vmatprep.subr.bf16.mxu0 0
        %2088 = vmatpush1.bf16.xpose.msra.mxu0 0
        %2089 = vmatprep.subr.bf16.mxu0 0
        %2090 = vmatpush1.bf16.xpose.msra.mxu0 0
        %2091 = vmatprep.subr.bf16.mxu0 0
        %2092 = vmatpush1.bf16.xpose.msra.mxu0 0
        %2093 = vmatprep.subr.bf16.mxu0 0
        %2094 = vmatpush1.bf16.xpose.msra.mxu0 %v2077
        %2095 = vmatprep.subr.bf16.mxu0 0
        %2096 = vmatpush2.bf16.xpose.msra.mxu0 0
        %2097 = vmatprep.subr.bf16.mxu0 0
        %2098 = vmatpush2.bf16.xpose.msra.mxu0 0
        %2099 = vmatprep.subr.bf16.mxu0 0
        %2100 = vmatpush2.bf16.xpose.msra.mxu0 0
        %2101 = vmatprep.subr.bf16.mxu0 0
        %2102 = vmatpush2.bf16.xpose.msra.mxu0 0
        %2103 = vmatprep.subr.bf16.mxu0 0
        %2104 = vmatpush2.bf16.xpose.msra.mxu0 0
        %2105 = vmatprep.subr.bf16.mxu0 0
        %2106 = vmatpush2.bf16.xpose.msra.mxu0 0
        %2107 = vmatprep.subr.bf16.mxu0 0
        %2108 = vmatpush2.bf16.xpose.msra.mxu0 0
        %2109 = vmatprep.subr.bf16.mxu0 0
        %2110 = vmatpush2.bf16.xpose.msra.mxu0 0
        %2111 = vmatprep.mubr.bf16.mxu0 0
        %2112 = vmatmul.mubr.bf16.gmra.mxu0 %v2074
        %v2113 = vpop.f32.mrf.mxu0
        %v2114 = vadd.f32 0.0, %v2113
        %v2115 = vpop.f32.mrf.mxu0
        %v2116 = vpop.f32.mrf.mxu0
        %v2117 = vpop.f32.mrf.mxu0
        %2118 = vdwg.mxu0
        %2119 = vrot.lane.b32.xlu0 %v1779, 96
        %v2120 = vpop.permute.xlu0 %2119
        %v2122 = vsel %vm1832, %v1779, 0
        %v2125 = vsel %vm1832, %v2120, 0
        %2127 = vmatprep.subr.bf16.mxu0 0
        %2128 = vmatpush1.bf16.xpose.msra.mxu0 0
        %2129 = vmatprep.subr.bf16.mxu0 0
        %2130 = vmatpush1.bf16.xpose.msra.mxu0 0
        %2131 = vmatprep.subr.bf16.mxu0 0
        %2132 = vmatpush1.bf16.xpose.msra.mxu0 0
        %2133 = vmatprep.subr.bf16.mxu0 0
        %2134 = vmatpush1.bf16.xpose.msra.mxu0 0
        %2135 = vmatprep.subr.bf16.mxu0 0
        %2136 = vmatpush1.bf16.xpose.msra.mxu0 0
        %2137 = vmatprep.subr.bf16.mxu0 0
        %2138 = vmatpush1.bf16.xpose.msra.mxu0 0
        %2139 = vmatprep.subr.bf16.mxu0 0
        %2140 = vmatpush1.bf16.xpose.msra.mxu0 0
        %2141 = vmatprep.subr.bf16.mxu0 0
        %2142 = vmatpush1.bf16.xpose.msra.mxu0 %v2125
        %2143 = vmatprep.subr.bf16.mxu0 0
        %2144 = vmatpush2.bf16.xpose.msra.mxu0 0
        %2145 = vmatprep.subr.bf16.mxu0 0
        %2146 = vmatpush2.bf16.xpose.msra.mxu0 0
        %2147 = vmatprep.subr.bf16.mxu0 0
        %2148 = vmatpush2.bf16.xpose.msra.mxu0 0
        %2149 = vmatprep.subr.bf16.mxu0 0
        %2150 = vmatpush2.bf16.xpose.msra.mxu0 0
        %2151 = vmatprep.subr.bf16.mxu0 0
        %2152 = vmatpush2.bf16.xpose.msra.mxu0 0
        %2153 = vmatprep.subr.bf16.mxu0 0
        %2154 = vmatpush2.bf16.xpose.msra.mxu0 0
        %2155 = vmatprep.subr.bf16.mxu0 0
        %2156 = vmatpush2.bf16.xpose.msra.mxu0 0
        %2157 = vmatprep.subr.bf16.mxu0 0
        %2158 = vmatpush2.bf16.xpose.msra.mxu0 0
        %2159 = vmatprep.mubr.bf16.mxu0 0
        %2160 = vmatmul.mubr.bf16.gmra.mxu0 %v2122
        %v2161 = vpop.f32.mrf.mxu0
        %v2162 = vadd.f32 0.0, %v2161
        %v2163 = vpop.f32.mrf.mxu0
        %v2164 = vpop.f32.mrf.mxu0
        %v2165 = vpop.f32.mrf.mxu0
        %2166 = vdwg.mxu0
        %2167 = vrot.lane.b32.xlu0 %v1781, 96
        %v2168 = vpop.permute.xlu0 %2167
        %v2170 = vsel %vm1832, %v1781, 0
        %v2173 = vsel %vm1832, %v2168, 0
        %2175 = vmatprep.subr.bf16.mxu0 0
        %2176 = vmatpush1.bf16.xpose.msra.mxu0 0
        %2177 = vmatprep.subr.bf16.mxu0 0
        %2178 = vmatpush1.bf16.xpose.msra.mxu0 0
        %2179 = vmatprep.subr.bf16.mxu0 0
        %2180 = vmatpush1.bf16.xpose.msra.mxu0 0
        %2181 = vmatprep.subr.bf16.mxu0 0
        %2182 = vmatpush1.bf16.xpose.msra.mxu0 0
        %2183 = vmatprep.subr.bf16.mxu0 0
        %2184 = vmatpush1.bf16.xpose.msra.mxu0 0
        %2185 = vmatprep.subr.bf16.mxu0 0
        %2186 = vmatpush1.bf16.xpose.msra.mxu0 0
        %2187 = vmatprep.subr.bf16.mxu0 0
        %2188 = vmatpush1.bf16.xpose.msra.mxu0 0
        %2189 = vmatprep.subr.bf16.mxu0 0
        %2190 = vmatpush1.bf16.xpose.msra.mxu0 %v2173
        %2191 = vmatprep.subr.bf16.mxu0 0
        %2192 = vmatpush2.bf16.xpose.msra.mxu0 0
        %2193 = vmatprep.subr.bf16.mxu0 0
        %2194 = vmatpush2.bf16.xpose.msra.mxu0 0
        %2195 = vmatprep.subr.bf16.mxu0 0
        %2196 = vmatpush2.bf16.xpose.msra.mxu0 0
        %2197 = vmatprep.subr.bf16.mxu0 0
        %2198 = vmatpush2.bf16.xpose.msra.mxu0 0
        %2199 = vmatprep.subr.bf16.mxu0 0
        %2200 = vmatpush2.bf16.xpose.msra.mxu0 0
        %2201 = vmatprep.subr.bf16.mxu0 0
        %2202 = vmatpush2.bf16.xpose.msra.mxu0 0
        %2203 = vmatprep.subr.bf16.mxu0 0
        %2204 = vmatpush2.bf16.xpose.msra.mxu0 0
        %2205 = vmatprep.subr.bf16.mxu0 0
        %2206 = vmatpush2.bf16.xpose.msra.mxu0 0
        %2207 = vmatprep.mubr.bf16.mxu0 0
        %2208 = vmatmul.mubr.bf16.gmra.mxu0 %v2170
        %v2209 = vpop.f32.mrf.mxu0
        %v2210 = vadd.f32 0.0, %v2209
        %v2211 = vpop.f32.mrf.mxu0
        %v2212 = vpop.f32.mrf.mxu0
        %v2213 = vpop.f32.mrf.mxu0
        %2214 = vdwg.mxu0
        %2215 = vrot.lane.b32.xlu0 %v1783, 96
        %v2216 = vpop.permute.xlu0 %2215
        %v2218 = vsel %vm1832, %v1783, 0
        %v2221 = vsel %vm1832, %v2216, 0
        %2223 = vmatprep.subr.bf16.mxu0 0
        %2224 = vmatpush1.bf16.xpose.msra.mxu0 0
        %2225 = vmatprep.subr.bf16.mxu0 0
        %2226 = vmatpush1.bf16.xpose.msra.mxu0 0
        %2227 = vmatprep.subr.bf16.mxu0 0
        %2228 = vmatpush1.bf16.xpose.msra.mxu0 0
        %2229 = vmatprep.subr.bf16.mxu0 0
        %2230 = vmatpush1.bf16.xpose.msra.mxu0 0
        %2231 = vmatprep.subr.bf16.mxu0 0
        %2232 = vmatpush1.bf16.xpose.msra.mxu0 0
        %2233 = vmatprep.subr.bf16.mxu0 0
        %2234 = vmatpush1.bf16.xpose.msra.mxu0 0
        %2235 = vmatprep.subr.bf16.mxu0 0
        %2236 = vmatpush1.bf16.xpose.msra.mxu0 0
        %2237 = vmatprep.subr.bf16.mxu0 0
        %2238 = vmatpush1.bf16.xpose.msra.mxu0 %v2221
        %2239 = vmatprep.subr.bf16.mxu0 0
        %2240 = vmatpush2.bf16.xpose.msra.mxu0 0
        %2241 = vmatprep.subr.bf16.mxu0 0
        %2242 = vmatpush2.bf16.xpose.msra.mxu0 0
        %2243 = vmatprep.subr.bf16.mxu0 0
        %2244 = vmatpush2.bf16.xpose.msra.mxu0 0
        %2245 = vmatprep.subr.bf16.mxu0 0
        %2246 = vmatpush2.bf16.xpose.msra.mxu0 0
        %2247 = vmatprep.subr.bf16.mxu0 0
        %2248 = vmatpush2.bf16.xpose.msra.mxu0 0
        %2249 = vmatprep.subr.bf16.mxu0 0
        %2250 = vmatpush2.bf16.xpose.msra.mxu0 0
        %2251 = vmatprep.subr.bf16.mxu0 0
        %2252 = vmatpush2.bf16.xpose.msra.mxu0 0
        %2253 = vmatprep.subr.bf16.mxu0 0
        %2254 = vmatpush2.bf16.xpose.msra.mxu0 0
        %2255 = vmatprep.mubr.bf16.mxu0 0
        %2256 = vmatmul.mubr.bf16.gmra.mxu0 %v2218
        %v2257 = vpop.f32.mrf.mxu0
        %v2258 = vadd.f32 0.0, %v2257
        %v2259 = vpop.f32.mrf.mxu0
        %v2260 = vpop.f32.mrf.mxu0
        %v2261 = vpop.f32.mrf.mxu0
        %2262 = vdwg.mxu0
        %2263 = vrot.lane.b32.xlu0 %v1785, 96
        %v2264 = vpop.permute.xlu0 %2263
        %v2266 = vsel %vm1832, %v1785, 0
        %v2269 = vsel %vm1832, %v2264, 0
        %2271 = vmatprep.subr.bf16.mxu0 0
        %2272 = vmatpush1.bf16.xpose.msra.mxu0 0
        %2273 = vmatprep.subr.bf16.mxu0 0
        %2274 = vmatpush1.bf16.xpose.msra.mxu0 0
        %2275 = vmatprep.subr.bf16.mxu0 0
        %2276 = vmatpush1.bf16.xpose.msra.mxu0 0
        %2277 = vmatprep.subr.bf16.mxu0 0
        %2278 = vmatpush1.bf16.xpose.msra.mxu0 0
        %2279 = vmatprep.subr.bf16.mxu0 0
        %2280 = vmatpush1.bf16.xpose.msra.mxu0 0
        %2281 = vmatprep.subr.bf16.mxu0 0
        %2282 = vmatpush1.bf16.xpose.msra.mxu0 0
        %2283 = vmatprep.subr.bf16.mxu0 0
        %2284 = vmatpush1.bf16.xpose.msra.mxu0 0
        %2285 = vmatprep.subr.bf16.mxu0 0
        %2286 = vmatpush1.bf16.xpose.msra.mxu0 %v2269
        %2287 = vmatprep.subr.bf16.mxu0 0
        %2288 = vmatpush2.bf16.xpose.msra.mxu0 0
        %2289 = vmatprep.subr.bf16.mxu0 0
        %2290 = vmatpush2.bf16.xpose.msra.mxu0 0
        %2291 = vmatprep.subr.bf16.mxu0 0
        %2292 = vmatpush2.bf16.xpose.msra.mxu0 0
        %2293 = vmatprep.subr.bf16.mxu0 0
        %2294 = vmatpush2.bf16.xpose.msra.mxu0 0
        %2295 = vmatprep.subr.bf16.mxu0 0
        %2296 = vmatpush2.bf16.xpose.msra.mxu0 0
        %2297 = vmatprep.subr.bf16.mxu0 0
        %2298 = vmatpush2.bf16.xpose.msra.mxu0 0
        %2299 = vmatprep.subr.bf16.mxu0 0
        %2300 = vmatpush2.bf16.xpose.msra.mxu0 0
        %2301 = vmatprep.subr.bf16.mxu0 0
        %2302 = vmatpush2.bf16.xpose.msra.mxu0 0
        %2303 = vmatprep.mubr.bf16.mxu0 0
        %2304 = vmatmul.mubr.bf16.gmra.mxu0 %v2266
        %v2305 = vpop.f32.mrf.mxu0
        %v2306 = vadd.f32 0.0, %v2305
        %v2307 = vpop.f32.mrf.mxu0
        %v2308 = vpop.f32.mrf.mxu0
        %v2309 = vpop.f32.mrf.mxu0
        %2310 = vdwg.mxu0
        %2311 = vrot.lane.b32.xlu0 %v1787, 96
        %v2312 = vpop.permute.xlu0 %2311
        %v2314 = vsel %vm1832, %v1787, 0
        %v2317 = vsel %vm1832, %v2312, 0
        %2319 = vmatprep.subr.bf16.mxu0 0
        %2320 = vmatpush1.bf16.xpose.msra.mxu0 0
        %2321 = vmatprep.subr.bf16.mxu0 0
        %2322 = vmatpush1.bf16.xpose.msra.mxu0 0
        %2323 = vmatprep.subr.bf16.mxu0 0
        %2324 = vmatpush1.bf16.xpose.msra.mxu0 0
        %2325 = vmatprep.subr.bf16.mxu0 0
        %2326 = vmatpush1.bf16.xpose.msra.mxu0 0
        %2327 = vmatprep.subr.bf16.mxu0 0
        %2328 = vmatpush1.bf16.xpose.msra.mxu0 0
        %2329 = vmatprep.subr.bf16.mxu0 0
        %2330 = vmatpush1.bf16.xpose.msra.mxu0 0
        %2331 = vmatprep.subr.bf16.mxu0 0
        %2332 = vmatpush1.bf16.xpose.msra.mxu0 0
        %2333 = vmatprep.subr.bf16.mxu0 0
        %2334 = vmatpush1.bf16.xpose.msra.mxu0 %v2317
        %2335 = vmatprep.subr.bf16.mxu0 0
        %2336 = vmatpush2.bf16.xpose.msra.mxu0 0
        %2337 = vmatprep.subr.bf16.mxu0 0
        %2338 = vmatpush2.bf16.xpose.msra.mxu0 0
        %2339 = vmatprep.subr.bf16.mxu0 0
        %2340 = vmatpush2.bf16.xpose.msra.mxu0 0
        %2341 = vmatprep.subr.bf16.mxu0 0
        %2342 = vmatpush2.bf16.xpose.msra.mxu0 0
        %2343 = vmatprep.subr.bf16.mxu0 0
        %2344 = vmatpush2.bf16.xpose.msra.mxu0 0
        %2345 = vmatprep.subr.bf16.mxu0 0
        %2346 = vmatpush2.bf16.xpose.msra.mxu0 0
        %2347 = vmatprep.subr.bf16.mxu0 0
        %2348 = vmatpush2.bf16.xpose.msra.mxu0 0
        %2349 = vmatprep.subr.bf16.mxu0 0
        %2350 = vmatpush2.bf16.xpose.msra.mxu0 0
        %2351 = vmatprep.mubr.bf16.mxu0 0
        %2352 = vmatmul.mubr.bf16.gmra.mxu0 %v2314
        %v2353 = vpop.f32.mrf.mxu0
        %v2354 = vadd.f32 0.0, %v2353
        %v2355 = vpop.f32.mrf.mxu0
        %v2356 = vpop.f32.mrf.mxu0
        %v2357 = vpop.f32.mrf.mxu0
        %2358 = vdwg.mxu0
        %2359 = vrot.lane.b32.xlu0 %v1789, 96
        %v2360 = vpop.permute.xlu0 %2359
        %v2362 = vsel %vm1832, %v1789, 0
        %v2365 = vsel %vm1832, %v2360, 0
        %2367 = vmatprep.subr.bf16.mxu0 0
        %2368 = vmatpush1.bf16.xpose.msra.mxu0 0
        %2369 = vmatprep.subr.bf16.mxu0 0
        %2370 = vmatpush1.bf16.xpose.msra.mxu0 0
        %2371 = vmatprep.subr.bf16.mxu0 0
        %2372 = vmatpush1.bf16.xpose.msra.mxu0 0
        %2373 = vmatprep.subr.bf16.mxu0 0
        %2374 = vmatpush1.bf16.xpose.msra.mxu0 0
        %2375 = vmatprep.subr.bf16.mxu0 0
        %2376 = vmatpush1.bf16.xpose.msra.mxu0 0
        %2377 = vmatprep.subr.bf16.mxu0 0
        %2378 = vmatpush1.bf16.xpose.msra.mxu0 0
        %2379 = vmatprep.subr.bf16.mxu0 0
        %2380 = vmatpush1.bf16.xpose.msra.mxu0 0
        %2381 = vmatprep.subr.bf16.mxu0 0
        %2382 = vmatpush1.bf16.xpose.msra.mxu0 %v2365
        %2383 = vmatprep.subr.bf16.mxu0 0
        %2384 = vmatpush2.bf16.xpose.msra.mxu0 0
        %2385 = vmatprep.subr.bf16.mxu0 0
        %2386 = vmatpush2.bf16.xpose.msra.mxu0 0
        %2387 = vmatprep.subr.bf16.mxu0 0
        %2388 = vmatpush2.bf16.xpose.msra.mxu0 0
        %2389 = vmatprep.subr.bf16.mxu0 0
        %2390 = vmatpush2.bf16.xpose.msra.mxu0 0
        %2391 = vmatprep.subr.bf16.mxu0 0
        %2392 = vmatpush2.bf16.xpose.msra.mxu0 0
        %2393 = vmatprep.subr.bf16.mxu0 0
        %2394 = vmatpush2.bf16.xpose.msra.mxu0 0
        %2395 = vmatprep.subr.bf16.mxu0 0
        %2396 = vmatpush2.bf16.xpose.msra.mxu0 0
        %2397 = vmatprep.subr.bf16.mxu0 0
        %2398 = vmatpush2.bf16.xpose.msra.mxu0 0
        %2399 = vmatprep.mubr.bf16.mxu0 0
        %2400 = vmatmul.mubr.bf16.gmra.mxu0 %v2362
        %v2401 = vpop.f32.mrf.mxu0
        %v2402 = vadd.f32 0.0, %v2401
        %v2403 = vpop.f32.mrf.mxu0
        %v2404 = vpop.f32.mrf.mxu0
        %v2405 = vpop.f32.mrf.mxu0
        %2406 = vdwg.mxu0
        %2407 = vrot.lane.b32.xlu0 %v1791, 96
        %v2408 = vpop.permute.xlu0 %2407
        %v2410 = vsel %vm1832, %v1791, 0
        %v2413 = vsel %vm1832, %v2408, 0
        %2415 = vmatprep.subr.bf16.mxu0 0
        %2416 = vmatpush1.bf16.xpose.msra.mxu0 0
        %2417 = vmatprep.subr.bf16.mxu0 0
        %2418 = vmatpush1.bf16.xpose.msra.mxu0 0
        %2419 = vmatprep.subr.bf16.mxu0 0
        %2420 = vmatpush1.bf16.xpose.msra.mxu0 0
        %2421 = vmatprep.subr.bf16.mxu0 0
        %2422 = vmatpush1.bf16.xpose.msra.mxu0 0
        %2423 = vmatprep.subr.bf16.mxu0 0
        %2424 = vmatpush1.bf16.xpose.msra.mxu0 0
        %2425 = vmatprep.subr.bf16.mxu0 0
        %2426 = vmatpush1.bf16.xpose.msra.mxu0 0
        %2427 = vmatprep.subr.bf16.mxu0 0
        %2428 = vmatpush1.bf16.xpose.msra.mxu0 0
        %2429 = vmatprep.subr.bf16.mxu0 0
        %2430 = vmatpush1.bf16.xpose.msra.mxu0 %v2413
        %2431 = vmatprep.subr.bf16.mxu0 0
        %2432 = vmatpush2.bf16.xpose.msra.mxu0 0
        %2433 = vmatprep.subr.bf16.mxu0 0
        %2434 = vmatpush2.bf16.xpose.msra.mxu0 0
        %2435 = vmatprep.subr.bf16.mxu0 0
        %2436 = vmatpush2.bf16.xpose.msra.mxu0 0
        %2437 = vmatprep.subr.bf16.mxu0 0
        %2438 = vmatpush2.bf16.xpose.msra.mxu0 0
        %2439 = vmatprep.subr.bf16.mxu0 0
        %2440 = vmatpush2.bf16.xpose.msra.mxu0 0
        %2441 = vmatprep.subr.bf16.mxu0 0
        %2442 = vmatpush2.bf16.xpose.msra.mxu0 0
        %2443 = vmatprep.subr.bf16.mxu0 0
        %2444 = vmatpush2.bf16.xpose.msra.mxu0 0
        %2445 = vmatprep.subr.bf16.mxu0 0
        %2446 = vmatpush2.bf16.xpose.msra.mxu0 0
        %2447 = vmatprep.mubr.bf16.mxu0 0
        %2448 = vmatmul.mubr.bf16.gmra.mxu0 %v2410
        %v2449 = vpop.f32.mrf.mxu0
        %v2450 = vadd.f32 0.0, %v2449
        %v2451 = vpop.f32.mrf.mxu0
        %v2452 = vpop.f32.mrf.mxu0
        %v2453 = vpop.f32.mrf.mxu0
        %2454 = vdwg.mxu0
        %2455 = vrot.lane.b32.xlu0 %v1793, 96
        %v2456 = vpop.permute.xlu0 %2455
        %v2458 = vsel %vm1832, %v1793, 0
        %v2461 = vsel %vm1832, %v2456, 0
        %2463 = vmatprep.subr.bf16.mxu0 0
        %2464 = vmatpush1.bf16.xpose.msra.mxu0 0
        %2465 = vmatprep.subr.bf16.mxu0 0
        %2466 = vmatpush1.bf16.xpose.msra.mxu0 0
        %2467 = vmatprep.subr.bf16.mxu0 0
        %2468 = vmatpush1.bf16.xpose.msra.mxu0 0
        %2469 = vmatprep.subr.bf16.mxu0 0
        %2470 = vmatpush1.bf16.xpose.msra.mxu0 0
        %2471 = vmatprep.subr.bf16.mxu0 0
        %2472 = vmatpush1.bf16.xpose.msra.mxu0 0
        %2473 = vmatprep.subr.bf16.mxu0 0
        %2474 = vmatpush1.bf16.xpose.msra.mxu0 0
        %2475 = vmatprep.subr.bf16.mxu0 0
        %2476 = vmatpush1.bf16.xpose.msra.mxu0 0
        %2477 = vmatprep.subr.bf16.mxu0 0
        %2478 = vmatpush1.bf16.xpose.msra.mxu0 %v2461
        %2479 = vmatprep.subr.bf16.mxu0 0
        %2480 = vmatpush2.bf16.xpose.msra.mxu0 0
        %2481 = vmatprep.subr.bf16.mxu0 0
        %2482 = vmatpush2.bf16.xpose.msra.mxu0 0
        %2483 = vmatprep.subr.bf16.mxu0 0
        %2484 = vmatpush2.bf16.xpose.msra.mxu0 0
        %2485 = vmatprep.subr.bf16.mxu0 0
        %2486 = vmatpush2.bf16.xpose.msra.mxu0 0
        %2487 = vmatprep.subr.bf16.mxu0 0
        %2488 = vmatpush2.bf16.xpose.msra.mxu0 0
        %2489 = vmatprep.subr.bf16.mxu0 0
        %2490 = vmatpush2.bf16.xpose.msra.mxu0 0
        %2491 = vmatprep.subr.bf16.mxu0 0
        %2492 = vmatpush2.bf16.xpose.msra.mxu0 0
        %2493 = vmatprep.subr.bf16.mxu0 0
        %2494 = vmatpush2.bf16.xpose.msra.mxu0 0
        %2495 = vmatprep.mubr.bf16.mxu0 0
        %2496 = vmatmul.mubr.bf16.gmra.mxu0 %v2458
        %v2497 = vpop.f32.mrf.mxu0
        %v2498 = vadd.f32 0.0, %v2497
        %v2499 = vpop.f32.mrf.mxu0
        %v2500 = vpop.f32.mrf.mxu0
        %v2501 = vpop.f32.mrf.mxu0
        %2502 = vdwg.mxu0
        %2503 = vrot.lane.b32.xlu0 %v1795, 96
        %v2504 = vpop.permute.xlu0 %2503
        %v2506 = vsel %vm1832, %v1795, 0
        %v2509 = vsel %vm1832, %v2504, 0
        %2511 = vmatprep.subr.bf16.mxu0 0
        %2512 = vmatpush1.bf16.xpose.msra.mxu0 0
        %2513 = vmatprep.subr.bf16.mxu0 0
        %2514 = vmatpush1.bf16.xpose.msra.mxu0 0
        %2515 = vmatprep.subr.bf16.mxu0 0
        %2516 = vmatpush1.bf16.xpose.msra.mxu0 0
        %2517 = vmatprep.subr.bf16.mxu0 0
        %2518 = vmatpush1.bf16.xpose.msra.mxu0 0
        %2519 = vmatprep.subr.bf16.mxu0 0
        %2520 = vmatpush1.bf16.xpose.msra.mxu0 0
        %2521 = vmatprep.subr.bf16.mxu0 0
        %2522 = vmatpush1.bf16.xpose.msra.mxu0 0
        %2523 = vmatprep.subr.bf16.mxu0 0
        %2524 = vmatpush1.bf16.xpose.msra.mxu0 0
        %2525 = vmatprep.subr.bf16.mxu0 0
        %2526 = vmatpush1.bf16.xpose.msra.mxu0 %v2509
        %2527 = vmatprep.subr.bf16.mxu0 0
        %2528 = vmatpush2.bf16.xpose.msra.mxu0 0
        %2529 = vmatprep.subr.bf16.mxu0 0
        %2530 = vmatpush2.bf16.xpose.msra.mxu0 0
        %2531 = vmatprep.subr.bf16.mxu0 0
        %2532 = vmatpush2.bf16.xpose.msra.mxu0 0
        %2533 = vmatprep.subr.bf16.mxu0 0
        %2534 = vmatpush2.bf16.xpose.msra.mxu0 0
        %2535 = vmatprep.subr.bf16.mxu0 0
        %2536 = vmatpush2.bf16.xpose.msra.mxu0 0
        %2537 = vmatprep.subr.bf16.mxu0 0
        %2538 = vmatpush2.bf16.xpose.msra.mxu0 0
        %2539 = vmatprep.subr.bf16.mxu0 0
        %2540 = vmatpush2.bf16.xpose.msra.mxu0 0
        %2541 = vmatprep.subr.bf16.mxu0 0
        %2542 = vmatpush2.bf16.xpose.msra.mxu0 0
        %2543 = vmatprep.mubr.bf16.mxu0 0
        %2544 = vmatmul.mubr.bf16.gmra.mxu0 %v2506
        %v2545 = vpop.f32.mrf.mxu0
        %v2546 = vadd.f32 0.0, %v2545
        %v2547 = vpop.f32.mrf.mxu0
        %v2548 = vpop.f32.mrf.mxu0
        %v2549 = vpop.f32.mrf.mxu0
        %2550 = vdwg.mxu0
        %2551 = vrot.lane.b32.xlu0 %v1797, 96
        %v2552 = vpop.permute.xlu0 %2551
        %v2554 = vsel %vm1832, %v1797, 0
        %v2557 = vsel %vm1832, %v2552, 0
        %2559 = vmatprep.subr.bf16.mxu0 0
        %2560 = vmatpush1.bf16.xpose.msra.mxu0 0
        %2561 = vmatprep.subr.bf16.mxu0 0
        %2562 = vmatpush1.bf16.xpose.msra.mxu0 0
        %2563 = vmatprep.subr.bf16.mxu0 0
        %2564 = vmatpush1.bf16.xpose.msra.mxu0 0
        %2565 = vmatprep.subr.bf16.mxu0 0
        %2566 = vmatpush1.bf16.xpose.msra.mxu0 0
        %2567 = vmatprep.subr.bf16.mxu0 0
        %2568 = vmatpush1.bf16.xpose.msra.mxu0 0
        %2569 = vmatprep.subr.bf16.mxu0 0
        %2570 = vmatpush1.bf16.xpose.msra.mxu0 0
        %2571 = vmatprep.subr.bf16.mxu0 0
        %2572 = vmatpush1.bf16.xpose.msra.mxu0 0
        %2573 = vmatprep.subr.bf16.mxu0 0
        %2574 = vmatpush1.bf16.xpose.msra.mxu0 %v2557
        %2575 = vmatprep.subr.bf16.mxu0 0
        %2576 = vmatpush2.bf16.xpose.msra.mxu0 0
        %2577 = vmatprep.subr.bf16.mxu0 0
        %2578 = vmatpush2.bf16.xpose.msra.mxu0 0
        %2579 = vmatprep.subr.bf16.mxu0 0
        %2580 = vmatpush2.bf16.xpose.msra.mxu0 0
        %2581 = vmatprep.subr.bf16.mxu0 0
        %2582 = vmatpush2.bf16.xpose.msra.mxu0 0
        %2583 = vmatprep.subr.bf16.mxu0 0
        %2584 = vmatpush2.bf16.xpose.msra.mxu0 0
        %2585 = vmatprep.subr.bf16.mxu0 0
        %2586 = vmatpush2.bf16.xpose.msra.mxu0 0
        %2587 = vmatprep.subr.bf16.mxu0 0
        %2588 = vmatpush2.bf16.xpose.msra.mxu0 0
        %2589 = vmatprep.subr.bf16.mxu0 0
        %2590 = vmatpush2.bf16.xpose.msra.mxu0 0
        %2591 = vmatprep.mubr.bf16.mxu0 0
        %2592 = vmatmul.mubr.bf16.gmra.mxu0 %v2554
        %v2593 = vpop.f32.mrf.mxu0
        %v2594 = vadd.f32 0.0, %v2593
        %v2595 = vpop.f32.mrf.mxu0
        %v2596 = vpop.f32.mrf.mxu0
        %v2597 = vpop.f32.mrf.mxu0
        %2598 = vdwg.mxu0
        %v2599 = vmul.f32 %v1874, 0.5
        %v2600 = vmul.f32 %v1922, 0.5
        %v2601 = vmul.f32 %v1970, 0.5
        %v2602 = vmul.f32 %v2018, 0.5
        %v2603 = vmul.f32 %v2066, 0.5
        %v2604 = vmul.f32 %v2114, 0.5
        %v2605 = vmul.f32 %v2162, 0.5
        %v2606 = vmul.f32 %v2210, 0.5
        %v2607 = vmul.f32 %v2258, 0.5
        %v2608 = vmul.f32 %v2306, 0.5
        %v2609 = vmul.f32 %v2354, 0.5
        %v2610 = vmul.f32 %v2402, 0.5
        %v2611 = vmul.f32 %v2450, 0.5
        %v2612 = vmul.f32 %v2498, 0.5
        %v2613 = vmul.f32 %v2546, 0.5
        %v2614 = vmul.f32 %v2594, 0.5
        %vm2615 = vcmask 64512
        %v2616 = vsel %vm2615, %v2599, -inf
        %2617 = vmax.xlane.f32.xlu0 %v2616
        %v2618 = vpop.xlane.xlu0 %2617
        %v2619 = vsel %vm2615, %v2600, -inf
        %2620 = vmax.xlane.f32.xlu0 %v2619
        %v2621 = vpop.xlane.xlu0 %2620
        %v2622 = vsel %vm2615, %v2601, -inf
        %2623 = vmax.xlane.f32.xlu0 %v2622
        %v2624 = vpop.xlane.xlu0 %2623
        %v2625 = vsel %vm2615, %v2602, -inf
        %2626 = vmax.xlane.f32.xlu0 %v2625
        %v2627 = vpop.xlane.xlu0 %2626
        %v2628 = vsel %vm2615, %v2603, -inf
        %2629 = vmax.xlane.f32.xlu0 %v2628
        %v2630 = vpop.xlane.xlu0 %2629
        %v2631 = vsel %vm2615, %v2604, -inf
        %2632 = vmax.xlane.f32.xlu0 %v2631
        %v2633 = vpop.xlane.xlu0 %2632
        %v2634 = vsel %vm2615, %v2605, -inf
        %2635 = vmax.xlane.f32.xlu0 %v2634
        %v2636 = vpop.xlane.xlu0 %2635
        %v2637 = vsel %vm2615, %v2606, -inf
        %2638 = vmax.xlane.f32.xlu0 %v2637
        %v2639 = vpop.xlane.xlu0 %2638
        %v2640 = vsel %vm2615, %v2607, -inf
        %2641 = vmax.xlane.f32.xlu0 %v2640
        %v2642 = vpop.xlane.xlu0 %2641
        %v2643 = vsel %vm2615, %v2608, -inf
        %2644 = vmax.xlane.f32.xlu0 %v2643
        %v2645 = vpop.xlane.xlu0 %2644
        %v2646 = vsel %vm2615, %v2609, -inf
        %2647 = vmax.xlane.f32.xlu0 %v2646
        %v2648 = vpop.xlane.xlu0 %2647
        %v2649 = vsel %vm2615, %v2610, -inf
        %2650 = vmax.xlane.f32.xlu0 %v2649
        %v2651 = vpop.xlane.xlu0 %2650
        %v2652 = vsel %vm2615, %v2611, -inf
        %2653 = vmax.xlane.f32.xlu0 %v2652
        %v2654 = vpop.xlane.xlu0 %2653
        %v2655 = vsel %vm2615, %v2612, -inf
        %2656 = vmax.xlane.f32.xlu0 %v2655
        %v2657 = vpop.xlane.xlu0 %2656
        %v2658 = vsel %vm2615, %v2613, -inf
        %2659 = vmax.xlane.f32.xlu0 %v2658
        %v2660 = vpop.xlane.xlu0 %2659
        %v2661 = vsel %vm2615, %v2614, -inf
        %2662 = vmax.xlane.f32.xlu0 %v2661
        %v2663 = vpop.xlane.xlu0 %2662
        %v2664 = vsub.f32 %v2599, %v2618
        %v2665 = vsub.f32 %v2600, %v2621
        %v2666 = vsub.f32 %v2601, %v2624
        %v2667 = vsub.f32 %v2602, %v2627
        %v2668 = vsub.f32 %v2603, %v2630
        %v2669 = vsub.f32 %v2604, %v2633
        %v2670 = vsub.f32 %v2605, %v2636
        %v2671 = vsub.f32 %v2606, %v2639
        %v2672 = vsub.f32 %v2607, %v2642
        %v2673 = vsub.f32 %v2608, %v2645
        %v2674 = vsub.f32 %v2609, %v2648
        %v2675 = vsub.f32 %v2610, %v2651
        %v2676 = vsub.f32 %v2611, %v2654
        %v2677 = vsub.f32 %v2612, %v2657
        %v2678 = vsub.f32 %v2613, %v2660
        %v2679 = vsub.f32 %v2614, %v2663
        %v2680 = vmul.f32 %v2664, 1.442695
        %v2681 = vpow.pop %v2680
        %v2682 = vmul.f32 %v2665, 1.442695
        %v2683 = vpow.pop %v2682
        %v2684 = vmul.f32 %v2666, 1.442695
        %v2685 = vpow.pop %v2684
        %v2686 = vmul.f32 %v2667, 1.442695
        %v2687 = vpow.pop %v2686
        %v2688 = vmul.f32 %v2668, 1.442695
        %v2689 = vpow.pop %v2688
        %v2690 = vmul.f32 %v2669, 1.442695
        %v2691 = vpow.pop %v2690
        %v2692 = vmul.f32 %v2670, 1.442695
        %v2693 = vpow.pop %v2692
        %v2694 = vmul.f32 %v2671, 1.442695
        %v2695 = vpow.pop %v2694
        %v2696 = vmul.f32 %v2672, 1.442695
        %v2697 = vpow.pop %v2696
        %v2698 = vmul.f32 %v2673, 1.442695
        %v2699 = vpow.pop %v2698
        %v2700 = vmul.f32 %v2674, 1.442695
        %v2701 = vpow.pop %v2700
        %v2702 = vmul.f32 %v2675, 1.442695
        %v2703 = vpow.pop %v2702
        %v2704 = vmul.f32 %v2676, 1.442695
        %v2705 = vpow.pop %v2704
        %v2706 = vmul.f32 %v2677, 1.442695
        %v2707 = vpow.pop %v2706
        %v2708 = vmul.f32 %v2678, 1.442695
        %v2709 = vpow.pop %v2708
        %v2710 = vmul.f32 %v2679, 1.442695
        %v2711 = vpow.pop %v2710
        %v2712 = vsel %vm2615, %v2681, 0.0
        %2713 = vadd.xlane.f32.xlu0 %v2712
        %v2714 = vpop.xlane.xlu0 %2713
        %v2715 = vsel %vm2615, %v2683, 0.0
        %2716 = vadd.xlane.f32.xlu0 %v2715
        %v2717 = vpop.xlane.xlu0 %2716
        %v2718 = vsel %vm2615, %v2685, 0.0
        %2719 = vadd.xlane.f32.xlu0 %v2718
        %v2720 = vpop.xlane.xlu0 %2719
        %v2721 = vsel %vm2615, %v2687, 0.0
        %2722 = vadd.xlane.f32.xlu0 %v2721
        %v2723 = vpop.xlane.xlu0 %2722
        %v2724 = vsel %vm2615, %v2689, 0.0
        %2725 = vadd.xlane.f32.xlu0 %v2724
        %v2726 = vpop.xlane.xlu0 %2725
        %v2727 = vsel %vm2615, %v2691, 0.0
        %2728 = vadd.xlane.f32.xlu0 %v2727
        %v2729 = vpop.xlane.xlu0 %2728
        %v2730 = vsel %vm2615, %v2693, 0.0
        %2731 = vadd.xlane.f32.xlu0 %v2730
        %v2732 = vpop.xlane.xlu0 %2731
        %v2733 = vsel %vm2615, %v2695, 0.0
        %2734 = vadd.xlane.f32.xlu0 %v2733
        %v2735 = vpop.xlane.xlu0 %2734
        %v2736 = vsel %vm2615, %v2697, 0.0
        %2737 = vadd.xlane.f32.xlu0 %v2736
        %v2738 = vpop.xlane.xlu0 %2737
        %v2739 = vsel %vm2615, %v2699, 0.0
        %2740 = vadd.xlane.f32.xlu0 %v2739
        %v2741 = vpop.xlane.xlu0 %2740
        %v2742 = vsel %vm2615, %v2701, 0.0
        %2743 = vadd.xlane.f32.xlu0 %v2742
        %v2744 = vpop.xlane.xlu0 %2743
        %v2745 = vsel %vm2615, %v2703, 0.0
        %2746 = vadd.xlane.f32.xlu0 %v2745
        %v2747 = vpop.xlane.xlu0 %2746
        %v2748 = vsel %vm2615, %v2705, 0.0
        %2749 = vadd.xlane.f32.xlu0 %v2748
        %v2750 = vpop.xlane.xlu0 %2749
        %v2751 = vsel %vm2615, %v2707, 0.0
        %2752 = vadd.xlane.f32.xlu0 %v2751
        %v2753 = vpop.xlane.xlu0 %2752
        %v2754 = vsel %vm2615, %v2709, 0.0
        %2755 = vadd.xlane.f32.xlu0 %v2754
        %v2756 = vpop.xlane.xlu0 %2755
        %v2757 = vsel %vm2615, %v2711, 0.0
        %2758 = vadd.xlane.f32.xlu0 %v2757
        %v2759 = vpop.xlane.xlu0 %2758
        %v2760 = vrcp.pop %v2714
        %v2761 = vrcp.pop %v2717
        %v2762 = vrcp.pop %v2720
        %v2763 = vrcp.pop %v2723
        %v2764 = vrcp.pop %v2726
        %v2765 = vrcp.pop %v2729
        %v2766 = vrcp.pop %v2732
        %v2767 = vrcp.pop %v2735
        %v2768 = vrcp.pop %v2738
        %v2769 = vrcp.pop %v2741
        %v2770 = vrcp.pop %v2744
        %v2771 = vrcp.pop %v2747
        %v2772 = vrcp.pop %v2750
        %v2773 = vrcp.pop %v2753
        %v2774 = vrcp.pop %v2756
        %v2775 = vrcp.pop %v2759
        %v2776 = vmul.f32 %v2681, %v2760
        %v2777 = vmul.f32 %v2683, %v2761
        %v2778 = vmul.f32 %v2685, %v2762
        %v2779 = vmul.f32 %v2687, %v2763
        %v2780 = vmul.f32 %v2689, %v2764
        %v2781 = vmul.f32 %v2691, %v2765
        %v2782 = vmul.f32 %v2693, %v2766
        %v2783 = vmul.f32 %v2695, %v2767
        %v2784 = vmul.f32 %v2697, %v2768
        %v2785 = vmul.f32 %v2699, %v2769
        %v2786 = vmul.f32 %v2701, %v2770
        %v2787 = vmul.f32 %v2703, %v2771
        %v2788 = vmul.f32 %v2705, %v2772
        %v2789 = vmul.f32 %v2707, %v2773
        %v2790 = vmul.f32 %v2709, %v2774
        %v2791 = vmul.f32 %v2711, %v2775
        %v2792 = vpack.c.bf16 %v2776, %v2776
        %v2793 = vpack.c.bf16 %v2777, %v2777
        %v2794 = vpack.c.bf16 %v2778, %v2778
        %v2795 = vpack.c.bf16 %v2779, %v2779
        %v2796 = vpack.c.bf16 %v2780, %v2780
        %v2797 = vpack.c.bf16 %v2781, %v2781
        %v2798 = vpack.c.bf16 %v2782, %v2782
        %v2799 = vpack.c.bf16 %v2783, %v2783
        %v2800 = vpack.c.bf16 %v2784, %v2784
        %v2801 = vpack.c.bf16 %v2785, %v2785
        %v2802 = vpack.c.bf16 %v2786, %v2786
        %v2803 = vpack.c.bf16 %v2787, %v2787
        %v2804 = vpack.c.bf16 %v2788, %v2788
        %v2805 = vpack.c.bf16 %v2789, %v2789
        %v2806 = vpack.c.bf16 %v2790, %v2790
        %v2807 = vpack.c.bf16 %v2791, %v2791
        %v2809 = vsel %vm2615, %v2792, 0
        %vm2811 = vcmask 1043456
        %v2813 = vsel %vm2811, %v1798, 0
        %2815 = vmatprep.subr.bf16.mxu0 0
        %2816 = vmatpush1.bf16.msra.mxu0 0
        %2817 = vmatprep.subr.bf16.mxu0 0
        %2818 = vmatpush1.bf16.msra.mxu0 0
        %2819 = vmatprep.subr.bf16.mxu0 0
        %2820 = vmatpush1.bf16.msra.mxu0 0
        %2821 = vmatprep.subr.bf16.mxu0 0
        %2822 = vmatpush1.bf16.msra.mxu0 0
        %2823 = vmatprep.subr.bf16.mxu0 0
        %2824 = vmatpush1.bf16.msra.mxu0 0
        %2825 = vmatprep.subr.bf16.mxu0 0
        %2826 = vmatpush1.bf16.msra.mxu0 0
        %2827 = vmatprep.subr.bf16.mxu0 0
        %2828 = vmatpush1.bf16.msra.mxu0 0
        %2829 = vmatprep.subr.bf16.mxu0 0
        %2830 = vmatpush1.bf16.msra.mxu0 %v2813
        %2831 = vmatprep.subr.bf16.mxu0 0
        %2832 = vmatpush2.bf16.msra.mxu0 0
        %2833 = vmatprep.subr.bf16.mxu0 0
        %2834 = vmatpush2.bf16.msra.mxu0 0
        %2835 = vmatprep.subr.bf16.mxu0 0
        %2836 = vmatpush2.bf16.msra.mxu0 0
        %2837 = vmatprep.subr.bf16.mxu0 0
        %2838 = vmatpush2.bf16.msra.mxu0 0
        %2839 = vmatprep.subr.bf16.mxu0 0
        %2840 = vmatpush2.bf16.msra.mxu0 0
        %2841 = vmatprep.subr.bf16.mxu0 0
        %2842 = vmatpush2.bf16.msra.mxu0 0
        %2843 = vmatprep.subr.bf16.mxu0 0
        %2844 = vmatpush2.bf16.msra.mxu0 0
        %2845 = vmatprep.subr.bf16.mxu0 0
        %2846 = vmatpush2.bf16.msra.mxu0 0
        %2847 = vmatprep.mubr.bf16.mxu0 0
        %2848 = vmatmul.mubr.bf16.gmra.mxu0 %v2809
        %v2849 = vpop.f32.mrf.mxu0
        %v2850 = vadd.f32 0.0, %v2849
        %v2851 = vpop.f32.mrf.mxu0
        %v2852 = vpop.f32.mrf.mxu0
        %v2853 = vpop.f32.mrf.mxu0
        %2854 = vdwg.mxu0
        %v2856 = vsel %vm2615, %v2793, 0
        %v2859 = vsel %vm2811, %v1799, 0
        %2861 = vmatprep.subr.bf16.mxu0 0
        %2862 = vmatpush1.bf16.msra.mxu0 0
        %2863 = vmatprep.subr.bf16.mxu0 0
        %2864 = vmatpush1.bf16.msra.mxu0 0
        %2865 = vmatprep.subr.bf16.mxu0 0
        %2866 = vmatpush1.bf16.msra.mxu0 0
        %2867 = vmatprep.subr.bf16.mxu0 0
        %2868 = vmatpush1.bf16.msra.mxu0 0
        %2869 = vmatprep.subr.bf16.mxu0 0
        %2870 = vmatpush1.bf16.msra.mxu0 0
        %2871 = vmatprep.subr.bf16.mxu0 0
        %2872 = vmatpush1.bf16.msra.mxu0 0
        %2873 = vmatprep.subr.bf16.mxu0 0
        %2874 = vmatpush1.bf16.msra.mxu0 0
        %2875 = vmatprep.subr.bf16.mxu0 0
        %2876 = vmatpush1.bf16.msra.mxu0 %v2859
        %2877 = vmatprep.subr.bf16.mxu0 0
        %2878 = vmatpush2.bf16.msra.mxu0 0
        %2879 = vmatprep.subr.bf16.mxu0 0
        %2880 = vmatpush2.bf16.msra.mxu0 0
        %2881 = vmatprep.subr.bf16.mxu0 0
        %2882 = vmatpush2.bf16.msra.mxu0 0
        %2883 = vmatprep.subr.bf16.mxu0 0
        %2884 = vmatpush2.bf16.msra.mxu0 0
        %2885 = vmatprep.subr.bf16.mxu0 0
        %2886 = vmatpush2.bf16.msra.mxu0 0
        %2887 = vmatprep.subr.bf16.mxu0 0
        %2888 = vmatpush2.bf16.msra.mxu0 0
        %2889 = vmatprep.subr.bf16.mxu0 0
        %2890 = vmatpush2.bf16.msra.mxu0 0
        %2891 = vmatprep.subr.bf16.mxu0 0
        %2892 = vmatpush2.bf16.msra.mxu0 0
        %2893 = vmatprep.mubr.bf16.mxu0 0
        %2894 = vmatmul.mubr.bf16.gmra.mxu0 %v2856
        %v2895 = vpop.f32.mrf.mxu0
        %v2896 = vadd.f32 0.0, %v2895
        %v2897 = vpop.f32.mrf.mxu0
        %v2898 = vpop.f32.mrf.mxu0
        %v2899 = vpop.f32.mrf.mxu0
        %2900 = vdwg.mxu0
        %v2902 = vsel %vm2615, %v2794, 0
        %v2905 = vsel %vm2811, %v1803, 0
        %2907 = vmatprep.subr.bf16.mxu0 0
        %2908 = vmatpush1.bf16.msra.mxu0 0
        %2909 = vmatprep.subr.bf16.mxu0 0
        %2910 = vmatpush1.bf16.msra.mxu0 0
        %2911 = vmatprep.subr.bf16.mxu0 0
        %2912 = vmatpush1.bf16.msra.mxu0 0
        %2913 = vmatprep.subr.bf16.mxu0 0
        %2914 = vmatpush1.bf16.msra.mxu0 0
        %2915 = vmatprep.subr.bf16.mxu0 0
        %2916 = vmatpush1.bf16.msra.mxu0 0
        %2917 = vmatprep.subr.bf16.mxu0 0
        %2918 = vmatpush1.bf16.msra.mxu0 0
        %2919 = vmatprep.subr.bf16.mxu0 0
        %2920 = vmatpush1.bf16.msra.mxu0 0
        %2921 = vmatprep.subr.bf16.mxu0 0
        %2922 = vmatpush1.bf16.msra.mxu0 %v2905
        %2923 = vmatprep.subr.bf16.mxu0 0
        %2924 = vmatpush2.bf16.msra.mxu0 0
        %2925 = vmatprep.subr.bf16.mxu0 0
        %2926 = vmatpush2.bf16.msra.mxu0 0
        %2927 = vmatprep.subr.bf16.mxu0 0
        %2928 = vmatpush2.bf16.msra.mxu0 0
        %2929 = vmatprep.subr.bf16.mxu0 0
        %2930 = vmatpush2.bf16.msra.mxu0 0
        %2931 = vmatprep.subr.bf16.mxu0 0
        %2932 = vmatpush2.bf16.msra.mxu0 0
        %2933 = vmatprep.subr.bf16.mxu0 0
        %2934 = vmatpush2.bf16.msra.mxu0 0
        %2935 = vmatprep.subr.bf16.mxu0 0
        %2936 = vmatpush2.bf16.msra.mxu0 0
        %2937 = vmatprep.subr.bf16.mxu0 0
        %2938 = vmatpush2.bf16.msra.mxu0 0
        %2939 = vmatprep.mubr.bf16.mxu0 0
        %2940 = vmatmul.mubr.bf16.gmra.mxu0 %v2902
        %v2941 = vpop.f32.mrf.mxu0
        %v2942 = vadd.f32 0.0, %v2941
        %v2943 = vpop.f32.mrf.mxu0
        %v2944 = vpop.f32.mrf.mxu0
        %v2945 = vpop.f32.mrf.mxu0
        %2946 = vdwg.mxu0
        %v2948 = vsel %vm2615, %v2795, 0
        %v2951 = vsel %vm2811, %v1805, 0
        %2953 = vmatprep.subr.bf16.mxu0 0
        %2954 = vmatpush1.bf16.msra.mxu0 0
        %2955 = vmatprep.subr.bf16.mxu0 0
        %2956 = vmatpush1.bf16.msra.mxu0 0
        %2957 = vmatprep.subr.bf16.mxu0 0
        %2958 = vmatpush1.bf16.msra.mxu0 0
        %2959 = vmatprep.subr.bf16.mxu0 0
        %2960 = vmatpush1.bf16.msra.mxu0 0
        %2961 = vmatprep.subr.bf16.mxu0 0
        %2962 = vmatpush1.bf16.msra.mxu0 0
        %2963 = vmatprep.subr.bf16.mxu0 0
        %2964 = vmatpush1.bf16.msra.mxu0 0
        %2965 = vmatprep.subr.bf16.mxu0 0
        %2966 = vmatpush1.bf16.msra.mxu0 0
        %2967 = vmatprep.subr.bf16.mxu0 0
        %2968 = vmatpush1.bf16.msra.mxu0 %v2951
        %2969 = vmatprep.subr.bf16.mxu0 0
        %2970 = vmatpush2.bf16.msra.mxu0 0
        %2971 = vmatprep.subr.bf16.mxu0 0
        %2972 = vmatpush2.bf16.msra.mxu0 0
        %2973 = vmatprep.subr.bf16.mxu0 0
        %2974 = vmatpush2.bf16.msra.mxu0 0
        %2975 = vmatprep.subr.bf16.mxu0 0
        %2976 = vmatpush2.bf16.msra.mxu0 0
        %2977 = vmatprep.subr.bf16.mxu0 0
        %2978 = vmatpush2.bf16.msra.mxu0 0
        %2979 = vmatprep.subr.bf16.mxu0 0
        %2980 = vmatpush2.bf16.msra.mxu0 0
        %2981 = vmatprep.subr.bf16.mxu0 0
        %2982 = vmatpush2.bf16.msra.mxu0 0
        %2983 = vmatprep.subr.bf16.mxu0 0
        %2984 = vmatpush2.bf16.msra.mxu0 0
        %2985 = vmatprep.mubr.bf16.mxu0 0
        %2986 = vmatmul.mubr.bf16.gmra.mxu0 %v2948
        %v2987 = vpop.f32.mrf.mxu0
        %v2988 = vadd.f32 0.0, %v2987
        %v2989 = vpop.f32.mrf.mxu0
        %v2990 = vpop.f32.mrf.mxu0
        %v2991 = vpop.f32.mrf.mxu0
        %2992 = vdwg.mxu0
        %v2994 = vsel %vm2615, %v2796, 0
        %v2997 = vsel %vm2811, %v1807, 0
        %2999 = vmatprep.subr.bf16.mxu0 0
        %3000 = vmatpush1.bf16.msra.mxu0 0
        %3001 = vmatprep.subr.bf16.mxu0 0
        %3002 = vmatpush1.bf16.msra.mxu0 0
        %3003 = vmatprep.subr.bf16.mxu0 0
        %3004 = vmatpush1.bf16.msra.mxu0 0
        %3005 = vmatprep.subr.bf16.mxu0 0
        %3006 = vmatpush1.bf16.msra.mxu0 0
        %3007 = vmatprep.subr.bf16.mxu0 0
        %3008 = vmatpush1.bf16.msra.mxu0 0
        %3009 = vmatprep.subr.bf16.mxu0 0
        %3010 = vmatpush1.bf16.msra.mxu0 0
        %3011 = vmatprep.subr.bf16.mxu0 0
        %3012 = vmatpush1.bf16.msra.mxu0 0
        %3013 = vmatprep.subr.bf16.mxu0 0
        %3014 = vmatpush1.bf16.msra.mxu0 %v2997
        %3015 = vmatprep.subr.bf16.mxu0 0
        %3016 = vmatpush2.bf16.msra.mxu0 0
        %3017 = vmatprep.subr.bf16.mxu0 0
        %3018 = vmatpush2.bf16.msra.mxu0 0
        %3019 = vmatprep.subr.bf16.mxu0 0
        %3020 = vmatpush2.bf16.msra.mxu0 0
        %3021 = vmatprep.subr.bf16.mxu0 0
        %3022 = vmatpush2.bf16.msra.mxu0 0
        %3023 = vmatprep.subr.bf16.mxu0 0
        %3024 = vmatpush2.bf16.msra.mxu0 0
        %3025 = vmatprep.subr.bf16.mxu0 0
        %3026 = vmatpush2.bf16.msra.mxu0 0
        %3027 = vmatprep.subr.bf16.mxu0 0
        %3028 = vmatpush2.bf16.msra.mxu0 0
        %3029 = vmatprep.subr.bf16.mxu0 0
        %3030 = vmatpush2.bf16.msra.mxu0 0
        %3031 = vmatprep.mubr.bf16.mxu0 0
        %3032 = vmatmul.mubr.bf16.gmra.mxu0 %v2994
        %v3033 = vpop.f32.mrf.mxu0
        %v3034 = vadd.f32 0.0, %v3033
        %v3035 = vpop.f32.mrf.mxu0
        %v3036 = vpop.f32.mrf.mxu0
        %v3037 = vpop.f32.mrf.mxu0
        %3038 = vdwg.mxu0
        %v3040 = vsel %vm2615, %v2797, 0
        %v3043 = vsel %vm2811, %v1809, 0
        %3045 = vmatprep.subr.bf16.mxu0 0
        %3046 = vmatpush1.bf16.msra.mxu0 0
        %3047 = vmatprep.subr.bf16.mxu0 0
        %3048 = vmatpush1.bf16.msra.mxu0 0
        %3049 = vmatprep.subr.bf16.mxu0 0
        %3050 = vmatpush1.bf16.msra.mxu0 0
        %3051 = vmatprep.subr.bf16.mxu0 0
        %3052 = vmatpush1.bf16.msra.mxu0 0
        %3053 = vmatprep.subr.bf16.mxu0 0
        %3054 = vmatpush1.bf16.msra.mxu0 0
        %3055 = vmatprep.subr.bf16.mxu0 0
        %3056 = vmatpush1.bf16.msra.mxu0 0
        %3057 = vmatprep.subr.bf16.mxu0 0
        %3058 = vmatpush1.bf16.msra.mxu0 0
        %3059 = vmatprep.subr.bf16.mxu0 0
        %3060 = vmatpush1.bf16.msra.mxu0 %v3043
        %3061 = vmatprep.subr.bf16.mxu0 0
        %3062 = vmatpush2.bf16.msra.mxu0 0
        %3063 = vmatprep.subr.bf16.mxu0 0
        %3064 = vmatpush2.bf16.msra.mxu0 0
        %3065 = vmatprep.subr.bf16.mxu0 0
        %3066 = vmatpush2.bf16.msra.mxu0 0
        %3067 = vmatprep.subr.bf16.mxu0 0
        %3068 = vmatpush2.bf16.msra.mxu0 0
        %3069 = vmatprep.subr.bf16.mxu0 0
        %3070 = vmatpush2.bf16.msra.mxu0 0
        %3071 = vmatprep.subr.bf16.mxu0 0
        %3072 = vmatpush2.bf16.msra.mxu0 0
        %3073 = vmatprep.subr.bf16.mxu0 0
        %3074 = vmatpush2.bf16.msra.mxu0 0
        %3075 = vmatprep.subr.bf16.mxu0 0
        %3076 = vmatpush2.bf16.msra.mxu0 0
        %3077 = vmatprep.mubr.bf16.mxu0 0
        %3078 = vmatmul.mubr.bf16.gmra.mxu0 %v3040
        %v3079 = vpop.f32.mrf.mxu0
        %v3080 = vadd.f32 0.0, %v3079
        %v3081 = vpop.f32.mrf.mxu0
        %v3082 = vpop.f32.mrf.mxu0
        %v3083 = vpop.f32.mrf.mxu0
        %3084 = vdwg.mxu0
        %v3086 = vsel %vm2615, %v2798, 0
        %v3089 = vsel %vm2811, %v1811, 0
        %3091 = vmatprep.subr.bf16.mxu0 0
        %3092 = vmatpush1.bf16.msra.mxu0 0
        %3093 = vmatprep.subr.bf16.mxu0 0
        %3094 = vmatpush1.bf16.msra.mxu0 0
        %3095 = vmatprep.subr.bf16.mxu0 0
        %3096 = vmatpush1.bf16.msra.mxu0 0
        %3097 = vmatprep.subr.bf16.mxu0 0
        %3098 = vmatpush1.bf16.msra.mxu0 0
        %3099 = vmatprep.subr.bf16.mxu0 0
        %3100 = vmatpush1.bf16.msra.mxu0 0
        %3101 = vmatprep.subr.bf16.mxu0 0
        %3102 = vmatpush1.bf16.msra.mxu0 0
        %3103 = vmatprep.subr.bf16.mxu0 0
        %3104 = vmatpush1.bf16.msra.mxu0 0
        %3105 = vmatprep.subr.bf16.mxu0 0
        %3106 = vmatpush1.bf16.msra.mxu0 %v3089
        %3107 = vmatprep.subr.bf16.mxu0 0
        %3108 = vmatpush2.bf16.msra.mxu0 0
        %3109 = vmatprep.subr.bf16.mxu0 0
        %3110 = vmatpush2.bf16.msra.mxu0 0
        %3111 = vmatprep.subr.bf16.mxu0 0
        %3112 = vmatpush2.bf16.msra.mxu0 0
        %3113 = vmatprep.subr.bf16.mxu0 0
        %3114 = vmatpush2.bf16.msra.mxu0 0
        %3115 = vmatprep.subr.bf16.mxu0 0
        %3116 = vmatpush2.bf16.msra.mxu0 0
        %3117 = vmatprep.subr.bf16.mxu0 0
        %3118 = vmatpush2.bf16.msra.mxu0 0
        %3119 = vmatprep.subr.bf16.mxu0 0
        %3120 = vmatpush2.bf16.msra.mxu0 0
        %3121 = vmatprep.subr.bf16.mxu0 0
        %3122 = vmatpush2.bf16.msra.mxu0 0
        %3123 = vmatprep.mubr.bf16.mxu0 0
        %3124 = vmatmul.mubr.bf16.gmra.mxu0 %v3086
        %v3125 = vpop.f32.mrf.mxu0
        %v3126 = vadd.f32 0.0, %v3125
        %v3127 = vpop.f32.mrf.mxu0
        %v3128 = vpop.f32.mrf.mxu0
        %v3129 = vpop.f32.mrf.mxu0
        %3130 = vdwg.mxu0
        %v3132 = vsel %vm2615, %v2799, 0
        %v3135 = vsel %vm2811, %v1813, 0
        %3137 = vmatprep.subr.bf16.mxu0 0
        %3138 = vmatpush1.bf16.msra.mxu0 0
        %3139 = vmatprep.subr.bf16.mxu0 0
        %3140 = vmatpush1.bf16.msra.mxu0 0
        %3141 = vmatprep.subr.bf16.mxu0 0
        %3142 = vmatpush1.bf16.msra.mxu0 0
        %3143 = vmatprep.subr.bf16.mxu0 0
        %3144 = vmatpush1.bf16.msra.mxu0 0
        %3145 = vmatprep.subr.bf16.mxu0 0
        %3146 = vmatpush1.bf16.msra.mxu0 0
        %3147 = vmatprep.subr.bf16.mxu0 0
        %3148 = vmatpush1.bf16.msra.mxu0 0
        %3149 = vmatprep.subr.bf16.mxu0 0
        %3150 = vmatpush1.bf16.msra.mxu0 0
        %3151 = vmatprep.subr.bf16.mxu0 0
        %3152 = vmatpush1.bf16.msra.mxu0 %v3135
        %3153 = vmatprep.subr.bf16.mxu0 0
        %3154 = vmatpush2.bf16.msra.mxu0 0
        %3155 = vmatprep.subr.bf16.mxu0 0
        %3156 = vmatpush2.bf16.msra.mxu0 0
        %3157 = vmatprep.subr.bf16.mxu0 0
        %3158 = vmatpush2.bf16.msra.mxu0 0
        %3159 = vmatprep.subr.bf16.mxu0 0
        %3160 = vmatpush2.bf16.msra.mxu0 0
        %3161 = vmatprep.subr.bf16.mxu0 0
        %3162 = vmatpush2.bf16.msra.mxu0 0
        %3163 = vmatprep.subr.bf16.mxu0 0
        %3164 = vmatpush2.bf16.msra.mxu0 0
        %3165 = vmatprep.subr.bf16.mxu0 0
        %3166 = vmatpush2.bf16.msra.mxu0 0
        %3167 = vmatprep.subr.bf16.mxu0 0
        %3168 = vmatpush2.bf16.msra.mxu0 0
        %3169 = vmatprep.mubr.bf16.mxu0 0
        %3170 = vmatmul.mubr.bf16.gmra.mxu0 %v3132
        %v3171 = vpop.f32.mrf.mxu0
        %v3172 = vadd.f32 0.0, %v3171
        %v3173 = vpop.f32.mrf.mxu0
        %v3174 = vpop.f32.mrf.mxu0
        %v3175 = vpop.f32.mrf.mxu0
        %3176 = vdwg.mxu0
        %v3178 = vsel %vm2615, %v2800, 0
        %v3181 = vsel %vm2811, %v1815, 0
        %3183 = vmatprep.subr.bf16.mxu0 0
        %3184 = vmatpush1.bf16.msra.mxu0 0
        %3185 = vmatprep.subr.bf16.mxu0 0
        %3186 = vmatpush1.bf16.msra.mxu0 0
        %3187 = vmatprep.subr.bf16.mxu0 0
        %3188 = vmatpush1.bf16.msra.mxu0 0
        %3189 = vmatprep.subr.bf16.mxu0 0
        %3190 = vmatpush1.bf16.msra.mxu0 0
        %3191 = vmatprep.subr.bf16.mxu0 0
        %3192 = vmatpush1.bf16.msra.mxu0 0
        %3193 = vmatprep.subr.bf16.mxu0 0
        %3194 = vmatpush1.bf16.msra.mxu0 0
        %3195 = vmatprep.subr.bf16.mxu0 0
        %3196 = vmatpush1.bf16.msra.mxu0 0
        %3197 = vmatprep.subr.bf16.mxu0 0
        %3198 = vmatpush1.bf16.msra.mxu0 %v3181
        %3199 = vmatprep.subr.bf16.mxu0 0
        %3200 = vmatpush2.bf16.msra.mxu0 0
        %3201 = vmatprep.subr.bf16.mxu0 0
        %3202 = vmatpush2.bf16.msra.mxu0 0
        %3203 = vmatprep.subr.bf16.mxu0 0
        %3204 = vmatpush2.bf16.msra.mxu0 0
        %3205 = vmatprep.subr.bf16.mxu0 0
        %3206 = vmatpush2.bf16.msra.mxu0 0
        %3207 = vmatprep.subr.bf16.mxu0 0
        %3208 = vmatpush2.bf16.msra.mxu0 0
        %3209 = vmatprep.subr.bf16.mxu0 0
        %3210 = vmatpush2.bf16.msra.mxu0 0
        %3211 = vmatprep.subr.bf16.mxu0 0
        %3212 = vmatpush2.bf16.msra.mxu0 0
        %3213 = vmatprep.subr.bf16.mxu0 0
        %3214 = vmatpush2.bf16.msra.mxu0 0
        %3215 = vmatprep.mubr.bf16.mxu0 0
        %3216 = vmatmul.mubr.bf16.gmra.mxu0 %v3178
        %v3217 = vpop.f32.mrf.mxu0
        %v3218 = vadd.f32 0.0, %v3217
        %v3219 = vpop.f32.mrf.mxu0
        %v3220 = vpop.f32.mrf.mxu0
        %v3221 = vpop.f32.mrf.mxu0
        %3222 = vdwg.mxu0
        %v3224 = vsel %vm2615, %v2801, 0
        %v3227 = vsel %vm2811, %v1817, 0
        %3229 = vmatprep.subr.bf16.mxu0 0
        %3230 = vmatpush1.bf16.msra.mxu0 0
        %3231 = vmatprep.subr.bf16.mxu0 0
        %3232 = vmatpush1.bf16.msra.mxu0 0
        %3233 = vmatprep.subr.bf16.mxu0 0
        %3234 = vmatpush1.bf16.msra.mxu0 0
        %3235 = vmatprep.subr.bf16.mxu0 0
        %3236 = vmatpush1.bf16.msra.mxu0 0
        %3237 = vmatprep.subr.bf16.mxu0 0
        %3238 = vmatpush1.bf16.msra.mxu0 0
        %3239 = vmatprep.subr.bf16.mxu0 0
        %3240 = vmatpush1.bf16.msra.mxu0 0
        %3241 = vmatprep.subr.bf16.mxu0 0
        %3242 = vmatpush1.bf16.msra.mxu0 0
        %3243 = vmatprep.subr.bf16.mxu0 0
        %3244 = vmatpush1.bf16.msra.mxu0 %v3227
        %3245 = vmatprep.subr.bf16.mxu0 0
        %3246 = vmatpush2.bf16.msra.mxu0 0
        %3247 = vmatprep.subr.bf16.mxu0 0
        %3248 = vmatpush2.bf16.msra.mxu0 0
        %3249 = vmatprep.subr.bf16.mxu0 0
        %3250 = vmatpush2.bf16.msra.mxu0 0
        %3251 = vmatprep.subr.bf16.mxu0 0
        %3252 = vmatpush2.bf16.msra.mxu0 0
        %3253 = vmatprep.subr.bf16.mxu0 0
        %3254 = vmatpush2.bf16.msra.mxu0 0
        %3255 = vmatprep.subr.bf16.mxu0 0
        %3256 = vmatpush2.bf16.msra.mxu0 0
        %3257 = vmatprep.subr.bf16.mxu0 0
        %3258 = vmatpush2.bf16.msra.mxu0 0
        %3259 = vmatprep.subr.bf16.mxu0 0
        %3260 = vmatpush2.bf16.msra.mxu0 0
        %3261 = vmatprep.mubr.bf16.mxu0 0
        %3262 = vmatmul.mubr.bf16.gmra.mxu0 %v3224
        %v3263 = vpop.f32.mrf.mxu0
        %v3264 = vadd.f32 0.0, %v3263
        %v3265 = vpop.f32.mrf.mxu0
        %v3266 = vpop.f32.mrf.mxu0
        %v3267 = vpop.f32.mrf.mxu0
        %3268 = vdwg.mxu0
        %v3270 = vsel %vm2615, %v2802, 0
        %v3273 = vsel %vm2811, %v1819, 0
        %3275 = vmatprep.subr.bf16.mxu0 0
        %3276 = vmatpush1.bf16.msra.mxu0 0
        %3277 = vmatprep.subr.bf16.mxu0 0
        %3278 = vmatpush1.bf16.msra.mxu0 0
        %3279 = vmatprep.subr.bf16.mxu0 0
        %3280 = vmatpush1.bf16.msra.mxu0 0
        %3281 = vmatprep.subr.bf16.mxu0 0
        %3282 = vmatpush1.bf16.msra.mxu0 0
        %3283 = vmatprep.subr.bf16.mxu0 0
        %3284 = vmatpush1.bf16.msra.mxu0 0
        %3285 = vmatprep.subr.bf16.mxu0 0
        %3286 = vmatpush1.bf16.msra.mxu0 0
        %3287 = vmatprep.subr.bf16.mxu0 0
        %3288 = vmatpush1.bf16.msra.mxu0 0
        %3289 = vmatprep.subr.bf16.mxu0 0
        %3290 = vmatpush1.bf16.msra.mxu0 %v3273
        %3291 = vmatprep.subr.bf16.mxu0 0
        %3292 = vmatpush2.bf16.msra.mxu0 0
        %3293 = vmatprep.subr.bf16.mxu0 0
        %3294 = vmatpush2.bf16.msra.mxu0 0
        %3295 = vmatprep.subr.bf16.mxu0 0
        %3296 = vmatpush2.bf16.msra.mxu0 0
        %3297 = vmatprep.subr.bf16.mxu0 0
        %3298 = vmatpush2.bf16.msra.mxu0 0
        %3299 = vmatprep.subr.bf16.mxu0 0
        %3300 = vmatpush2.bf16.msra.mxu0 0
        %3301 = vmatprep.subr.bf16.mxu0 0
        %3302 = vmatpush2.bf16.msra.mxu0 0
        %3303 = vmatprep.subr.bf16.mxu0 0
        %3304 = vmatpush2.bf16.msra.mxu0 0
        %3305 = vmatprep.subr.bf16.mxu0 0
        %3306 = vmatpush2.bf16.msra.mxu0 0
        %3307 = vmatprep.mubr.bf16.mxu0 0
        %3308 = vmatmul.mubr.bf16.gmra.mxu0 %v3270
        %v3309 = vpop.f32.mrf.mxu0
        %v3310 = vadd.f32 0.0, %v3309
        %v3311 = vpop.f32.mrf.mxu0
        %v3312 = vpop.f32.mrf.mxu0
        %v3313 = vpop.f32.mrf.mxu0
        %3314 = vdwg.mxu0
        %v3316 = vsel %vm2615, %v2803, 0
        %v3319 = vsel %vm2811, %v1821, 0
        %3321 = vmatprep.subr.bf16.mxu0 0
        %3322 = vmatpush1.bf16.msra.mxu0 0
        %3323 = vmatprep.subr.bf16.mxu0 0
        %3324 = vmatpush1.bf16.msra.mxu0 0
        %3325 = vmatprep.subr.bf16.mxu0 0
        %3326 = vmatpush1.bf16.msra.mxu0 0
        %3327 = vmatprep.subr.bf16.mxu0 0
        %3328 = vmatpush1.bf16.msra.mxu0 0
        %3329 = vmatprep.subr.bf16.mxu0 0
        %3330 = vmatpush1.bf16.msra.mxu0 0
        %3331 = vmatprep.subr.bf16.mxu0 0
        %3332 = vmatpush1.bf16.msra.mxu0 0
        %3333 = vmatprep.subr.bf16.mxu0 0
        %3334 = vmatpush1.bf16.msra.mxu0 0
        %3335 = vmatprep.subr.bf16.mxu0 0
        %3336 = vmatpush1.bf16.msra.mxu0 %v3319
        %3337 = vmatprep.subr.bf16.mxu0 0
        %3338 = vmatpush2.bf16.msra.mxu0 0
        %3339 = vmatprep.subr.bf16.mxu0 0
        %3340 = vmatpush2.bf16.msra.mxu0 0
        %3341 = vmatprep.subr.bf16.mxu0 0
        %3342 = vmatpush2.bf16.msra.mxu0 0
        %3343 = vmatprep.subr.bf16.mxu0 0
        %3344 = vmatpush2.bf16.msra.mxu0 0
        %3345 = vmatprep.subr.bf16.mxu0 0
        %3346 = vmatpush2.bf16.msra.mxu0 0
        %3347 = vmatprep.subr.bf16.mxu0 0
        %3348 = vmatpush2.bf16.msra.mxu0 0
        %3349 = vmatprep.subr.bf16.mxu0 0
        %3350 = vmatpush2.bf16.msra.mxu0 0
        %3351 = vmatprep.subr.bf16.mxu0 0
        %3352 = vmatpush2.bf16.msra.mxu0 0
        %3353 = vmatprep.mubr.bf16.mxu0 0
        %3354 = vmatmul.mubr.bf16.gmra.mxu0 %v3316
        %v3355 = vpop.f32.mrf.mxu0
        %v3356 = vadd.f32 0.0, %v3355
        %v3357 = vpop.f32.mrf.mxu0
        %v3358 = vpop.f32.mrf.mxu0
        %v3359 = vpop.f32.mrf.mxu0
        %3360 = vdwg.mxu0
        %v3362 = vsel %vm2615, %v2804, 0
        %v3365 = vsel %vm2811, %v1823, 0
        %3367 = vmatprep.subr.bf16.mxu0 0
        %3368 = vmatpush1.bf16.msra.mxu0 0
        %3369 = vmatprep.subr.bf16.mxu0 0
        %3370 = vmatpush1.bf16.msra.mxu0 0
        %3371 = vmatprep.subr.bf16.mxu0 0
        %3372 = vmatpush1.bf16.msra.mxu0 0
        %3373 = vmatprep.subr.bf16.mxu0 0
        %3374 = vmatpush1.bf16.msra.mxu0 0
        %3375 = vmatprep.subr.bf16.mxu0 0
        %3376 = vmatpush1.bf16.msra.mxu0 0
        %3377 = vmatprep.subr.bf16.mxu0 0
        %3378 = vmatpush1.bf16.msra.mxu0 0
        %3379 = vmatprep.subr.bf16.mxu0 0
        %3380 = vmatpush1.bf16.msra.mxu0 0
        %3381 = vmatprep.subr.bf16.mxu0 0
        %3382 = vmatpush1.bf16.msra.mxu0 %v3365
        %3383 = vmatprep.subr.bf16.mxu0 0
        %3384 = vmatpush2.bf16.msra.mxu0 0
        %3385 = vmatprep.subr.bf16.mxu0 0
        %3386 = vmatpush2.bf16.msra.mxu0 0
        %3387 = vmatprep.subr.bf16.mxu0 0
        %3388 = vmatpush2.bf16.msra.mxu0 0
        %3389 = vmatprep.subr.bf16.mxu0 0
        %3390 = vmatpush2.bf16.msra.mxu0 0
        %3391 = vmatprep.subr.bf16.mxu0 0
        %3392 = vmatpush2.bf16.msra.mxu0 0
        %3393 = vmatprep.subr.bf16.mxu0 0
        %3394 = vmatpush2.bf16.msra.mxu0 0
        %3395 = vmatprep.subr.bf16.mxu0 0
        %3396 = vmatpush2.bf16.msra.mxu0 0
        %3397 = vmatprep.subr.bf16.mxu0 0
        %3398 = vmatpush2.bf16.msra.mxu0 0
        %3399 = vmatprep.mubr.bf16.mxu0 0
        %3400 = vmatmul.mubr.bf16.gmra.mxu0 %v3362
        %v3401 = vpop.f32.mrf.mxu0
        %v3402 = vadd.f32 0.0, %v3401
        %v3403 = vpop.f32.mrf.mxu0
        %v3404 = vpop.f32.mrf.mxu0
        %v3405 = vpop.f32.mrf.mxu0
        %3406 = vdwg.mxu0
        %v3408 = vsel %vm2615, %v2805, 0
        %v3411 = vsel %vm2811, %v1825, 0
        %3413 = vmatprep.subr.bf16.mxu0 0
        %3414 = vmatpush1.bf16.msra.mxu0 0
        %3415 = vmatprep.subr.bf16.mxu0 0
        %3416 = vmatpush1.bf16.msra.mxu0 0
        %3417 = vmatprep.subr.bf16.mxu0 0
        %3418 = vmatpush1.bf16.msra.mxu0 0
        %3419 = vmatprep.subr.bf16.mxu0 0
        %3420 = vmatpush1.bf16.msra.mxu0 0
        %3421 = vmatprep.subr.bf16.mxu0 0
        %3422 = vmatpush1.bf16.msra.mxu0 0
        %3423 = vmatprep.subr.bf16.mxu0 0
        %3424 = vmatpush1.bf16.msra.mxu0 0
        %3425 = vmatprep.subr.bf16.mxu0 0
        %3426 = vmatpush1.bf16.msra.mxu0 0
        %3427 = vmatprep.subr.bf16.mxu0 0
        %3428 = vmatpush1.bf16.msra.mxu0 %v3411
        %3429 = vmatprep.subr.bf16.mxu0 0
        %3430 = vmatpush2.bf16.msra.mxu0 0
        %3431 = vmatprep.subr.bf16.mxu0 0
        %3432 = vmatpush2.bf16.msra.mxu0 0
        %3433 = vmatprep.subr.bf16.mxu0 0
        %3434 = vmatpush2.bf16.msra.mxu0 0
        %3435 = vmatprep.subr.bf16.mxu0 0
        %3436 = vmatpush2.bf16.msra.mxu0 0
        %3437 = vmatprep.subr.bf16.mxu0 0
        %3438 = vmatpush2.bf16.msra.mxu0 0
        %3439 = vmatprep.subr.bf16.mxu0 0
        %3440 = vmatpush2.bf16.msra.mxu0 0
        %3441 = vmatprep.subr.bf16.mxu0 0
        %3442 = vmatpush2.bf16.msra.mxu0 0
        %3443 = vmatprep.subr.bf16.mxu0 0
        %3444 = vmatpush2.bf16.msra.mxu0 0
        %3445 = vmatprep.mubr.bf16.mxu0 0
        %3446 = vmatmul.mubr.bf16.gmra.mxu0 %v3408
        %v3447 = vpop.f32.mrf.mxu0
        %v3448 = vadd.f32 0.0, %v3447
        %v3449 = vpop.f32.mrf.mxu0
        %v3450 = vpop.f32.mrf.mxu0
        %v3451 = vpop.f32.mrf.mxu0
        %3452 = vdwg.mxu0
        %v3454 = vsel %vm2615, %v2806, 0
        %v3457 = vsel %vm2811, %v1827, 0
        %3459 = vmatprep.subr.bf16.mxu0 0
        %3460 = vmatpush1.bf16.msra.mxu0 0
        %3461 = vmatprep.subr.bf16.mxu0 0
        %3462 = vmatpush1.bf16.msra.mxu0 0
        %3463 = vmatprep.subr.bf16.mxu0 0
        %3464 = vmatpush1.bf16.msra.mxu0 0
        %3465 = vmatprep.subr.bf16.mxu0 0
        %3466 = vmatpush1.bf16.msra.mxu0 0
        %3467 = vmatprep.subr.bf16.mxu0 0
        %3468 = vmatpush1.bf16.msra.mxu0 0
        %3469 = vmatprep.subr.bf16.mxu0 0
        %3470 = vmatpush1.bf16.msra.mxu0 0
        %3471 = vmatprep.subr.bf16.mxu0 0
        %3472 = vmatpush1.bf16.msra.mxu0 0
        %3473 = vmatprep.subr.bf16.mxu0 0
        %3474 = vmatpush1.bf16.msra.mxu0 %v3457
        %3475 = vmatprep.subr.bf16.mxu0 0
        %3476 = vmatpush2.bf16.msra.mxu0 0
        %3477 = vmatprep.subr.bf16.mxu0 0
        %3478 = vmatpush2.bf16.msra.mxu0 0
        %3479 = vmatprep.subr.bf16.mxu0 0
        %3480 = vmatpush2.bf16.msra.mxu0 0
        %3481 = vmatprep.subr.bf16.mxu0 0
        %3482 = vmatpush2.bf16.msra.mxu0 0
        %3483 = vmatprep.subr.bf16.mxu0 0
        %3484 = vmatpush2.bf16.msra.mxu0 0
        %3485 = vmatprep.subr.bf16.mxu0 0
        %3486 = vmatpush2.bf16.msra.mxu0 0
        %3487 = vmatprep.subr.bf16.mxu0 0
        %3488 = vmatpush2.bf16.msra.mxu0 0
        %3489 = vmatprep.subr.bf16.mxu0 0
        %3490 = vmatpush2.bf16.msra.mxu0 0
        %3491 = vmatprep.mubr.bf16.mxu0 0
        %3492 = vmatmul.mubr.bf16.gmra.mxu0 %v3454
        %v3493 = vpop.f32.mrf.mxu0
        %v3494 = vadd.f32 0.0, %v3493
        %v3495 = vpop.f32.mrf.mxu0
        %v3496 = vpop.f32.mrf.mxu0
        %v3497 = vpop.f32.mrf.mxu0
        %3498 = vdwg.mxu0
        %v3500 = vsel %vm2615, %v2807, 0
        %v3503 = vsel %vm2811, %v1829, 0
        %3505 = vmatprep.subr.bf16.mxu0 0
        %3506 = vmatpush1.bf16.msra.mxu0 0
        %3507 = vmatprep.subr.bf16.mxu0 0
        %3508 = vmatpush1.bf16.msra.mxu0 0
        %3509 = vmatprep.subr.bf16.mxu0 0
        %3510 = vmatpush1.bf16.msra.mxu0 0
        %3511 = vmatprep.subr.bf16.mxu0 0
        %3512 = vmatpush1.bf16.msra.mxu0 0
        %3513 = vmatprep.subr.bf16.mxu0 0
        %3514 = vmatpush1.bf16.msra.mxu0 0
        %3515 = vmatprep.subr.bf16.mxu0 0
        %3516 = vmatpush1.bf16.msra.mxu0 0
        %3517 = vmatprep.subr.bf16.mxu0 0
        %3518 = vmatpush1.bf16.msra.mxu0 0
        %3519 = vmatprep.subr.bf16.mxu0 0
        %3520 = vmatpush1.bf16.msra.mxu0 %v3503
        %3521 = vmatprep.subr.bf16.mxu0 0
        %3522 = vmatpush2.bf16.msra.mxu0 0
        %3523 = vmatprep.subr.bf16.mxu0 0
        %3524 = vmatpush2.bf16.msra.mxu0 0
        %3525 = vmatprep.subr.bf16.mxu0 0
        %3526 = vmatpush2.bf16.msra.mxu0 0
        %3527 = vmatprep.subr.bf16.mxu0 0
        %3528 = vmatpush2.bf16.msra.mxu0 0
        %3529 = vmatprep.subr.bf16.mxu0 0
        %3530 = vmatpush2.bf16.msra.mxu0 0
        %3531 = vmatprep.subr.bf16.mxu0 0
        %3532 = vmatpush2.bf16.msra.mxu0 0
        %3533 = vmatprep.subr.bf16.mxu0 0
        %3534 = vmatpush2.bf16.msra.mxu0 0
        %3535 = vmatprep.subr.bf16.mxu0 0
        %3536 = vmatpush2.bf16.msra.mxu0 0
        %3537 = vmatprep.mubr.bf16.mxu0 0
        %3538 = vmatmul.mubr.bf16.gmra.mxu0 %v3500
        %v3539 = vpop.f32.mrf.mxu0
        %v3540 = vadd.f32 0.0, %v3539
        %v3541 = vpop.f32.mrf.mxu0
        %v3542 = vpop.f32.mrf.mxu0
        %v3543 = vpop.f32.mrf.mxu0
        %3544 = vdwg.mxu0
        %v3545 = vpack.c.bf16 %v2896, %v2850
        %v3546 = vpack.c.bf16 %v2988, %v2942
        %v3547 = vpack.c.bf16 %v3080, %v3034
        %v3548 = vpack.c.bf16 %v3172, %v3126
        %v3549 = vpack.c.bf16 %v3264, %v3218
        %v3550 = vpack.c.bf16 %v3356, %v3310
        %v3551 = vpack.c.bf16 %v3448, %v3402
        %v3552 = vpack.c.bf16 %v3540, %v3494
        %v3554 = vsel %vm1832, %v3545, 0
        %vm3556 = vcmask 1041408
        %v3558 = vsel %vm3556, %v1757, 0
        %3560 = vmatprep.subr.bf16.mxu0 0
        %3561 = vmatpush1.bf16.msra.mxu0 0
        %3562 = vmatprep.subr.bf16.mxu0 0
        %3563 = vmatpush1.bf16.msra.mxu0 0
        %3564 = vmatprep.subr.bf16.mxu0 0
        %3565 = vmatpush1.bf16.msra.mxu0 0
        %3566 = vmatprep.subr.bf16.mxu0 0
        %3567 = vmatpush1.bf16.msra.mxu0 0
        %3568 = vmatprep.subr.bf16.mxu0 0
        %3569 = vmatpush1.bf16.msra.mxu0 0
        %3570 = vmatprep.subr.bf16.mxu0 0
        %3571 = vmatpush1.bf16.msra.mxu0 0
        %3572 = vmatprep.subr.bf16.mxu0 0
        %3573 = vmatpush1.bf16.msra.mxu0 0
        %3574 = vmatprep.subr.bf16.mxu0 0
        %3575 = vmatpush1.bf16.msra.mxu0 %v3558
        %3576 = vmatprep.subr.bf16.mxu0 0
        %3577 = vmatpush2.bf16.msra.mxu0 0
        %3578 = vmatprep.subr.bf16.mxu0 0
        %3579 = vmatpush2.bf16.msra.mxu0 0
        %3580 = vmatprep.subr.bf16.mxu0 0
        %3581 = vmatpush2.bf16.msra.mxu0 0
        %3582 = vmatprep.subr.bf16.mxu0 0
        %3583 = vmatpush2.bf16.msra.mxu0 0
        %3584 = vmatprep.subr.bf16.mxu0 0
        %3585 = vmatpush2.bf16.msra.mxu0 0
        %3586 = vmatprep.subr.bf16.mxu0 0
        %3587 = vmatpush2.bf16.msra.mxu0 0
        %3588 = vmatprep.subr.bf16.mxu0 0
        %3589 = vmatpush2.bf16.msra.mxu0 0
        %3590 = vmatprep.subr.bf16.mxu0 0
        %3591 = vmatpush2.bf16.msra.mxu0 0
        %3592 = vmatprep.mubr.bf16.mxu0 0
        %3593 = vmatmul.mubr.bf16.gmra.mxu0 %v3554
        %v3594 = vpop.f32.mrf.mxu0
        %v3595 = vadd.f32 0.0, %v3594
        %v3596 = vpop.f32.mrf.mxu0
        %v3597 = vpop.f32.mrf.mxu0
        %v3598 = vadd.f32 0.0, %v3597
        %v3599 = vpop.f32.mrf.mxu0
        %3600 = vdwg.mxu0
        %v3602 = vsel %vm1832, %v3546, 0
        %v3605 = vsel %vm3556, %v1758, 0
        %3607 = vmatprep.subr.bf16.mxu0 0
        %3608 = vmatpush1.bf16.msra.mxu0 0
        %3609 = vmatprep.subr.bf16.mxu0 0
        %3610 = vmatpush1.bf16.msra.mxu0 0
        %3611 = vmatprep.subr.bf16.mxu0 0
        %3612 = vmatpush1.bf16.msra.mxu0 0
        %3613 = vmatprep.subr.bf16.mxu0 0
        %3614 = vmatpush1.bf16.msra.mxu0 0
        %3615 = vmatprep.subr.bf16.mxu0 0
        %3616 = vmatpush1.bf16.msra.mxu0 0
        %3617 = vmatprep.subr.bf16.mxu0 0
        %3618 = vmatpush1.bf16.msra.mxu0 0
        %3619 = vmatprep.subr.bf16.mxu0 0
        %3620 = vmatpush1.bf16.msra.mxu0 0
        %3621 = vmatprep.subr.bf16.mxu0 0
        %3622 = vmatpush1.bf16.msra.mxu0 %v3605
        %3623 = vmatprep.subr.bf16.mxu0 0
        %3624 = vmatpush2.bf16.msra.mxu0 0
        %3625 = vmatprep.subr.bf16.mxu0 0
        %3626 = vmatpush2.bf16.msra.mxu0 0
        %3627 = vmatprep.subr.bf16.mxu0 0
        %3628 = vmatpush2.bf16.msra.mxu0 0
        %3629 = vmatprep.subr.bf16.mxu0 0
        %3630 = vmatpush2.bf16.msra.mxu0 0
        %3631 = vmatprep.subr.bf16.mxu0 0
        %3632 = vmatpush2.bf16.msra.mxu0 0
        %3633 = vmatprep.subr.bf16.mxu0 0
        %3634 = vmatpush2.bf16.msra.mxu0 0
        %3635 = vmatprep.subr.bf16.mxu0 0
        %3636 = vmatpush2.bf16.msra.mxu0 0
        %3637 = vmatprep.subr.bf16.mxu0 0
        %3638 = vmatpush2.bf16.msra.mxu0 0
        %3639 = vmatprep.mubr.bf16.mxu0 0
        %3640 = vmatmul.mubr.bf16.gmra.mxu0 %v3602
        %v3641 = vpop.f32.mrf.mxu0
        %v3642 = vadd.f32 0.0, %v3641
        %v3643 = vpop.f32.mrf.mxu0
        %v3644 = vpop.f32.mrf.mxu0
        %v3645 = vadd.f32 0.0, %v3644
        %v3646 = vpop.f32.mrf.mxu0
        %3647 = vdwg.mxu0
        %v3649 = vsel %vm1832, %v3547, 0
        %v3652 = vsel %vm3556, %v1759, 0
        %3654 = vmatprep.subr.bf16.mxu0 0
        %3655 = vmatpush1.bf16.msra.mxu0 0
        %3656 = vmatprep.subr.bf16.mxu0 0
        %3657 = vmatpush1.bf16.msra.mxu0 0
        %3658 = vmatprep.subr.bf16.mxu0 0
        %3659 = vmatpush1.bf16.msra.mxu0 0
        %3660 = vmatprep.subr.bf16.mxu0 0
        %3661 = vmatpush1.bf16.msra.mxu0 0
        %3662 = vmatprep.subr.bf16.mxu0 0
        %3663 = vmatpush1.bf16.msra.mxu0 0
        %3664 = vmatprep.subr.bf16.mxu0 0
        %3665 = vmatpush1.bf16.msra.mxu0 0
        %3666 = vmatprep.subr.bf16.mxu0 0
        %3667 = vmatpush1.bf16.msra.mxu0 0
        %3668 = vmatprep.subr.bf16.mxu0 0
        %3669 = vmatpush1.bf16.msra.mxu0 %v3652
        %3670 = vmatprep.subr.bf16.mxu0 0
        %3671 = vmatpush2.bf16.msra.mxu0 0
        %3672 = vmatprep.subr.bf16.mxu0 0
        %3673 = vmatpush2.bf16.msra.mxu0 0
        %3674 = vmatprep.subr.bf16.mxu0 0
        %3675 = vmatpush2.bf16.msra.mxu0 0
        %3676 = vmatprep.subr.bf16.mxu0 0
        %3677 = vmatpush2.bf16.msra.mxu0 0
        %3678 = vmatprep.subr.bf16.mxu0 0
        %3679 = vmatpush2.bf16.msra.mxu0 0
        %3680 = vmatprep.subr.bf16.mxu0 0
        %3681 = vmatpush2.bf16.msra.mxu0 0
        %3682 = vmatprep.subr.bf16.mxu0 0
        %3683 = vmatpush2.bf16.msra.mxu0 0
        %3684 = vmatprep.subr.bf16.mxu0 0
        %3685 = vmatpush2.bf16.msra.mxu0 0
        %3686 = vmatprep.mubr.bf16.mxu0 0
        %3687 = vmatmul.mubr.bf16.gmra.mxu0 %v3649
        %v3688 = vpop.f32.mrf.mxu0
        %v3689 = vadd.f32 0.0, %v3688
        %v3690 = vpop.f32.mrf.mxu0
        %v3691 = vpop.f32.mrf.mxu0
        %v3692 = vadd.f32 0.0, %v3691
        %v3693 = vpop.f32.mrf.mxu0
        %3694 = vdwg.mxu0
        %v3696 = vsel %vm1832, %v3548, 0
        %v3699 = vsel %vm3556, %v1760, 0
        %3701 = vmatprep.subr.bf16.mxu0 0
        %3702 = vmatpush1.bf16.msra.mxu0 0
        %3703 = vmatprep.subr.bf16.mxu0 0
        %3704 = vmatpush1.bf16.msra.mxu0 0
        %3705 = vmatprep.subr.bf16.mxu0 0
        %3706 = vmatpush1.bf16.msra.mxu0 0
        %3707 = vmatprep.subr.bf16.mxu0 0
        %3708 = vmatpush1.bf16.msra.mxu0 0
        %3709 = vmatprep.subr.bf16.mxu0 0
        %3710 = vmatpush1.bf16.msra.mxu0 0
        %3711 = vmatprep.subr.bf16.mxu0 0
        %3712 = vmatpush1.bf16.msra.mxu0 0
        %3713 = vmatprep.subr.bf16.mxu0 0
        %3714 = vmatpush1.bf16.msra.mxu0 0
        %3715 = vmatprep.subr.bf16.mxu0 0
        %3716 = vmatpush1.bf16.msra.mxu0 %v3699
        %3717 = vmatprep.subr.bf16.mxu0 0
        %3718 = vmatpush2.bf16.msra.mxu0 0
        %3719 = vmatprep.subr.bf16.mxu0 0
        %3720 = vmatpush2.bf16.msra.mxu0 0
        %3721 = vmatprep.subr.bf16.mxu0 0
        %3722 = vmatpush2.bf16.msra.mxu0 0
        %3723 = vmatprep.subr.bf16.mxu0 0
        %3724 = vmatpush2.bf16.msra.mxu0 0
        %3725 = vmatprep.subr.bf16.mxu0 0
        %3726 = vmatpush2.bf16.msra.mxu0 0
        %3727 = vmatprep.subr.bf16.mxu0 0
        %3728 = vmatpush2.bf16.msra.mxu0 0
        %3729 = vmatprep.subr.bf16.mxu0 0
        %3730 = vmatpush2.bf16.msra.mxu0 0
        %3731 = vmatprep.subr.bf16.mxu0 0
        %3732 = vmatpush2.bf16.msra.mxu0 0
        %3733 = vmatprep.mubr.bf16.mxu0 0
        %3734 = vmatmul.mubr.bf16.gmra.mxu0 %v3696
        %v3735 = vpop.f32.mrf.mxu0
        %v3736 = vadd.f32 0.0, %v3735
        %v3737 = vpop.f32.mrf.mxu0
        %v3738 = vpop.f32.mrf.mxu0
        %v3739 = vadd.f32 0.0, %v3738
        %v3740 = vpop.f32.mrf.mxu0
        %3741 = vdwg.mxu0
        %v3743 = vsel %vm1832, %v3549, 0
        %v3746 = vsel %vm3556, %v1761, 0
        %3748 = vmatprep.subr.bf16.mxu0 0
        %3749 = vmatpush1.bf16.msra.mxu0 0
        %3750 = vmatprep.subr.bf16.mxu0 0
        %3751 = vmatpush1.bf16.msra.mxu0 0
        %3752 = vmatprep.subr.bf16.mxu0 0
        %3753 = vmatpush1.bf16.msra.mxu0 0
        %3754 = vmatprep.subr.bf16.mxu0 0
        %3755 = vmatpush1.bf16.msra.mxu0 0
        %3756 = vmatprep.subr.bf16.mxu0 0
        %3757 = vmatpush1.bf16.msra.mxu0 0
        %3758 = vmatprep.subr.bf16.mxu0 0
        %3759 = vmatpush1.bf16.msra.mxu0 0
        %3760 = vmatprep.subr.bf16.mxu0 0
        %3761 = vmatpush1.bf16.msra.mxu0 0
        %3762 = vmatprep.subr.bf16.mxu0 0
        %3763 = vmatpush1.bf16.msra.mxu0 %v3746
        %3764 = vmatprep.subr.bf16.mxu0 0
        %3765 = vmatpush2.bf16.msra.mxu0 0
        %3766 = vmatprep.subr.bf16.mxu0 0
        %3767 = vmatpush2.bf16.msra.mxu0 0
        %3768 = vmatprep.subr.bf16.mxu0 0
        %3769 = vmatpush2.bf16.msra.mxu0 0
        %3770 = vmatprep.subr.bf16.mxu0 0
        %3771 = vmatpush2.bf16.msra.mxu0 0
        %3772 = vmatprep.subr.bf16.mxu0 0
        %3773 = vmatpush2.bf16.msra.mxu0 0
        %3774 = vmatprep.subr.bf16.mxu0 0
        %3775 = vmatpush2.bf16.msra.mxu0 0
        %3776 = vmatprep.subr.bf16.mxu0 0
        %3777 = vmatpush2.bf16.msra.mxu0 0
        %3778 = vmatprep.subr.bf16.mxu0 0
        %3779 = vmatpush2.bf16.msra.mxu0 0
        %3780 = vmatprep.mubr.bf16.mxu0 0
        %3781 = vmatmul.mubr.bf16.gmra.mxu0 %v3743
        %v3782 = vpop.f32.mrf.mxu0
        %v3783 = vadd.f32 0.0, %v3782
        %v3784 = vpop.f32.mrf.mxu0
        %v3785 = vpop.f32.mrf.mxu0
        %v3786 = vadd.f32 0.0, %v3785
        %v3787 = vpop.f32.mrf.mxu0
        %3788 = vdwg.mxu0
        %v3790 = vsel %vm1832, %v3550, 0
        %v3793 = vsel %vm3556, %v1762, 0
        %3795 = vmatprep.subr.bf16.mxu0 0
        %3796 = vmatpush1.bf16.msra.mxu0 0
        %3797 = vmatprep.subr.bf16.mxu0 0
        %3798 = vmatpush1.bf16.msra.mxu0 0
        %3799 = vmatprep.subr.bf16.mxu0 0
        %3800 = vmatpush1.bf16.msra.mxu0 0
        %3801 = vmatprep.subr.bf16.mxu0 0
        %3802 = vmatpush1.bf16.msra.mxu0 0
        %3803 = vmatprep.subr.bf16.mxu0 0
        %3804 = vmatpush1.bf16.msra.mxu0 0
        %3805 = vmatprep.subr.bf16.mxu0 0
        %3806 = vmatpush1.bf16.msra.mxu0 0
        %3807 = vmatprep.subr.bf16.mxu0 0
        %3808 = vmatpush1.bf16.msra.mxu0 0
        %3809 = vmatprep.subr.bf16.mxu0 0
        %3810 = vmatpush1.bf16.msra.mxu0 %v3793
        %3811 = vmatprep.subr.bf16.mxu0 0
        %3812 = vmatpush2.bf16.msra.mxu0 0
        %3813 = vmatprep.subr.bf16.mxu0 0
        %3814 = vmatpush2.bf16.msra.mxu0 0
        %3815 = vmatprep.subr.bf16.mxu0 0
        %3816 = vmatpush2.bf16.msra.mxu0 0
        %3817 = vmatprep.subr.bf16.mxu0 0
        %3818 = vmatpush2.bf16.msra.mxu0 0
        %3819 = vmatprep.subr.bf16.mxu0 0
        %3820 = vmatpush2.bf16.msra.mxu0 0
        %3821 = vmatprep.subr.bf16.mxu0 0
        %3822 = vmatpush2.bf16.msra.mxu0 0
        %3823 = vmatprep.subr.bf16.mxu0 0
        %3824 = vmatpush2.bf16.msra.mxu0 0
        %3825 = vmatprep.subr.bf16.mxu0 0
        %3826 = vmatpush2.bf16.msra.mxu0 0
        %3827 = vmatprep.mubr.bf16.mxu0 0
        %3828 = vmatmul.mubr.bf16.gmra.mxu0 %v3790
        %v3829 = vpop.f32.mrf.mxu0
        %v3830 = vadd.f32 0.0, %v3829
        %v3831 = vpop.f32.mrf.mxu0
        %v3832 = vpop.f32.mrf.mxu0
        %v3833 = vadd.f32 0.0, %v3832
        %v3834 = vpop.f32.mrf.mxu0
        %3835 = vdwg.mxu0
        %v3837 = vsel %vm1832, %v3551, 0
        %v3840 = vsel %vm3556, %v1763, 0
        %3842 = vmatprep.subr.bf16.mxu0 0
        %3843 = vmatpush1.bf16.msra.mxu0 0
        %3844 = vmatprep.subr.bf16.mxu0 0
        %3845 = vmatpush1.bf16.msra.mxu0 0
        %3846 = vmatprep.subr.bf16.mxu0 0
        %3847 = vmatpush1.bf16.msra.mxu0 0
        %3848 = vmatprep.subr.bf16.mxu0 0
        %3849 = vmatpush1.bf16.msra.mxu0 0
        %3850 = vmatprep.subr.bf16.mxu0 0
        %3851 = vmatpush1.bf16.msra.mxu0 0
        %3852 = vmatprep.subr.bf16.mxu0 0
        %3853 = vmatpush1.bf16.msra.mxu0 0
        %3854 = vmatprep.subr.bf16.mxu0 0
        %3855 = vmatpush1.bf16.msra.mxu0 0
        %3856 = vmatprep.subr.bf16.mxu0 0
        %3857 = vmatpush1.bf16.msra.mxu0 %v3840
        %3858 = vmatprep.subr.bf16.mxu0 0
        %3859 = vmatpush2.bf16.msra.mxu0 0
        %3860 = vmatprep.subr.bf16.mxu0 0
        %3861 = vmatpush2.bf16.msra.mxu0 0
        %3862 = vmatprep.subr.bf16.mxu0 0
        %3863 = vmatpush2.bf16.msra.mxu0 0
        %3864 = vmatprep.subr.bf16.mxu0 0
        %3865 = vmatpush2.bf16.msra.mxu0 0
        %3866 = vmatprep.subr.bf16.mxu0 0
        %3867 = vmatpush2.bf16.msra.mxu0 0
        %3868 = vmatprep.subr.bf16.mxu0 0
        %3869 = vmatpush2.bf16.msra.mxu0 0
        %3870 = vmatprep.subr.bf16.mxu0 0
        %3871 = vmatpush2.bf16.msra.mxu0 0
        %3872 = vmatprep.subr.bf16.mxu0 0
        %3873 = vmatpush2.bf16.msra.mxu0 0
        %3874 = vmatprep.mubr.bf16.mxu0 0
        %3875 = vmatmul.mubr.bf16.gmra.mxu0 %v3837
        %v3876 = vpop.f32.mrf.mxu0
        %v3877 = vadd.f32 0.0, %v3876
        %v3878 = vpop.f32.mrf.mxu0
        %v3879 = vpop.f32.mrf.mxu0
        %v3880 = vadd.f32 0.0, %v3879
        %v3881 = vpop.f32.mrf.mxu0
        %3882 = vdwg.mxu0
        %v3884 = vsel %vm1832, %v3552, 0
        %v3887 = vsel %vm3556, %v1764, 0
        %3889 = vmatprep.subr.bf16.mxu0 0
        %3890 = vmatpush1.bf16.msra.mxu0 0
        %3891 = vmatprep.subr.bf16.mxu0 0
        %3892 = vmatpush1.bf16.msra.mxu0 0
        %3893 = vmatprep.subr.bf16.mxu0 0
        %3894 = vmatpush1.bf16.msra.mxu0 0
        %3895 = vmatprep.subr.bf16.mxu0 0
        %3896 = vmatpush1.bf16.msra.mxu0 0
        %3897 = vmatprep.subr.bf16.mxu0 0
        %3898 = vmatpush1.bf16.msra.mxu0 0
        %3899 = vmatprep.subr.bf16.mxu0 0
        %3900 = vmatpush1.bf16.msra.mxu0 0
        %3901 = vmatprep.subr.bf16.mxu0 0
        %3902 = vmatpush1.bf16.msra.mxu0 0
        %3903 = vmatprep.subr.bf16.mxu0 0
        %3904 = vmatpush1.bf16.msra.mxu0 %v3887
        %3905 = vmatprep.subr.bf16.mxu0 0
        %3906 = vmatpush2.bf16.msra.mxu0 0
        %3907 = vmatprep.subr.bf16.mxu0 0
        %3908 = vmatpush2.bf16.msra.mxu0 0
        %3909 = vmatprep.subr.bf16.mxu0 0
        %3910 = vmatpush2.bf16.msra.mxu0 0
        %3911 = vmatprep.subr.bf16.mxu0 0
        %3912 = vmatpush2.bf16.msra.mxu0 0
        %3913 = vmatprep.subr.bf16.mxu0 0
        %3914 = vmatpush2.bf16.msra.mxu0 0
        %3915 = vmatprep.subr.bf16.mxu0 0
        %3916 = vmatpush2.bf16.msra.mxu0 0
        %3917 = vmatprep.subr.bf16.mxu0 0
        %3918 = vmatpush2.bf16.msra.mxu0 0
        %3919 = vmatprep.subr.bf16.mxu0 0
        %3920 = vmatpush2.bf16.msra.mxu0 0
        %3921 = vmatprep.mubr.bf16.mxu0 0
        %3922 = vmatmul.mubr.bf16.gmra.mxu0 %v3884
        %v3923 = vpop.f32.mrf.mxu0
        %v3924 = vadd.f32 0.0, %v3923
        %v3925 = vpop.f32.mrf.mxu0
        %v3926 = vpop.f32.mrf.mxu0
        %v3927 = vadd.f32 0.0, %v3926
        %v3928 = vpop.f32.mrf.mxu0
        %3929 = vdwg.mxu0
        %v3930 = vsel %vm1644, %v3595, 0.0
        %v3931 = vsel %vm1644, %v3642, 0.0
        %v3932 = vadd.f32 %v3930, %v3931
        %v3933 = vsel %vm1644, %v3689, 0.0
        %v3934 = vadd.f32 %v3932, %v3933
        %v3935 = vsel %vm1644, %v3736, 0.0
        %v3936 = vadd.f32 %v3934, %v3935
        %v3937 = vsel %vm1644, %v3783, 0.0
        %v3938 = vadd.f32 %v3936, %v3937
        %v3939 = vsel %vm1644, %v3830, 0.0
        %v3940 = vadd.f32 %v3938, %v3939
        %v3941 = vsel %vm1644, %v3877, 0.0
        %v3942 = vadd.f32 %v3940, %v3941
        %v3943 = vsel %vm1644, %v3924, 0.0
        %v3944 = vadd.f32 %v3942, %v3943
        %v3945 = vsel %vm1644, %v3598, 0.0
        %v3946 = vsel %vm1644, %v3645, 0.0
        %v3947 = vadd.f32 %v3945, %v3946
        %v3948 = vsel %vm1644, %v3692, 0.0
        %v3949 = vadd.f32 %v3947, %v3948
        %v3950 = vsel %vm1644, %v3739, 0.0
        %v3951 = vadd.f32 %v3949, %v3950
        %v3952 = vsel %vm1644, %v3786, 0.0
        %v3953 = vadd.f32 %v3951, %v3952
        %v3954 = vsel %vm1644, %v3833, 0.0
        %v3955 = vadd.f32 %v3953, %v3954
        %v3956 = vsel %vm1644, %v3880, 0.0
        %v3957 = vadd.f32 %v3955, %v3956
        %v3958 = vsel %vm1644, %v3927, 0.0
        %v3959 = vadd.f32 %v3957, %v3958
        %v3961 = vlaneseq
        %v3962 = vshrl.u32 %v3961, 7
        %v3963 = vsub.s32 0, %v3962
        %v3964 = vrot.slane %v1765, %v3963
        %v3966 = vadd.f32 %v3944, %v3964
        %v3967 = vadd.f32 %v3959, %v3964
        %v3968 = vadd.f32 %v1614, %v3966
        %v3969 = vadd.f32 %v1615, %v3967
        %v3970 = vld [vmem:[%s1590] sm:$0x1]
        %v3971 = vld [vmem:[%s1593] sm:$0x1]
        %v3972 = vsel %vm1644, %v3968, 0.0
        %3973 = vadd.xlane.f32.xlu0 %v3972
        %v3974 = vpop.xlane.xlu0 %3973
        %v3975 = vsel %vm1644, %v3969, 0.0
        %3976 = vadd.xlane.f32.xlu0 %v3975
        %v3977 = vpop.xlane.xlu0 %3976
        %v3978 = vrcp.pop 32.0
        %v3979 = vmul.f32 %v3974, %v3978
        %v3980 = vmul.f32 %v3977, %v3978
        %v3981 = vsub.f32 %v3968, %v3979
        %v3982 = vsub.f32 %v3969, %v3980
        %v3983 = vmul.f32 %v3981, %v3981
        %v3984 = vmul.f32 %v3982, %v3982
        %v3985 = vsel %vm1644, %v3983, 0.0
        %3986 = vadd.xlane.f32.xlu0 %v3985
        %v3987 = vpop.xlane.xlu0 %3986
        %v3988 = vsel %vm1644, %v3984, 0.0
        %3989 = vadd.xlane.f32.xlu0 %v3988
        %v3990 = vpop.xlane.xlu0 %3989
        %v3991 = vmul.f32 %v3987, %v3978
        %v3992 = vmul.f32 %v3990, %v3978
        %v3993 = vadd.f32 %v3991, 1e-05
        %v3994 = vadd.f32 %v3992, 1e-05
        %v3995 = vrsqrt.pop %v3993
        %v3996 = vrsqrt.pop %v3994
        %v3997 = vmul.f32 %v3981, %v3995
        %v3998 = vmul.f32 %v3982, %v3996
        %v4000 = vlaneseq
        %v4001 = vshrl.u32 %v4000, 7
        %v4002 = vsub.s32 0, %v4001
        %v4003 = vrot.slane %v3970, %v4002
        %v4005 = vmul.f32 %v3997, %v4003
        %v4006 = vmul.f32 %v3998, %v4003
        %v4008 = vlaneseq
        %v4009 = vshrl.u32 %v4008, 7
        %v4010 = vsub.s32 0, %v4009
        %v4011 = vrot.slane %v3971, %v4010
        %v4013 = vadd.f32 %v4005, %v4011
        %v4014 = vadd.f32 %v4006, %v4011
        %v4015 = vadd.f32 %v4013, %v1616
        %v4016 = vadd.f32 %v4014, %v1617
        %v4017 = vpack.c.bf16 %v4016, %v4015
        %v4018 = vld [vmem:[%s1307] sm:$0xf]
        %v4019 = vld [vmem:[%s1307 + $0x4] sm:$0xf]
        %v4020 = vld [vmem:[%s1307 + $0x8] sm:$0xf]
        %v4021 = vld [vmem:[%s1307 + $0xc] sm:$0xf]
        %v4022 = vld [vmem:[%s1315] sm:$0x1]
        %v4024 = vlaneseq
        %v4025 = vshrl.u32 %v4024, 7
        %v4026 = vsub.s32 0, %v4025
        %v4027 = vrot.slane %v4022, %v4026
        %v4033 = vunpack.c.l.b16 %v4018
        %v4034 = vunpack.c.l.b16 %v4019
        %v4035 = vunpack.c.l.b16 %v4020
        %v4036 = vunpack.c.l.b16 %v4021
        %v4037 = vpack.c.b16 %v4034, %v4033
        %v4038 = vpack.c.b16 %v4036, %v4035
        %v4042 = vsel %vm1644, %v4017, 0
        %4044 = vmatprep.subr.bf16.mxu0 0
        %4045 = vmatpush1.bf16.msra.mxu0 0
        %4046 = vmatprep.subr.bf16.mxu0 0
        %4047 = vmatpush1.bf16.msra.mxu0 0
        %4048 = vmatprep.subr.bf16.mxu0 0
        %4049 = vmatpush1.bf16.msra.mxu0 0
        %4050 = vmatprep.subr.bf16.mxu0 0
        %4051 = vmatpush1.bf16.msra.mxu0 0
        %4052 = vmatprep.subr.bf16.mxu0 0
        %4053 = vmatpush1.bf16.msra.mxu0 0
        %4054 = vmatprep.subr.bf16.mxu0 0
        %4055 = vmatpush1.bf16.msra.mxu0 0
        %4056 = vmatprep.subr.bf16.mxu0 0
        %4057 = vmatpush1.bf16.msra.mxu0 %v4038
        %4058 = vmatprep.subr.bf16.mxu0 0
        %4059 = vmatpush1.bf16.msra.mxu0 %v4037
        %4060 = vmatprep.subr.bf16.mxu0 0
        %4061 = vmatpush2.bf16.msra.mxu0 0
        %4062 = vmatprep.subr.bf16.mxu0 0
        %4063 = vmatpush2.bf16.msra.mxu0 0
        %4064 = vmatprep.subr.bf16.mxu0 0
        %4065 = vmatpush2.bf16.msra.mxu0 0
        %4066 = vmatprep.subr.bf16.mxu0 0
        %4067 = vmatpush2.bf16.msra.mxu0 0
        %4068 = vmatprep.subr.bf16.mxu0 0
        %4069 = vmatpush2.bf16.msra.mxu0 0
        %4070 = vmatprep.subr.bf16.mxu0 0
        %4071 = vmatpush2.bf16.msra.mxu0 0
        %4072 = vmatprep.subr.bf16.mxu0 0
        %4073 = vmatpush2.bf16.msra.mxu0 0
        %4074 = vmatprep.subr.bf16.mxu0 0
        %4075 = vmatpush2.bf16.msra.mxu0 0
        %4076 = vmatprep.mubr.bf16.mxu0 0
        %4077 = vmatmul.mubr.bf16.gmra.mxu0 %v4042
        %v4078 = vpop.f32.mrf.mxu0
        %v4079 = vadd.f32 %v4027, %v4078
        %v4080 = vpop.f32.mrf.mxu0
        %v4081 = vpop.f32.mrf.mxu0
        %v4082 = vadd.f32 %v4027, %v4081
        %v4083 = vpop.f32.mrf.mxu0
        %4084 = vdwg.mxu0
        %v4085 = vld [vmem:[#allocation9] sm:$0xf]
        %v4086 = vld [vmem:[#allocation9 + $0x4] sm:$0xf]
        %v4087 = vld [vmem:[#allocation9 + $0x8] sm:$0xf]
        %v4088 = vld [vmem:[#allocation9 + $0xc] sm:$0xf]
        %v4089 = vld [vmem:[%s1324] sm:$0xf]
        %v4090 = vld [vmem:[%s1324 + $0x4] sm:$0xf]
        %v4091 = vld [vmem:[%s1324 + $0x8] sm:$0xf]
        %v4092 = vld [vmem:[%s1324 + $0xc] sm:$0xf]
        %v4093 = vld [vmem:[%s1332] sm:$0x1]
        %v4095 = vlaneseq
        %v4096 = vshrl.u32 %v4095, 7
        %v4097 = vsub.s32 0, %v4096
        %v4098 = vrot.slane %v4093, %v4097
        %v4104 = vunpack.c.l.b16 %v4085
        %v4105 = vunpack.c.l.b16 %v4086
        %v4106 = vunpack.c.l.b16 %v4087
        %v4107 = vunpack.c.l.b16 %v4088
        %v4108 = vpack.c.b16 %v4105, %v4104
        %v4109 = vpack.c.b16 %v4107, %v4106
        %v4114 = vunpack.c.l.b16 %v4089
        %v4115 = vunpack.c.l.b16 %v4090
        %v4116 = vunpack.c.l.b16 %v4091
        %v4117 = vunpack.c.l.b16 %v4092
        %v4118 = vpack.c.b16 %v4115, %v4114
        %v4119 = vpack.c.b16 %v4117, %v4116
        %v4123 = vsel %vm1644, %v4108, 0
        %v4126 = vsel %vm1644, %v4109, 0
        %4128 = vmatprep.subr.bf16.mxu0 0
        %4129 = vmatpush1.bf16.msra.mxu0 0
        %4130 = vmatprep.subr.bf16.mxu0 0
        %4131 = vmatpush1.bf16.msra.mxu0 0
        %4132 = vmatprep.subr.bf16.mxu0 0
        %4133 = vmatpush1.bf16.msra.mxu0 0
        %4134 = vmatprep.subr.bf16.mxu0 0
        %4135 = vmatpush1.bf16.msra.mxu0 0
        %4136 = vmatprep.subr.bf16.mxu0 0
        %4137 = vmatpush1.bf16.msra.mxu0 0
        %4138 = vmatprep.subr.bf16.mxu0 0
        %4139 = vmatpush1.bf16.msra.mxu0 0
        %4140 = vmatprep.subr.bf16.mxu0 0
        %4141 = vmatpush1.bf16.msra.mxu0 %v4119
        %4142 = vmatprep.subr.bf16.mxu0 0
        %4143 = vmatpush1.bf16.msra.mxu0 %v4118
        %4144 = vmatprep.subr.bf16.mxu0 0
        %4145 = vmatpush2.bf16.msra.mxu0 0
        %4146 = vmatprep.subr.bf16.mxu0 0
        %4147 = vmatpush2.bf16.msra.mxu0 0
        %4148 = vmatprep.subr.bf16.mxu0 0
        %4149 = vmatpush2.bf16.msra.mxu0 0
        %4150 = vmatprep.subr.bf16.mxu0 0
        %4151 = vmatpush2.bf16.msra.mxu0 0
        %4152 = vmatprep.subr.bf16.mxu0 0
        %4153 = vmatpush2.bf16.msra.mxu0 0
        %4154 = vmatprep.subr.bf16.mxu0 0
        %4155 = vmatpush2.bf16.msra.mxu0 0
        %4156 = vmatprep.subr.bf16.mxu0 0
        %4157 = vmatpush2.bf16.msra.mxu0 0
        %4158 = vmatprep.subr.bf16.mxu0 0
        %4159 = vmatpush2.bf16.msra.mxu0 0
        %4160 = vmatprep.mubr.bf16.mxu0 0
        %4161 = vmatmul.mubr.bf16.gmra.mxu0 %v4123
        %v4162 = vpop.f32.mrf.mxu0
        %v4163 = vadd.f32 %v4098, %v4162
        %v4164 = vpop.f32.mrf.mxu0
        %v4165 = vpop.f32.mrf.mxu0
        %v4166 = vadd.f32 %v4098, %v4165
        %v4167 = vpop.f32.mrf.mxu0
        %4168 = vmatprep.mubr.bf16.mxu0 0
        %4169 = vmatmul.mubr.bf16.gmra.mxu0 %v4126
        %v4170 = vpop.f32.mrf.mxu0
        %v4171 = vadd.f32 %v4098, %v4170
        %v4172 = vpop.f32.mrf.mxu0
        %v4173 = vpop.f32.mrf.mxu0
        %v4174 = vadd.f32 %v4098, %v4173
        %v4175 = vpop.f32.mrf.mxu0
        %4176 = vdwg.mxu0
        %v4177 = vld [vmem:[#allocation8] sm:$0xf]
        %v4178 = vld [vmem:[#allocation8 + $0x4] sm:$0xf]
        %v4179 = vld [vmem:[#allocation8 + $0x8] sm:$0xf]
        %v4180 = vld [vmem:[#allocation8 + $0xc] sm:$0xf]
        %v4181 = vld [vmem:[%s1341] sm:$0xf]
        %v4182 = vld [vmem:[%s1341 + $0x4] sm:$0xf]
        %v4183 = vld [vmem:[%s1341 + $0x8] sm:$0xf]
        %v4184 = vld [vmem:[%s1341 + $0xc] sm:$0xf]
        %v4185 = vld [vmem:[%s1349] sm:$0x1]
        %v4187 = vlaneseq
        %v4188 = vshrl.u32 %v4187, 7
        %v4189 = vsub.s32 0, %v4188
        %v4190 = vrot.slane %v4185, %v4189
        %v4196 = vunpack.c.l.b16 %v4177
        %v4197 = vunpack.c.l.b16 %v4178
        %v4198 = vunpack.c.l.b16 %v4179
        %v4199 = vunpack.c.l.b16 %v4180
        %v4200 = vpack.c.b16 %v4197, %v4196
        %v4201 = vpack.c.b16 %v4199, %v4198
        %v4206 = vunpack.c.l.b16 %v4181
        %v4207 = vunpack.c.l.b16 %v4182
        %v4208 = vunpack.c.l.b16 %v4183
        %v4209 = vunpack.c.l.b16 %v4184
        %v4210 = vpack.c.b16 %v4207, %v4206
        %v4211 = vpack.c.b16 %v4209, %v4208
        %v4215 = vsel %vm1644, %v4200, 0
        %v4218 = vsel %vm1644, %v4201, 0
        %4220 = vmatprep.subr.bf16.mxu0 0
        %4221 = vmatpush1.bf16.msra.mxu0 0
        %4222 = vmatprep.subr.bf16.mxu0 0
        %4223 = vmatpush1.bf16.msra.mxu0 0
        %4224 = vmatprep.subr.bf16.mxu0 0
        %4225 = vmatpush1.bf16.msra.mxu0 0
        %4226 = vmatprep.subr.bf16.mxu0 0
        %4227 = vmatpush1.bf16.msra.mxu0 0
        %4228 = vmatprep.subr.bf16.mxu0 0
        %4229 = vmatpush1.bf16.msra.mxu0 0
        %4230 = vmatprep.subr.bf16.mxu0 0
        %4231 = vmatpush1.bf16.msra.mxu0 0
        %4232 = vmatprep.subr.bf16.mxu0 0
        %4233 = vmatpush1.bf16.msra.mxu0 %v4211
        %4234 = vmatprep.subr.bf16.mxu0 0
        %4235 = vmatpush1.bf16.msra.mxu0 %v4210
        %4236 = vmatprep.subr.bf16.mxu0 0
        %4237 = vmatpush2.bf16.msra.mxu0 0
        %4238 = vmatprep.subr.bf16.mxu0 0
        %4239 = vmatpush2.bf16.msra.mxu0 0
        %4240 = vmatprep.subr.bf16.mxu0 0
        %4241 = vmatpush2.bf16.msra.mxu0 0
        %4242 = vmatprep.subr.bf16.mxu0 0
        %4243 = vmatpush2.bf16.msra.mxu0 0
        %4244 = vmatprep.subr.bf16.mxu0 0
        %4245 = vmatpush2.bf16.msra.mxu0 0
        %4246 = vmatprep.subr.bf16.mxu0 0
        %4247 = vmatpush2.bf16.msra.mxu0 0
        %4248 = vmatprep.subr.bf16.mxu0 0
        %4249 = vmatpush2.bf16.msra.mxu0 0
        %4250 = vmatprep.subr.bf16.mxu0 0
        %4251 = vmatpush2.bf16.msra.mxu0 0
        %4252 = vmatprep.mubr.bf16.mxu0 0
        %4253 = vmatmul.mubr.bf16.gmra.mxu0 %v4215
        %v4254 = vpop.f32.mrf.mxu0
        %v4255 = vadd.f32 %v4190, %v4254
        %v4256 = vpop.f32.mrf.mxu0
        %v4257 = vpop.f32.mrf.mxu0
        %v4258 = vadd.f32 %v4190, %v4257
        %v4259 = vpop.f32.mrf.mxu0
        %4260 = vmatprep.mubr.bf16.mxu0 0
        %4261 = vmatmul.mubr.bf16.gmra.mxu0 %v4218
        %v4262 = vpop.f32.mrf.mxu0
        %v4263 = vadd.f32 %v4190, %v4262
        %v4264 = vpop.f32.mrf.mxu0
        %v4265 = vpop.f32.mrf.mxu0
        %v4266 = vadd.f32 %v4190, %v4265
        %v4267 = vpop.f32.mrf.mxu0
        %4268 = vdwg.mxu0
        %v4269 = vld [vmem:[%s1358] sm:$0x3]
        %v4270 = vld [vmem:[%s1358 + $0x2] sm:$0x3]
        %v4271 = vld [vmem:[%s1358 + $0x4] sm:$0x3]
        %v4272 = vld [vmem:[%s1358 + $0x6] sm:$0x3]
        %v4273 = vld [vmem:[%s1358 + $0x8] sm:$0x3]
        %v4274 = vld [vmem:[%s1358 + $0xa] sm:$0x3]
        %v4275 = vld [vmem:[%s1358 + $0xc] sm:$0x3]
        %v4276 = vld [vmem:[%s1358 + $0xe] sm:$0x3]
        %v4277 = vld [vmem:[%s1366] sm:$0x1]
        %v4278 = vpack.c.bf16 %v4079, %v4079
        %v4279 = vpack.c.bf16 %v4082, %v4082
        %4282 = vrot.lane.b32.xlu0 %v4278, 124
        %v4283 = vpop.permute.xlu0 %4282
        %4284 = vrot.lane.b32.xlu0 %v4279, 124
        %v4285 = vpop.permute.xlu0 %4284
        %4286 = vrot.lane.b32.xlu0 %v4278, 120
        %v4287 = vpop.permute.xlu0 %4286
        %4288 = vrot.lane.b32.xlu0 %v4279, 120
        %v4289 = vpop.permute.xlu0 %4288
        %4290 = vrot.lane.b32.xlu0 %v4278, 116
        %v4291 = vpop.permute.xlu0 %4290
        %4292 = vrot.lane.b32.xlu0 %v4279, 116
        %v4293 = vpop.permute.xlu0 %4292
        %4294 = vrot.lane.b32.xlu0 %v4278, 112
        %v4295 = vpop.permute.xlu0 %4294
        %4296 = vrot.lane.b32.xlu0 %v4279, 112
        %v4297 = vpop.permute.xlu0 %4296
        %4298 = vrot.lane.b32.xlu0 %v4278, 108
        %v4299 = vpop.permute.xlu0 %4298
        %4300 = vrot.lane.b32.xlu0 %v4279, 108
        %v4301 = vpop.permute.xlu0 %4300
        %4302 = vrot.lane.b32.xlu0 %v4278, 104
        %v4303 = vpop.permute.xlu0 %4302
        %4304 = vrot.lane.b32.xlu0 %v4279, 104
        %v4305 = vpop.permute.xlu0 %4304
        %4306 = vrot.lane.b32.xlu0 %v4278, 100
        %v4307 = vpop.permute.xlu0 %4306
        %4308 = vrot.lane.b32.xlu0 %v4279, 100
        %v4309 = vpop.permute.xlu0 %4308
        %v4310 = vpack.c.bf16 %v4166, %v4163
        %v4311 = vpack.c.bf16 %v4174, %v4171
        %4314 = vrot.lane.b32.xlu0 %v4310, 124
        %v4315 = vpop.permute.xlu0 %4314
        %4316 = vrot.lane.b32.xlu0 %v4311, 124
        %v4317 = vpop.permute.xlu0 %4316
        %4318 = vrot.lane.b32.xlu0 %v4310, 120
        %v4319 = vpop.permute.xlu0 %4318
        %4320 = vrot.lane.b32.xlu0 %v4311, 120
        %v4321 = vpop.permute.xlu0 %4320
        %4322 = vrot.lane.b32.xlu0 %v4310, 116
        %v4323 = vpop.permute.xlu0 %4322
        %4324 = vrot.lane.b32.xlu0 %v4311, 116
        %v4325 = vpop.permute.xlu0 %4324
        %4326 = vrot.lane.b32.xlu0 %v4310, 112
        %v4327 = vpop.permute.xlu0 %4326
        %4328 = vrot.lane.b32.xlu0 %v4311, 112
        %v4329 = vpop.permute.xlu0 %4328
        %4330 = vrot.lane.b32.xlu0 %v4310, 108
        %v4331 = vpop.permute.xlu0 %4330
        %4332 = vrot.lane.b32.xlu0 %v4311, 108
        %v4333 = vpop.permute.xlu0 %4332
        %4334 = vrot.lane.b32.xlu0 %v4310, 104
        %v4335 = vpop.permute.xlu0 %4334
        %4336 = vrot.lane.b32.xlu0 %v4311, 104
        %v4337 = vpop.permute.xlu0 %4336
        %4338 = vrot.lane.b32.xlu0 %v4310, 100
        %v4339 = vpop.permute.xlu0 %4338
        %4340 = vrot.lane.b32.xlu0 %v4311, 100
        %v4341 = vpop.permute.xlu0 %4340
        %v4342 = vpack.c.bf16 %v4258, %v4255
        %v4343 = vpack.c.bf16 %v4266, %v4263
        %4346 = vrot.lane.b32.xlu0 %v4342, 124
        %v4347 = vpop.permute.xlu0 %4346
        %4348 = vrot.lane.b32.xlu0 %v4343, 124
        %v4349 = vpop.permute.xlu0 %4348
        %4352 = vrot.lane.b32.xlu0 %v4342, 120
        %v4353 = vpop.permute.xlu0 %4352
        %4354 = vrot.lane.b32.xlu0 %v4343, 120
        %v4355 = vpop.permute.xlu0 %4354
        %4358 = vrot.lane.b32.xlu0 %v4342, 116
        %v4359 = vpop.permute.xlu0 %4358
        %4360 = vrot.lane.b32.xlu0 %v4343, 116
        %v4361 = vpop.permute.xlu0 %4360
        %4364 = vrot.lane.b32.xlu0 %v4342, 112
        %v4365 = vpop.permute.xlu0 %4364
        %4366 = vrot.lane.b32.xlu0 %v4343, 112
        %v4367 = vpop.permute.xlu0 %4366
        %4370 = vrot.lane.b32.xlu0 %v4342, 108
        %v4371 = vpop.permute.xlu0 %4370
        %4372 = vrot.lane.b32.xlu0 %v4343, 108
        %v4373 = vpop.permute.xlu0 %4372
        %4376 = vrot.lane.b32.xlu0 %v4342, 104
        %v4377 = vpop.permute.xlu0 %4376
        %4378 = vrot.lane.b32.xlu0 %v4343, 104
        %v4379 = vpop.permute.xlu0 %4378
        %4382 = vrot.lane.b32.xlu0 %v4342, 100
        %v4383 = vpop.permute.xlu0 %4382
        %4384 = vrot.lane.b32.xlu0 %v4343, 100
        %v4385 = vpop.permute.xlu0 %4384
        %v4389 = vsel %vm1832, %v4278, 0
        %v4392 = vsel %vm1832, %v4310, 0
        %4394 = vmatprep.subr.bf16.mxu0 0
        %4395 = vmatpush1.bf16.xpose.msra.mxu0 0
        %4396 = vmatprep.subr.bf16.mxu0 0
        %4397 = vmatpush1.bf16.xpose.msra.mxu0 0
        %4398 = vmatprep.subr.bf16.mxu0 0
        %4399 = vmatpush1.bf16.xpose.msra.mxu0 0
        %4400 = vmatprep.subr.bf16.mxu0 0
        %4401 = vmatpush1.bf16.xpose.msra.mxu0 0
        %4402 = vmatprep.subr.bf16.mxu0 0
        %4403 = vmatpush1.bf16.xpose.msra.mxu0 0
        %4404 = vmatprep.subr.bf16.mxu0 0
        %4405 = vmatpush1.bf16.xpose.msra.mxu0 0
        %4406 = vmatprep.subr.bf16.mxu0 0
        %4407 = vmatpush1.bf16.xpose.msra.mxu0 0
        %4408 = vmatprep.subr.bf16.mxu0 0
        %4409 = vmatpush1.bf16.xpose.msra.mxu0 %v4392
        %4410 = vmatprep.subr.bf16.mxu0 0
        %4411 = vmatpush2.bf16.xpose.msra.mxu0 0
        %4412 = vmatprep.subr.bf16.mxu0 0
        %4413 = vmatpush2.bf16.xpose.msra.mxu0 0
        %4414 = vmatprep.subr.bf16.mxu0 0
        %4415 = vmatpush2.bf16.xpose.msra.mxu0 0
        %4416 = vmatprep.subr.bf16.mxu0 0
        %4417 = vmatpush2.bf16.xpose.msra.mxu0 0
        %4418 = vmatprep.subr.bf16.mxu0 0
        %4419 = vmatpush2.bf16.xpose.msra.mxu0 0
        %4420 = vmatprep.subr.bf16.mxu0 0
        %4421 = vmatpush2.bf16.xpose.msra.mxu0 0
        %4422 = vmatprep.subr.bf16.mxu0 0
        %4423 = vmatpush2.bf16.xpose.msra.mxu0 0
        %4424 = vmatprep.subr.bf16.mxu0 0
        %4425 = vmatpush2.bf16.xpose.msra.mxu0 0
        %4426 = vmatprep.mubr.bf16.mxu0 0
        %4427 = vmatmul.mubr.bf16.gmra.mxu0 %v4389
        %v4428 = vpop.f32.mrf.mxu0
        %v4429 = vadd.f32 0.0, %v4428
        %v4430 = vpop.f32.mrf.mxu0
        %v4431 = vpop.f32.mrf.mxu0
        %v4432 = vpop.f32.mrf.mxu0
        %4433 = vdwg.mxu0
        %v4435 = vsel %vm1832, %v4279, 0
        %v4438 = vsel %vm1832, %v4311, 0
        %4440 = vmatprep.subr.bf16.mxu0 0
        %4441 = vmatpush1.bf16.xpose.msra.mxu0 0
        %4442 = vmatprep.subr.bf16.mxu0 0
        %4443 = vmatpush1.bf16.xpose.msra.mxu0 0
        %4444 = vmatprep.subr.bf16.mxu0 0
        %4445 = vmatpush1.bf16.xpose.msra.mxu0 0
        %4446 = vmatprep.subr.bf16.mxu0 0
        %4447 = vmatpush1.bf16.xpose.msra.mxu0 0
        %4448 = vmatprep.subr.bf16.mxu0 0
        %4449 = vmatpush1.bf16.xpose.msra.mxu0 0
        %4450 = vmatprep.subr.bf16.mxu0 0
        %4451 = vmatpush1.bf16.xpose.msra.mxu0 0
        %4452 = vmatprep.subr.bf16.mxu0 0
        %4453 = vmatpush1.bf16.xpose.msra.mxu0 0
        %4454 = vmatprep.subr.bf16.mxu0 0
        %4455 = vmatpush1.bf16.xpose.msra.mxu0 %v4438
        %4456 = vmatprep.subr.bf16.mxu0 0
        %4457 = vmatpush2.bf16.xpose.msra.mxu0 0
        %4458 = vmatprep.subr.bf16.mxu0 0
        %4459 = vmatpush2.bf16.xpose.msra.mxu0 0
        %4460 = vmatprep.subr.bf16.mxu0 0
        %4461 = vmatpush2.bf16.xpose.msra.mxu0 0
        %4462 = vmatprep.subr.bf16.mxu0 0
        %4463 = vmatpush2.bf16.xpose.msra.mxu0 0
        %4464 = vmatprep.subr.bf16.mxu0 0
        %4465 = vmatpush2.bf16.xpose.msra.mxu0 0
        %4466 = vmatprep.subr.bf16.mxu0 0
        %4467 = vmatpush2.bf16.xpose.msra.mxu0 0
        %4468 = vmatprep.subr.bf16.mxu0 0
        %4469 = vmatpush2.bf16.xpose.msra.mxu0 0
        %4470 = vmatprep.subr.bf16.mxu0 0
        %4471 = vmatpush2.bf16.xpose.msra.mxu0 0
        %4472 = vmatprep.mubr.bf16.mxu0 0
        %4473 = vmatmul.mubr.bf16.gmra.mxu0 %v4435
        %v4474 = vpop.f32.mrf.mxu0
        %v4475 = vadd.f32 0.0, %v4474
        %v4476 = vpop.f32.mrf.mxu0
        %v4477 = vpop.f32.mrf.mxu0
        %v4478 = vpop.f32.mrf.mxu0
        %4479 = vdwg.mxu0
        %v4481 = vsel %vm1832, %v4283, 0
        %v4484 = vsel %vm1832, %v4315, 0
        %4486 = vmatprep.subr.bf16.mxu0 0
        %4487 = vmatpush1.bf16.xpose.msra.mxu0 0
        %4488 = vmatprep.subr.bf16.mxu0 0
        %4489 = vmatpush1.bf16.xpose.msra.mxu0 0
        %4490 = vmatprep.subr.bf16.mxu0 0
        %4491 = vmatpush1.bf16.xpose.msra.mxu0 0
        %4492 = vmatprep.subr.bf16.mxu0 0
        %4493 = vmatpush1.bf16.xpose.msra.mxu0 0
        %4494 = vmatprep.subr.bf16.mxu0 0
        %4495 = vmatpush1.bf16.xpose.msra.mxu0 0
        %4496 = vmatprep.subr.bf16.mxu0 0
        %4497 = vmatpush1.bf16.xpose.msra.mxu0 0
        %4498 = vmatprep.subr.bf16.mxu0 0
        %4499 = vmatpush1.bf16.xpose.msra.mxu0 0
        %4500 = vmatprep.subr.bf16.mxu0 0
        %4501 = vmatpush1.bf16.xpose.msra.mxu0 %v4484
        %4502 = vmatprep.subr.bf16.mxu0 0
        %4503 = vmatpush2.bf16.xpose.msra.mxu0 0
        %4504 = vmatprep.subr.bf16.mxu0 0
        %4505 = vmatpush2.bf16.xpose.msra.mxu0 0
        %4506 = vmatprep.subr.bf16.mxu0 0
        %4507 = vmatpush2.bf16.xpose.msra.mxu0 0
        %4508 = vmatprep.subr.bf16.mxu0 0
        %4509 = vmatpush2.bf16.xpose.msra.mxu0 0
        %4510 = vmatprep.subr.bf16.mxu0 0
        %4511 = vmatpush2.bf16.xpose.msra.mxu0 0
        %4512 = vmatprep.subr.bf16.mxu0 0
        %4513 = vmatpush2.bf16.xpose.msra.mxu0 0
        %4514 = vmatprep.subr.bf16.mxu0 0
        %4515 = vmatpush2.bf16.xpose.msra.mxu0 0
        %4516 = vmatprep.subr.bf16.mxu0 0
        %4517 = vmatpush2.bf16.xpose.msra.mxu0 0
        %4518 = vmatprep.mubr.bf16.mxu0 0
        %4519 = vmatmul.mubr.bf16.gmra.mxu0 %v4481
        %v4520 = vpop.f32.mrf.mxu0
        %v4521 = vadd.f32 0.0, %v4520
        %v4522 = vpop.f32.mrf.mxu0
        %v4523 = vpop.f32.mrf.mxu0
        %v4524 = vpop.f32.mrf.mxu0
        %4525 = vdwg.mxu0
        %v4527 = vsel %vm1832, %v4285, 0
        %v4530 = vsel %vm1832, %v4317, 0
        %4532 = vmatprep.subr.bf16.mxu0 0
        %4533 = vmatpush1.bf16.xpose.msra.mxu0 0
        %4534 = vmatprep.subr.bf16.mxu0 0
        %4535 = vmatpush1.bf16.xpose.msra.mxu0 0
        %4536 = vmatprep.subr.bf16.mxu0 0
        %4537 = vmatpush1.bf16.xpose.msra.mxu0 0
        %4538 = vmatprep.subr.bf16.mxu0 0
        %4539 = vmatpush1.bf16.xpose.msra.mxu0 0
        %4540 = vmatprep.subr.bf16.mxu0 0
        %4541 = vmatpush1.bf16.xpose.msra.mxu0 0
        %4542 = vmatprep.subr.bf16.mxu0 0
        %4543 = vmatpush1.bf16.xpose.msra.mxu0 0
        %4544 = vmatprep.subr.bf16.mxu0 0
        %4545 = vmatpush1.bf16.xpose.msra.mxu0 0
        %4546 = vmatprep.subr.bf16.mxu0 0
        %4547 = vmatpush1.bf16.xpose.msra.mxu0 %v4530
        %4548 = vmatprep.subr.bf16.mxu0 0
        %4549 = vmatpush2.bf16.xpose.msra.mxu0 0
        %4550 = vmatprep.subr.bf16.mxu0 0
        %4551 = vmatpush2.bf16.xpose.msra.mxu0 0
        %4552 = vmatprep.subr.bf16.mxu0 0
        %4553 = vmatpush2.bf16.xpose.msra.mxu0 0
        %4554 = vmatprep.subr.bf16.mxu0 0
        %4555 = vmatpush2.bf16.xpose.msra.mxu0 0
        %4556 = vmatprep.subr.bf16.mxu0 0
        %4557 = vmatpush2.bf16.xpose.msra.mxu0 0
        %4558 = vmatprep.subr.bf16.mxu0 0
        %4559 = vmatpush2.bf16.xpose.msra.mxu0 0
        %4560 = vmatprep.subr.bf16.mxu0 0
        %4561 = vmatpush2.bf16.xpose.msra.mxu0 0
        %4562 = vmatprep.subr.bf16.mxu0 0
        %4563 = vmatpush2.bf16.xpose.msra.mxu0 0
        %4564 = vmatprep.mubr.bf16.mxu0 0
        %4565 = vmatmul.mubr.bf16.gmra.mxu0 %v4527
        %v4566 = vpop.f32.mrf.mxu0
        %v4567 = vadd.f32 0.0, %v4566
        %v4568 = vpop.f32.mrf.mxu0
        %v4569 = vpop.f32.mrf.mxu0
        %v4570 = vpop.f32.mrf.mxu0
        %4571 = vdwg.mxu0
        %v4573 = vsel %vm1832, %v4287, 0
        %v4576 = vsel %vm1832, %v4319, 0
        %4578 = vmatprep.subr.bf16.mxu0 0
        %4579 = vmatpush1.bf16.xpose.msra.mxu0 0
        %4580 = vmatprep.subr.bf16.mxu0 0
        %4581 = vmatpush1.bf16.xpose.msra.mxu0 0
        %4582 = vmatprep.subr.bf16.mxu0 0
        %4583 = vmatpush1.bf16.xpose.msra.mxu0 0
        %4584 = vmatprep.subr.bf16.mxu0 0
        %4585 = vmatpush1.bf16.xpose.msra.mxu0 0
        %4586 = vmatprep.subr.bf16.mxu0 0
        %4587 = vmatpush1.bf16.xpose.msra.mxu0 0
        %4588 = vmatprep.subr.bf16.mxu0 0
        %4589 = vmatpush1.bf16.xpose.msra.mxu0 0
        %4590 = vmatprep.subr.bf16.mxu0 0
        %4591 = vmatpush1.bf16.xpose.msra.mxu0 0
        %4592 = vmatprep.subr.bf16.mxu0 0
        %4593 = vmatpush1.bf16.xpose.msra.mxu0 %v4576
        %4594 = vmatprep.subr.bf16.mxu0 0
        %4595 = vmatpush2.bf16.xpose.msra.mxu0 0
        %4596 = vmatprep.subr.bf16.mxu0 0
        %4597 = vmatpush2.bf16.xpose.msra.mxu0 0
        %4598 = vmatprep.subr.bf16.mxu0 0
        %4599 = vmatpush2.bf16.xpose.msra.mxu0 0
        %4600 = vmatprep.subr.bf16.mxu0 0
        %4601 = vmatpush2.bf16.xpose.msra.mxu0 0
        %4602 = vmatprep.subr.bf16.mxu0 0
        %4603 = vmatpush2.bf16.xpose.msra.mxu0 0
        %4604 = vmatprep.subr.bf16.mxu0 0
        %4605 = vmatpush2.bf16.xpose.msra.mxu0 0
        %4606 = vmatprep.subr.bf16.mxu0 0
        %4607 = vmatpush2.bf16.xpose.msra.mxu0 0
        %4608 = vmatprep.subr.bf16.mxu0 0
        %4609 = vmatpush2.bf16.xpose.msra.mxu0 0
        %4610 = vmatprep.mubr.bf16.mxu0 0
        %4611 = vmatmul.mubr.bf16.gmra.mxu0 %v4573
        %v4612 = vpop.f32.mrf.mxu0
        %v4613 = vadd.f32 0.0, %v4612
        %v4614 = vpop.f32.mrf.mxu0
        %v4615 = vpop.f32.mrf.mxu0
        %v4616 = vpop.f32.mrf.mxu0
        %4617 = vdwg.mxu0
        %v4619 = vsel %vm1832, %v4289, 0
        %v4622 = vsel %vm1832, %v4321, 0
        %4624 = vmatprep.subr.bf16.mxu0 0
        %4625 = vmatpush1.bf16.xpose.msra.mxu0 0
        %4626 = vmatprep.subr.bf16.mxu0 0
        %4627 = vmatpush1.bf16.xpose.msra.mxu0 0
        %4628 = vmatprep.subr.bf16.mxu0 0
        %4629 = vmatpush1.bf16.xpose.msra.mxu0 0
        %4630 = vmatprep.subr.bf16.mxu0 0
        %4631 = vmatpush1.bf16.xpose.msra.mxu0 0
        %4632 = vmatprep.subr.bf16.mxu0 0
        %4633 = vmatpush1.bf16.xpose.msra.mxu0 0
        %4634 = vmatprep.subr.bf16.mxu0 0
        %4635 = vmatpush1.bf16.xpose.msra.mxu0 0
        %4636 = vmatprep.subr.bf16.mxu0 0
        %4637 = vmatpush1.bf16.xpose.msra.mxu0 0
        %4638 = vmatprep.subr.bf16.mxu0 0
        %4639 = vmatpush1.bf16.xpose.msra.mxu0 %v4622
        %4640 = vmatprep.subr.bf16.mxu0 0
        %4641 = vmatpush2.bf16.xpose.msra.mxu0 0
        %4642 = vmatprep.subr.bf16.mxu0 0
        %4643 = vmatpush2.bf16.xpose.msra.mxu0 0
        %4644 = vmatprep.subr.bf16.mxu0 0
        %4645 = vmatpush2.bf16.xpose.msra.mxu0 0
        %4646 = vmatprep.subr.bf16.mxu0 0
        %4647 = vmatpush2.bf16.xpose.msra.mxu0 0
        %4648 = vmatprep.subr.bf16.mxu0 0
        %4649 = vmatpush2.bf16.xpose.msra.mxu0 0
        %4650 = vmatprep.subr.bf16.mxu0 0
        %4651 = vmatpush2.bf16.xpose.msra.mxu0 0
        %4652 = vmatprep.subr.bf16.mxu0 0
        %4653 = vmatpush2.bf16.xpose.msra.mxu0 0
        %4654 = vmatprep.subr.bf16.mxu0 0
        %4655 = vmatpush2.bf16.xpose.msra.mxu0 0
        %4656 = vmatprep.mubr.bf16.mxu0 0
        %4657 = vmatmul.mubr.bf16.gmra.mxu0 %v4619
        %v4658 = vpop.f32.mrf.mxu0
        %v4659 = vadd.f32 0.0, %v4658
        %v4660 = vpop.f32.mrf.mxu0
        %v4661 = vpop.f32.mrf.mxu0
        %v4662 = vpop.f32.mrf.mxu0
        %4663 = vdwg.mxu0
        %v4665 = vsel %vm1832, %v4291, 0
        %v4668 = vsel %vm1832, %v4323, 0
        %4670 = vmatprep.subr.bf16.mxu0 0
        %4671 = vmatpush1.bf16.xpose.msra.mxu0 0
        %4672 = vmatprep.subr.bf16.mxu0 0
        %4673 = vmatpush1.bf16.xpose.msra.mxu0 0
        %4674 = vmatprep.subr.bf16.mxu0 0
        %4675 = vmatpush1.bf16.xpose.msra.mxu0 0
        %4676 = vmatprep.subr.bf16.mxu0 0
        %4677 = vmatpush1.bf16.xpose.msra.mxu0 0
        %4678 = vmatprep.subr.bf16.mxu0 0
        %4679 = vmatpush1.bf16.xpose.msra.mxu0 0
        %4680 = vmatprep.subr.bf16.mxu0 0
        %4681 = vmatpush1.bf16.xpose.msra.mxu0 0
        %4682 = vmatprep.subr.bf16.mxu0 0
        %4683 = vmatpush1.bf16.xpose.msra.mxu0 0
        %4684 = vmatprep.subr.bf16.mxu0 0
        %4685 = vmatpush1.bf16.xpose.msra.mxu0 %v4668
        %4686 = vmatprep.subr.bf16.mxu0 0
        %4687 = vmatpush2.bf16.xpose.msra.mxu0 0
        %4688 = vmatprep.subr.bf16.mxu0 0
        %4689 = vmatpush2.bf16.xpose.msra.mxu0 0
        %4690 = vmatprep.subr.bf16.mxu0 0
        %4691 = vmatpush2.bf16.xpose.msra.mxu0 0
        %4692 = vmatprep.subr.bf16.mxu0 0
        %4693 = vmatpush2.bf16.xpose.msra.mxu0 0
        %4694 = vmatprep.subr.bf16.mxu0 0
        %4695 = vmatpush2.bf16.xpose.msra.mxu0 0
        %4696 = vmatprep.subr.bf16.mxu0 0
        %4697 = vmatpush2.bf16.xpose.msra.mxu0 0
        %4698 = vmatprep.subr.bf16.mxu0 0
        %4699 = vmatpush2.bf16.xpose.msra.mxu0 0
        %4700 = vmatprep.subr.bf16.mxu0 0
        %4701 = vmatpush2.bf16.xpose.msra.mxu0 0
        %4702 = vmatprep.mubr.bf16.mxu0 0
        %4703 = vmatmul.mubr.bf16.gmra.mxu0 %v4665
        %v4704 = vpop.f32.mrf.mxu0
        %v4705 = vadd.f32 0.0, %v4704
        %v4706 = vpop.f32.mrf.mxu0
        %v4707 = vpop.f32.mrf.mxu0
        %v4708 = vpop.f32.mrf.mxu0
        %4709 = vdwg.mxu0
        %v4711 = vsel %vm1832, %v4293, 0
        %v4714 = vsel %vm1832, %v4325, 0
        %4716 = vmatprep.subr.bf16.mxu0 0
        %4717 = vmatpush1.bf16.xpose.msra.mxu0 0
        %4718 = vmatprep.subr.bf16.mxu0 0
        %4719 = vmatpush1.bf16.xpose.msra.mxu0 0
        %4720 = vmatprep.subr.bf16.mxu0 0
        %4721 = vmatpush1.bf16.xpose.msra.mxu0 0
        %4722 = vmatprep.subr.bf16.mxu0 0
        %4723 = vmatpush1.bf16.xpose.msra.mxu0 0
        %4724 = vmatprep.subr.bf16.mxu0 0
        %4725 = vmatpush1.bf16.xpose.msra.mxu0 0
        %4726 = vmatprep.subr.bf16.mxu0 0
        %4727 = vmatpush1.bf16.xpose.msra.mxu0 0
        %4728 = vmatprep.subr.bf16.mxu0 0
        %4729 = vmatpush1.bf16.xpose.msra.mxu0 0
        %4730 = vmatprep.subr.bf16.mxu0 0
        %4731 = vmatpush1.bf16.xpose.msra.mxu0 %v4714
        %4732 = vmatprep.subr.bf16.mxu0 0
        %4733 = vmatpush2.bf16.xpose.msra.mxu0 0
        %4734 = vmatprep.subr.bf16.mxu0 0
        %4735 = vmatpush2.bf16.xpose.msra.mxu0 0
        %4736 = vmatprep.subr.bf16.mxu0 0
        %4737 = vmatpush2.bf16.xpose.msra.mxu0 0
        %4738 = vmatprep.subr.bf16.mxu0 0
        %4739 = vmatpush2.bf16.xpose.msra.mxu0 0
        %4740 = vmatprep.subr.bf16.mxu0 0
        %4741 = vmatpush2.bf16.xpose.msra.mxu0 0
        %4742 = vmatprep.subr.bf16.mxu0 0
        %4743 = vmatpush2.bf16.xpose.msra.mxu0 0
        %4744 = vmatprep.subr.bf16.mxu0 0
        %4745 = vmatpush2.bf16.xpose.msra.mxu0 0
        %4746 = vmatprep.subr.bf16.mxu0 0
        %4747 = vmatpush2.bf16.xpose.msra.mxu0 0
        %4748 = vmatprep.mubr.bf16.mxu0 0
        %4749 = vmatmul.mubr.bf16.gmra.mxu0 %v4711
        %v4750 = vpop.f32.mrf.mxu0
        %v4751 = vadd.f32 0.0, %v4750
        %v4752 = vpop.f32.mrf.mxu0
        %v4753 = vpop.f32.mrf.mxu0
        %v4754 = vpop.f32.mrf.mxu0
        %4755 = vdwg.mxu0
        %v4757 = vsel %vm1832, %v4295, 0
        %v4760 = vsel %vm1832, %v4327, 0
        %4762 = vmatprep.subr.bf16.mxu0 0
        %4763 = vmatpush1.bf16.xpose.msra.mxu0 0
        %4764 = vmatprep.subr.bf16.mxu0 0
        %4765 = vmatpush1.bf16.xpose.msra.mxu0 0
        %4766 = vmatprep.subr.bf16.mxu0 0
        %4767 = vmatpush1.bf16.xpose.msra.mxu0 0
        %4768 = vmatprep.subr.bf16.mxu0 0
        %4769 = vmatpush1.bf16.xpose.msra.mxu0 0
        %4770 = vmatprep.subr.bf16.mxu0 0
        %4771 = vmatpush1.bf16.xpose.msra.mxu0 0
        %4772 = vmatprep.subr.bf16.mxu0 0
        %4773 = vmatpush1.bf16.xpose.msra.mxu0 0
        %4774 = vmatprep.subr.bf16.mxu0 0
        %4775 = vmatpush1.bf16.xpose.msra.mxu0 0
        %4776 = vmatprep.subr.bf16.mxu0 0
        %4777 = vmatpush1.bf16.xpose.msra.mxu0 %v4760
        %4778 = vmatprep.subr.bf16.mxu0 0
        %4779 = vmatpush2.bf16.xpose.msra.mxu0 0
        %4780 = vmatprep.subr.bf16.mxu0 0
        %4781 = vmatpush2.bf16.xpose.msra.mxu0 0
        %4782 = vmatprep.subr.bf16.mxu0 0
        %4783 = vmatpush2.bf16.xpose.msra.mxu0 0
        %4784 = vmatprep.subr.bf16.mxu0 0
        %4785 = vmatpush2.bf16.xpose.msra.mxu0 0
        %4786 = vmatprep.subr.bf16.mxu0 0
        %4787 = vmatpush2.bf16.xpose.msra.mxu0 0
        %4788 = vmatprep.subr.bf16.mxu0 0
        %4789 = vmatpush2.bf16.xpose.msra.mxu0 0
        %4790 = vmatprep.subr.bf16.mxu0 0
        %4791 = vmatpush2.bf16.xpose.msra.mxu0 0
        %4792 = vmatprep.subr.bf16.mxu0 0
        %4793 = vmatpush2.bf16.xpose.msra.mxu0 0
        %4794 = vmatprep.mubr.bf16.mxu0 0
        %4795 = vmatmul.mubr.bf16.gmra.mxu0 %v4757
        %v4796 = vpop.f32.mrf.mxu0
        %v4797 = vadd.f32 0.0, %v4796
        %v4798 = vpop.f32.mrf.mxu0
        %v4799 = vpop.f32.mrf.mxu0
        %v4800 = vpop.f32.mrf.mxu0
        %4801 = vdwg.mxu0
        %v4803 = vsel %vm1832, %v4297, 0
        %v4806 = vsel %vm1832, %v4329, 0
        %4808 = vmatprep.subr.bf16.mxu0 0
        %4809 = vmatpush1.bf16.xpose.msra.mxu0 0
        %4810 = vmatprep.subr.bf16.mxu0 0
        %4811 = vmatpush1.bf16.xpose.msra.mxu0 0
        %4812 = vmatprep.subr.bf16.mxu0 0
        %4813 = vmatpush1.bf16.xpose.msra.mxu0 0
        %4814 = vmatprep.subr.bf16.mxu0 0
        %4815 = vmatpush1.bf16.xpose.msra.mxu0 0
        %4816 = vmatprep.subr.bf16.mxu0 0
        %4817 = vmatpush1.bf16.xpose.msra.mxu0 0
        %4818 = vmatprep.subr.bf16.mxu0 0
        %4819 = vmatpush1.bf16.xpose.msra.mxu0 0
        %4820 = vmatprep.subr.bf16.mxu0 0
        %4821 = vmatpush1.bf16.xpose.msra.mxu0 0
        %4822 = vmatprep.subr.bf16.mxu0 0
        %4823 = vmatpush1.bf16.xpose.msra.mxu0 %v4806
        %4824 = vmatprep.subr.bf16.mxu0 0
        %4825 = vmatpush2.bf16.xpose.msra.mxu0 0
        %4826 = vmatprep.subr.bf16.mxu0 0
        %4827 = vmatpush2.bf16.xpose.msra.mxu0 0
        %4828 = vmatprep.subr.bf16.mxu0 0
        %4829 = vmatpush2.bf16.xpose.msra.mxu0 0
        %4830 = vmatprep.subr.bf16.mxu0 0
        %4831 = vmatpush2.bf16.xpose.msra.mxu0 0
        %4832 = vmatprep.subr.bf16.mxu0 0
        %4833 = vmatpush2.bf16.xpose.msra.mxu0 0
        %4834 = vmatprep.subr.bf16.mxu0 0
        %4835 = vmatpush2.bf16.xpose.msra.mxu0 0
        %4836 = vmatprep.subr.bf16.mxu0 0
        %4837 = vmatpush2.bf16.xpose.msra.mxu0 0
        %4838 = vmatprep.subr.bf16.mxu0 0
        %4839 = vmatpush2.bf16.xpose.msra.mxu0 0
        %4840 = vmatprep.mubr.bf16.mxu0 0
        %4841 = vmatmul.mubr.bf16.gmra.mxu0 %v4803
        %v4842 = vpop.f32.mrf.mxu0
        %v4843 = vadd.f32 0.0, %v4842
        %v4844 = vpop.f32.mrf.mxu0
        %v4845 = vpop.f32.mrf.mxu0
        %v4846 = vpop.f32.mrf.mxu0
        %4847 = vdwg.mxu0
        %v4849 = vsel %vm1832, %v4299, 0
        %v4852 = vsel %vm1832, %v4331, 0
        %4854 = vmatprep.subr.bf16.mxu0 0
        %4855 = vmatpush1.bf16.xpose.msra.mxu0 0
        %4856 = vmatprep.subr.bf16.mxu0 0
        %4857 = vmatpush1.bf16.xpose.msra.mxu0 0
        %4858 = vmatprep.subr.bf16.mxu0 0
        %4859 = vmatpush1.bf16.xpose.msra.mxu0 0
        %4860 = vmatprep.subr.bf16.mxu0 0
        %4861 = vmatpush1.bf16.xpose.msra.mxu0 0
        %4862 = vmatprep.subr.bf16.mxu0 0
        %4863 = vmatpush1.bf16.xpose.msra.mxu0 0
        %4864 = vmatprep.subr.bf16.mxu0 0
        %4865 = vmatpush1.bf16.xpose.msra.mxu0 0
        %4866 = vmatprep.subr.bf16.mxu0 0
        %4867 = vmatpush1.bf16.xpose.msra.mxu0 0
        %4868 = vmatprep.subr.bf16.mxu0 0
        %4869 = vmatpush1.bf16.xpose.msra.mxu0 %v4852
        %4870 = vmatprep.subr.bf16.mxu0 0
        %4871 = vmatpush2.bf16.xpose.msra.mxu0 0
        %4872 = vmatprep.subr.bf16.mxu0 0
        %4873 = vmatpush2.bf16.xpose.msra.mxu0 0
        %4874 = vmatprep.subr.bf16.mxu0 0
        %4875 = vmatpush2.bf16.xpose.msra.mxu0 0
        %4876 = vmatprep.subr.bf16.mxu0 0
        %4877 = vmatpush2.bf16.xpose.msra.mxu0 0
        %4878 = vmatprep.subr.bf16.mxu0 0
        %4879 = vmatpush2.bf16.xpose.msra.mxu0 0
        %4880 = vmatprep.subr.bf16.mxu0 0
        %4881 = vmatpush2.bf16.xpose.msra.mxu0 0
        %4882 = vmatprep.subr.bf16.mxu0 0
        %4883 = vmatpush2.bf16.xpose.msra.mxu0 0
        %4884 = vmatprep.subr.bf16.mxu0 0
        %4885 = vmatpush2.bf16.xpose.msra.mxu0 0
        %4886 = vmatprep.mubr.bf16.mxu0 0
        %4887 = vmatmul.mubr.bf16.gmra.mxu0 %v4849
        %v4888 = vpop.f32.mrf.mxu0
        %v4889 = vadd.f32 0.0, %v4888
        %v4890 = vpop.f32.mrf.mxu0
        %v4891 = vpop.f32.mrf.mxu0
        %v4892 = vpop.f32.mrf.mxu0
        %4893 = vdwg.mxu0
        %v4895 = vsel %vm1832, %v4301, 0
        %v4898 = vsel %vm1832, %v4333, 0
        %4900 = vmatprep.subr.bf16.mxu0 0
        %4901 = vmatpush1.bf16.xpose.msra.mxu0 0
        %4902 = vmatprep.subr.bf16.mxu0 0
        %4903 = vmatpush1.bf16.xpose.msra.mxu0 0
        %4904 = vmatprep.subr.bf16.mxu0 0
        %4905 = vmatpush1.bf16.xpose.msra.mxu0 0
        %4906 = vmatprep.subr.bf16.mxu0 0
        %4907 = vmatpush1.bf16.xpose.msra.mxu0 0
        %4908 = vmatprep.subr.bf16.mxu0 0
        %4909 = vmatpush1.bf16.xpose.msra.mxu0 0
        %4910 = vmatprep.subr.bf16.mxu0 0
        %4911 = vmatpush1.bf16.xpose.msra.mxu0 0
        %4912 = vmatprep.subr.bf16.mxu0 0
        %4913 = vmatpush1.bf16.xpose.msra.mxu0 0
        %4914 = vmatprep.subr.bf16.mxu0 0
        %4915 = vmatpush1.bf16.xpose.msra.mxu0 %v4898
        %4916 = vmatprep.subr.bf16.mxu0 0
        %4917 = vmatpush2.bf16.xpose.msra.mxu0 0
        %4918 = vmatprep.subr.bf16.mxu0 0
        %4919 = vmatpush2.bf16.xpose.msra.mxu0 0
        %4920 = vmatprep.subr.bf16.mxu0 0
        %4921 = vmatpush2.bf16.xpose.msra.mxu0 0
        %4922 = vmatprep.subr.bf16.mxu0 0
        %4923 = vmatpush2.bf16.xpose.msra.mxu0 0
        %4924 = vmatprep.subr.bf16.mxu0 0
        %4925 = vmatpush2.bf16.xpose.msra.mxu0 0
        %4926 = vmatprep.subr.bf16.mxu0 0
        %4927 = vmatpush2.bf16.xpose.msra.mxu0 0
        %4928 = vmatprep.subr.bf16.mxu0 0
        %4929 = vmatpush2.bf16.xpose.msra.mxu0 0
        %4930 = vmatprep.subr.bf16.mxu0 0
        %4931 = vmatpush2.bf16.xpose.msra.mxu0 0
        %4932 = vmatprep.mubr.bf16.mxu0 0
        %4933 = vmatmul.mubr.bf16.gmra.mxu0 %v4895
        %v4934 = vpop.f32.mrf.mxu0
        %v4935 = vadd.f32 0.0, %v4934
        %v4936 = vpop.f32.mrf.mxu0
        %v4937 = vpop.f32.mrf.mxu0
        %v4938 = vpop.f32.mrf.mxu0
        %4939 = vdwg.mxu0
        %v4941 = vsel %vm1832, %v4303, 0
        %v4944 = vsel %vm1832, %v4335, 0
        %4946 = vmatprep.subr.bf16.mxu0 0
        %4947 = vmatpush1.bf16.xpose.msra.mxu0 0
        %4948 = vmatprep.subr.bf16.mxu0 0
        %4949 = vmatpush1.bf16.xpose.msra.mxu0 0
        %4950 = vmatprep.subr.bf16.mxu0 0
        %4951 = vmatpush1.bf16.xpose.msra.mxu0 0
        %4952 = vmatprep.subr.bf16.mxu0 0
        %4953 = vmatpush1.bf16.xpose.msra.mxu0 0
        %4954 = vmatprep.subr.bf16.mxu0 0
        %4955 = vmatpush1.bf16.xpose.msra.mxu0 0
        %4956 = vmatprep.subr.bf16.mxu0 0
        %4957 = vmatpush1.bf16.xpose.msra.mxu0 0
        %4958 = vmatprep.subr.bf16.mxu0 0
        %4959 = vmatpush1.bf16.xpose.msra.mxu0 0
        %4960 = vmatprep.subr.bf16.mxu0 0
        %4961 = vmatpush1.bf16.xpose.msra.mxu0 %v4944
        %4962 = vmatprep.subr.bf16.mxu0 0
        %4963 = vmatpush2.bf16.xpose.msra.mxu0 0
        %4964 = vmatprep.subr.bf16.mxu0 0
        %4965 = vmatpush2.bf16.xpose.msra.mxu0 0
        %4966 = vmatprep.subr.bf16.mxu0 0
        %4967 = vmatpush2.bf16.xpose.msra.mxu0 0
        %4968 = vmatprep.subr.bf16.mxu0 0
        %4969 = vmatpush2.bf16.xpose.msra.mxu0 0
        %4970 = vmatprep.subr.bf16.mxu0 0
        %4971 = vmatpush2.bf16.xpose.msra.mxu0 0
        %4972 = vmatprep.subr.bf16.mxu0 0
        %4973 = vmatpush2.bf16.xpose.msra.mxu0 0
        %4974 = vmatprep.subr.bf16.mxu0 0
        %4975 = vmatpush2.bf16.xpose.msra.mxu0 0
        %4976 = vmatprep.subr.bf16.mxu0 0
        %4977 = vmatpush2.bf16.xpose.msra.mxu0 0
        %4978 = vmatprep.mubr.bf16.mxu0 0
        %4979 = vmatmul.mubr.bf16.gmra.mxu0 %v4941
        %v4980 = vpop.f32.mrf.mxu0
        %v4981 = vadd.f32 0.0, %v4980
        %v4982 = vpop.f32.mrf.mxu0
        %v4983 = vpop.f32.mrf.mxu0
        %v4984 = vpop.f32.mrf.mxu0
        %4985 = vdwg.mxu0
        %v4987 = vsel %vm1832, %v4305, 0
        %v4990 = vsel %vm1832, %v4337, 0
        %4992 = vmatprep.subr.bf16.mxu0 0
        %4993 = vmatpush1.bf16.xpose.msra.mxu0 0
        %4994 = vmatprep.subr.bf16.mxu0 0
        %4995 = vmatpush1.bf16.xpose.msra.mxu0 0
        %4996 = vmatprep.subr.bf16.mxu0 0
        %4997 = vmatpush1.bf16.xpose.msra.mxu0 0
        %4998 = vmatprep.subr.bf16.mxu0 0
        %4999 = vmatpush1.bf16.xpose.msra.mxu0 0
        %5000 = vmatprep.subr.bf16.mxu0 0
        %5001 = vmatpush1.bf16.xpose.msra.mxu0 0
        %5002 = vmatprep.subr.bf16.mxu0 0
        %5003 = vmatpush1.bf16.xpose.msra.mxu0 0
        %5004 = vmatprep.subr.bf16.mxu0 0
        %5005 = vmatpush1.bf16.xpose.msra.mxu0 0
        %5006 = vmatprep.subr.bf16.mxu0 0
        %5007 = vmatpush1.bf16.xpose.msra.mxu0 %v4990
        %5008 = vmatprep.subr.bf16.mxu0 0
        %5009 = vmatpush2.bf16.xpose.msra.mxu0 0
        %5010 = vmatprep.subr.bf16.mxu0 0
        %5011 = vmatpush2.bf16.xpose.msra.mxu0 0
        %5012 = vmatprep.subr.bf16.mxu0 0
        %5013 = vmatpush2.bf16.xpose.msra.mxu0 0
        %5014 = vmatprep.subr.bf16.mxu0 0
        %5015 = vmatpush2.bf16.xpose.msra.mxu0 0
        %5016 = vmatprep.subr.bf16.mxu0 0
        %5017 = vmatpush2.bf16.xpose.msra.mxu0 0
        %5018 = vmatprep.subr.bf16.mxu0 0
        %5019 = vmatpush2.bf16.xpose.msra.mxu0 0
        %5020 = vmatprep.subr.bf16.mxu0 0
        %5021 = vmatpush2.bf16.xpose.msra.mxu0 0
        %5022 = vmatprep.subr.bf16.mxu0 0
        %5023 = vmatpush2.bf16.xpose.msra.mxu0 0
        %5024 = vmatprep.mubr.bf16.mxu0 0
        %5025 = vmatmul.mubr.bf16.gmra.mxu0 %v4987
        %v5026 = vpop.f32.mrf.mxu0
        %v5027 = vadd.f32 0.0, %v5026
        %v5028 = vpop.f32.mrf.mxu0
        %v5029 = vpop.f32.mrf.mxu0
        %v5030 = vpop.f32.mrf.mxu0
        %5031 = vdwg.mxu0
        %v5033 = vsel %vm1832, %v4307, 0
        %v5036 = vsel %vm1832, %v4339, 0
        %5038 = vmatprep.subr.bf16.mxu0 0
        %5039 = vmatpush1.bf16.xpose.msra.mxu0 0
        %5040 = vmatprep.subr.bf16.mxu0 0
        %5041 = vmatpush1.bf16.xpose.msra.mxu0 0
        %5042 = vmatprep.subr.bf16.mxu0 0
        %5043 = vmatpush1.bf16.xpose.msra.mxu0 0
        %5044 = vmatprep.subr.bf16.mxu0 0
        %5045 = vmatpush1.bf16.xpose.msra.mxu0 0
        %5046 = vmatprep.subr.bf16.mxu0 0
        %5047 = vmatpush1.bf16.xpose.msra.mxu0 0
        %5048 = vmatprep.subr.bf16.mxu0 0
        %5049 = vmatpush1.bf16.xpose.msra.mxu0 0
        %5050 = vmatprep.subr.bf16.mxu0 0
        %5051 = vmatpush1.bf16.xpose.msra.mxu0 0
        %5052 = vmatprep.subr.bf16.mxu0 0
        %5053 = vmatpush1.bf16.xpose.msra.mxu0 %v5036
        %5054 = vmatprep.subr.bf16.mxu0 0
        %5055 = vmatpush2.bf16.xpose.msra.mxu0 0
        %5056 = vmatprep.subr.bf16.mxu0 0
        %5057 = vmatpush2.bf16.xpose.msra.mxu0 0
        %5058 = vmatprep.subr.bf16.mxu0 0
        %5059 = vmatpush2.bf16.xpose.msra.mxu0 0
        %5060 = vmatprep.subr.bf16.mxu0 0
        %5061 = vmatpush2.bf16.xpose.msra.mxu0 0
        %5062 = vmatprep.subr.bf16.mxu0 0
        %5063 = vmatpush2.bf16.xpose.msra.mxu0 0
        %5064 = vmatprep.subr.bf16.mxu0 0
        %5065 = vmatpush2.bf16.xpose.msra.mxu0 0
        %5066 = vmatprep.subr.bf16.mxu0 0
        %5067 = vmatpush2.bf16.xpose.msra.mxu0 0
        %5068 = vmatprep.subr.bf16.mxu0 0
        %5069 = vmatpush2.bf16.xpose.msra.mxu0 0
        %5070 = vmatprep.mubr.bf16.mxu0 0
        %5071 = vmatmul.mubr.bf16.gmra.mxu0 %v5033
        %v5072 = vpop.f32.mrf.mxu0
        %v5073 = vadd.f32 0.0, %v5072
        %v5074 = vpop.f32.mrf.mxu0
        %v5075 = vpop.f32.mrf.mxu0
        %v5076 = vpop.f32.mrf.mxu0
        %5077 = vdwg.mxu0
        %v5079 = vsel %vm1832, %v4309, 0
        %v5082 = vsel %vm1832, %v4341, 0
        %5084 = vmatprep.subr.bf16.mxu0 0
        %5085 = vmatpush1.bf16.xpose.msra.mxu0 0
        %5086 = vmatprep.subr.bf16.mxu0 0
        %5087 = vmatpush1.bf16.xpose.msra.mxu0 0
        %5088 = vmatprep.subr.bf16.mxu0 0
        %5089 = vmatpush1.bf16.xpose.msra.mxu0 0
        %5090 = vmatprep.subr.bf16.mxu0 0
        %5091 = vmatpush1.bf16.xpose.msra.mxu0 0
        %5092 = vmatprep.subr.bf16.mxu0 0
        %5093 = vmatpush1.bf16.xpose.msra.mxu0 0
        %5094 = vmatprep.subr.bf16.mxu0 0
        %5095 = vmatpush1.bf16.xpose.msra.mxu0 0
        %5096 = vmatprep.subr.bf16.mxu0 0
        %5097 = vmatpush1.bf16.xpose.msra.mxu0 0
        %5098 = vmatprep.subr.bf16.mxu0 0
        %5099 = vmatpush1.bf16.xpose.msra.mxu0 %v5082
        %5100 = vmatprep.subr.bf16.mxu0 0
        %5101 = vmatpush2.bf16.xpose.msra.mxu0 0
        %5102 = vmatprep.subr.bf16.mxu0 0
        %5103 = vmatpush2.bf16.xpose.msra.mxu0 0
        %5104 = vmatprep.subr.bf16.mxu0 0
        %5105 = vmatpush2.bf16.xpose.msra.mxu0 0
        %5106 = vmatprep.subr.bf16.mxu0 0
        %5107 = vmatpush2.bf16.xpose.msra.mxu0 0
        %5108 = vmatprep.subr.bf16.mxu0 0
        %5109 = vmatpush2.bf16.xpose.msra.mxu0 0
        %5110 = vmatprep.subr.bf16.mxu0 0
        %5111 = vmatpush2.bf16.xpose.msra.mxu0 0
        %5112 = vmatprep.subr.bf16.mxu0 0
        %5113 = vmatpush2.bf16.xpose.msra.mxu0 0
        %5114 = vmatprep.subr.bf16.mxu0 0
        %5115 = vmatpush2.bf16.xpose.msra.mxu0 0
        %5116 = vmatprep.mubr.bf16.mxu0 0
        %5117 = vmatmul.mubr.bf16.gmra.mxu0 %v5079
        %v5118 = vpop.f32.mrf.mxu0
        %v5119 = vadd.f32 0.0, %v5118
        %v5120 = vpop.f32.mrf.mxu0
        %v5121 = vpop.f32.mrf.mxu0
        %v5122 = vpop.f32.mrf.mxu0
        %5123 = vdwg.mxu0
        %v5124 = vmul.f32 %v4429, 0.5
        %v5125 = vmul.f32 %v4475, 0.5
        %v5126 = vmul.f32 %v4521, 0.5
        %v5127 = vmul.f32 %v4567, 0.5
        %v5128 = vmul.f32 %v4613, 0.5
        %v5129 = vmul.f32 %v4659, 0.5
        %v5130 = vmul.f32 %v4705, 0.5
        %v5131 = vmul.f32 %v4751, 0.5
        %v5132 = vmul.f32 %v4797, 0.5
        %v5133 = vmul.f32 %v4843, 0.5
        %v5134 = vmul.f32 %v4889, 0.5
        %v5135 = vmul.f32 %v4935, 0.5
        %v5136 = vmul.f32 %v4981, 0.5
        %v5137 = vmul.f32 %v5027, 0.5
        %v5138 = vmul.f32 %v5073, 0.5
        %v5139 = vmul.f32 %v5119, 0.5
        %vm5140 = vcmask 130048
        %v5141 = vsel %vm5140, %v5124, -inf
        %5142 = vmax.xlane.f32.xlu0 %v5141
        %v5143 = vpop.xlane.xlu0 %5142
        %v5144 = vsel %vm5140, %v5125, -inf
        %5145 = vmax.xlane.f32.xlu0 %v5144
        %v5146 = vpop.xlane.xlu0 %5145
        %v5147 = vsel %vm5140, %v5126, -inf
        %5148 = vmax.xlane.f32.xlu0 %v5147
        %v5149 = vpop.xlane.xlu0 %5148
        %v5150 = vsel %vm5140, %v5127, -inf
        %5151 = vmax.xlane.f32.xlu0 %v5150
        %v5152 = vpop.xlane.xlu0 %5151
        %v5153 = vsel %vm5140, %v5128, -inf
        %5154 = vmax.xlane.f32.xlu0 %v5153
        %v5155 = vpop.xlane.xlu0 %5154
        %v5156 = vsel %vm5140, %v5129, -inf
        %5157 = vmax.xlane.f32.xlu0 %v5156
        %v5158 = vpop.xlane.xlu0 %5157
        %v5159 = vsel %vm5140, %v5130, -inf
        %5160 = vmax.xlane.f32.xlu0 %v5159
        %v5161 = vpop.xlane.xlu0 %5160
        %v5162 = vsel %vm5140, %v5131, -inf
        %5163 = vmax.xlane.f32.xlu0 %v5162
        %v5164 = vpop.xlane.xlu0 %5163
        %v5165 = vsel %vm5140, %v5132, -inf
        %5166 = vmax.xlane.f32.xlu0 %v5165
        %v5167 = vpop.xlane.xlu0 %5166
        %v5168 = vsel %vm5140, %v5133, -inf
        %5169 = vmax.xlane.f32.xlu0 %v5168
        %v5170 = vpop.xlane.xlu0 %5169
        %v5171 = vsel %vm5140, %v5134, -inf
        %5172 = vmax.xlane.f32.xlu0 %v5171
        %v5173 = vpop.xlane.xlu0 %5172
        %v5174 = vsel %vm5140, %v5135, -inf
        %5175 = vmax.xlane.f32.xlu0 %v5174
        %v5176 = vpop.xlane.xlu0 %5175
        %v5177 = vsel %vm5140, %v5136, -inf
        %5178 = vmax.xlane.f32.xlu0 %v5177
        %v5179 = vpop.xlane.xlu0 %5178
        %v5180 = vsel %vm5140, %v5137, -inf
        %5181 = vmax.xlane.f32.xlu0 %v5180
        %v5182 = vpop.xlane.xlu0 %5181
        %v5183 = vsel %vm5140, %v5138, -inf
        %5184 = vmax.xlane.f32.xlu0 %v5183
        %v5185 = vpop.xlane.xlu0 %5184
        %v5186 = vsel %vm5140, %v5139, -inf
        %5187 = vmax.xlane.f32.xlu0 %v5186
        %v5188 = vpop.xlane.xlu0 %5187
        %v5189 = vsub.f32 %v5124, %v5143
        %v5190 = vsub.f32 %v5125, %v5146
        %v5191 = vsub.f32 %v5126, %v5149
        %v5192 = vsub.f32 %v5127, %v5152
        %v5193 = vsub.f32 %v5128, %v5155
        %v5194 = vsub.f32 %v5129, %v5158
        %v5195 = vsub.f32 %v5130, %v5161
        %v5196 = vsub.f32 %v5131, %v5164
        %v5197 = vsub.f32 %v5132, %v5167
        %v5198 = vsub.f32 %v5133, %v5170
        %v5199 = vsub.f32 %v5134, %v5173
        %v5200 = vsub.f32 %v5135, %v5176
        %v5201 = vsub.f32 %v5136, %v5179
        %v5202 = vsub.f32 %v5137, %v5182
        %v5203 = vsub.f32 %v5138, %v5185
        %v5204 = vsub.f32 %v5139, %v5188
        %v5205 = vmul.f32 %v5189, 1.442695
        %v5206 = vpow.pop %v5205
        %v5207 = vmul.f32 %v5190, 1.442695
        %v5208 = vpow.pop %v5207
        %v5209 = vmul.f32 %v5191, 1.442695
        %v5210 = vpow.pop %v5209
        %v5211 = vmul.f32 %v5192, 1.442695
        %v5212 = vpow.pop %v5211
        %v5213 = vmul.f32 %v5193, 1.442695
        %v5214 = vpow.pop %v5213
        %v5215 = vmul.f32 %v5194, 1.442695
        %v5216 = vpow.pop %v5215
        %v5217 = vmul.f32 %v5195, 1.442695
        %v5218 = vpow.pop %v5217
        %v5219 = vmul.f32 %v5196, 1.442695
        %v5220 = vpow.pop %v5219
        %v5221 = vmul.f32 %v5197, 1.442695
        %v5222 = vpow.pop %v5221
        %v5223 = vmul.f32 %v5198, 1.442695
        %v5224 = vpow.pop %v5223
        %v5225 = vmul.f32 %v5199, 1.442695
        %v5226 = vpow.pop %v5225
        %v5227 = vmul.f32 %v5200, 1.442695
        %v5228 = vpow.pop %v5227
        %v5229 = vmul.f32 %v5201, 1.442695
        %v5230 = vpow.pop %v5229
        %v5231 = vmul.f32 %v5202, 1.442695
        %v5232 = vpow.pop %v5231
        %v5233 = vmul.f32 %v5203, 1.442695
        %v5234 = vpow.pop %v5233
        %v5235 = vmul.f32 %v5204, 1.442695
        %v5236 = vpow.pop %v5235
        %v5237 = vsel %vm5140, %v5206, 0.0
        %5238 = vadd.xlane.f32.xlu0 %v5237
        %v5239 = vpop.xlane.xlu0 %5238
        %v5240 = vsel %vm5140, %v5208, 0.0
        %5241 = vadd.xlane.f32.xlu0 %v5240
        %v5242 = vpop.xlane.xlu0 %5241
        %v5243 = vsel %vm5140, %v5210, 0.0
        %5244 = vadd.xlane.f32.xlu0 %v5243
        %v5245 = vpop.xlane.xlu0 %5244
        %v5246 = vsel %vm5140, %v5212, 0.0
        %5247 = vadd.xlane.f32.xlu0 %v5246
        %v5248 = vpop.xlane.xlu0 %5247
        %v5249 = vsel %vm5140, %v5214, 0.0
        %5250 = vadd.xlane.f32.xlu0 %v5249
        %v5251 = vpop.xlane.xlu0 %5250
        %v5252 = vsel %vm5140, %v5216, 0.0
        %5253 = vadd.xlane.f32.xlu0 %v5252
        %v5254 = vpop.xlane.xlu0 %5253
        %v5255 = vsel %vm5140, %v5218, 0.0
        %5256 = vadd.xlane.f32.xlu0 %v5255
        %v5257 = vpop.xlane.xlu0 %5256
        %v5258 = vsel %vm5140, %v5220, 0.0
        %5259 = vadd.xlane.f32.xlu0 %v5258
        %v5260 = vpop.xlane.xlu0 %5259
        %v5261 = vsel %vm5140, %v5222, 0.0
        %5262 = vadd.xlane.f32.xlu0 %v5261
        %v5263 = vpop.xlane.xlu0 %5262
        %v5264 = vsel %vm5140, %v5224, 0.0
        %5265 = vadd.xlane.f32.xlu0 %v5264
        %v5266 = vpop.xlane.xlu0 %5265
        %v5267 = vsel %vm5140, %v5226, 0.0
        %5268 = vadd.xlane.f32.xlu0 %v5267
        %v5269 = vpop.xlane.xlu0 %5268
        %v5270 = vsel %vm5140, %v5228, 0.0
        %5271 = vadd.xlane.f32.xlu0 %v5270
        %v5272 = vpop.xlane.xlu0 %5271
        %v5273 = vsel %vm5140, %v5230, 0.0
        %5274 = vadd.xlane.f32.xlu0 %v5273
        %v5275 = vpop.xlane.xlu0 %5274
        %v5276 = vsel %vm5140, %v5232, 0.0
        %5277 = vadd.xlane.f32.xlu0 %v5276
        %v5278 = vpop.xlane.xlu0 %5277
        %v5279 = vsel %vm5140, %v5234, 0.0
        %5280 = vadd.xlane.f32.xlu0 %v5279
        %v5281 = vpop.xlane.xlu0 %5280
        %v5282 = vsel %vm5140, %v5236, 0.0
        %5283 = vadd.xlane.f32.xlu0 %v5282
        %v5284 = vpop.xlane.xlu0 %5283
        %v5285 = vrcp.pop %v5239
        %v5286 = vrcp.pop %v5242
        %v5287 = vrcp.pop %v5245
        %v5288 = vrcp.pop %v5248
        %v5289 = vrcp.pop %v5251
        %v5290 = vrcp.pop %v5254
        %v5291 = vrcp.pop %v5257
        %v5292 = vrcp.pop %v5260
        %v5293 = vrcp.pop %v5263
        %v5294 = vrcp.pop %v5266
        %v5295 = vrcp.pop %v5269
        %v5296 = vrcp.pop %v5272
        %v5297 = vrcp.pop %v5275
        %v5298 = vrcp.pop %v5278
        %v5299 = vrcp.pop %v5281
        %v5300 = vrcp.pop %v5284
        %v5301 = vmul.f32 %v5206, %v5285
        %v5302 = vmul.f32 %v5208, %v5286
        %v5303 = vmul.f32 %v5210, %v5287
        %v5304 = vmul.f32 %v5212, %v5288
        %v5305 = vmul.f32 %v5214, %v5289
        %v5306 = vmul.f32 %v5216, %v5290
        %v5307 = vmul.f32 %v5218, %v5291
        %v5308 = vmul.f32 %v5220, %v5292
        %v5309 = vmul.f32 %v5222, %v5293
        %v5310 = vmul.f32 %v5224, %v5294
        %v5311 = vmul.f32 %v5226, %v5295
        %v5312 = vmul.f32 %v5228, %v5296
        %v5313 = vmul.f32 %v5230, %v5297
        %v5314 = vmul.f32 %v5232, %v5298
        %v5315 = vmul.f32 %v5234, %v5299
        %v5316 = vmul.f32 %v5236, %v5300
        %v5317 = vpack.c.bf16 %v5301, %v5301
        %v5318 = vpack.c.bf16 %v5302, %v5302
        %v5319 = vpack.c.bf16 %v5303, %v5303
        %v5320 = vpack.c.bf16 %v5304, %v5304
        %v5321 = vpack.c.bf16 %v5305, %v5305
        %v5322 = vpack.c.bf16 %v5306, %v5306
        %v5323 = vpack.c.bf16 %v5307, %v5307
        %v5324 = vpack.c.bf16 %v5308, %v5308
        %v5325 = vpack.c.bf16 %v5309, %v5309
        %v5326 = vpack.c.bf16 %v5310, %v5310
        %v5327 = vpack.c.bf16 %v5311, %v5311
        %v5328 = vpack.c.bf16 %v5312, %v5312
        %v5329 = vpack.c.bf16 %v5313, %v5313
        %v5330 = vpack.c.bf16 %v5314, %v5314
        %v5331 = vpack.c.bf16 %v5315, %v5315
        %v5332 = vpack.c.bf16 %v5316, %v5316
        %v5334 = vsel %vm5140, %v5317, 0
        %5336 = vmatprep.subr.bf16.mxu0 0
        %5337 = vmatpush1.bf16.msra.mxu0 0
        %5338 = vmatprep.subr.bf16.mxu0 0
        %5339 = vmatpush1.bf16.msra.mxu0 0
        %5340 = vmatprep.subr.bf16.mxu0 0
        %5341 = vmatpush1.bf16.msra.mxu0 0
        %5342 = vmatprep.subr.bf16.mxu0 0
        %5343 = vmatpush1.bf16.msra.mxu0 0
        %5344 = vmatprep.subr.bf16.mxu0 0
        %5345 = vmatpush1.bf16.msra.mxu0 0
        %5346 = vmatprep.subr.bf16.mxu0 0
        %5347 = vmatpush1.bf16.msra.mxu0 0
        %5348 = vmatprep.subr.bf16.mxu0 0
        %5349 = vmatpush1.bf16.msra.mxu0 0
        %5350 = vmatprep.subr.bf16.mxu0 0
        %5351 = vmatpush1.bf16.msra.mxu0 %v4342
        %5352 = vmatprep.subr.bf16.mxu0 0
        %5353 = vmatpush2.bf16.msra.mxu0 0
        %5354 = vmatprep.subr.bf16.mxu0 0
        %5355 = vmatpush2.bf16.msra.mxu0 0
        %5356 = vmatprep.subr.bf16.mxu0 0
        %5357 = vmatpush2.bf16.msra.mxu0 0
        %5358 = vmatprep.subr.bf16.mxu0 0
        %5359 = vmatpush2.bf16.msra.mxu0 0
        %5360 = vmatprep.subr.bf16.mxu0 0
        %5361 = vmatpush2.bf16.msra.mxu0 0
        %5362 = vmatprep.subr.bf16.mxu0 0
        %5363 = vmatpush2.bf16.msra.mxu0 0
        %5364 = vmatprep.subr.bf16.mxu0 0
        %5365 = vmatpush2.bf16.msra.mxu0 0
        %5366 = vmatprep.subr.bf16.mxu0 0
        %5367 = vmatpush2.bf16.msra.mxu0 0
        %5368 = vmatprep.mubr.bf16.mxu0 0
        %5369 = vmatmul.mubr.bf16.gmra.mxu0 %v5334
        %v5370 = vpop.f32.mrf.mxu0
        %v5371 = vadd.f32 0.0, %v5370
        %v5372 = vpop.f32.mrf.mxu0
        %v5373 = vpop.f32.mrf.mxu0
        %v5374 = vpop.f32.mrf.mxu0
        %5375 = vdwg.mxu0
        %v5377 = vsel %vm5140, %v5318, 0
        %5379 = vmatprep.subr.bf16.mxu0 0
        %5380 = vmatpush1.bf16.msra.mxu0 0
        %5381 = vmatprep.subr.bf16.mxu0 0
        %5382 = vmatpush1.bf16.msra.mxu0 0
        %5383 = vmatprep.subr.bf16.mxu0 0
        %5384 = vmatpush1.bf16.msra.mxu0 0
        %5385 = vmatprep.subr.bf16.mxu0 0
        %5386 = vmatpush1.bf16.msra.mxu0 0
        %5387 = vmatprep.subr.bf16.mxu0 0
        %5388 = vmatpush1.bf16.msra.mxu0 0
        %5389 = vmatprep.subr.bf16.mxu0 0
        %5390 = vmatpush1.bf16.msra.mxu0 0
        %5391 = vmatprep.subr.bf16.mxu0 0
        %5392 = vmatpush1.bf16.msra.mxu0 0
        %5393 = vmatprep.subr.bf16.mxu0 0
        %5394 = vmatpush1.bf16.msra.mxu0 %v4343
        %5395 = vmatprep.subr.bf16.mxu0 0
        %5396 = vmatpush2.bf16.msra.mxu0 0
        %5397 = vmatprep.subr.bf16.mxu0 0
        %5398 = vmatpush2.bf16.msra.mxu0 0
        %5399 = vmatprep.subr.bf16.mxu0 0
        %5400 = vmatpush2.bf16.msra.mxu0 0
        %5401 = vmatprep.subr.bf16.mxu0 0
        %5402 = vmatpush2.bf16.msra.mxu0 0
        %5403 = vmatprep.subr.bf16.mxu0 0
        %5404 = vmatpush2.bf16.msra.mxu0 0
        %5405 = vmatprep.subr.bf16.mxu0 0
        %5406 = vmatpush2.bf16.msra.mxu0 0
        %5407 = vmatprep.subr.bf16.mxu0 0
        %5408 = vmatpush2.bf16.msra.mxu0 0
        %5409 = vmatprep.subr.bf16.mxu0 0
        %5410 = vmatpush2.bf16.msra.mxu0 0
        %5411 = vmatprep.mubr.bf16.mxu0 0
        %5412 = vmatmul.mubr.bf16.gmra.mxu0 %v5377
        %v5413 = vpop.f32.mrf.mxu0
        %v5414 = vadd.f32 0.0, %v5413
        %v5415 = vpop.f32.mrf.mxu0
        %v5416 = vpop.f32.mrf.mxu0
        %v5417 = vpop.f32.mrf.mxu0
        %5418 = vdwg.mxu0
        %v5420 = vsel %vm5140, %v5319, 0
        %5422 = vmatprep.subr.bf16.mxu0 0
        %5423 = vmatpush1.bf16.msra.mxu0 0
        %5424 = vmatprep.subr.bf16.mxu0 0
        %5425 = vmatpush1.bf16.msra.mxu0 0
        %5426 = vmatprep.subr.bf16.mxu0 0
        %5427 = vmatpush1.bf16.msra.mxu0 0
        %5428 = vmatprep.subr.bf16.mxu0 0
        %5429 = vmatpush1.bf16.msra.mxu0 0
        %5430 = vmatprep.subr.bf16.mxu0 0
        %5431 = vmatpush1.bf16.msra.mxu0 0
        %5432 = vmatprep.subr.bf16.mxu0 0
        %5433 = vmatpush1.bf16.msra.mxu0 0
        %5434 = vmatprep.subr.bf16.mxu0 0
        %5435 = vmatpush1.bf16.msra.mxu0 0
        %5436 = vmatprep.subr.bf16.mxu0 0
        %5437 = vmatpush1.bf16.msra.mxu0 %v4347
        %5438 = vmatprep.subr.bf16.mxu0 0
        %5439 = vmatpush2.bf16.msra.mxu0 0
        %5440 = vmatprep.subr.bf16.mxu0 0
        %5441 = vmatpush2.bf16.msra.mxu0 0
        %5442 = vmatprep.subr.bf16.mxu0 0
        %5443 = vmatpush2.bf16.msra.mxu0 0
        %5444 = vmatprep.subr.bf16.mxu0 0
        %5445 = vmatpush2.bf16.msra.mxu0 0
        %5446 = vmatprep.subr.bf16.mxu0 0
        %5447 = vmatpush2.bf16.msra.mxu0 0
        %5448 = vmatprep.subr.bf16.mxu0 0
        %5449 = vmatpush2.bf16.msra.mxu0 0
        %5450 = vmatprep.subr.bf16.mxu0 0
        %5451 = vmatpush2.bf16.msra.mxu0 0
        %5452 = vmatprep.subr.bf16.mxu0 0
        %5453 = vmatpush2.bf16.msra.mxu0 0
        %5454 = vmatprep.mubr.bf16.mxu0 0
        %5455 = vmatmul.mubr.bf16.gmra.mxu0 %v5420
        %v5456 = vpop.f32.mrf.mxu0
        %v5457 = vadd.f32 0.0, %v5456
        %v5458 = vpop.f32.mrf.mxu0
        %v5459 = vpop.f32.mrf.mxu0
        %v5460 = vpop.f32.mrf.mxu0
        %5461 = vdwg.mxu0
        %v5463 = vsel %vm5140, %v5320, 0
        %5465 = vmatprep.subr.bf16.mxu0 0
        %5466 = vmatpush1.bf16.msra.mxu0 0
        %5467 = vmatprep.subr.bf16.mxu0 0
        %5468 = vmatpush1.bf16.msra.mxu0 0
        %5469 = vmatprep.subr.bf16.mxu0 0
        %5470 = vmatpush1.bf16.msra.mxu0 0
        %5471 = vmatprep.subr.bf16.mxu0 0
        %5472 = vmatpush1.bf16.msra.mxu0 0
        %5473 = vmatprep.subr.bf16.mxu0 0
        %5474 = vmatpush1.bf16.msra.mxu0 0
        %5475 = vmatprep.subr.bf16.mxu0 0
        %5476 = vmatpush1.bf16.msra.mxu0 0
        %5477 = vmatprep.subr.bf16.mxu0 0
        %5478 = vmatpush1.bf16.msra.mxu0 0
        %5479 = vmatprep.subr.bf16.mxu0 0
        %5480 = vmatpush1.bf16.msra.mxu0 %v4349
        %5481 = vmatprep.subr.bf16.mxu0 0
        %5482 = vmatpush2.bf16.msra.mxu0 0
        %5483 = vmatprep.subr.bf16.mxu0 0
        %5484 = vmatpush2.bf16.msra.mxu0 0
        %5485 = vmatprep.subr.bf16.mxu0 0
        %5486 = vmatpush2.bf16.msra.mxu0 0
        %5487 = vmatprep.subr.bf16.mxu0 0
        %5488 = vmatpush2.bf16.msra.mxu0 0
        %5489 = vmatprep.subr.bf16.mxu0 0
        %5490 = vmatpush2.bf16.msra.mxu0 0
        %5491 = vmatprep.subr.bf16.mxu0 0
        %5492 = vmatpush2.bf16.msra.mxu0 0
        %5493 = vmatprep.subr.bf16.mxu0 0
        %5494 = vmatpush2.bf16.msra.mxu0 0
        %5495 = vmatprep.subr.bf16.mxu0 0
        %5496 = vmatpush2.bf16.msra.mxu0 0
        %5497 = vmatprep.mubr.bf16.mxu0 0
        %5498 = vmatmul.mubr.bf16.gmra.mxu0 %v5463
        %v5499 = vpop.f32.mrf.mxu0
        %v5500 = vadd.f32 0.0, %v5499
        %v5501 = vpop.f32.mrf.mxu0
        %v5502 = vpop.f32.mrf.mxu0
        %v5503 = vpop.f32.mrf.mxu0
        %5504 = vdwg.mxu0
        %v5506 = vsel %vm5140, %v5321, 0
        %5508 = vmatprep.subr.bf16.mxu0 0
        %5509 = vmatpush1.bf16.msra.mxu0 0
        %5510 = vmatprep.subr.bf16.mxu0 0
        %5511 = vmatpush1.bf16.msra.mxu0 0
        %5512 = vmatprep.subr.bf16.mxu0 0
        %5513 = vmatpush1.bf16.msra.mxu0 0
        %5514 = vmatprep.subr.bf16.mxu0 0
        %5515 = vmatpush1.bf16.msra.mxu0 0
        %5516 = vmatprep.subr.bf16.mxu0 0
        %5517 = vmatpush1.bf16.msra.mxu0 0
        %5518 = vmatprep.subr.bf16.mxu0 0
        %5519 = vmatpush1.bf16.msra.mxu0 0
        %5520 = vmatprep.subr.bf16.mxu0 0
        %5521 = vmatpush1.bf16.msra.mxu0 0
        %5522 = vmatprep.subr.bf16.mxu0 0
        %5523 = vmatpush1.bf16.msra.mxu0 %v4353
        %5524 = vmatprep.subr.bf16.mxu0 0
        %5525 = vmatpush2.bf16.msra.mxu0 0
        %5526 = vmatprep.subr.bf16.mxu0 0
        %5527 = vmatpush2.bf16.msra.mxu0 0
        %5528 = vmatprep.subr.bf16.mxu0 0
        %5529 = vmatpush2.bf16.msra.mxu0 0
        %5530 = vmatprep.subr.bf16.mxu0 0
        %5531 = vmatpush2.bf16.msra.mxu0 0
        %5532 = vmatprep.subr.bf16.mxu0 0
        %5533 = vmatpush2.bf16.msra.mxu0 0
        %5534 = vmatprep.subr.bf16.mxu0 0
        %5535 = vmatpush2.bf16.msra.mxu0 0
        %5536 = vmatprep.subr.bf16.mxu0 0
        %5537 = vmatpush2.bf16.msra.mxu0 0
        %5538 = vmatprep.subr.bf16.mxu0 0
        %5539 = vmatpush2.bf16.msra.mxu0 0
        %5540 = vmatprep.mubr.bf16.mxu0 0
        %5541 = vmatmul.mubr.bf16.gmra.mxu0 %v5506
        %v5542 = vpop.f32.mrf.mxu0
        %v5543 = vadd.f32 0.0, %v5542
        %v5544 = vpop.f32.mrf.mxu0
        %v5545 = vpop.f32.mrf.mxu0
        %v5546 = vpop.f32.mrf.mxu0
        %5547 = vdwg.mxu0
        %v5549 = vsel %vm5140, %v5322, 0
        %5551 = vmatprep.subr.bf16.mxu0 0
        %5552 = vmatpush1.bf16.msra.mxu0 0
        %5553 = vmatprep.subr.bf16.mxu0 0
        %5554 = vmatpush1.bf16.msra.mxu0 0
        %5555 = vmatprep.subr.bf16.mxu0 0
        %5556 = vmatpush1.bf16.msra.mxu0 0
        %5557 = vmatprep.subr.bf16.mxu0 0
        %5558 = vmatpush1.bf16.msra.mxu0 0
        %5559 = vmatprep.subr.bf16.mxu0 0
        %5560 = vmatpush1.bf16.msra.mxu0 0
        %5561 = vmatprep.subr.bf16.mxu0 0
        %5562 = vmatpush1.bf16.msra.mxu0 0
        %5563 = vmatprep.subr.bf16.mxu0 0
        %5564 = vmatpush1.bf16.msra.mxu0 0
        %5565 = vmatprep.subr.bf16.mxu0 0
        %5566 = vmatpush1.bf16.msra.mxu0 %v4355
        %5567 = vmatprep.subr.bf16.mxu0 0
        %5568 = vmatpush2.bf16.msra.mxu0 0
        %5569 = vmatprep.subr.bf16.mxu0 0
        %5570 = vmatpush2.bf16.msra.mxu0 0
        %5571 = vmatprep.subr.bf16.mxu0 0
        %5572 = vmatpush2.bf16.msra.mxu0 0
        %5573 = vmatprep.subr.bf16.mxu0 0
        %5574 = vmatpush2.bf16.msra.mxu0 0
        %5575 = vmatprep.subr.bf16.mxu0 0
        %5576 = vmatpush2.bf16.msra.mxu0 0
        %5577 = vmatprep.subr.bf16.mxu0 0
        %5578 = vmatpush2.bf16.msra.mxu0 0
        %5579 = vmatprep.subr.bf16.mxu0 0
        %5580 = vmatpush2.bf16.msra.mxu0 0
        %5581 = vmatprep.subr.bf16.mxu0 0
        %5582 = vmatpush2.bf16.msra.mxu0 0
        %5583 = vmatprep.mubr.bf16.mxu0 0
        %5584 = vmatmul.mubr.bf16.gmra.mxu0 %v5549
        %v5585 = vpop.f32.mrf.mxu0
        %v5586 = vadd.f32 0.0, %v5585
        %v5587 = vpop.f32.mrf.mxu0
        %v5588 = vpop.f32.mrf.mxu0
        %v5589 = vpop.f32.mrf.mxu0
        %5590 = vdwg.mxu0
        %v5592 = vsel %vm5140, %v5323, 0
        %5594 = vmatprep.subr.bf16.mxu0 0
        %5595 = vmatpush1.bf16.msra.mxu0 0
        %5596 = vmatprep.subr.bf16.mxu0 0
        %5597 = vmatpush1.bf16.msra.mxu0 0
        %5598 = vmatprep.subr.bf16.mxu0 0
        %5599 = vmatpush1.bf16.msra.mxu0 0
        %5600 = vmatprep.subr.bf16.mxu0 0
        %5601 = vmatpush1.bf16.msra.mxu0 0
        %5602 = vmatprep.subr.bf16.mxu0 0
        %5603 = vmatpush1.bf16.msra.mxu0 0
        %5604 = vmatprep.subr.bf16.mxu0 0
        %5605 = vmatpush1.bf16.msra.mxu0 0
        %5606 = vmatprep.subr.bf16.mxu0 0
        %5607 = vmatpush1.bf16.msra.mxu0 0
        %5608 = vmatprep.subr.bf16.mxu0 0
        %5609 = vmatpush1.bf16.msra.mxu0 %v4359
        %5610 = vmatprep.subr.bf16.mxu0 0
        %5611 = vmatpush2.bf16.msra.mxu0 0
        %5612 = vmatprep.subr.bf16.mxu0 0
        %5613 = vmatpush2.bf16.msra.mxu0 0
        %5614 = vmatprep.subr.bf16.mxu0 0
        %5615 = vmatpush2.bf16.msra.mxu0 0
        %5616 = vmatprep.subr.bf16.mxu0 0
        %5617 = vmatpush2.bf16.msra.mxu0 0
        %5618 = vmatprep.subr.bf16.mxu0 0
        %5619 = vmatpush2.bf16.msra.mxu0 0
        %5620 = vmatprep.subr.bf16.mxu0 0
        %5621 = vmatpush2.bf16.msra.mxu0 0
        %5622 = vmatprep.subr.bf16.mxu0 0
        %5623 = vmatpush2.bf16.msra.mxu0 0
        %5624 = vmatprep.subr.bf16.mxu0 0
        %5625 = vmatpush2.bf16.msra.mxu0 0
        %5626 = vmatprep.mubr.bf16.mxu0 0
        %5627 = vmatmul.mubr.bf16.gmra.mxu0 %v5592
        %v5628 = vpop.f32.mrf.mxu0
        %v5629 = vadd.f32 0.0, %v5628
        %v5630 = vpop.f32.mrf.mxu0
        %v5631 = vpop.f32.mrf.mxu0
        %v5632 = vpop.f32.mrf.mxu0
        %5633 = vdwg.mxu0
        %v5635 = vsel %vm5140, %v5324, 0
        %5637 = vmatprep.subr.bf16.mxu0 0
        %5638 = vmatpush1.bf16.msra.mxu0 0
        %5639 = vmatprep.subr.bf16.mxu0 0
        %5640 = vmatpush1.bf16.msra.mxu0 0
        %5641 = vmatprep.subr.bf16.mxu0 0
        %5642 = vmatpush1.bf16.msra.mxu0 0
        %5643 = vmatprep.subr.bf16.mxu0 0
        %5644 = vmatpush1.bf16.msra.mxu0 0
        %5645 = vmatprep.subr.bf16.mxu0 0
        %5646 = vmatpush1.bf16.msra.mxu0 0
        %5647 = vmatprep.subr.bf16.mxu0 0
        %5648 = vmatpush1.bf16.msra.mxu0 0
        %5649 = vmatprep.subr.bf16.mxu0 0
        %5650 = vmatpush1.bf16.msra.mxu0 0
        %5651 = vmatprep.subr.bf16.mxu0 0
        %5652 = vmatpush1.bf16.msra.mxu0 %v4361
        %5653 = vmatprep.subr.bf16.mxu0 0
        %5654 = vmatpush2.bf16.msra.mxu0 0
        %5655 = vmatprep.subr.bf16.mxu0 0
        %5656 = vmatpush2.bf16.msra.mxu0 0
        %5657 = vmatprep.subr.bf16.mxu0 0
        %5658 = vmatpush2.bf16.msra.mxu0 0
        %5659 = vmatprep.subr.bf16.mxu0 0
        %5660 = vmatpush2.bf16.msra.mxu0 0
        %5661 = vmatprep.subr.bf16.mxu0 0
        %5662 = vmatpush2.bf16.msra.mxu0 0
        %5663 = vmatprep.subr.bf16.mxu0 0
        %5664 = vmatpush2.bf16.msra.mxu0 0
        %5665 = vmatprep.subr.bf16.mxu0 0
        %5666 = vmatpush2.bf16.msra.mxu0 0
        %5667 = vmatprep.subr.bf16.mxu0 0
        %5668 = vmatpush2.bf16.msra.mxu0 0
        %5669 = vmatprep.mubr.bf16.mxu0 0
        %5670 = vmatmul.mubr.bf16.gmra.mxu0 %v5635
        %v5671 = vpop.f32.mrf.mxu0
        %v5672 = vadd.f32 0.0, %v5671
        %v5673 = vpop.f32.mrf.mxu0
        %v5674 = vpop.f32.mrf.mxu0
        %v5675 = vpop.f32.mrf.mxu0
        %5676 = vdwg.mxu0
        %v5678 = vsel %vm5140, %v5325, 0
        %5680 = vmatprep.subr.bf16.mxu0 0
        %5681 = vmatpush1.bf16.msra.mxu0 0
        %5682 = vmatprep.subr.bf16.mxu0 0
        %5683 = vmatpush1.bf16.msra.mxu0 0
        %5684 = vmatprep.subr.bf16.mxu0 0
        %5685 = vmatpush1.bf16.msra.mxu0 0
        %5686 = vmatprep.subr.bf16.mxu0 0
        %5687 = vmatpush1.bf16.msra.mxu0 0
        %5688 = vmatprep.subr.bf16.mxu0 0
        %5689 = vmatpush1.bf16.msra.mxu0 0
        %5690 = vmatprep.subr.bf16.mxu0 0
        %5691 = vmatpush1.bf16.msra.mxu0 0
        %5692 = vmatprep.subr.bf16.mxu0 0
        %5693 = vmatpush1.bf16.msra.mxu0 0
        %5694 = vmatprep.subr.bf16.mxu0 0
        %5695 = vmatpush1.bf16.msra.mxu0 %v4365
        %5696 = vmatprep.subr.bf16.mxu0 0
        %5697 = vmatpush2.bf16.msra.mxu0 0
        %5698 = vmatprep.subr.bf16.mxu0 0
        %5699 = vmatpush2.bf16.msra.mxu0 0
        %5700 = vmatprep.subr.bf16.mxu0 0
        %5701 = vmatpush2.bf16.msra.mxu0 0
        %5702 = vmatprep.subr.bf16.mxu0 0
        %5703 = vmatpush2.bf16.msra.mxu0 0
        %5704 = vmatprep.subr.bf16.mxu0 0
        %5705 = vmatpush2.bf16.msra.mxu0 0
        %5706 = vmatprep.subr.bf16.mxu0 0
        %5707 = vmatpush2.bf16.msra.mxu0 0
        %5708 = vmatprep.subr.bf16.mxu0 0
        %5709 = vmatpush2.bf16.msra.mxu0 0
        %5710 = vmatprep.subr.bf16.mxu0 0
        %5711 = vmatpush2.bf16.msra.mxu0 0
        %5712 = vmatprep.mubr.bf16.mxu0 0
        %5713 = vmatmul.mubr.bf16.gmra.mxu0 %v5678
        %v5714 = vpop.f32.mrf.mxu0
        %v5715 = vadd.f32 0.0, %v5714
        %v5716 = vpop.f32.mrf.mxu0
        %v5717 = vpop.f32.mrf.mxu0
        %v5718 = vpop.f32.mrf.mxu0
        %5719 = vdwg.mxu0
        %v5721 = vsel %vm5140, %v5326, 0
        %5723 = vmatprep.subr.bf16.mxu0 0
        %5724 = vmatpush1.bf16.msra.mxu0 0
        %5725 = vmatprep.subr.bf16.mxu0 0
        %5726 = vmatpush1.bf16.msra.mxu0 0
        %5727 = vmatprep.subr.bf16.mxu0 0
        %5728 = vmatpush1.bf16.msra.mxu0 0
        %5729 = vmatprep.subr.bf16.mxu0 0
        %5730 = vmatpush1.bf16.msra.mxu0 0
        %5731 = vmatprep.subr.bf16.mxu0 0
        %5732 = vmatpush1.bf16.msra.mxu0 0
        %5733 = vmatprep.subr.bf16.mxu0 0
        %5734 = vmatpush1.bf16.msra.mxu0 0
        %5735 = vmatprep.subr.bf16.mxu0 0
        %5736 = vmatpush1.bf16.msra.mxu0 0
        %5737 = vmatprep.subr.bf16.mxu0 0
        %5738 = vmatpush1.bf16.msra.mxu0 %v4367
        %5739 = vmatprep.subr.bf16.mxu0 0
        %5740 = vmatpush2.bf16.msra.mxu0 0
        %5741 = vmatprep.subr.bf16.mxu0 0
        %5742 = vmatpush2.bf16.msra.mxu0 0
        %5743 = vmatprep.subr.bf16.mxu0 0
        %5744 = vmatpush2.bf16.msra.mxu0 0
        %5745 = vmatprep.subr.bf16.mxu0 0
        %5746 = vmatpush2.bf16.msra.mxu0 0
        %5747 = vmatprep.subr.bf16.mxu0 0
        %5748 = vmatpush2.bf16.msra.mxu0 0
        %5749 = vmatprep.subr.bf16.mxu0 0
        %5750 = vmatpush2.bf16.msra.mxu0 0
        %5751 = vmatprep.subr.bf16.mxu0 0
        %5752 = vmatpush2.bf16.msra.mxu0 0
        %5753 = vmatprep.subr.bf16.mxu0 0
        %5754 = vmatpush2.bf16.msra.mxu0 0
        %5755 = vmatprep.mubr.bf16.mxu0 0
        %5756 = vmatmul.mubr.bf16.gmra.mxu0 %v5721
        %v5757 = vpop.f32.mrf.mxu0
        %v5758 = vadd.f32 0.0, %v5757
        %v5759 = vpop.f32.mrf.mxu0
        %v5760 = vpop.f32.mrf.mxu0
        %v5761 = vpop.f32.mrf.mxu0
        %5762 = vdwg.mxu0
        %v5764 = vsel %vm5140, %v5327, 0
        %5766 = vmatprep.subr.bf16.mxu0 0
        %5767 = vmatpush1.bf16.msra.mxu0 0
        %5768 = vmatprep.subr.bf16.mxu0 0
        %5769 = vmatpush1.bf16.msra.mxu0 0
        %5770 = vmatprep.subr.bf16.mxu0 0
        %5771 = vmatpush1.bf16.msra.mxu0 0
        %5772 = vmatprep.subr.bf16.mxu0 0
        %5773 = vmatpush1.bf16.msra.mxu0 0
        %5774 = vmatprep.subr.bf16.mxu0 0
        %5775 = vmatpush1.bf16.msra.mxu0 0
        %5776 = vmatprep.subr.bf16.mxu0 0
        %5777 = vmatpush1.bf16.msra.mxu0 0
        %5778 = vmatprep.subr.bf16.mxu0 0
        %5779 = vmatpush1.bf16.msra.mxu0 0
        %5780 = vmatprep.subr.bf16.mxu0 0
        %5781 = vmatpush1.bf16.msra.mxu0 %v4371
        %5782 = vmatprep.subr.bf16.mxu0 0
        %5783 = vmatpush2.bf16.msra.mxu0 0
        %5784 = vmatprep.subr.bf16.mxu0 0
        %5785 = vmatpush2.bf16.msra.mxu0 0
        %5786 = vmatprep.subr.bf16.mxu0 0
        %5787 = vmatpush2.bf16.msra.mxu0 0
        %5788 = vmatprep.subr.bf16.mxu0 0
        %5789 = vmatpush2.bf16.msra.mxu0 0
        %5790 = vmatprep.subr.bf16.mxu0 0
        %5791 = vmatpush2.bf16.msra.mxu0 0
        %5792 = vmatprep.subr.bf16.mxu0 0
        %5793 = vmatpush2.bf16.msra.mxu0 0
        %5794 = vmatprep.subr.bf16.mxu0 0
        %5795 = vmatpush2.bf16.msra.mxu0 0
        %5796 = vmatprep.subr.bf16.mxu0 0
        %5797 = vmatpush2.bf16.msra.mxu0 0
        %5798 = vmatprep.mubr.bf16.mxu0 0
        %5799 = vmatmul.mubr.bf16.gmra.mxu0 %v5764
        %v5800 = vpop.f32.mrf.mxu0
        %v5801 = vadd.f32 0.0, %v5800
        %v5802 = vpop.f32.mrf.mxu0
        %v5803 = vpop.f32.mrf.mxu0
        %v5804 = vpop.f32.mrf.mxu0
        %5805 = vdwg.mxu0
        %v5807 = vsel %vm5140, %v5328, 0
        %5809 = vmatprep.subr.bf16.mxu0 0
        %5810 = vmatpush1.bf16.msra.mxu0 0
        %5811 = vmatprep.subr.bf16.mxu0 0
        %5812 = vmatpush1.bf16.msra.mxu0 0
        %5813 = vmatprep.subr.bf16.mxu0 0
        %5814 = vmatpush1.bf16.msra.mxu0 0
        %5815 = vmatprep.subr.bf16.mxu0 0
        %5816 = vmatpush1.bf16.msra.mxu0 0
        %5817 = vmatprep.subr.bf16.mxu0 0
        %5818 = vmatpush1.bf16.msra.mxu0 0
        %5819 = vmatprep.subr.bf16.mxu0 0
        %5820 = vmatpush1.bf16.msra.mxu0 0
        %5821 = vmatprep.subr.bf16.mxu0 0
        %5822 = vmatpush1.bf16.msra.mxu0 0
        %5823 = vmatprep.subr.bf16.mxu0 0
        %5824 = vmatpush1.bf16.msra.mxu0 %v4373
        %5825 = vmatprep.subr.bf16.mxu0 0
        %5826 = vmatpush2.bf16.msra.mxu0 0
        %5827 = vmatprep.subr.bf16.mxu0 0
        %5828 = vmatpush2.bf16.msra.mxu0 0
        %5829 = vmatprep.subr.bf16.mxu0 0
        %5830 = vmatpush2.bf16.msra.mxu0 0
        %5831 = vmatprep.subr.bf16.mxu0 0
        %5832 = vmatpush2.bf16.msra.mxu0 0
        %5833 = vmatprep.subr.bf16.mxu0 0
        %5834 = vmatpush2.bf16.msra.mxu0 0
        %5835 = vmatprep.subr.bf16.mxu0 0
        %5836 = vmatpush2.bf16.msra.mxu0 0
        %5837 = vmatprep.subr.bf16.mxu0 0
        %5838 = vmatpush2.bf16.msra.mxu0 0
        %5839 = vmatprep.subr.bf16.mxu0 0
        %5840 = vmatpush2.bf16.msra.mxu0 0
        %5841 = vmatprep.mubr.bf16.mxu0 0
        %5842 = vmatmul.mubr.bf16.gmra.mxu0 %v5807
        %v5843 = vpop.f32.mrf.mxu0
        %v5844 = vadd.f32 0.0, %v5843
        %v5845 = vpop.f32.mrf.mxu0
        %v5846 = vpop.f32.mrf.mxu0
        %v5847 = vpop.f32.mrf.mxu0
        %5848 = vdwg.mxu0
        %v5850 = vsel %vm5140, %v5329, 0
        %5852 = vmatprep.subr.bf16.mxu0 0
        %5853 = vmatpush1.bf16.msra.mxu0 0
        %5854 = vmatprep.subr.bf16.mxu0 0
        %5855 = vmatpush1.bf16.msra.mxu0 0
        %5856 = vmatprep.subr.bf16.mxu0 0
        %5857 = vmatpush1.bf16.msra.mxu0 0
        %5858 = vmatprep.subr.bf16.mxu0 0
        %5859 = vmatpush1.bf16.msra.mxu0 0
        %5860 = vmatprep.subr.bf16.mxu0 0
        %5861 = vmatpush1.bf16.msra.mxu0 0
        %5862 = vmatprep.subr.bf16.mxu0 0
        %5863 = vmatpush1.bf16.msra.mxu0 0
        %5864 = vmatprep.subr.bf16.mxu0 0
        %5865 = vmatpush1.bf16.msra.mxu0 0
        %5866 = vmatprep.subr.bf16.mxu0 0
        %5867 = vmatpush1.bf16.msra.mxu0 %v4377
        %5868 = vmatprep.subr.bf16.mxu0 0
        %5869 = vmatpush2.bf16.msra.mxu0 0
        %5870 = vmatprep.subr.bf16.mxu0 0
        %5871 = vmatpush2.bf16.msra.mxu0 0
        %5872 = vmatprep.subr.bf16.mxu0 0
        %5873 = vmatpush2.bf16.msra.mxu0 0
        %5874 = vmatprep.subr.bf16.mxu0 0
        %5875 = vmatpush2.bf16.msra.mxu0 0
        %5876 = vmatprep.subr.bf16.mxu0 0
        %5877 = vmatpush2.bf16.msra.mxu0 0
        %5878 = vmatprep.subr.bf16.mxu0 0
        %5879 = vmatpush2.bf16.msra.mxu0 0
        %5880 = vmatprep.subr.bf16.mxu0 0
        %5881 = vmatpush2.bf16.msra.mxu0 0
        %5882 = vmatprep.subr.bf16.mxu0 0
        %5883 = vmatpush2.bf16.msra.mxu0 0
        %5884 = vmatprep.mubr.bf16.mxu0 0
        %5885 = vmatmul.mubr.bf16.gmra.mxu0 %v5850
        %v5886 = vpop.f32.mrf.mxu0
        %v5887 = vadd.f32 0.0, %v5886
        %v5888 = vpop.f32.mrf.mxu0
        %v5889 = vpop.f32.mrf.mxu0
        %v5890 = vpop.f32.mrf.mxu0
        %5891 = vdwg.mxu0
        %v5893 = vsel %vm5140, %v5330, 0
        %5895 = vmatprep.subr.bf16.mxu0 0
        %5896 = vmatpush1.bf16.msra.mxu0 0
        %5897 = vmatprep.subr.bf16.mxu0 0
        %5898 = vmatpush1.bf16.msra.mxu0 0
        %5899 = vmatprep.subr.bf16.mxu0 0
        %5900 = vmatpush1.bf16.msra.mxu0 0
        %5901 = vmatprep.subr.bf16.mxu0 0
        %5902 = vmatpush1.bf16.msra.mxu0 0
        %5903 = vmatprep.subr.bf16.mxu0 0
        %5904 = vmatpush1.bf16.msra.mxu0 0
        %5905 = vmatprep.subr.bf16.mxu0 0
        %5906 = vmatpush1.bf16.msra.mxu0 0
        %5907 = vmatprep.subr.bf16.mxu0 0
        %5908 = vmatpush1.bf16.msra.mxu0 0
        %5909 = vmatprep.subr.bf16.mxu0 0
        %5910 = vmatpush1.bf16.msra.mxu0 %v4379
        %5911 = vmatprep.subr.bf16.mxu0 0
        %5912 = vmatpush2.bf16.msra.mxu0 0
        %5913 = vmatprep.subr.bf16.mxu0 0
        %5914 = vmatpush2.bf16.msra.mxu0 0
        %5915 = vmatprep.subr.bf16.mxu0 0
        %5916 = vmatpush2.bf16.msra.mxu0 0
        %5917 = vmatprep.subr.bf16.mxu0 0
        %5918 = vmatpush2.bf16.msra.mxu0 0
        %5919 = vmatprep.subr.bf16.mxu0 0
        %5920 = vmatpush2.bf16.msra.mxu0 0
        %5921 = vmatprep.subr.bf16.mxu0 0
        %5922 = vmatpush2.bf16.msra.mxu0 0
        %5923 = vmatprep.subr.bf16.mxu0 0
        %5924 = vmatpush2.bf16.msra.mxu0 0
        %5925 = vmatprep.subr.bf16.mxu0 0
        %5926 = vmatpush2.bf16.msra.mxu0 0
        %5927 = vmatprep.mubr.bf16.mxu0 0
        %5928 = vmatmul.mubr.bf16.gmra.mxu0 %v5893
        %v5929 = vpop.f32.mrf.mxu0
        %v5930 = vadd.f32 0.0, %v5929
        %v5931 = vpop.f32.mrf.mxu0
        %v5932 = vpop.f32.mrf.mxu0
        %v5933 = vpop.f32.mrf.mxu0
        %5934 = vdwg.mxu0
        %v5936 = vsel %vm5140, %v5331, 0
        %5938 = vmatprep.subr.bf16.mxu0 0
        %5939 = vmatpush1.bf16.msra.mxu0 0
        %5940 = vmatprep.subr.bf16.mxu0 0
        %5941 = vmatpush1.bf16.msra.mxu0 0
        %5942 = vmatprep.subr.bf16.mxu0 0
        %5943 = vmatpush1.bf16.msra.mxu0 0
        %5944 = vmatprep.subr.bf16.mxu0 0
        %5945 = vmatpush1.bf16.msra.mxu0 0
        %5946 = vmatprep.subr.bf16.mxu0 0
        %5947 = vmatpush1.bf16.msra.mxu0 0
        %5948 = vmatprep.subr.bf16.mxu0 0
        %5949 = vmatpush1.bf16.msra.mxu0 0
        %5950 = vmatprep.subr.bf16.mxu0 0
        %5951 = vmatpush1.bf16.msra.mxu0 0
        %5952 = vmatprep.subr.bf16.mxu0 0
        %5953 = vmatpush1.bf16.msra.mxu0 %v4383
        %5954 = vmatprep.subr.bf16.mxu0 0
        %5955 = vmatpush2.bf16.msra.mxu0 0
        %5956 = vmatprep.subr.bf16.mxu0 0
        %5957 = vmatpush2.bf16.msra.mxu0 0
        %5958 = vmatprep.subr.bf16.mxu0 0
        %5959 = vmatpush2.bf16.msra.mxu0 0
        %5960 = vmatprep.subr.bf16.mxu0 0
        %5961 = vmatpush2.bf16.msra.mxu0 0
        %5962 = vmatprep.subr.bf16.mxu0 0
        %5963 = vmatpush2.bf16.msra.mxu0 0
        %5964 = vmatprep.subr.bf16.mxu0 0
        %5965 = vmatpush2.bf16.msra.mxu0 0
        %5966 = vmatprep.subr.bf16.mxu0 0
        %5967 = vmatpush2.bf16.msra.mxu0 0
        %5968 = vmatprep.subr.bf16.mxu0 0
        %5969 = vmatpush2.bf16.msra.mxu0 0
        %5970 = vmatprep.mubr.bf16.mxu0 0
        %5971 = vmatmul.mubr.bf16.gmra.mxu0 %v5936
        %v5972 = vpop.f32.mrf.mxu0
        %v5973 = vadd.f32 0.0, %v5972
        %v5974 = vpop.f32.mrf.mxu0
        %v5975 = vpop.f32.mrf.mxu0
        %v5976 = vpop.f32.mrf.mxu0
        %5977 = vdwg.mxu0
        %v5979 = vsel %vm5140, %v5332, 0
        %5981 = vmatprep.subr.bf16.mxu0 0
        %5982 = vmatpush1.bf16.msra.mxu0 0
        %5983 = vmatprep.subr.bf16.mxu0 0
        %5984 = vmatpush1.bf16.msra.mxu0 0
        %5985 = vmatprep.subr.bf16.mxu0 0
        %5986 = vmatpush1.bf16.msra.mxu0 0
        %5987 = vmatprep.subr.bf16.mxu0 0
        %5988 = vmatpush1.bf16.msra.mxu0 0
        %5989 = vmatprep.subr.bf16.mxu0 0
        %5990 = vmatpush1.bf16.msra.mxu0 0
        %5991 = vmatprep.subr.bf16.mxu0 0
        %5992 = vmatpush1.bf16.msra.mxu0 0
        %5993 = vmatprep.subr.bf16.mxu0 0
        %5994 = vmatpush1.bf16.msra.mxu0 0
        %5995 = vmatprep.subr.bf16.mxu0 0
        %5996 = vmatpush1.bf16.msra.mxu0 %v4385
        %5997 = vmatprep.subr.bf16.mxu0 0
        %5998 = vmatpush2.bf16.msra.mxu0 0
        %5999 = vmatprep.subr.bf16.mxu0 0
        %6000 = vmatpush2.bf16.msra.mxu0 0
        %6001 = vmatprep.subr.bf16.mxu0 0
        %6002 = vmatpush2.bf16.msra.mxu0 0
        %6003 = vmatprep.subr.bf16.mxu0 0
        %6004 = vmatpush2.bf16.msra.mxu0 0
        %6005 = vmatprep.subr.bf16.mxu0 0
        %6006 = vmatpush2.bf16.msra.mxu0 0
        %6007 = vmatprep.subr.bf16.mxu0 0
        %6008 = vmatpush2.bf16.msra.mxu0 0
        %6009 = vmatprep.subr.bf16.mxu0 0
        %6010 = vmatpush2.bf16.msra.mxu0 0
        %6011 = vmatprep.subr.bf16.mxu0 0
        %6012 = vmatpush2.bf16.msra.mxu0 0
        %6013 = vmatprep.mubr.bf16.mxu0 0
        %6014 = vmatmul.mubr.bf16.gmra.mxu0 %v5979
        %v6015 = vpop.f32.mrf.mxu0
        %v6016 = vadd.f32 0.0, %v6015
        %v6017 = vpop.f32.mrf.mxu0
        %v6018 = vpop.f32.mrf.mxu0
        %v6019 = vpop.f32.mrf.mxu0
        %6020 = vdwg.mxu0
        %v6021 = vpack.c.bf16 %v5414, %v5371
        %v6022 = vpack.c.bf16 %v5500, %v5457
        %v6023 = vpack.c.bf16 %v5586, %v5543
        %v6024 = vpack.c.bf16 %v5672, %v5629
        %v6025 = vpack.c.bf16 %v5758, %v5715
        %v6026 = vpack.c.bf16 %v5844, %v5801
        %v6027 = vpack.c.bf16 %v5930, %v5887
        %v6028 = vpack.c.bf16 %v6016, %v5973
        %v6030 = vsel %vm1832, %v6021, 0
        %v6033 = vsel %vm3556, %v4269, 0
        %6035 = vmatprep.subr.bf16.mxu0 0
        %6036 = vmatpush1.bf16.msra.mxu0 0
        %6037 = vmatprep.subr.bf16.mxu0 0
        %6038 = vmatpush1.bf16.msra.mxu0 0
        %6039 = vmatprep.subr.bf16.mxu0 0
        %6040 = vmatpush1.bf16.msra.mxu0 0
        %6041 = vmatprep.subr.bf16.mxu0 0
        %6042 = vmatpush1.bf16.msra.mxu0 0
        %6043 = vmatprep.subr.bf16.mxu0 0
        %6044 = vmatpush1.bf16.msra.mxu0 0
        %6045 = vmatprep.subr.bf16.mxu0 0
        %6046 = vmatpush1.bf16.msra.mxu0 0
        %6047 = vmatprep.subr.bf16.mxu0 0
        %6048 = vmatpush1.bf16.msra.mxu0 0
        %6049 = vmatprep.subr.bf16.mxu0 0
        %6050 = vmatpush1.bf16.msra.mxu0 %v6033
        %6051 = vmatprep.subr.bf16.mxu0 0
        %6052 = vmatpush2.bf16.msra.mxu0 0
        %6053 = vmatprep.subr.bf16.mxu0 0
        %6054 = vmatpush2.bf16.msra.mxu0 0
        %6055 = vmatprep.subr.bf16.mxu0 0
        %6056 = vmatpush2.bf16.msra.mxu0 0
        %6057 = vmatprep.subr.bf16.mxu0 0
        %6058 = vmatpush2.bf16.msra.mxu0 0
        %6059 = vmatprep.subr.bf16.mxu0 0
        %6060 = vmatpush2.bf16.msra.mxu0 0
        %6061 = vmatprep.subr.bf16.mxu0 0
        %6062 = vmatpush2.bf16.msra.mxu0 0
        %6063 = vmatprep.subr.bf16.mxu0 0
        %6064 = vmatpush2.bf16.msra.mxu0 0
        %6065 = vmatprep.subr.bf16.mxu0 0
        %6066 = vmatpush2.bf16.msra.mxu0 0
        %6067 = vmatprep.mubr.bf16.mxu0 0
        %6068 = vmatmul.mubr.bf16.gmra.mxu0 %v6030
        %v6069 = vpop.f32.mrf.mxu0
        %v6070 = vadd.f32 0.0, %v6069
        %v6071 = vpop.f32.mrf.mxu0
        %v6072 = vpop.f32.mrf.mxu0
        %v6073 = vadd.f32 0.0, %v6072
        %v6074 = vpop.f32.mrf.mxu0
        %6075 = vdwg.mxu0
        %v6077 = vsel %vm1832, %v6022, 0
        %v6080 = vsel %vm3556, %v4270, 0
        %6082 = vmatprep.subr.bf16.mxu0 0
        %6083 = vmatpush1.bf16.msra.mxu0 0
        %6084 = vmatprep.subr.bf16.mxu0 0
        %6085 = vmatpush1.bf16.msra.mxu0 0
        %6086 = vmatprep.subr.bf16.mxu0 0
        %6087 = vmatpush1.bf16.msra.mxu0 0
        %6088 = vmatprep.subr.bf16.mxu0 0
        %6089 = vmatpush1.bf16.msra.mxu0 0
        %6090 = vmatprep.subr.bf16.mxu0 0
        %6091 = vmatpush1.bf16.msra.mxu0 0
        %6092 = vmatprep.subr.bf16.mxu0 0
        %6093 = vmatpush1.bf16.msra.mxu0 0
        %6094 = vmatprep.subr.bf16.mxu0 0
        %6095 = vmatpush1.bf16.msra.mxu0 0
        %6096 = vmatprep.subr.bf16.mxu0 0
        %6097 = vmatpush1.bf16.msra.mxu0 %v6080
        %6098 = vmatprep.subr.bf16.mxu0 0
        %6099 = vmatpush2.bf16.msra.mxu0 0
        %6100 = vmatprep.subr.bf16.mxu0 0
        %6101 = vmatpush2.bf16.msra.mxu0 0
        %6102 = vmatprep.subr.bf16.mxu0 0
        %6103 = vmatpush2.bf16.msra.mxu0 0
        %6104 = vmatprep.subr.bf16.mxu0 0
        %6105 = vmatpush2.bf16.msra.mxu0 0
        %6106 = vmatprep.subr.bf16.mxu0 0
        %6107 = vmatpush2.bf16.msra.mxu0 0
        %6108 = vmatprep.subr.bf16.mxu0 0
        %6109 = vmatpush2.bf16.msra.mxu0 0
        %6110 = vmatprep.subr.bf16.mxu0 0
        %6111 = vmatpush2.bf16.msra.mxu0 0
        %6112 = vmatprep.subr.bf16.mxu0 0
        %6113 = vmatpush2.bf16.msra.mxu0 0
        %6114 = vmatprep.mubr.bf16.mxu0 0
        %6115 = vmatmul.mubr.bf16.gmra.mxu0 %v6077
        %v6116 = vpop.f32.mrf.mxu0
        %v6117 = vadd.f32 0.0, %v6116
        %v6118 = vpop.f32.mrf.mxu0
        %v6119 = vpop.f32.mrf.mxu0
        %v6120 = vadd.f32 0.0, %v6119
        %v6121 = vpop.f32.mrf.mxu0
        %6122 = vdwg.mxu0
        %v6124 = vsel %vm1832, %v6023, 0
        %v6127 = vsel %vm3556, %v4271, 0
        %6129 = vmatprep.subr.bf16.mxu0 0
        %6130 = vmatpush1.bf16.msra.mxu0 0
        %6131 = vmatprep.subr.bf16.mxu0 0
        %6132 = vmatpush1.bf16.msra.mxu0 0
        %6133 = vmatprep.subr.bf16.mxu0 0
        %6134 = vmatpush1.bf16.msra.mxu0 0
        %6135 = vmatprep.subr.bf16.mxu0 0
        %6136 = vmatpush1.bf16.msra.mxu0 0
        %6137 = vmatprep.subr.bf16.mxu0 0
        %6138 = vmatpush1.bf16.msra.mxu0 0
        %6139 = vmatprep.subr.bf16.mxu0 0
        %6140 = vmatpush1.bf16.msra.mxu0 0
        %6141 = vmatprep.subr.bf16.mxu0 0
        %6142 = vmatpush1.bf16.msra.mxu0 0
        %6143 = vmatprep.subr.bf16.mxu0 0
        %6144 = vmatpush1.bf16.msra.mxu0 %v6127
        %6145 = vmatprep.subr.bf16.mxu0 0
        %6146 = vmatpush2.bf16.msra.mxu0 0
        %6147 = vmatprep.subr.bf16.mxu0 0
        %6148 = vmatpush2.bf16.msra.mxu0 0
        %6149 = vmatprep.subr.bf16.mxu0 0
        %6150 = vmatpush2.bf16.msra.mxu0 0
        %6151 = vmatprep.subr.bf16.mxu0 0
        %6152 = vmatpush2.bf16.msra.mxu0 0
        %6153 = vmatprep.subr.bf16.mxu0 0
        %6154 = vmatpush2.bf16.msra.mxu0 0
        %6155 = vmatprep.subr.bf16.mxu0 0
        %6156 = vmatpush2.bf16.msra.mxu0 0
        %6157 = vmatprep.subr.bf16.mxu0 0
        %6158 = vmatpush2.bf16.msra.mxu0 0
        %6159 = vmatprep.subr.bf16.mxu0 0
        %6160 = vmatpush2.bf16.msra.mxu0 0
        %6161 = vmatprep.mubr.bf16.mxu0 0
        %6162 = vmatmul.mubr.bf16.gmra.mxu0 %v6124
        %v6163 = vpop.f32.mrf.mxu0
        %v6164 = vadd.f32 0.0, %v6163
        %v6165 = vpop.f32.mrf.mxu0
        %v6166 = vpop.f32.mrf.mxu0
        %v6167 = vadd.f32 0.0, %v6166
        %v6168 = vpop.f32.mrf.mxu0
        %6169 = vdwg.mxu0
        %v6171 = vsel %vm1832, %v6024, 0
        %v6174 = vsel %vm3556, %v4272, 0
        %6176 = vmatprep.subr.bf16.mxu0 0
        %6177 = vmatpush1.bf16.msra.mxu0 0
        %6178 = vmatprep.subr.bf16.mxu0 0
        %6179 = vmatpush1.bf16.msra.mxu0 0
        %6180 = vmatprep.subr.bf16.mxu0 0
        %6181 = vmatpush1.bf16.msra.mxu0 0
        %6182 = vmatprep.subr.bf16.mxu0 0
        %6183 = vmatpush1.bf16.msra.mxu0 0
        %6184 = vmatprep.subr.bf16.mxu0 0
        %6185 = vmatpush1.bf16.msra.mxu0 0
        %6186 = vmatprep.subr.bf16.mxu0 0
        %6187 = vmatpush1.bf16.msra.mxu0 0
        %6188 = vmatprep.subr.bf16.mxu0 0
        %6189 = vmatpush1.bf16.msra.mxu0 0
        %6190 = vmatprep.subr.bf16.mxu0 0
        %6191 = vmatpush1.bf16.msra.mxu0 %v6174
        %6192 = vmatprep.subr.bf16.mxu0 0
        %6193 = vmatpush2.bf16.msra.mxu0 0
        %6194 = vmatprep.subr.bf16.mxu0 0
        %6195 = vmatpush2.bf16.msra.mxu0 0
        %6196 = vmatprep.subr.bf16.mxu0 0
        %6197 = vmatpush2.bf16.msra.mxu0 0
        %6198 = vmatprep.subr.bf16.mxu0 0
        %6199 = vmatpush2.bf16.msra.mxu0 0
        %6200 = vmatprep.subr.bf16.mxu0 0
        %6201 = vmatpush2.bf16.msra.mxu0 0
        %6202 = vmatprep.subr.bf16.mxu0 0
        %6203 = vmatpush2.bf16.msra.mxu0 0
        %6204 = vmatprep.subr.bf16.mxu0 0
        %6205 = vmatpush2.bf16.msra.mxu0 0
        %6206 = vmatprep.subr.bf16.mxu0 0
        %6207 = vmatpush2.bf16.msra.mxu0 0
        %6208 = vmatprep.mubr.bf16.mxu0 0
        %6209 = vmatmul.mubr.bf16.gmra.mxu0 %v6171
        %v6210 = vpop.f32.mrf.mxu0
        %v6211 = vadd.f32 0.0, %v6210
        %v6212 = vpop.f32.mrf.mxu0
        %v6213 = vpop.f32.mrf.mxu0
        %v6214 = vadd.f32 0.0, %v6213
        %v6215 = vpop.f32.mrf.mxu0
        %6216 = vdwg.mxu0
        %v6218 = vsel %vm1832, %v6025, 0
        %v6221 = vsel %vm3556, %v4273, 0
        %6223 = vmatprep.subr.bf16.mxu0 0
        %6224 = vmatpush1.bf16.msra.mxu0 0
        %6225 = vmatprep.subr.bf16.mxu0 0
        %6226 = vmatpush1.bf16.msra.mxu0 0
        %6227 = vmatprep.subr.bf16.mxu0 0
        %6228 = vmatpush1.bf16.msra.mxu0 0
        %6229 = vmatprep.subr.bf16.mxu0 0
        %6230 = vmatpush1.bf16.msra.mxu0 0
        %6231 = vmatprep.subr.bf16.mxu0 0
        %6232 = vmatpush1.bf16.msra.mxu0 0
        %6233 = vmatprep.subr.bf16.mxu0 0
        %6234 = vmatpush1.bf16.msra.mxu0 0
        %6235 = vmatprep.subr.bf16.mxu0 0
        %6236 = vmatpush1.bf16.msra.mxu0 0
        %6237 = vmatprep.subr.bf16.mxu0 0
        %6238 = vmatpush1.bf16.msra.mxu0 %v6221
        %6239 = vmatprep.subr.bf16.mxu0 0
        %6240 = vmatpush2.bf16.msra.mxu0 0
        %6241 = vmatprep.subr.bf16.mxu0 0
        %6242 = vmatpush2.bf16.msra.mxu0 0
        %6243 = vmatprep.subr.bf16.mxu0 0
        %6244 = vmatpush2.bf16.msra.mxu0 0
        %6245 = vmatprep.subr.bf16.mxu0 0
        %6246 = vmatpush2.bf16.msra.mxu0 0
        %6247 = vmatprep.subr.bf16.mxu0 0
        %6248 = vmatpush2.bf16.msra.mxu0 0
        %6249 = vmatprep.subr.bf16.mxu0 0
        %6250 = vmatpush2.bf16.msra.mxu0 0
        %6251 = vmatprep.subr.bf16.mxu0 0
        %6252 = vmatpush2.bf16.msra.mxu0 0
        %6253 = vmatprep.subr.bf16.mxu0 0
        %6254 = vmatpush2.bf16.msra.mxu0 0
        %6255 = vmatprep.mubr.bf16.mxu0 0
        %6256 = vmatmul.mubr.bf16.gmra.mxu0 %v6218
        %v6257 = vpop.f32.mrf.mxu0
        %v6258 = vadd.f32 0.0, %v6257
        %v6259 = vpop.f32.mrf.mxu0
        %v6260 = vpop.f32.mrf.mxu0
        %v6261 = vadd.f32 0.0, %v6260
        %v6262 = vpop.f32.mrf.mxu0
        %6263 = vdwg.mxu0
        %v6265 = vsel %vm1832, %v6026, 0
        %v6268 = vsel %vm3556, %v4274, 0
        %6270 = vmatprep.subr.bf16.mxu0 0
        %6271 = vmatpush1.bf16.msra.mxu0 0
        %6272 = vmatprep.subr.bf16.mxu0 0
        %6273 = vmatpush1.bf16.msra.mxu0 0
        %6274 = vmatprep.subr.bf16.mxu0 0
        %6275 = vmatpush1.bf16.msra.mxu0 0
        %6276 = vmatprep.subr.bf16.mxu0 0
        %6277 = vmatpush1.bf16.msra.mxu0 0
        %6278 = vmatprep.subr.bf16.mxu0 0
        %6279 = vmatpush1.bf16.msra.mxu0 0
        %6280 = vmatprep.subr.bf16.mxu0 0
        %6281 = vmatpush1.bf16.msra.mxu0 0
        %6282 = vmatprep.subr.bf16.mxu0 0
        %6283 = vmatpush1.bf16.msra.mxu0 0
        %6284 = vmatprep.subr.bf16.mxu0 0
        %6285 = vmatpush1.bf16.msra.mxu0 %v6268
        %6286 = vmatprep.subr.bf16.mxu0 0
        %6287 = vmatpush2.bf16.msra.mxu0 0
        %6288 = vmatprep.subr.bf16.mxu0 0
        %6289 = vmatpush2.bf16.msra.mxu0 0
        %6290 = vmatprep.subr.bf16.mxu0 0
        %6291 = vmatpush2.bf16.msra.mxu0 0
        %6292 = vmatprep.subr.bf16.mxu0 0
        %6293 = vmatpush2.bf16.msra.mxu0 0
        %6294 = vmatprep.subr.bf16.mxu0 0
        %6295 = vmatpush2.bf16.msra.mxu0 0
        %6296 = vmatprep.subr.bf16.mxu0 0
        %6297 = vmatpush2.bf16.msra.mxu0 0
        %6298 = vmatprep.subr.bf16.mxu0 0
        %6299 = vmatpush2.bf16.msra.mxu0 0
        %6300 = vmatprep.subr.bf16.mxu0 0
        %6301 = vmatpush2.bf16.msra.mxu0 0
        %6302 = vmatprep.mubr.bf16.mxu0 0
        %6303 = vmatmul.mubr.bf16.gmra.mxu0 %v6265
        %v6304 = vpop.f32.mrf.mxu0
        %v6305 = vadd.f32 0.0, %v6304
        %v6306 = vpop.f32.mrf.mxu0
        %v6307 = vpop.f32.mrf.mxu0
        %v6308 = vadd.f32 0.0, %v6307
        %v6309 = vpop.f32.mrf.mxu0
        %6310 = vdwg.mxu0
        %v6312 = vsel %vm1832, %v6027, 0
        %v6315 = vsel %vm3556, %v4275, 0
        %6317 = vmatprep.subr.bf16.mxu0 0
        %6318 = vmatpush1.bf16.msra.mxu0 0
        %6319 = vmatprep.subr.bf16.mxu0 0
        %6320 = vmatpush1.bf16.msra.mxu0 0
        %6321 = vmatprep.subr.bf16.mxu0 0
        %6322 = vmatpush1.bf16.msra.mxu0 0
        %6323 = vmatprep.subr.bf16.mxu0 0
        %6324 = vmatpush1.bf16.msra.mxu0 0
        %6325 = vmatprep.subr.bf16.mxu0 0
        %6326 = vmatpush1.bf16.msra.mxu0 0
        %6327 = vmatprep.subr.bf16.mxu0 0
        %6328 = vmatpush1.bf16.msra.mxu0 0
        %6329 = vmatprep.subr.bf16.mxu0 0
        %6330 = vmatpush1.bf16.msra.mxu0 0
        %6331 = vmatprep.subr.bf16.mxu0 0
        %6332 = vmatpush1.bf16.msra.mxu0 %v6315
        %6333 = vmatprep.subr.bf16.mxu0 0
        %6334 = vmatpush2.bf16.msra.mxu0 0
        %6335 = vmatprep.subr.bf16.mxu0 0
        %6336 = vmatpush2.bf16.msra.mxu0 0
        %6337 = vmatprep.subr.bf16.mxu0 0
        %6338 = vmatpush2.bf16.msra.mxu0 0
        %6339 = vmatprep.subr.bf16.mxu0 0
        %6340 = vmatpush2.bf16.msra.mxu0 0
        %6341 = vmatprep.subr.bf16.mxu0 0
        %6342 = vmatpush2.bf16.msra.mxu0 0
        %6343 = vmatprep.subr.bf16.mxu0 0
        %6344 = vmatpush2.bf16.msra.mxu0 0
        %6345 = vmatprep.subr.bf16.mxu0 0
        %6346 = vmatpush2.bf16.msra.mxu0 0
        %6347 = vmatprep.subr.bf16.mxu0 0
        %6348 = vmatpush2.bf16.msra.mxu0 0
        %6349 = vmatprep.mubr.bf16.mxu0 0
        %6350 = vmatmul.mubr.bf16.gmra.mxu0 %v6312
        %v6351 = vpop.f32.mrf.mxu0
        %v6352 = vadd.f32 0.0, %v6351
        %v6353 = vpop.f32.mrf.mxu0
        %v6354 = vpop.f32.mrf.mxu0
        %v6355 = vadd.f32 0.0, %v6354
        %v6356 = vpop.f32.mrf.mxu0
        %6357 = vdwg.mxu0
        %v6359 = vsel %vm1832, %v6028, 0
        %v6362 = vsel %vm3556, %v4276, 0
        %6364 = vmatprep.subr.bf16.mxu0 0
        %6365 = vmatpush1.bf16.msra.mxu0 0
        %6366 = vmatprep.subr.bf16.mxu0 0
        %6367 = vmatpush1.bf16.msra.mxu0 0
        %6368 = vmatprep.subr.bf16.mxu0 0
        %6369 = vmatpush1.bf16.msra.mxu0 0
        %6370 = vmatprep.subr.bf16.mxu0 0
        %6371 = vmatpush1.bf16.msra.mxu0 0
        %6372 = vmatprep.subr.bf16.mxu0 0
        %6373 = vmatpush1.bf16.msra.mxu0 0
        %6374 = vmatprep.subr.bf16.mxu0 0
        %6375 = vmatpush1.bf16.msra.mxu0 0
        %6376 = vmatprep.subr.bf16.mxu0 0
        %6377 = vmatpush1.bf16.msra.mxu0 0
        %6378 = vmatprep.subr.bf16.mxu0 0
        %6379 = vmatpush1.bf16.msra.mxu0 %v6362
        %6380 = vmatprep.subr.bf16.mxu0 0
        %6381 = vmatpush2.bf16.msra.mxu0 0
        %6382 = vmatprep.subr.bf16.mxu0 0
        %6383 = vmatpush2.bf16.msra.mxu0 0
        %6384 = vmatprep.subr.bf16.mxu0 0
        %6385 = vmatpush2.bf16.msra.mxu0 0
        %6386 = vmatprep.subr.bf16.mxu0 0
        %6387 = vmatpush2.bf16.msra.mxu0 0
        %6388 = vmatprep.subr.bf16.mxu0 0
        %6389 = vmatpush2.bf16.msra.mxu0 0
        %6390 = vmatprep.subr.bf16.mxu0 0
        %6391 = vmatpush2.bf16.msra.mxu0 0
        %6392 = vmatprep.subr.bf16.mxu0 0
        %6393 = vmatpush2.bf16.msra.mxu0 0
        %6394 = vmatprep.subr.bf16.mxu0 0
        %6395 = vmatpush2.bf16.msra.mxu0 0
        %6396 = vmatprep.mubr.bf16.mxu0 0
        %6397 = vmatmul.mubr.bf16.gmra.mxu0 %v6359
        %v6398 = vpop.f32.mrf.mxu0
        %v6399 = vadd.f32 0.0, %v6398
        %v6400 = vpop.f32.mrf.mxu0
        %v6401 = vpop.f32.mrf.mxu0
        %v6402 = vadd.f32 0.0, %v6401
        %v6403 = vpop.f32.mrf.mxu0
        %6404 = vdwg.mxu0
        %v6405 = vsel %vm1644, %v6070, 0.0
        %v6406 = vsel %vm1644, %v6117, 0.0
        %v6407 = vadd.f32 %v6405, %v6406
        %v6408 = vsel %vm1644, %v6164, 0.0
        %v6409 = vadd.f32 %v6407, %v6408
        %v6410 = vsel %vm1644, %v6211, 0.0
        %v6411 = vadd.f32 %v6409, %v6410
        %v6412 = vsel %vm1644, %v6258, 0.0
        %v6413 = vadd.f32 %v6411, %v6412
        %v6414 = vsel %vm1644, %v6305, 0.0
        %v6415 = vadd.f32 %v6413, %v6414
        %v6416 = vsel %vm1644, %v6352, 0.0
        %v6417 = vadd.f32 %v6415, %v6416
        %v6418 = vsel %vm1644, %v6399, 0.0
        %v6419 = vadd.f32 %v6417, %v6418
        %v6420 = vsel %vm1644, %v6073, 0.0
        %v6421 = vsel %vm1644, %v6120, 0.0
        %v6422 = vadd.f32 %v6420, %v6421
        %v6423 = vsel %vm1644, %v6167, 0.0
        %v6424 = vadd.f32 %v6422, %v6423
        %v6425 = vsel %vm1644, %v6214, 0.0
        %v6426 = vadd.f32 %v6424, %v6425
        %v6427 = vsel %vm1644, %v6261, 0.0
        %v6428 = vadd.f32 %v6426, %v6427
        %v6429 = vsel %vm1644, %v6308, 0.0
        %v6430 = vadd.f32 %v6428, %v6429
        %v6431 = vsel %vm1644, %v6355, 0.0
        %v6432 = vadd.f32 %v6430, %v6431
        %v6433 = vsel %vm1644, %v6402, 0.0
        %v6434 = vadd.f32 %v6432, %v6433
        %v6436 = vlaneseq
        %v6437 = vshrl.u32 %v6436, 7
        %v6438 = vsub.s32 0, %v6437
        %v6439 = vrot.slane %v4277, %v6438
        %v6441 = vadd.f32 %v6419, %v6439
        %v6442 = vadd.f32 %v6434, %v6439
        %v6443 = vadd.f32 %v4013, %v6441
        %v6444 = vadd.f32 %v4014, %v6442
        %v6445 = vld [vmem:[%s1391] sm:$0x1]
        %v6446 = vld [vmem:[%s1596] sm:$0x1]
        %v6447 = vsel %vm1644, %v6443, 0.0
        %6448 = vadd.xlane.f32.xlu0 %v6447
        %v6449 = vpop.xlane.xlu0 %6448
        %v6450 = vsel %vm1644, %v6444, 0.0
        %6451 = vadd.xlane.f32.xlu0 %v6450
        %v6452 = vpop.xlane.xlu0 %6451
        %v6453 = vmul.f32 %v6449, %v3978
        %v6454 = vmul.f32 %v6452, %v3978
        %v6455 = vsub.f32 %v6443, %v6453
        %v6456 = vsub.f32 %v6444, %v6454
        %v6457 = vmul.f32 %v6455, %v6455
        %v6458 = vmul.f32 %v6456, %v6456
        %v6459 = vsel %vm1644, %v6457, 0.0
        %6460 = vadd.xlane.f32.xlu0 %v6459
        %v6461 = vpop.xlane.xlu0 %6460
        %v6462 = vsel %vm1644, %v6458, 0.0
        %6463 = vadd.xlane.f32.xlu0 %v6462
        %v6464 = vpop.xlane.xlu0 %6463
        %v6465 = vmul.f32 %v6461, %v3978
        %v6466 = vmul.f32 %v6464, %v3978
        %v6467 = vadd.f32 %v6465, 1e-05
        %v6468 = vadd.f32 %v6466, 1e-05
        %v6469 = vrsqrt.pop %v6467
        %v6470 = vrsqrt.pop %v6468
        %v6471 = vmul.f32 %v6455, %v6469
        %v6472 = vmul.f32 %v6456, %v6470
        %v6474 = vlaneseq
        %v6475 = vshrl.u32 %v6474, 7
        %v6476 = vsub.s32 0, %v6475
        %v6477 = vrot.slane %v6445, %v6476
        %v6479 = vmul.f32 %v6471, %v6477
        %v6480 = vmul.f32 %v6472, %v6477
        %v6482 = vlaneseq
        %v6483 = vshrl.u32 %v6482, 7
        %v6484 = vsub.s32 0, %v6483
        %v6485 = vrot.slane %v6446, %v6484
        %v6487 = vadd.f32 %v6479, %v6485
        %v6488 = vadd.f32 %v6480, %v6485
        %v6489 = vpack.c.bf16 %v6488, %v6487
        %v6490 = vld [vmem:[%s1375] sm:$0xf]
        %v6491 = vld [vmem:[%s1375 + $0x4] sm:$0xf]
        %v6492 = vld [vmem:[%s1375 + $0x8] sm:$0xf]
        %v6493 = vld [vmem:[%s1375 + $0xc] sm:$0xf]
        %v6494 = vld [vmem:[%s1383] sm:$0x1]
        %v6496 = vlaneseq
        %v6497 = vshrl.u32 %v6496, 7
        %v6498 = vsub.s32 0, %v6497
        %v6499 = vrot.slane %v6494, %v6498
        %v6505 = vunpack.c.l.b16 %v6490
        %v6506 = vunpack.c.l.b16 %v6491
        %v6507 = vunpack.c.l.b16 %v6492
        %v6508 = vunpack.c.l.b16 %v6493
        %v6509 = vpack.c.b16 %v6506, %v6505
        %v6510 = vpack.c.b16 %v6508, %v6507
        %v6514 = vsel %vm1644, %v6489, 0
        %6516 = vmatprep.subr.bf16.mxu0 0
        %6517 = vmatpush1.bf16.msra.mxu0 0
        %6518 = vmatprep.subr.bf16.mxu0 0
        %6519 = vmatpush1.bf16.msra.mxu0 0
        %6520 = vmatprep.subr.bf16.mxu0 0
        %6521 = vmatpush1.bf16.msra.mxu0 0
        %6522 = vmatprep.subr.bf16.mxu0 0
        %6523 = vmatpush1.bf16.msra.mxu0 0
        %6524 = vmatprep.subr.bf16.mxu0 0
        %6525 = vmatpush1.bf16.msra.mxu0 0
        %6526 = vmatprep.subr.bf16.mxu0 0
        %6527 = vmatpush1.bf16.msra.mxu0 0
        %6528 = vmatprep.subr.bf16.mxu0 0
        %6529 = vmatpush1.bf16.msra.mxu0 %v6510
        %6530 = vmatprep.subr.bf16.mxu0 0
        %6531 = vmatpush1.bf16.msra.mxu0 %v6509
        %6532 = vmatprep.subr.bf16.mxu0 0
        %6533 = vmatpush2.bf16.msra.mxu0 0
        %6534 = vmatprep.subr.bf16.mxu0 0
        %6535 = vmatpush2.bf16.msra.mxu0 0
        %6536 = vmatprep.subr.bf16.mxu0 0
        %6537 = vmatpush2.bf16.msra.mxu0 0
        %6538 = vmatprep.subr.bf16.mxu0 0
        %6539 = vmatpush2.bf16.msra.mxu0 0
        %6540 = vmatprep.subr.bf16.mxu0 0
        %6541 = vmatpush2.bf16.msra.mxu0 0
        %6542 = vmatprep.subr.bf16.mxu0 0
        %6543 = vmatpush2.bf16.msra.mxu0 0
        %6544 = vmatprep.subr.bf16.mxu0 0
        %6545 = vmatpush2.bf16.msra.mxu0 0
        %6546 = vmatprep.subr.bf16.mxu0 0
        %6547 = vmatpush2.bf16.msra.mxu0 0
        %6548 = vmatprep.mubr.bf16.mxu0 0
        %6549 = vmatmul.mubr.bf16.gmra.mxu0 %v6514
        %v6550 = vpop.f32.mrf.mxu0
        %v6551 = vadd.f32 %v6499, %v6550
        %v6552 = vpop.f32.mrf.mxu0
        %v6553 = vpop.f32.mrf.mxu0
        %v6554 = vadd.f32 %v6499, %v6553
        %v6555 = vpop.f32.mrf.mxu0
        %6556 = vdwg.mxu0
        %v6557 = vmax.f32 %v6551, 0.0
        %v6558 = vmax.f32 %v6554, 0.0
        %v6559 = vpack.c.bf16 %v6558, %v6557
        %v6560 = vld [vmem:[%s1584] sm:$0xf]
        %v6561 = vld [vmem:[%s1584 + $0x4] sm:$0xf]
        %v6562 = vld [vmem:[%s1584 + $0x8] sm:$0xf]
        %v6563 = vld [vmem:[%s1584 + $0xc] sm:$0xf]
        %v6564 = vld [vmem:[%s1584 + $0x10] sm:$0xf]
        %v6565 = vld [vmem:[%s1584 + $0x14] sm:$0xf]
        %v6566 = vld [vmem:[%s1584 + $0x18] sm:$0xf]
        %v6567 = vld [vmem:[%s1584 + $0x1c] sm:$0xf]
        %v6568 = vld [vmem:[%s1587] sm:$0x1]
        %v6570 = vlaneseq
        %v6571 = vshrl.u32 %v6570, 7
        %v6572 = vsub.s32 0, %v6571
        %v6573 = vrot.slane %v6568, %v6572
        %v6583 = vunpack.c.l.b16 %v6560
        %v6584 = vunpack.c.l.b16 %v6561
        %v6585 = vunpack.c.l.b16 %v6562
        %v6586 = vunpack.c.l.b16 %v6563
        %v6587 = vunpack.c.l.b16 %v6564
        %v6588 = vunpack.c.l.b16 %v6565
        %v6589 = vunpack.c.l.b16 %v6566
        %v6590 = vunpack.c.l.b16 %v6567
        %v6591 = vpack.c.b16 %v6584, %v6583
        %v6592 = vpack.c.b16 %v6586, %v6585
        %v6593 = vpack.c.b16 %v6588, %v6587
        %v6594 = vpack.c.b16 %v6590, %v6589
        %vm6599 = vcmask 523264
        %v6601 = vsel %vm6599, %v6559, 0
        %6603 = vmatprep.subr.bf16.mxu0 0
        %6604 = vmatpush1.bf16.msra.mxu0 0
        %6605 = vmatprep.subr.bf16.mxu0 0
        %6606 = vmatpush1.bf16.msra.mxu0 0
        %6607 = vmatprep.subr.bf16.mxu0 0
        %6608 = vmatpush1.bf16.msra.mxu0 0
        %6609 = vmatprep.subr.bf16.mxu0 0
        %6610 = vmatpush1.bf16.msra.mxu0 0
        %6611 = vmatprep.subr.bf16.mxu0 0
        %6612 = vmatpush1.bf16.msra.mxu0 %v6594
        %6613 = vmatprep.subr.bf16.mxu0 0
        %6614 = vmatpush1.bf16.msra.mxu0 %v6593
        %6615 = vmatprep.subr.bf16.mxu0 0
        %6616 = vmatpush1.bf16.msra.mxu0 %v6592
        %6617 = vmatprep.subr.bf16.mxu0 0
        %6618 = vmatpush1.bf16.msra.mxu0 %v6591
        %6619 = vmatprep.subr.bf16.mxu0 0
        %6620 = vmatpush2.bf16.msra.mxu0 0
        %6621 = vmatprep.subr.bf16.mxu0 0
        %6622 = vmatpush2.bf16.msra.mxu0 0
        %6623 = vmatprep.subr.bf16.mxu0 0
        %6624 = vmatpush2.bf16.msra.mxu0 0
        %6625 = vmatprep.subr.bf16.mxu0 0
        %6626 = vmatpush2.bf16.msra.mxu0 0
        %6627 = vmatprep.subr.bf16.mxu0 0
        %6628 = vmatpush2.bf16.msra.mxu0 0
        %6629 = vmatprep.subr.bf16.mxu0 0
        %6630 = vmatpush2.bf16.msra.mxu0 0
        %6631 = vmatprep.subr.bf16.mxu0 0
        %6632 = vmatpush2.bf16.msra.mxu0 0
        %6633 = vmatprep.subr.bf16.mxu0 0
        %6634 = vmatpush2.bf16.msra.mxu0 0
        %6635 = vmatprep.mubr.bf16.mxu0 0
        %6636 = vmatmul.mubr.bf16.gmra.mxu0 %v6601
        %v6637 = vpop.f32.mrf.mxu0
        %v6638 = vadd.f32 %v6573, %v6637
        %v6639 = vpop.f32.mrf.mxu0
        %v6640 = vpop.f32.mrf.mxu0
        %v6641 = vadd.f32 %v6573, %v6640
        %v6642 = vpop.f32.mrf.mxu0
        %6643 = vdwg.mxu0
        %v6644 = vadd.f32 %v6487, %v6638
        %v6645 = vadd.f32 %v6488, %v6641
        %v6646 = vld [vmem:[%s1599] sm:$0x1]
        %v6647 = vld [vmem:[%s1602] sm:$0x1]
        %v6648 = vsel %vm1644, %v6644, 0.0
        %6649 = vadd.xlane.f32.xlu0 %v6648
        %v6650 = vpop.xlane.xlu0 %6649
        %v6651 = vsel %vm1644, %v6645, 0.0
        %6652 = vadd.xlane.f32.xlu0 %v6651
        %v6653 = vpop.xlane.xlu0 %6652
        %v6654 = vmul.f32 %v6650, %v3978
        %v6655 = vmul.f32 %v6653, %v3978
        %v6656 = vsub.f32 %v6644, %v6654
        %v6657 = vsub.f32 %v6645, %v6655
        %v6658 = vmul.f32 %v6656, %v6656
        %v6659 = vmul.f32 %v6657, %v6657
        %v6660 = vsel %vm1644, %v6658, 0.0
        %6661 = vadd.xlane.f32.xlu0 %v6660
        %v6662 = vpop.xlane.xlu0 %6661
        %v6663 = vsel %vm1644, %v6659, 0.0
        %6664 = vadd.xlane.f32.xlu0 %v6663
        %v6665 = vpop.xlane.xlu0 %6664
        %v6666 = vmul.f32 %v6662, %v3978
        %v6667 = vmul.f32 %v6665, %v3978
        %v6668 = vadd.f32 %v6666, 1e-05
        %v6669 = vadd.f32 %v6667, 1e-05
        %v6670 = vrsqrt.pop %v6668
        %v6671 = vrsqrt.pop %v6669
        %v6672 = vmul.f32 %v6656, %v6670
        %v6673 = vmul.f32 %v6657, %v6671
        %v6675 = vlaneseq
        %v6676 = vshrl.u32 %v6675, 7
        %v6677 = vsub.s32 0, %v6676
        %v6678 = vrot.slane %v6646, %v6677
        %v6680 = vmul.f32 %v6672, %v6678
        %v6681 = vmul.f32 %v6673, %v6678
        %v6683 = vlaneseq
        %v6684 = vshrl.u32 %v6683, 7
        %v6685 = vsub.s32 0, %v6684
        %v6686 = vrot.slane %v6647, %v6685
        %v6688 = vadd.f32 %v6680, %v6686
        %v6689 = vadd.f32 %v6681, %v6686
        %6690 = vst.msk [vmem:[#allocation2] sm:$0xff] %vm1644, %v6688
        %6691 = vst.msk [vmem:[#allocation2 + $0x8] sm:$0xff] %vm1644, %v6689
        %p6692 = scmp.eq.s32.totalorder %s81, 1
        // Predicated region
        $region209: #{tpu_custom_call.1} parent=139 // pred_check
          %p6693 = pneg %p6692
        $region210: #{tpu_custom_call.1} parent=139 // pred_check_branch
          %6695 = sbr.rel (%p6693) target = $region212
        $region211: #{tpu_custom_call.1} parent=139 // pred_region
          %v6696 = vld [vmem:[%s57] sm:$0x1]
          %v6697 = vld [vmem:[%s59] sm:$0x1]
          %v6698 = vsel %vm1644, %v6688, 0.0
          %6699 = vadd.xlane.f32.xlu0 %v6698
          %v6700 = vpop.xlane.xlu0 %6699
          %v6701 = vsel %vm1644, %v6689, 0.0
          %6702 = vadd.xlane.f32.xlu0 %v6701
          %v6703 = vpop.xlane.xlu0 %6702
          %v6704 = vmul.f32 %v6700, %v3978
          %v6705 = vmul.f32 %v6703, %v3978
          %v6706 = vsub.f32 %v6688, %v6704
          %v6707 = vsub.f32 %v6689, %v6705
          %v6708 = vmul.f32 %v6706, %v6706
          %v6709 = vmul.f32 %v6707, %v6707
          %v6710 = vsel %vm1644, %v6708, 0.0
          %6711 = vadd.xlane.f32.xlu0 %v6710
          %v6712 = vpop.xlane.xlu0 %6711
          %v6713 = vsel %vm1644, %v6709, 0.0
          %6714 = vadd.xlane.f32.xlu0 %v6713
          %v6715 = vpop.xlane.xlu0 %6714
          %v6716 = vmul.f32 %v6712, %v3978
          %v6717 = vmul.f32 %v6715, %v3978
          %v6718 = vadd.f32 %v6716, 1e-05
          %v6719 = vadd.f32 %v6717, 1e-05
          %v6720 = vrsqrt.pop %v6718
          %v6721 = vrsqrt.pop %v6719
          %v6722 = vmul.f32 %v6706, %v6720
          %v6723 = vmul.f32 %v6707, %v6721
          %v6725 = vlaneseq
          %v6726 = vshrl.u32 %v6725, 7
          %v6727 = vsub.s32 0, %v6726
          %v6728 = vrot.slane %v6696, %v6727
          %v6730 = vmul.f32 %v6722, %v6728
          %v6731 = vmul.f32 %v6723, %v6728
          %v6733 = vlaneseq
          %v6734 = vshrl.u32 %v6733, 7
          %v6735 = vsub.s32 0, %v6734
          %v6736 = vrot.slane %v6697, %v6735
          %v6738 = vadd.f32 %v6730, %v6736
          %v6739 = vadd.f32 %v6731, %v6736
          %6740 = vst.msk [vmem:[#allocation23] sm:$0xff] %vm1644, %v6738
          %6741 = vst.msk [vmem:[#allocation23 + $0x8] sm:$0xff] %vm1644, %v6739
        $region212: #{tpu_custom_call.1} parent=139 // pred_fallthru
          _
        // Predicated region
        $region213: #{tpu_custom_call.1} parent=139 // pred_check
          %p6742 = pneg %p876
        $region214: #{tpu_custom_call.1} parent=139 // pred_check_branch
          %6744 = sbr.rel (%p6742) target = $region216
        $region215: #{tpu_custom_call.1} parent=139 // pred_region
          %s6745 = smul.u32 2, %s80
          %s6747 = ssub.s32 256, 256
          %6748 = vsyncadd [#allocation5], %s6747
          %s6749 = smul.addr %s6745, 128
          %s6750 = scalar_lea.hbm %s61, %s6749
          %s6751 = sshll.u32 [#allocation23], 4
          %s6752 = int_to_ptr.vmem [resolvable:$true] %s6751
          %6757 = dma.vmem_to_hbm [thread:$0]  %s6752, 256, %s6750, [#allocation5], 128, 128, 8
        $region216: #{tpu_custom_call.1} parent=139 // pred_fallthru
          _
        // Predicated region
        $region217: #{tpu_custom_call.1} parent=139 // pred_check
          %p6758 = pneg %p876
        $region218: #{tpu_custom_call.1} parent=139 // pred_check_branch
          %6760 = sbr.rel (%p6758) target = $region220
        $region219: #{tpu_custom_call.1} parent=139 // pred_region
          %6761 = dma.done [#allocation5], 256
        $region220: #{tpu_custom_call.1} parent=139 // pred_fallthru
          _
      $region140: #{tpu_custom_call.1} parent=5 // pred_fallthru
        _
      %p6762 = scmp.le.s32.totalorder 2, %s71
      // Predicated region
      $region221: #{tpu_custom_call.1} parent=5 // pred_check
        %p6763 = pneg %p6762
      $region222: #{tpu_custom_call.1} parent=5 // pred_check_branch
        %6765 = sbr.rel (%p6763) target = $region224
      $region223: #{tpu_custom_call.1} parent=5 // pred_region
        %s6766 = ssub.s32 %s71, 2
      $region224: #{tpu_custom_call.1} parent=5 // pred_fallthru
        _
    $region6: #{tpu_custom_call.1} parent=1 // loop_footer
      %s75 = sadd.s32 1, %s71
    $region7: #{tpu_custom_call.1} parent=1 // loop_footer_branch
      %70 = sbr.rel target = $region3
    $region8: #{tpu_custom_call.1} parent=1 // loop_exit
      _
    %6767 = vsyncpa [#allocation4], 1
    %s6768 = scalar_lea.sflag [#allocation4], 1
    %6769 = vsyncpa %s6768, 1
    %6770 = vsyncpa [#allocation7], 1
    %6771 = vsyncpa [#allocation10], 1
    %6772 = vsyncpa [#allocation5], 1
    %s6773 = scalar_lea.sflag [#allocation5], 1
    %6774 = vsyncpa %s6773, 1

</llo_original>
